<compile_context>
chip_gen: v6e
topology: v6e:2x2x1
jax: 0.10.0
libtpu: 0.0.40
codegen_flags: <defaults>
</compile_context>

<pallas_src>
import numpy as np
import jax
import jax.numpy as jnp
from jax import lax
from jax.experimental import pallas as pl
from jax.experimental.pallas import tpu as pltpu

C = 128  # lane width used for channel / feature padding


def _full_spec(shape):
    """BlockSpec covering the whole array (single grid step)."""
    nd = len(shape)
    return pl.BlockSpec(shape, lambda i, _nd=nd: (0,) * _nd)


# ---------------------------------------------------------------------------
# Fused Pallas kernel
# ---------------------------------------------------------------------------
# Row/lane conventions (all built on the host or in VMEM scratch):
#   stage-A rows:  R(hp, wq, awp, ah, b)  with s1 spatial (h, w) = (2*ah + hp, 2*awp + wq)
#   s1p lanes:     aw2*64 + j*10 + c      holding s1[b, 2*ah + hp, 2*aw2 + wp2 + j, c]
#   stage-B lanes: b4*32 + oc             (pooled w index b4, conv2 out-channel oc)

def _mnist_fused_kernel(xcols_ref, w1_ref, b1_ref, g1_ref, be1_ref,
                        w2_ref, b2_ref, g2_ref, be2_ref,
                        f1_ref, bf1_ref, f2_ref, bf2_ref,
                        o_ref, a1_ref, s1p_ref, s2_ref):
    f32 = jnp.float32
    bf16 = jnp.bfloat16
    eps = 1e-5
    B = o_ref.shape[0]

    # ---- stage A: conv1 (MXU) + 2x2 maxpool + relu; BN1 stats accumulated per chunk ----
    w1 = w1_ref[...]
    b1 = b1_ref[...]
    n1 = float(144 * B)
    sum1 = jnp.zeros((1, C), f32)
    sq1 = jnp.zeros((1, C), f32)
    for cnk in range(4):                               # (hp, wq) chunks of 36*B rows
        r0 = cnk * 36 * B
        conv = jnp.dot(xcols_ref[0, r0:r0 + 36 * B, :], w1, preferred_element_type=f32)
        for p in range(1, 4):                          # max over the 4 conv1 pool phases
            conv = jnp.maximum(conv,
                               jnp.dot(xcols_ref[p, r0:r0 + 36 * B, :], w1,
                                       preferred_element_type=f32))
        act = jnp.maximum(conv + b1, 0.0)              # bias + relu (bias commutes with max)
        a1_ref[r0:r0 + 36 * B, :] = act                # pre-BN activation, f32
        sum1 = sum1 + jnp.sum(act, axis=0, keepdims=True)
        sq1 = sq1 + jnp.sum(act * act, axis=0, keepdims=True)
    mean1 = sum1 / n1                                  # one-pass biased BN stats (train mode)
    var1 = jnp.maximum(sq1 / n1 - mean1 * mean1, 0.0)
    scale1 = g1_ref[...] * lax.rsqrt(var1 + eps)
    shift1 = be1_ref[...] - mean1 * scale1
    sc10 = scale1[:, 0:10]
    sh10 = shift1[:, 0:10]

    # ---- repack s1 -> s1p: parity-split (h, wo2); lanes = (aw2, j, c); BN1 applied here ----
    s1p_ref[...] = jnp.zeros_like(s1p_ref)             # unwritten pad lanes must be 0 (not NaN)
    for hp2 in range(2):
        for wp2 in range(2):
            for j in range(5):
                q = wp2 + j
                for aw2 in range(4):
                    r0 = ((hp2 * 2 + (q % 2)) * 6 + (aw2 + q // 2)) * 6 * B
                    off = aw2 * 64 + j * 10
                    src = a1_ref[r0:r0 + 6 * B, 0:10] * sc10 + sh10
                    s1p_ref[hp2, wp2, :, off:off + 10] = src.astype(bf16)

    # ---- stage B: conv2 (MXU, pool-phase split) + 2x2 maxpool + relu + bn2 ----
    pooled = None
    for dh in range(2):
        for dw in range(2):
            acc = None
            for i in range(5):
                hpi = (dh + i) % 2
                offi = (dh + i) // 2
                lhs = s1p_ref[hpi, dw, offi * B:(offi + 4) * B, :]       # [4B, 256] bf16
                z = jnp.dot(lhs, w2_ref[i], preferred_element_type=f32)  # [4B, 128]
                acc = z if acc is None else acc + z
            pooled = acc if pooled is None else jnp.maximum(pooled, acc)
    a2 = jnp.maximum(pooled + b2_ref[...], 0.0)                           # [4B, 128]
    n2 = float(16 * B)
    cs = jnp.sum(a2, axis=0, keepdims=True)
    cq = jnp.sum(a2 * a2, axis=0, keepdims=True)
    m2 = (cs[:, 0:32] + cs[:, 32:64] + cs[:, 64:96] + cs[:, 96:128]) / n2
    q2 = (cq[:, 0:32] + cq[:, 32:64] + cq[:, 64:96] + cq[:, 96:128]) / n2
    var2 = jnp.maximum(q2 - m2 * m2, 0.0)
    scale2 = g2_ref[:, 0:32] * lax.rsqrt(var2 + eps)
    shift2 = be2_ref[:, 0:32] - m2 * scale2
    for g4 in range(4):                                                   # BN2 apply per lane group
        s2_ref[:, g4 * 32:(g4 + 1) * 32] = a2[:, g4 * 32:(g4 + 1) * 32] * scale2 + shift2

    # ---- stage C: fc1 + relu + fc2 + log_softmax ----
    h = None
    for a in range(4):                                                    # 4 pooled rows -> K=4x128
        lhs = s2_ref[a * B:(a + 1) * B, :].astype(bf16)                   # [B, 128]
        z = jnp.dot(lhs, f1_ref[a], preferred_element_type=f32)
        h = z if h is None else h + z
    h = jnp.maximum(h + bf1_ref[...], 0.0)                                # [B, 128], 50 real
    logits = jnp.dot(h.astype(bf16), f2_ref[...],
                     preferred_element_type=f32) + bf2_ref[...]           # [B, 128], 10 real
    lane = lax.broadcasted_iota(jnp.int32, logits.shape, 1)
    lm = jnp.where(lane < 10, logits, jnp.float32(-1e30))
    mx = jnp.max(lm, axis=1, keepdims=True)
    lse = jnp.log(jnp.sum(jnp.exp(lm - mx), axis=1, keepdims=True))
    o_ref[...] = jnp.where(lane < 10, lm - mx - lse, 0.0)                 # zero the pad lanes


# ---------------------------------------------------------------------------
# Host-side parameter / input packing (layout plumbing only, fused by XLA)
# ---------------------------------------------------------------------------

def _row(v, n):
    return jnp.zeros((1, C), jnp.float32).at[0, :n].set(v.astype(jnp.float32))


def mnist_forward(x, params):
    f32 = jnp.float32
    bf16 = jnp.bfloat16
    B = x.shape[0]

    # conv1 im2col, pool-phase split, lane-dense:
    #   xcols[p=(dh,dw), R(hp,wq,awp,ah,b), i*5+j] = x[b, 4*ah+2*hp+dh+i, 4*awp+2*wq+dw+j]
    xs = x.reshape(B, 28, 28).astype(f32)
    ar6 = np.arange(6)
    ar5 = np.arange(5)
    ar2 = np.arange(2)
    Hidx = (4 * ar6[None, None, :, None] + 2 * ar2[None, :, None, None]
            + ar2[:, None, None, None] + ar5[None, None, None, :])        # [dh, hp, ah, i]
    Widx = (4 * ar6[None, None, :, None] + 2 * ar2[None, :, None, None]
            + ar2[:, None, None, None] + ar5[None, None, None, :])        # [dw, wq, awp, j]
    g = xs[:, Hidx[:, :, :, :, None, None, None, None],
           Widx[None, None, None, None, :, :, :, :]]                      # [B,2,2,6,5,2,2,6,5]
    g = g.transpose(1, 5, 2, 6, 7, 3, 0, 4, 8)                            # (dh,dw,hp,wq,awp,ah,b,i,j)
    g = g.reshape(4, 144 * B, 25)
    xcols = jnp.zeros((4, 144 * B, 32), f32).at[:, :, :25].set(g).astype(bf16)

    # conv1 weight: [10,1,5,5] -> [32, 128] (tap, padded out-channel)
    w1 = params["conv1_w"].reshape(10, 25)
    w1r = jnp.zeros((32, C), f32).at[:25, :10].set(w1.T).astype(bf16)
    b1r, g1r, be1r = _row(params["conv1_b"], 10), _row(params["bn1_g"], 10), _row(params["bn1_b"], 10)

    # conv2 weight: [20,10,5,5] -> 5 block-diagonal [256,128] mats (lane packing (aw2, j, c) -> (b4, oc))
    w2 = params["conv2_w"]
    w2r = jnp.zeros((5, 256, C), f32)
    for i in range(5):
        blk = w2[:, :, i, :].transpose(2, 1, 0).reshape(50, 20)           # [j*10+c, oc]
        for g4 in range(4):
            w2r = w2r.at[i, g4 * 64:g4 * 64 + 50, g4 * 32:g4 * 32 + 20].set(blk)
    w2r = w2r.astype(bf16)
    b2rep = jnp.zeros((1, C), f32)
    for g4 in range(4):
        b2rep = b2rep.at[0, g4 * 32:g4 * 32 + 20].set(params["conv2_b"].astype(f32))
    g2r, be2r = _row(params["bn2_g"], 20), _row(params["bn2_b"], 20)

    # fc1: [50,320] -> 4 mats [128,128]; lane-in = b4*32+oc, cols = k (PyTorch flatten = c*16+h*4+w)
    Wf1 = params["fc1_w"].reshape(50, 20, 4, 4)                           # [k, oc, a(h), b4(w)]
    f1r = jnp.zeros((4, C, C), f32)
    for a in range(4):
        for b4 in range(4):
            f1r = f1r.at[a, b4 * 32:b4 * 32 + 20, :50].set(Wf1[:, :, a, b4].T)
    f1r = f1r.astype(bf16)
    bf1r = _row(params["fc1_b"], 50)
    f2r = jnp.zeros((C, C), f32).at[:50, :10].set(params["fc2_w"].T).astype(bf16)
    bf2r = _row(params["fc2_b"], 10)

    args = (xcols, w1r, b1r, g1r, be1r, w2r, b2rep, g2r, be2r, f1r, bf1r, f2r, bf2r)

    out = pl.pallas_call(
        _mnist_fused_kernel,
        out_shape=jax.ShapeDtypeStruct((B, C), jnp.float32),
        grid=(1,),
        in_specs=[_full_spec(a.shape) for a in args],
        out_specs=_full_spec((B, C)),
        scratch_shapes=[pltpu.VMEM((144 * B, C), jnp.float32),            # stage-A activation
                        pltpu.VMEM((2, 2, 6 * B, 256), jnp.bfloat16),     # packed conv2 lhs
                        pltpu.VMEM((4 * B, C), jnp.float32)],             # bn2 output
        compiler_params=pltpu.CompilerParams(dimension_semantics=("arbitrary",)),
    )(*args)
    return out[:, :10]


# ---------------------------------------------------------------------------
# Pure-JAX reference (golden) and test harness
# ---------------------------------------------------------------------------

def mnist_reference(x, params):
    f32 = jnp.float32
    eps = 1e-5
    hi = lax.Precision.HIGHEST

    def conv(t, w, b):
        out = lax.conv_general_dilated(t, w, (1, 1), 'VALID',
                                       dimension_numbers=('NCHW', 'OIHW', 'NCHW'),
                                       precision=hi)
        return out + b[None, :, None, None]

    def pool(t):
        return lax.reduce_window(t, -jnp.inf, lax.max, (1, 1, 2, 2), (1, 1, 2, 2), 'VALID')

    def bn(t, g, be):
        mean = jnp.mean(t, axis=(0, 2, 3), keepdims=True)
        var = jnp.mean((t - mean) ** 2, axis=(0, 2, 3), keepdims=True)
        return (t - mean) * lax.rsqrt(var + eps) * g[None, :, None, None] + be[None, :, None, None]

    t = x.astype(f32)
    t = bn(jax.nn.relu(pool(conv(t, params["conv1_w"], params["conv1_b"]))),
           params["bn1_g"], params["bn1_b"])
    t = bn(jax.nn.relu(pool(conv(t, params["conv2_w"], params["conv2_b"]))),
           params["bn2_g"], params["bn2_b"])
    t = t.reshape(t.shape[0], -1)
    t = jax.nn.relu(jnp.dot(t, params["fc1_w"].T, precision=hi) + params["fc1_b"])
    t = jnp.dot(t, params["fc2_w"].T, precision=hi) + params["fc2_b"]
    return jax.nn.log_softmax(t, axis=1)


def init_params(key):
    ks = jax.random.split(key, 8)

    def u(k, shape, fan_in):
        bound = 1.0 / jnp.sqrt(jnp.float32(fan_in))
        return jax.random.uniform(k, shape, jnp.float32, -bound, bound)

    return {
        "conv1_w": u(ks[0], (10, 1, 5, 5), 25), "conv1_b": u(ks[1], (10,), 25),
        "bn1_g": jnp.ones((10,), jnp.float32), "bn1_b": jnp.zeros((10,), jnp.float32),
        "conv2_w": u(ks[2], (20, 10, 5, 5), 250), "conv2_b": u(ks[3], (20,), 250),
        "bn2_g": jnp.ones((20,), jnp.float32), "bn2_b": jnp.zeros((20,), jnp.float32),
        "fc1_w": u(ks[4], (50, 320), 320), "fc1_b": u(ks[5], (50,), 320),
        "fc2_w": u(ks[6], (10, 50), 50), "fc2_b": u(ks[7], (10,), 50),
    }


if __name__ == "__main__":
    key = jax.random.PRNGKey(0)
    k_x, k_p = jax.random.split(key)
    # MNIST geometry: 28x28 single-channel input (fc1 expects 20*4*4 = 320 features).
    x = jax.random.normal(k_x, (2, 1, 28, 28), jnp.float32)
    params = init_params(k_p)

    out = jax.block_until_ready(jax.jit(mnist_forward)(x, params))

    assert out.shape == (2, 10) and out.dtype == jnp.float32
    assert bool(jnp.all(jnp.isfinite(out)))
    # log_softmax rows must exponentiate-sum to ~1
    assert bool(jnp.all(jnp.abs(jnp.sum(jnp.exp(out), axis=1) - 1.0) < 1e-3))
    # golden check against a pure-JAX f32 reference (loose: kernel matmuls run in bf16)
    ref = jax.block_until_ready(jax.jit(mnist_reference)(x, params))
    assert float(jnp.max(jnp.abs(out - ref))) < 0.25
    print("KERNEL_OK")
</pallas_src>

<mosaic_0001>
module attributes {stable_mosaic.version = 11 : i64} {
  func.func @_mnist_fused_kernel(%arg0: i32, %arg1: memref<4x288x32xbf16, #tpu.memory_space<vmem>>, %arg2: memref<32x128xbf16, #tpu.memory_space<vmem>>, %arg3: memref<1x128xf32, #tpu.memory_space<vmem>>, %arg4: memref<1x128xf32, #tpu.memory_space<vmem>>, %arg5: memref<1x128xf32, #tpu.memory_space<vmem>>, %arg6: memref<5x256x128xbf16, #tpu.memory_space<vmem>>, %arg7: memref<1x128xf32, #tpu.memory_space<vmem>>, %arg8: memref<1x128xf32, #tpu.memory_space<vmem>>, %arg9: memref<1x128xf32, #tpu.memory_space<vmem>>, %arg10: memref<4x128x128xbf16, #tpu.memory_space<vmem>>, %arg11: memref<1x128xf32, #tpu.memory_space<vmem>>, %arg12: memref<128x128xbf16, #tpu.memory_space<vmem>>, %arg13: memref<1x128xf32, #tpu.memory_space<vmem>>, %arg14: memref<2x128xf32, #tpu.memory_space<vmem>>, %arg15: memref<288x128xf32, #tpu.memory_space<vmem>>, %arg16: memref<2x2x12x256xbf16, #tpu.memory_space<vmem>>, %arg17: memref<8x128xf32, #tpu.memory_space<vmem>>) attributes {dimension_semantics = [#tpu.dimension_semantics<arbitrary>], iteration_bounds = array<i64: 1>, scalar_prefetch = 0 : i64, scratch_operands = 3 : i64, tpu.core_type = #tpu.core_type<tc>, window_params = [{pipeline_mode = #tpu.pipeline_mode<synchronous>, transform_indices = @transform_0, window_bounds = array<i64: 4, 288, 32>}, {pipeline_mode = #tpu.pipeline_mode<synchronous>, transform_indices = @transform_1, window_bounds = array<i64: 32, 128>}, {pipeline_mode = #tpu.pipeline_mode<synchronous>, transform_indices = @transform_2, window_bounds = array<i64: 1, 128>}, {pipeline_mode = #tpu.pipeline_mode<synchronous>, transform_indices = @transform_3, window_bounds = array<i64: 1, 128>}, {pipeline_mode = #tpu.pipeline_mode<synchronous>, transform_indices = @transform_4, window_bounds = array<i64: 1, 128>}, {pipeline_mode = #tpu.pipeline_mode<synchronous>, transform_indices = @transform_5, window_bounds = array<i64: 5, 256, 128>}, {pipeline_mode = #tpu.pipeline_mode<synchronous>, transform_indices = @transform_6, window_bounds = array<i64: 1, 128>}, {pipeline_mode = #tpu.pipeline_mode<synchronous>, transform_indices = @transform_7, window_bounds = array<i64: 1, 128>}, {pipeline_mode = #tpu.pipeline_mode<synchronous>, transform_indices = @transform_8, window_bounds = array<i64: 1, 128>}, {pipeline_mode = #tpu.pipeline_mode<synchronous>, transform_indices = @transform_9, window_bounds = array<i64: 4, 128, 128>}, {pipeline_mode = #tpu.pipeline_mode<synchronous>, transform_indices = @transform_10, window_bounds = array<i64: 1, 128>}, {pipeline_mode = #tpu.pipeline_mode<synchronous>, transform_indices = @transform_11, window_bounds = array<i64: 128, 128>}, {pipeline_mode = #tpu.pipeline_mode<synchronous>, transform_indices = @transform_12, window_bounds = array<i64: 1, 128>}, {pipeline_mode = #tpu.pipeline_mode<synchronous>, transform_indices = @transform_13, window_bounds = array<i64: 2, 128>}]} {
    %c0 = arith.constant 0 : index
    %c0_0 = arith.constant 0 : index
    %0 = vector.load %arg2[%c0, %c0_0] : memref<32x128xbf16, #tpu.memory_space<vmem>>, vector<32x128xbf16>
    %c0_1 = arith.constant 0 : index
    %c0_2 = arith.constant 0 : index
    %1 = vector.load %arg3[%c0_1, %c0_2] : memref<1x128xf32, #tpu.memory_space<vmem>>, vector<1x128xf32>
    %cst = arith.constant 0.000000e+00 : f32
    %2 = vector.broadcast %cst : f32 to vector<1x128xf32>
    %cst_3 = arith.constant 0.000000e+00 : f32
    %3 = vector.broadcast %cst_3 : f32 to vector<1x128xf32>
    %c0_4 = arith.constant 0 : index
    %c0_5 = arith.constant 0 : index
    %c0_6 = arith.constant 0 : index
    %4 = vector.load %arg1[%c0_4, %c0_5, %c0_6] : memref<4x288x32xbf16, #tpu.memory_space<vmem>>, vector<1x72x32xbf16>
    %5 = vector.shape_cast %4 : vector<1x72x32xbf16> to vector<72x32xbf16>
    %cst_7 = arith.constant dense<0.000000e+00> : vector<72x128xf32>
    %6 = tpu.matmul %5, %0, %cst_7 {dimension_numbers = #tpu.dot_dimension_numbers<[1], [0], [0], [1], [0, 0, 1, 1], [], []>} : vector<72x32xbf16>, vector<32x128xbf16>, vector<72x128xf32> -> vector<72x128xf32>
    %c1 = arith.constant 1 : index
    %c0_8 = arith.constant 0 : index
    %c0_9 = arith.constant 0 : index
    %7 = vector.load %arg1[%c1, %c0_8, %c0_9] : memref<4x288x32xbf16, #tpu.memory_space<vmem>>, vector<1x72x32xbf16>
    %8 = vector.shape_cast %7 : vector<1x72x32xbf16> to vector<72x32xbf16>
    %cst_10 = arith.constant dense<0.000000e+00> : vector<72x128xf32>
    %9 = tpu.matmul %8, %0, %cst_10 {dimension_numbers = #tpu.dot_dimension_numbers<[1], [0], [0], [1], [0, 0, 1, 1], [], []>} : vector<72x32xbf16>, vector<32x128xbf16>, vector<72x128xf32> -> vector<72x128xf32>
    %10 = arith.maximumf %6, %9 : vector<72x128xf32>
    %c2 = arith.constant 2 : index
    %c0_11 = arith.constant 0 : index
    %c0_12 = arith.constant 0 : index
    %11 = vector.load %arg1[%c2, %c0_11, %c0_12] : memref<4x288x32xbf16, #tpu.memory_space<vmem>>, vector<1x72x32xbf16>
    %12 = vector.shape_cast %11 : vector<1x72x32xbf16> to vector<72x32xbf16>
    %cst_13 = arith.constant dense<0.000000e+00> : vector<72x128xf32>
    %13 = tpu.matmul %12, %0, %cst_13 {dimension_numbers = #tpu.dot_dimension_numbers<[1], [0], [0], [1], [0, 0, 1, 1], [], []>} : vector<72x32xbf16>, vector<32x128xbf16>, vector<72x128xf32> -> vector<72x128xf32>
    %14 = arith.maximumf %10, %13 : vector<72x128xf32>
    %c3 = arith.constant 3 : index
    %c0_14 = arith.constant 0 : index
    %c0_15 = arith.constant 0 : index
    %15 = vector.load %arg1[%c3, %c0_14, %c0_15] : memref<4x288x32xbf16, #tpu.memory_space<vmem>>, vector<1x72x32xbf16>
    %16 = vector.shape_cast %15 : vector<1x72x32xbf16> to vector<72x32xbf16>
    %cst_16 = arith.constant dense<0.000000e+00> : vector<72x128xf32>
    %17 = tpu.matmul %16, %0, %cst_16 {dimension_numbers = #tpu.dot_dimension_numbers<[1], [0], [0], [1], [0, 0, 1, 1], [], []>} : vector<72x32xbf16>, vector<32x128xbf16>, vector<72x128xf32> -> vector<72x128xf32>
    %18 = arith.maximumf %14, %17 : vector<72x128xf32>
    %19 = vector.broadcast %1 : vector<1x128xf32> to vector<72x128xf32>
    %20 = arith.addf %18, %19 : vector<72x128xf32>
    %cst_17 = arith.constant 0.000000e+00 : f32
    %21 = vector.broadcast %cst_17 : f32 to vector<72x128xf32>
    %22 = arith.maximumf %20, %21 : vector<72x128xf32>
    %c0_18 = arith.constant 0 : index
    %c0_19 = arith.constant 0 : index
    %23 = vector.load %arg15[%c0_18, %c0_19] : memref<288x128xf32, #tpu.memory_space<vmem>>, vector<72x128xf32>
    tpu.vector_store %arg15[%c0_18, %c0_19], %22 {strides = array<i32>} : memref<288x128xf32, #tpu.memory_space<vmem>>, vector<72x128xf32>,
    %cst_20 = arith.constant dense<0.000000e+00> : vector<128xf32>
    %24 = vector.multi_reduction <add>, %22, %cst_20 [0] : vector<72x128xf32> to vector<128xf32>
    %25 = vector.shape_cast %24 : vector<128xf32> to vector<1x128xf32>
    %26 = arith.addf %2, %25 : vector<1x128xf32>
    %27 = arith.mulf %22, %22 : vector<72x128xf32>
    %cst_21 = arith.constant dense<0.000000e+00> : vector<128xf32>
    %28 = vector.multi_reduction <add>, %27, %cst_21 [0] : vector<72x128xf32> to vector<128xf32>
    %29 = vector.shape_cast %28 : vector<128xf32> to vector<1x128xf32>
    %30 = arith.addf %3, %29 : vector<1x128xf32>
    %c0_22 = arith.constant 0 : index
    %c72 = arith.constant 72 : index
    %c0_23 = arith.constant 0 : index
    %31 = vector.load %arg1[%c0_22, %c72, %c0_23] : memref<4x288x32xbf16, #tpu.memory_space<vmem>>, vector<1x72x32xbf16>
    %32 = vector.shape_cast %31 : vector<1x72x32xbf16> to vector<72x32xbf16>
    %cst_24 = arith.constant dense<0.000000e+00> : vector<72x128xf32>
    %33 = tpu.matmul %32, %0, %cst_24 {dimension_numbers = #tpu.dot_dimension_numbers<[1], [0], [0], [1], [0, 0, 1, 1], [], []>} : vector<72x32xbf16>, vector<32x128xbf16>, vector<72x128xf32> -> vector<72x128xf32>
    %c1_25 = arith.constant 1 : index
    %c72_26 = arith.constant 72 : index
    %c0_27 = arith.constant 0 : index
    %34 = vector.load %arg1[%c1_25, %c72_26, %c0_27] : memref<4x288x32xbf16, #tpu.memory_space<vmem>>, vector<1x72x32xbf16>
    %35 = vector.shape_cast %34 : vector<1x72x32xbf16> to vector<72x32xbf16>
    %cst_28 = arith.constant dense<0.000000e+00> : vector<72x128xf32>
    %36 = tpu.matmul %35, %0, %cst_28 {dimension_numbers = #tpu.dot_dimension_numbers<[1], [0], [0], [1], [0, 0, 1, 1], [], []>} : vector<72x32xbf16>, vector<32x128xbf16>, vector<72x128xf32> -> vector<72x128xf32>
    %37 = arith.maximumf %33, %36 : vector<72x128xf32>
    %c2_29 = arith.constant 2 : index
    %c72_30 = arith.constant 72 : index
    %c0_31 = arith.constant 0 : index
    %38 = vector.load %arg1[%c2_29, %c72_30, %c0_31] : memref<4x288x32xbf16, #tpu.memory_space<vmem>>, vector<1x72x32xbf16>
    %39 = vector.shape_cast %38 : vector<1x72x32xbf16> to vector<72x32xbf16>
    %cst_32 = arith.constant dense<0.000000e+00> : vector<72x128xf32>
    %40 = tpu.matmul %39, %0, %cst_32 {dimension_numbers = #tpu.dot_dimension_numbers<[1], [0], [0], [1], [0, 0, 1, 1], [], []>} : vector<72x32xbf16>, vector<32x128xbf16>, vector<72x128xf32> -> vector<72x128xf32>
    %41 = arith.maximumf %37, %40 : vector<72x128xf32>
    %c3_33 = arith.constant 3 : index
    %c72_34 = arith.constant 72 : index
    %c0_35 = arith.constant 0 : index
    %42 = vector.load %arg1[%c3_33, %c72_34, %c0_35] : memref<4x288x32xbf16, #tpu.memory_space<vmem>>, vector<1x72x32xbf16>
    %43 = vector.shape_cast %42 : vector<1x72x32xbf16> to vector<72x32xbf16>
    %cst_36 = arith.constant dense<0.000000e+00> : vector<72x128xf32>
    %44 = tpu.matmul %43, %0, %cst_36 {dimension_numbers = #tpu.dot_dimension_numbers<[1], [0], [0], [1], [0, 0, 1, 1], [], []>} : vector<72x32xbf16>, vector<32x128xbf16>, vector<72x128xf32> -> vector<72x128xf32>
    %45 = arith.maximumf %41, %44 : vector<72x128xf32>
    %46 = vector.broadcast %1 : vector<1x128xf32> to vector<72x128xf32>
    %47 = arith.addf %45, %46 : vector<72x128xf32>
    %cst_37 = arith.constant 0.000000e+00 : f32
    %48 = vector.broadcast %cst_37 : f32 to vector<72x128xf32>
    %49 = arith.maximumf %47, %48 : vector<72x128xf32>
    %c72_38 = arith.constant 72 : index
    %c0_39 = arith.constant 0 : index
    %50 = vector.load %arg15[%c72_38, %c0_39] : memref<288x128xf32, #tpu.memory_space<vmem>>, vector<72x128xf32>
    tpu.vector_store %arg15[%c72_38, %c0_39], %49 {strides = array<i32>} : memref<288x128xf32, #tpu.memory_space<vmem>>, vector<72x128xf32>,
    %cst_40 = arith.constant dense<0.000000e+00> : vector<128xf32>
    %51 = vector.multi_reduction <add>, %49, %cst_40 [0] : vector<72x128xf32> to vector<128xf32>
    %52 = vector.shape_cast %51 : vector<128xf32> to vector<1x128xf32>
    %53 = arith.addf %26, %52 : vector<1x128xf32>
    %54 = arith.mulf %49, %49 : vector<72x128xf32>
    %cst_41 = arith.constant dense<0.000000e+00> : vector<128xf32>
    %55 = vector.multi_reduction <add>, %54, %cst_41 [0] : vector<72x128xf32> to vector<128xf32>
    %56 = vector.shape_cast %55 : vector<128xf32> to vector<1x128xf32>
    %57 = arith.addf %30, %56 : vector<1x128xf32>
    %c0_42 = arith.constant 0 : index
    %c144 = arith.constant 144 : index
    %c0_43 = arith.constant 0 : index
    %58 = vector.load %arg1[%c0_42, %c144, %c0_43] : memref<4x288x32xbf16, #tpu.memory_space<vmem>>, vector<1x72x32xbf16>
    %59 = vector.shape_cast %58 : vector<1x72x32xbf16> to vector<72x32xbf16>
    %cst_44 = arith.constant dense<0.000000e+00> : vector<72x128xf32>
    %60 = tpu.matmul %59, %0, %cst_44 {dimension_numbers = #tpu.dot_dimension_numbers<[1], [0], [0], [1], [0, 0, 1, 1], [], []>} : vector<72x32xbf16>, vector<32x128xbf16>, vector<72x128xf32> -> vector<72x128xf32>
    %c1_45 = arith.constant 1 : index
    %c144_46 = arith.constant 144 : index
    %c0_47 = arith.constant 0 : index
    %61 = vector.load %arg1[%c1_45, %c144_46, %c0_47] : memref<4x288x32xbf16, #tpu.memory_space<vmem>>, vector<1x72x32xbf16>
    %62 = vector.shape_cast %61 : vector<1x72x32xbf16> to vector<72x32xbf16>
    %cst_48 = arith.constant dense<0.000000e+00> : vector<72x128xf32>
    %63 = tpu.matmul %62, %0, %cst_48 {dimension_numbers = #tpu.dot_dimension_numbers<[1], [0], [0], [1], [0, 0, 1, 1], [], []>} : vector<72x32xbf16>, vector<32x128xbf16>, vector<72x128xf32> -> vector<72x128xf32>
    %64 = arith.maximumf %60, %63 : vector<72x128xf32>
    %c2_49 = arith.constant 2 : index
    %c144_50 = arith.constant 144 : index
    %c0_51 = arith.constant 0 : index
    %65 = vector.load %arg1[%c2_49, %c144_50, %c0_51] : memref<4x288x32xbf16, #tpu.memory_space<vmem>>, vector<1x72x32xbf16>
    %66 = vector.shape_cast %65 : vector<1x72x32xbf16> to vector<72x32xbf16>
    %cst_52 = arith.constant dense<0.000000e+00> : vector<72x128xf32>
    %67 = tpu.matmul %66, %0, %cst_52 {dimension_numbers = #tpu.dot_dimension_numbers<[1], [0], [0], [1], [0, 0, 1, 1], [], []>} : vector<72x32xbf16>, vector<32x128xbf16>, vector<72x128xf32> -> vector<72x128xf32>
    %68 = arith.maximumf %64, %67 : vector<72x128xf32>
    %c3_53 = arith.constant 3 : index
    %c144_54 = arith.constant 144 : index
    %c0_55 = arith.constant 0 : index
    %69 = vector.load %arg1[%c3_53, %c144_54, %c0_55] : memref<4x288x32xbf16, #tpu.memory_space<vmem>>, vector<1x72x32xbf16>
    %70 = vector.shape_cast %69 : vector<1x72x32xbf16> to vector<72x32xbf16>
    %cst_56 = arith.constant dense<0.000000e+00> : vector<72x128xf32>
    %71 = tpu.matmul %70, %0, %cst_56 {dimension_numbers = #tpu.dot_dimension_numbers<[1], [0], [0], [1], [0, 0, 1, 1], [], []>} : vector<72x32xbf16>, vector<32x128xbf16>, vector<72x128xf32> -> vector<72x128xf32>
    %72 = arith.maximumf %68, %71 : vector<72x128xf32>
    %73 = vector.broadcast %1 : vector<1x128xf32> to vector<72x128xf32>
    %74 = arith.addf %72, %73 : vector<72x128xf32>
    %cst_57 = arith.constant 0.000000e+00 : f32
    %75 = vector.broadcast %cst_57 : f32 to vector<72x128xf32>
    %76 = arith.maximumf %74, %75 : vector<72x128xf32>
    %c144_58 = arith.constant 144 : index
    %c0_59 = arith.constant 0 : index
    %77 = vector.load %arg15[%c144_58, %c0_59] : memref<288x128xf32, #tpu.memory_space<vmem>>, vector<72x128xf32>
    tpu.vector_store %arg15[%c144_58, %c0_59], %76 {strides = array<i32>} : memref<288x128xf32, #tpu.memory_space<vmem>>, vector<72x128xf32>,
    %cst_60 = arith.constant dense<0.000000e+00> : vector<128xf32>
    %78 = vector.multi_reduction <add>, %76, %cst_60 [0] : vector<72x128xf32> to vector<128xf32>
    %79 = vector.shape_cast %78 : vector<128xf32> to vector<1x128xf32>
    %80 = arith.addf %53, %79 : vector<1x128xf32>
    %81 = arith.mulf %76, %76 : vector<72x128xf32>
    %cst_61 = arith.constant dense<0.000000e+00> : vector<128xf32>
    %82 = vector.multi_reduction <add>, %81, %cst_61 [0] : vector<72x128xf32> to vector<128xf32>
    %83 = vector.shape_cast %82 : vector<128xf32> to vector<1x128xf32>
    %84 = arith.addf %57, %83 : vector<1x128xf32>
    %c0_62 = arith.constant 0 : index
    %c216 = arith.constant 216 : index
    %c0_63 = arith.constant 0 : index
    %85 = vector.load %arg1[%c0_62, %c216, %c0_63] : memref<4x288x32xbf16, #tpu.memory_space<vmem>>, vector<1x72x32xbf16>
    %86 = vector.shape_cast %85 : vector<1x72x32xbf16> to vector<72x32xbf16>
    %cst_64 = arith.constant dense<0.000000e+00> : vector<72x128xf32>
    %87 = tpu.matmul %86, %0, %cst_64 {dimension_numbers = #tpu.dot_dimension_numbers<[1], [0], [0], [1], [0, 0, 1, 1], [], []>} : vector<72x32xbf16>, vector<32x128xbf16>, vector<72x128xf32> -> vector<72x128xf32>
    %c1_65 = arith.constant 1 : index
    %c216_66 = arith.constant 216 : index
    %c0_67 = arith.constant 0 : index
    %88 = vector.load %arg1[%c1_65, %c216_66, %c0_67] : memref<4x288x32xbf16, #tpu.memory_space<vmem>>, vector<1x72x32xbf16>
    %89 = vector.shape_cast %88 : vector<1x72x32xbf16> to vector<72x32xbf16>
    %cst_68 = arith.constant dense<0.000000e+00> : vector<72x128xf32>
    %90 = tpu.matmul %89, %0, %cst_68 {dimension_numbers = #tpu.dot_dimension_numbers<[1], [0], [0], [1], [0, 0, 1, 1], [], []>} : vector<72x32xbf16>, vector<32x128xbf16>, vector<72x128xf32> -> vector<72x128xf32>
    %91 = arith.maximumf %87, %90 : vector<72x128xf32>
    %c2_69 = arith.constant 2 : index
    %c216_70 = arith.constant 216 : index
    %c0_71 = arith.constant 0 : index
    %92 = vector.load %arg1[%c2_69, %c216_70, %c0_71] : memref<4x288x32xbf16, #tpu.memory_space<vmem>>, vector<1x72x32xbf16>
    %93 = vector.shape_cast %92 : vector<1x72x32xbf16> to vector<72x32xbf16>
    %cst_72 = arith.constant dense<0.000000e+00> : vector<72x128xf32>
    %94 = tpu.matmul %93, %0, %cst_72 {dimension_numbers = #tpu.dot_dimension_numbers<[1], [0], [0], [1], [0, 0, 1, 1], [], []>} : vector<72x32xbf16>, vector<32x128xbf16>, vector<72x128xf32> -> vector<72x128xf32>
    %95 = arith.maximumf %91, %94 : vector<72x128xf32>
    %c3_73 = arith.constant 3 : index
    %c216_74 = arith.constant 216 : index
    %c0_75 = arith.constant 0 : index
    %96 = vector.load %arg1[%c3_73, %c216_74, %c0_75] : memref<4x288x32xbf16, #tpu.memory_space<vmem>>, vector<1x72x32xbf16>
    %97 = vector.shape_cast %96 : vector<1x72x32xbf16> to vector<72x32xbf16>
    %cst_76 = arith.constant dense<0.000000e+00> : vector<72x128xf32>
    %98 = tpu.matmul %97, %0, %cst_76 {dimension_numbers = #tpu.dot_dimension_numbers<[1], [0], [0], [1], [0, 0, 1, 1], [], []>} : vector<72x32xbf16>, vector<32x128xbf16>, vector<72x128xf32> -> vector<72x128xf32>
    %99 = arith.maximumf %95, %98 : vector<72x128xf32>
    %100 = vector.broadcast %1 : vector<1x128xf32> to vector<72x128xf32>
    %101 = arith.addf %99, %100 : vector<72x128xf32>
    %cst_77 = arith.constant 0.000000e+00 : f32
    %102 = vector.broadcast %cst_77 : f32 to vector<72x128xf32>
    %103 = arith.maximumf %101, %102 : vector<72x128xf32>
    %c216_78 = arith.constant 216 : index
    %c0_79 = arith.constant 0 : index
    %104 = vector.load %arg15[%c216_78, %c0_79] : memref<288x128xf32, #tpu.memory_space<vmem>>, vector<72x128xf32>
    tpu.vector_store %arg15[%c216_78, %c0_79], %103 {strides = array<i32>} : memref<288x128xf32, #tpu.memory_space<vmem>>, vector<72x128xf32>,
    %cst_80 = arith.constant dense<0.000000e+00> : vector<128xf32>
    %105 = vector.multi_reduction <add>, %103, %cst_80 [0] : vector<72x128xf32> to vector<128xf32>
    %106 = vector.shape_cast %105 : vector<128xf32> to vector<1x128xf32>
    %107 = arith.addf %80, %106 : vector<1x128xf32>
    %108 = arith.mulf %103, %103 : vector<72x128xf32>
    %cst_81 = arith.constant dense<0.000000e+00> : vector<128xf32>
    %109 = vector.multi_reduction <add>, %108, %cst_81 [0] : vector<72x128xf32> to vector<128xf32>
    %110 = vector.shape_cast %109 : vector<128xf32> to vector<1x128xf32>
    %111 = arith.addf %84, %110 : vector<1x128xf32>
    %cst_82 = arith.constant 2.880000e+02 : f32
    %112 = vector.broadcast %cst_82 : f32 to vector<1x128xf32>
    %113 = arith.divf %107, %112 : vector<1x128xf32>
    %cst_83 = arith.constant 2.880000e+02 : f32
    %114 = vector.broadcast %cst_83 : f32 to vector<1x128xf32>
    %115 = arith.divf %111, %114 : vector<1x128xf32>
    %116 = arith.mulf %113, %113 : vector<1x128xf32>
    %117 = arith.subf %115, %116 : vector<1x128xf32>
    %cst_84 = arith.constant 0.000000e+00 : f32
    %118 = vector.broadcast %cst_84 : f32 to vector<1x128xf32>
    %119 = arith.maximumf %117, %118 : vector<1x128xf32>
    %c0_85 = arith.constant 0 : index
    %c0_86 = arith.constant 0 : index
    %120 = vector.load %arg4[%c0_85, %c0_86] : memref<1x128xf32, #tpu.memory_space<vmem>>, vector<1x128xf32>
    %cst_87 = arith.constant 9.99999974E-6 : f32
    %121 = vector.broadcast %cst_87 : f32 to vector<1x128xf32>
    %122 = arith.addf %119, %121 : vector<1x128xf32>
    %123 = math.rsqrt %122 : vector<1x128xf32>
    %124 = arith.mulf %120, %123 : vector<1x128xf32>
    %c0_88 = arith.constant 0 : index
    %c0_89 = arith.constant 0 : index
    %125 = vector.load %arg5[%c0_88, %c0_89] : memref<1x128xf32, #tpu.memory_space<vmem>>, vector<1x128xf32>
    %126 = arith.mulf %113, %124 : vector<1x128xf32>
    %127 = arith.subf %125, %126 : vector<1x128xf32>
    %128 = vector.extract_strided_slice %124 {offsets = [0, 0], sizes = [1, 10], strides = [1, 1]} : vector<1x128xf32> to vector<1x10xf32>
    %129 = vector.extract_strided_slice %127 {offsets = [0, 0], sizes = [1, 10], strides = [1, 1]} : vector<1x128xf32> to vector<1x10xf32>
    %cst_90 = arith.constant 0.000000e+00 : bf16
    %130 = vector.broadcast %cst_90 : bf16 to vector<2x2x12x256xbf16>
    %c0_91 = arith.constant 0 : index
    %c0_92 = arith.constant 0 : index
    %c0_93 = arith.constant 0 : index
    %c0_94 = arith.constant 0 : index
    %131 = vector.load %arg16[%c0_91, %c0_92, %c0_93, %c0_94] : memref<2x2x12x256xbf16, #tpu.memory_space<vmem>>, vector<2x2x12x256xbf16>
    tpu.vector_store %arg16[%c0_91, %c0_92, %c0_93, %c0_94], %130 {strides = array<i32>} : memref<2x2x12x256xbf16, #tpu.memory_space<vmem>>, vector<2x2x12x256xbf16>,
    %c0_95 = arith.constant 0 : index
    %c0_96 = arith.constant 0 : index
    %132 = vector.load %arg15[%c0_95, %c0_96] : memref<288x128xf32, #tpu.memory_space<vmem>>, vector<12x10xf32>
    %133 = vector.broadcast %128 : vector<1x10xf32> to vector<12x10xf32>
    %134 = arith.mulf %132, %133 : vector<12x10xf32>
    %135 = vector.broadcast %129 : vector<1x10xf32> to vector<12x10xf32>
    %136 = arith.addf %134, %135 : vector<12x10xf32>
    %137 = arith.truncf %136 : vector<12x10xf32> to vector<12x10xbf16>
    %c0_97 = arith.constant 0 : index
    %c0_98 = arith.constant 0 : index
    %c0_99 = arith.constant 0 : index
    %c0_100 = arith.constant 0 : index
    %138 = vector.load %arg16[%c0_97, %c0_98, %c0_99, %c0_100] : memref<2x2x12x256xbf16, #tpu.memory_space<vmem>>, vector<1x1x12x10xbf16>
    %139 = vector.shape_cast %138 : vector<1x1x12x10xbf16> to vector<12x10xbf16>
    %140 = vector.shape_cast %137 : vector<12x10xbf16> to vector<1x1x12x10xbf16>
    tpu.vector_store %arg16[%c0_97, %c0_98, %c0_99, %c0_100], %140 {strides = array<i32>} : memref<2x2x12x256xbf16, #tpu.memory_space<vmem>>, vector<1x1x12x10xbf16>,
    %c12 = arith.constant 12 : index
    %c0_101 = arith.constant 0 : index
    %141 = vector.load %arg15[%c12, %c0_101] : memref<288x128xf32, #tpu.memory_space<vmem>>, vector<12x10xf32>
    %142 = vector.broadcast %128 : vector<1x10xf32> to vector<12x10xf32>
    %143 = arith.mulf %141, %142 : vector<12x10xf32>
    %144 = vector.broadcast %129 : vector<1x10xf32> to vector<12x10xf32>
    %145 = arith.addf %143, %144 : vector<12x10xf32>
    %146 = arith.truncf %145 : vector<12x10xf32> to vector<12x10xbf16>
    %c0_102 = arith.constant 0 : index
    %c0_103 = arith.constant 0 : index
    %c0_104 = arith.constant 0 : index
    %c64 = arith.constant 64 : index
    %147 = vector.load %arg16[%c0_102, %c0_103, %c0_104, %c64] : memref<2x2x12x256xbf16, #tpu.memory_space<vmem>>, vector<1x1x12x10xbf16>
    %148 = vector.shape_cast %147 : vector<1x1x12x10xbf16> to vector<12x10xbf16>
    %149 = vector.shape_cast %146 : vector<12x10xbf16> to vector<1x1x12x10xbf16>
    tpu.vector_store %arg16[%c0_102, %c0_103, %c0_104, %c64], %149 {strides = array<i32>} : memref<2x2x12x256xbf16, #tpu.memory_space<vmem>>, vector<1x1x12x10xbf16>,
    %c24 = arith.constant 24 : index
    %c0_105 = arith.constant 0 : index
    %150 = vector.load %arg15[%c24, %c0_105] : memref<288x128xf32, #tpu.memory_space<vmem>>, vector<12x10xf32>
    %151 = vector.broadcast %128 : vector<1x10xf32> to vector<12x10xf32>
    %152 = arith.mulf %150, %151 : vector<12x10xf32>
    %153 = vector.broadcast %129 : vector<1x10xf32> to vector<12x10xf32>
    %154 = arith.addf %152, %153 : vector<12x10xf32>
    %155 = arith.truncf %154 : vector<12x10xf32> to vector<12x10xbf16>
    %c0_106 = arith.constant 0 : index
    %c0_107 = arith.constant 0 : index
    %c0_108 = arith.constant 0 : index
    %c128 = arith.constant 128 : index
    %156 = vector.load %arg16[%c0_106, %c0_107, %c0_108, %c128] : memref<2x2x12x256xbf16, #tpu.memory_space<vmem>>, vector<1x1x12x10xbf16>
    %157 = vector.shape_cast %156 : vector<1x1x12x10xbf16> to vector<12x10xbf16>
    %158 = vector.shape_cast %155 : vector<12x10xbf16> to vector<1x1x12x10xbf16>
    tpu.vector_store %arg16[%c0_106, %c0_107, %c0_108, %c128], %158 {strides = array<i32>} : memref<2x2x12x256xbf16, #tpu.memory_space<vmem>>, vector<1x1x12x10xbf16>,
    %c36 = arith.constant 36 : index
    %c0_109 = arith.constant 0 : index
    %159 = vector.load %arg15[%c36, %c0_109] : memref<288x128xf32, #tpu.memory_space<vmem>>, vector<12x10xf32>
    %160 = vector.broadcast %128 : vector<1x10xf32> to vector<12x10xf32>
    %161 = arith.mulf %159, %160 : vector<12x10xf32>
    %162 = vector.broadcast %129 : vector<1x10xf32> to vector<12x10xf32>
    %163 = arith.addf %161, %162 : vector<12x10xf32>
    %164 = arith.truncf %163 : vector<12x10xf32> to vector<12x10xbf16>
    %c0_110 = arith.constant 0 : index
    %c0_111 = arith.constant 0 : index
    %c0_112 = arith.constant 0 : index
    %c192 = arith.constant 192 : index
    %165 = vector.load %arg16[%c0_110, %c0_111, %c0_112, %c192] : memref<2x2x12x256xbf16, #tpu.memory_space<vmem>>, vector<1x1x12x10xbf16>
    %166 = vector.shape_cast %165 : vector<1x1x12x10xbf16> to vector<12x10xbf16>
    %167 = vector.shape_cast %164 : vector<12x10xbf16> to vector<1x1x12x10xbf16>
    tpu.vector_store %arg16[%c0_110, %c0_111, %c0_112, %c192], %167 {strides = array<i32>} : memref<2x2x12x256xbf16, #tpu.memory_space<vmem>>, vector<1x1x12x10xbf16>,
    %c72_113 = arith.constant 72 : index
    %c0_114 = arith.constant 0 : index
    %168 = vector.load %arg15[%c72_113, %c0_114] : memref<288x128xf32, #tpu.memory_space<vmem>>, vector<12x10xf32>
    %169 = vector.broadcast %128 : vector<1x10xf32> to vector<12x10xf32>
    %170 = arith.mulf %168, %169 : vector<12x10xf32>
    %171 = vector.broadcast %129 : vector<1x10xf32> to vector<12x10xf32>
    %172 = arith.addf %170, %171 : vector<12x10xf32>
    %173 = arith.truncf %172 : vector<12x10xf32> to vector<12x10xbf16>
    %c0_115 = arith.constant 0 : index
    %c0_116 = arith.constant 0 : index
    %c0_117 = arith.constant 0 : index
    %c10 = arith.constant 10 : index
    %174 = vector.load %arg16[%c0_115, %c0_116, %c0_117, %c10] : memref<2x2x12x256xbf16, #tpu.memory_space<vmem>>, vector<1x1x12x10xbf16>
    %175 = vector.shape_cast %174 : vector<1x1x12x10xbf16> to vector<12x10xbf16>
    %176 = vector.shape_cast %173 : vector<12x10xbf16> to vector<1x1x12x10xbf16>
    tpu.vector_store %arg16[%c0_115, %c0_116, %c0_117, %c10], %176 {strides = array<i32>} : memref<2x2x12x256xbf16, #tpu.memory_space<vmem>>, vector<1x1x12x10xbf16>,
    %c84 = arith.constant 84 : index
    %c0_118 = arith.constant 0 : index
    %177 = vector.load %arg15[%c84, %c0_118] : memref<288x128xf32, #tpu.memory_space<vmem>>, vector<12x10xf32>
    %178 = vector.broadcast %128 : vector<1x10xf32> to vector<12x10xf32>
    %179 = arith.mulf %177, %178 : vector<12x10xf32>
    %180 = vector.broadcast %129 : vector<1x10xf32> to vector<12x10xf32>
    %181 = arith.addf %179, %180 : vector<12x10xf32>
    %182 = arith.truncf %181 : vector<12x10xf32> to vector<12x10xbf16>
    %c0_119 = arith.constant 0 : index
    %c0_120 = arith.constant 0 : index
    %c0_121 = arith.constant 0 : index
    %c74 = arith.constant 74 : index
    %183 = vector.load %arg16[%c0_119, %c0_120, %c0_121, %c74] : memref<2x2x12x256xbf16, #tpu.memory_space<vmem>>, vector<1x1x12x10xbf16>
    %184 = vector.shape_cast %183 : vector<1x1x12x10xbf16> to vector<12x10xbf16>
    %185 = vector.shape_cast %182 : vector<12x10xbf16> to vector<1x1x12x10xbf16>
    tpu.vector_store %arg16[%c0_119, %c0_120, %c0_121, %c74], %185 {strides = array<i32>} : memref<2x2x12x256xbf16, #tpu.memory_space<vmem>>, vector<1x1x12x10xbf16>,
    %c96 = arith.constant 96 : index
    %c0_122 = arith.constant 0 : index
    %186 = vector.load %arg15[%c96, %c0_122] : memref<288x128xf32, #tpu.memory_space<vmem>>, vector<12x10xf32>
    %187 = vector.broadcast %128 : vector<1x10xf32> to vector<12x10xf32>
    %188 = arith.mulf %186, %187 : vector<12x10xf32>
    %189 = vector.broadcast %129 : vector<1x10xf32> to vector<12x10xf32>
    %190 = arith.addf %188, %189 : vector<12x10xf32>
    %191 = arith.truncf %190 : vector<12x10xf32> to vector<12x10xbf16>
    %c0_123 = arith.constant 0 : index
    %c0_124 = arith.constant 0 : index
    %c0_125 = arith.constant 0 : index
    %c138 = arith.constant 138 : index
    %192 = vector.load %arg16[%c0_123, %c0_124, %c0_125, %c138] : memref<2x2x12x256xbf16, #tpu.memory_space<vmem>>, vector<1x1x12x10xbf16>
    %193 = vector.shape_cast %192 : vector<1x1x12x10xbf16> to vector<12x10xbf16>
    %194 = vector.shape_cast %191 : vector<12x10xbf16> to vector<1x1x12x10xbf16>
    tpu.vector_store %arg16[%c0_123, %c0_124, %c0_125, %c138], %194 {strides = array<i32>} : memref<2x2x12x256xbf16, #tpu.memory_space<vmem>>, vector<1x1x12x10xbf16>,
    %c108 = arith.constant 108 : index
    %c0_126 = arith.constant 0 : index
    %195 = vector.load %arg15[%c108, %c0_126] : memref<288x128xf32, #tpu.memory_space<vmem>>, vector<12x10xf32>
    %196 = vector.broadcast %128 : vector<1x10xf32> to vector<12x10xf32>
    %197 = arith.mulf %195, %196 : vector<12x10xf32>
    %198 = vector.broadcast %129 : vector<1x10xf32> to vector<12x10xf32>
    %199 = arith.addf %197, %198 : vector<12x10xf32>
    %200 = arith.truncf %199 : vector<12x10xf32> to vector<12x10xbf16>
    %c0_127 = arith.constant 0 : index
    %c0_128 = arith.constant 0 : index
    %c0_129 = arith.constant 0 : index
    %c202 = arith.constant 202 : index
    %201 = vector.load %arg16[%c0_127, %c0_128, %c0_129, %c202] : memref<2x2x12x256xbf16, #tpu.memory_space<vmem>>, vector<1x1x12x10xbf16>
    %202 = vector.shape_cast %201 : vector<1x1x12x10xbf16> to vector<12x10xbf16>
    %203 = vector.shape_cast %200 : vector<12x10xbf16> to vector<1x1x12x10xbf16>
    tpu.vector_store %arg16[%c0_127, %c0_128, %c0_129, %c202], %203 {strides = array<i32>} : memref<2x2x12x256xbf16, #tpu.memory_space<vmem>>, vector<1x1x12x10xbf16>,
    %c12_130 = arith.constant 12 : index
    %c0_131 = arith.constant 0 : index
    %204 = vector.load %arg15[%c12_130, %c0_131] : memref<288x128xf32, #tpu.memory_space<vmem>>, vector<12x10xf32>
    %205 = vector.broadcast %128 : vector<1x10xf32> to vector<12x10xf32>
    %206 = arith.mulf %204, %205 : vector<12x10xf32>
    %207 = vector.broadcast %129 : vector<1x10xf32> to vector<12x10xf32>
    %208 = arith.addf %206, %207 : vector<12x10xf32>
    %209 = arith.truncf %208 : vector<12x10xf32> to vector<12x10xbf16>
    %c0_132 = arith.constant 0 : index
    %c0_133 = arith.constant 0 : index
    %c0_134 = arith.constant 0 : index
    %c20 = arith.constant 20 : index
    %210 = vector.load %arg16[%c0_132, %c0_133, %c0_134, %c20] : memref<2x2x12x256xbf16, #tpu.memory_space<vmem>>, vector<1x1x12x10xbf16>
    %211 = vector.shape_cast %210 : vector<1x1x12x10xbf16> to vector<12x10xbf16>
    %212 = vector.shape_cast %209 : vector<12x10xbf16> to vector<1x1x12x10xbf16>
    tpu.vector_store %arg16[%c0_132, %c0_133, %c0_134, %c20], %212 {strides = array<i32>} : memref<2x2x12x256xbf16, #tpu.memory_space<vmem>>, vector<1x1x12x10xbf16>,
    %c24_135 = arith.constant 24 : index
    %c0_136 = arith.constant 0 : index
    %213 = vector.load %arg15[%c24_135, %c0_136] : memref<288x128xf32, #tpu.memory_space<vmem>>, vector<12x10xf32>
    %214 = vector.broadcast %128 : vector<1x10xf32> to vector<12x10xf32>
    %215 = arith.mulf %213, %214 : vector<12x10xf32>
    %216 = vector.broadcast %129 : vector<1x10xf32> to vector<12x10xf32>
    %217 = arith.addf %215, %216 : vector<12x10xf32>
    %218 = arith.truncf %217 : vector<12x10xf32> to vector<12x10xbf16>
    %c0_137 = arith.constant 0 : index
    %c0_138 = arith.constant 0 : index
    %c0_139 = arith.constant 0 : index
    %c84_140 = arith.constant 84 : index
    %219 = vector.load %arg16[%c0_137, %c0_138, %c0_139, %c84_140] : memref<2x2x12x256xbf16, #tpu.memory_space<vmem>>, vector<1x1x12x10xbf16>
    %220 = vector.shape_cast %219 : vector<1x1x12x10xbf16> to vector<12x10xbf16>
    %221 = vector.shape_cast %218 : vector<12x10xbf16> to vector<1x1x12x10xbf16>
    tpu.vector_store %arg16[%c0_137, %c0_138, %c0_139, %c84_140], %221 {strides = array<i32>} : memref<2x2x12x256xbf16, #tpu.memory_space<vmem>>, vector<1x1x12x10xbf16>,
    %c36_141 = arith.constant 36 : index
    %c0_142 = arith.constant 0 : index
    %222 = vector.load %arg15[%c36_141, %c0_142] : memref<288x128xf32, #tpu.memory_space<vmem>>, vector<12x10xf32>
    %223 = vector.broadcast %128 : vector<1x10xf32> to vector<12x10xf32>
    %224 = arith.mulf %222, %223 : vector<12x10xf32>
    %225 = vector.broadcast %129 : vector<1x10xf32> to vector<12x10xf32>
    %226 = arith.addf %224, %225 : vector<12x10xf32>
    %227 = arith.truncf %226 : vector<12x10xf32> to vector<12x10xbf16>
    %c0_143 = arith.constant 0 : index
    %c0_144 = arith.constant 0 : index
    %c0_145 = arith.constant 0 : index
    %c148 = arith.constant 148 : index
    %228 = vector.load %arg16[%c0_143, %c0_144, %c0_145, %c148] : memref<2x2x12x256xbf16, #tpu.memory_space<vmem>>, vector<1x1x12x10xbf16>
    %229 = vector.shape_cast %228 : vector<1x1x12x10xbf16> to vector<12x10xbf16>
    %230 = vector.shape_cast %227 : vector<12x10xbf16> to vector<1x1x12x10xbf16>
    tpu.vector_store %arg16[%c0_143, %c0_144, %c0_145, %c148], %230 {strides = array<i32>} : memref<2x2x12x256xbf16, #tpu.memory_space<vmem>>, vector<1x1x12x10xbf16>,
    %c48 = arith.constant 48 : index
    %c0_146 = arith.constant 0 : index
    %231 = vector.load %arg15[%c48, %c0_146] : memref<288x128xf32, #tpu.memory_space<vmem>>, vector<12x10xf32>
    %232 = vector.broadcast %128 : vector<1x10xf32> to vector<12x10xf32>
    %233 = arith.mulf %231, %232 : vector<12x10xf32>
    %234 = vector.broadcast %129 : vector<1x10xf32> to vector<12x10xf32>
    %235 = arith.addf %233, %234 : vector<12x10xf32>
    %236 = arith.truncf %235 : vector<12x10xf32> to vector<12x10xbf16>
    %c0_147 = arith.constant 0 : index
    %c0_148 = arith.constant 0 : index
    %c0_149 = arith.constant 0 : index
    %c212 = arith.constant 212 : index
    %237 = vector.load %arg16[%c0_147, %c0_148, %c0_149, %c212] : memref<2x2x12x256xbf16, #tpu.memory_space<vmem>>, vector<1x1x12x10xbf16>
    %238 = vector.shape_cast %237 : vector<1x1x12x10xbf16> to vector<12x10xbf16>
    %239 = vector.shape_cast %236 : vector<12x10xbf16> to vector<1x1x12x10xbf16>
    tpu.vector_store %arg16[%c0_147, %c0_148, %c0_149, %c212], %239 {strides = array<i32>} : memref<2x2x12x256xbf16, #tpu.memory_space<vmem>>, vector<1x1x12x10xbf16>,
    %c84_150 = arith.constant 84 : index
    %c0_151 = arith.constant 0 : index
    %240 = vector.load %arg15[%c84_150, %c0_151] : memref<288x128xf32, #tpu.memory_space<vmem>>, vector<12x10xf32>
    %241 = vector.broadcast %128 : vector<1x10xf32> to vector<12x10xf32>
    %242 = arith.mulf %240, %241 : vector<12x10xf32>
    %243 = vector.broadcast %129 : vector<1x10xf32> to vector<12x10xf32>
    %244 = arith.addf %242, %243 : vector<12x10xf32>
    %245 = arith.truncf %244 : vector<12x10xf32> to vector<12x10xbf16>
    %c0_152 = arith.constant 0 : index
    %c0_153 = arith.constant 0 : index
    %c0_154 = arith.constant 0 : index
    %c30 = arith.constant 30 : index
    %246 = vector.load %arg16[%c0_152, %c0_153, %c0_154, %c30] : memref<2x2x12x256xbf16, #tpu.memory_space<vmem>>, vector<1x1x12x10xbf16>
    %247 = vector.shape_cast %246 : vector<1x1x12x10xbf16> to vector<12x10xbf16>
    %248 = vector.shape_cast %245 : vector<12x10xbf16> to vector<1x1x12x10xbf16>
    tpu.vector_store %arg16[%c0_152, %c0_153, %c0_154, %c30], %248 {strides = array<i32>} : memref<2x2x12x256xbf16, #tpu.memory_space<vmem>>, vector<1x1x12x10xbf16>,
    %c96_155 = arith.constant 96 : index
    %c0_156 = arith.constant 0 : index
    %249 = vector.load %arg15[%c96_155, %c0_156] : memref<288x128xf32, #tpu.memory_space<vmem>>, vector<12x10xf32>
    %250 = vector.broadcast %128 : vector<1x10xf32> to vector<12x10xf32>
    %251 = arith.mulf %249, %250 : vector<12x10xf32>
    %252 = vector.broadcast %129 : vector<1x10xf32> to vector<12x10xf32>
    %253 = arith.addf %251, %252 : vector<12x10xf32>
    %254 = arith.truncf %253 : vector<12x10xf32> to vector<12x10xbf16>
    %c0_157 = arith.constant 0 : index
    %c0_158 = arith.constant 0 : index
    %c0_159 = arith.constant 0 : index
    %c94 = arith.constant 94 : index
    %255 = vector.load %arg16[%c0_157, %c0_158, %c0_159, %c94] : memref<2x2x12x256xbf16, #tpu.memory_space<vmem>>, vector<1x1x12x10xbf16>
    %256 = vector.shape_cast %255 : vector<1x1x12x10xbf16> to vector<12x10xbf16>
    %257 = vector.shape_cast %254 : vector<12x10xbf16> to vector<1x1x12x10xbf16>
    tpu.vector_store %arg16[%c0_157, %c0_158, %c0_159, %c94], %257 {strides = array<i32>} : memref<2x2x12x256xbf16, #tpu.memory_space<vmem>>, vector<1x1x12x10xbf16>,
    %c108_160 = arith.constant 108 : index
    %c0_161 = arith.constant 0 : index
    %258 = vector.load %arg15[%c108_160, %c0_161] : memref<288x128xf32, #tpu.memory_space<vmem>>, vector<12x10xf32>
    %259 = vector.broadcast %128 : vector<1x10xf32> to vector<12x10xf32>
    %260 = arith.mulf %258, %259 : vector<12x10xf32>
    %261 = vector.broadcast %129 : vector<1x10xf32> to vector<12x10xf32>
    %262 = arith.addf %260, %261 : vector<12x10xf32>
    %263 = arith.truncf %262 : vector<12x10xf32> to vector<12x10xbf16>
    %c0_162 = arith.constant 0 : index
    %c0_163 = arith.constant 0 : index
    %c0_164 = arith.constant 0 : index
    %c158 = arith.constant 158 : index
    %264 = vector.load %arg16[%c0_162, %c0_163, %c0_164, %c158] : memref<2x2x12x256xbf16, #tpu.memory_space<vmem>>, vector<1x1x12x10xbf16>
    %265 = vector.shape_cast %264 : vector<1x1x12x10xbf16> to vector<12x10xbf16>
    %266 = vector.shape_cast %263 : vector<12x10xbf16> to vector<1x1x12x10xbf16>
    tpu.vector_store %arg16[%c0_162, %c0_163, %c0_164, %c158], %266 {strides = array<i32>} : memref<2x2x12x256xbf16, #tpu.memory_space<vmem>>, vector<1x1x12x10xbf16>,
    %c120 = arith.constant 120 : index
    %c0_165 = arith.constant 0 : index
    %267 = vector.load %arg15[%c120, %c0_165] : memref<288x128xf32, #tpu.memory_space<vmem>>, vector<12x10xf32>
    %268 = vector.broadcast %128 : vector<1x10xf32> to vector<12x10xf32>
    %269 = arith.mulf %267, %268 : vector<12x10xf32>
    %270 = vector.broadcast %129 : vector<1x10xf32> to vector<12x10xf32>
    %271 = arith.addf %269, %270 : vector<12x10xf32>
    %272 = arith.truncf %271 : vector<12x10xf32> to vector<12x10xbf16>
    %c0_166 = arith.constant 0 : index
    %c0_167 = arith.constant 0 : index
    %c0_168 = arith.constant 0 : index
    %c222 = arith.constant 222 : index
    %273 = vector.load %arg16[%c0_166, %c0_167, %c0_168, %c222] : memref<2x2x12x256xbf16, #tpu.memory_space<vmem>>, vector<1x1x12x10xbf16>
    %274 = vector.shape_cast %273 : vector<1x1x12x10xbf16> to vector<12x10xbf16>
    %275 = vector.shape_cast %272 : vector<12x10xbf16> to vector<1x1x12x10xbf16>
    tpu.vector_store %arg16[%c0_166, %c0_167, %c0_168, %c222], %275 {strides = array<i32>} : memref<2x2x12x256xbf16, #tpu.memory_space<vmem>>, vector<1x1x12x10xbf16>,
    %c24_169 = arith.constant 24 : index
    %c0_170 = arith.constant 0 : index
    %276 = vector.load %arg15[%c24_169, %c0_170] : memref<288x128xf32, #tpu.memory_space<vmem>>, vector<12x10xf32>
    %277 = vector.broadcast %128 : vector<1x10xf32> to vector<12x10xf32>
    %278 = arith.mulf %276, %277 : vector<12x10xf32>
    %279 = vector.broadcast %129 : vector<1x10xf32> to vector<12x10xf32>
    %280 = arith.addf %278, %279 : vector<12x10xf32>
    %281 = arith.truncf %280 : vector<12x10xf32> to vector<12x10xbf16>
    %c0_171 = arith.constant 0 : index
    %c0_172 = arith.constant 0 : index
    %c0_173 = arith.constant 0 : index
    %c40 = arith.constant 40 : index
    %282 = vector.load %arg16[%c0_171, %c0_172, %c0_173, %c40] : memref<2x2x12x256xbf16, #tpu.memory_space<vmem>>, vector<1x1x12x10xbf16>
    %283 = vector.shape_cast %282 : vector<1x1x12x10xbf16> to vector<12x10xbf16>
    %284 = vector.shape_cast %281 : vector<12x10xbf16> to vector<1x1x12x10xbf16>
    tpu.vector_store %arg16[%c0_171, %c0_172, %c0_173, %c40], %284 {strides = array<i32>} : memref<2x2x12x256xbf16, #tpu.memory_space<vmem>>, vector<1x1x12x10xbf16>,
    %c36_174 = arith.constant 36 : index
    %c0_175 = arith.constant 0 : index
    %285 = vector.load %arg15[%c36_174, %c0_175] : memref<288x128xf32, #tpu.memory_space<vmem>>, vector<12x10xf32>
    %286 = vector.broadcast %128 : vector<1x10xf32> to vector<12x10xf32>
    %287 = arith.mulf %285, %286 : vector<12x10xf32>
    %288 = vector.broadcast %129 : vector<1x10xf32> to vector<12x10xf32>
    %289 = arith.addf %287, %288 : vector<12x10xf32>
    %290 = arith.truncf %289 : vector<12x10xf32> to vector<12x10xbf16>
    %c0_176 = arith.constant 0 : index
    %c0_177 = arith.constant 0 : index
    %c0_178 = arith.constant 0 : index
    %c104 = arith.constant 104 : index
    %291 = vector.load %arg16[%c0_176, %c0_177, %c0_178, %c104] : memref<2x2x12x256xbf16, #tpu.memory_space<vmem>>, vector<1x1x12x10xbf16>
    %292 = vector.shape_cast %291 : vector<1x1x12x10xbf16> to vector<12x10xbf16>
    %293 = vector.shape_cast %290 : vector<12x10xbf16> to vector<1x1x12x10xbf16>
    tpu.vector_store %arg16[%c0_176, %c0_177, %c0_178, %c104], %293 {strides = array<i32>} : memref<2x2x12x256xbf16, #tpu.memory_space<vmem>>, vector<1x1x12x10xbf16>,
    %c48_179 = arith.constant 48 : index
    %c0_180 = arith.constant 0 : index
    %294 = vector.load %arg15[%c48_179, %c0_180] : memref<288x128xf32, #tpu.memory_space<vmem>>, vector<12x10xf32>
    %295 = vector.broadcast %128 : vector<1x10xf32> to vector<12x10xf32>
    %296 = arith.mulf %294, %295 : vector<12x10xf32>
    %297 = vector.broadcast %129 : vector<1x10xf32> to vector<12x10xf32>
    %298 = arith.addf %296, %297 : vector<12x10xf32>
    %299 = arith.truncf %298 : vector<12x10xf32> to vector<12x10xbf16>
    %c0_181 = arith.constant 0 : index
    %c0_182 = arith.constant 0 : index
    %c0_183 = arith.constant 0 : index
    %c168 = arith.constant 168 : index
    %300 = vector.load %arg16[%c0_181, %c0_182, %c0_183, %c168] : memref<2x2x12x256xbf16, #tpu.memory_space<vmem>>, vector<1x1x12x10xbf16>
    %301 = vector.shape_cast %300 : vector<1x1x12x10xbf16> to vector<12x10xbf16>
    %302 = vector.shape_cast %299 : vector<12x10xbf16> to vector<1x1x12x10xbf16>
    tpu.vector_store %arg16[%c0_181, %c0_182, %c0_183, %c168], %302 {strides = array<i32>} : memref<2x2x12x256xbf16, #tpu.memory_space<vmem>>, vector<1x1x12x10xbf16>,
    %c60 = arith.constant 60 : index
    %c0_184 = arith.constant 0 : index
    %303 = vector.load %arg15[%c60, %c0_184] : memref<288x128xf32, #tpu.memory_space<vmem>>, vector<12x10xf32>
    %304 = vector.broadcast %128 : vector<1x10xf32> to vector<12x10xf32>
    %305 = arith.mulf %303, %304 : vector<12x10xf32>
    %306 = vector.broadcast %129 : vector<1x10xf32> to vector<12x10xf32>
    %307 = arith.addf %305, %306 : vector<12x10xf32>
    %308 = arith.truncf %307 : vector<12x10xf32> to vector<12x10xbf16>
    %c0_185 = arith.constant 0 : index
    %c0_186 = arith.constant 0 : index
    %c0_187 = arith.constant 0 : index
    %c232 = arith.constant 232 : index
    %309 = vector.load %arg16[%c0_185, %c0_186, %c0_187, %c232] : memref<2x2x12x256xbf16, #tpu.memory_space<vmem>>, vector<1x1x12x10xbf16>
    %310 = vector.shape_cast %309 : vector<1x1x12x10xbf16> to vector<12x10xbf16>
    %311 = vector.shape_cast %308 : vector<12x10xbf16> to vector<1x1x12x10xbf16>
    tpu.vector_store %arg16[%c0_185, %c0_186, %c0_187, %c232], %311 {strides = array<i32>} : memref<2x2x12x256xbf16, #tpu.memory_space<vmem>>, vector<1x1x12x10xbf16>,
    %c72_188 = arith.constant 72 : index
    %c0_189 = arith.constant 0 : index
    %312 = vector.load %arg15[%c72_188, %c0_189] : memref<288x128xf32, #tpu.memory_space<vmem>>, vector<12x10xf32>
    %313 = vector.broadcast %128 : vector<1x10xf32> to vector<12x10xf32>
    %314 = arith.mulf %312, %313 : vector<12x10xf32>
    %315 = vector.broadcast %129 : vector<1x10xf32> to vector<12x10xf32>
    %316 = arith.addf %314, %315 : vector<12x10xf32>
    %317 = arith.truncf %316 : vector<12x10xf32> to vector<12x10xbf16>
    %c0_190 = arith.constant 0 : index
    %c1_191 = arith.constant 1 : index
    %c0_192 = arith.constant 0 : index
    %c0_193 = arith.constant 0 : index
    %318 = vector.load %arg16[%c0_190, %c1_191, %c0_192, %c0_193] : memref<2x2x12x256xbf16, #tpu.memory_space<vmem>>, vector<1x1x12x10xbf16>
    %319 = vector.shape_cast %318 : vector<1x1x12x10xbf16> to vector<12x10xbf16>
    %320 = vector.shape_cast %317 : vector<12x10xbf16> to vector<1x1x12x10xbf16>
    tpu.vector_store %arg16[%c0_190, %c1_191, %c0_192, %c0_193], %320 {strides = array<i32>} : memref<2x2x12x256xbf16, #tpu.memory_space<vmem>>, vector<1x1x12x10xbf16>,
    %c84_194 = arith.constant 84 : index
    %c0_195 = arith.constant 0 : index
    %321 = vector.load %arg15[%c84_194, %c0_195] : memref<288x128xf32, #tpu.memory_space<vmem>>, vector<12x10xf32>
    %322 = vector.broadcast %128 : vector<1x10xf32> to vector<12x10xf32>
    %323 = arith.mulf %321, %322 : vector<12x10xf32>
    %324 = vector.broadcast %129 : vector<1x10xf32> to vector<12x10xf32>
    %325 = arith.addf %323, %324 : vector<12x10xf32>
    %326 = arith.truncf %325 : vector<12x10xf32> to vector<12x10xbf16>
    %c0_196 = arith.constant 0 : index
    %c1_197 = arith.constant 1 : index
    %c0_198 = arith.constant 0 : index
    %c64_199 = arith.constant 64 : index
    %327 = vector.load %arg16[%c0_196, %c1_197, %c0_198, %c64_199] : memref<2x2x12x256xbf16, #tpu.memory_space<vmem>>, vector<1x1x12x10xbf16>
    %328 = vector.shape_cast %327 : vector<1x1x12x10xbf16> to vector<12x10xbf16>
    %329 = vector.shape_cast %326 : vector<12x10xbf16> to vector<1x1x12x10xbf16>
    tpu.vector_store %arg16[%c0_196, %c1_197, %c0_198, %c64_199], %329 {strides = array<i32>} : memref<2x2x12x256xbf16, #tpu.memory_space<vmem>>, vector<1x1x12x10xbf16>,
    %c96_200 = arith.constant 96 : index
    %c0_201 = arith.constant 0 : index
    %330 = vector.load %arg15[%c96_200, %c0_201] : memref<288x128xf32, #tpu.memory_space<vmem>>, vector<12x10xf32>
    %331 = vector.broadcast %128 : vector<1x10xf32> to vector<12x10xf32>
    %332 = arith.mulf %330, %331 : vector<12x10xf32>
    %333 = vector.broadcast %129 : vector<1x10xf32> to vector<12x10xf32>
    %334 = arith.addf %332, %333 : vector<12x10xf32>
    %335 = arith.truncf %334 : vector<12x10xf32> to vector<12x10xbf16>
    %c0_202 = arith.constant 0 : index
    %c1_203 = arith.constant 1 : index
    %c0_204 = arith.constant 0 : index
    %c128_205 = arith.constant 128 : index
    %336 = vector.load %arg16[%c0_202, %c1_203, %c0_204, %c128_205] : memref<2x2x12x256xbf16, #tpu.memory_space<vmem>>, vector<1x1x12x10xbf16>
    %337 = vector.shape_cast %336 : vector<1x1x12x10xbf16> to vector<12x10xbf16>
    %338 = vector.shape_cast %335 : vector<12x10xbf16> to vector<1x1x12x10xbf16>
    tpu.vector_store %arg16[%c0_202, %c1_203, %c0_204, %c128_205], %338 {strides = array<i32>} : memref<2x2x12x256xbf16, #tpu.memory_space<vmem>>, vector<1x1x12x10xbf16>,
    %c108_206 = arith.constant 108 : index
    %c0_207 = arith.constant 0 : index
    %339 = vector.load %arg15[%c108_206, %c0_207] : memref<288x128xf32, #tpu.memory_space<vmem>>, vector<12x10xf32>
    %340 = vector.broadcast %128 : vector<1x10xf32> to vector<12x10xf32>
    %341 = arith.mulf %339, %340 : vector<12x10xf32>
    %342 = vector.broadcast %129 : vector<1x10xf32> to vector<12x10xf32>
    %343 = arith.addf %341, %342 : vector<12x10xf32>
    %344 = arith.truncf %343 : vector<12x10xf32> to vector<12x10xbf16>
    %c0_208 = arith.constant 0 : index
    %c1_209 = arith.constant 1 : index
    %c0_210 = arith.constant 0 : index
    %c192_211 = arith.constant 192 : index
    %345 = vector.load %arg16[%c0_208, %c1_209, %c0_210, %c192_211] : memref<2x2x12x256xbf16, #tpu.memory_space<vmem>>, vector<1x1x12x10xbf16>
    %346 = vector.shape_cast %345 : vector<1x1x12x10xbf16> to vector<12x10xbf16>
    %347 = vector.shape_cast %344 : vector<12x10xbf16> to vector<1x1x12x10xbf16>
    tpu.vector_store %arg16[%c0_208, %c1_209, %c0_210, %c192_211], %347 {strides = array<i32>} : memref<2x2x12x256xbf16, #tpu.memory_space<vmem>>, vector<1x1x12x10xbf16>,
    %c12_212 = arith.constant 12 : index
    %c0_213 = arith.constant 0 : index
    %348 = vector.load %arg15[%c12_212, %c0_213] : memref<288x128xf32, #tpu.memory_space<vmem>>, vector<12x10xf32>
    %349 = vector.broadcast %128 : vector<1x10xf32> to vector<12x10xf32>
    %350 = arith.mulf %348, %349 : vector<12x10xf32>
    %351 = vector.broadcast %129 : vector<1x10xf32> to vector<12x10xf32>
    %352 = arith.addf %350, %351 : vector<12x10xf32>
    %353 = arith.truncf %352 : vector<12x10xf32> to vector<12x10xbf16>
    %c0_214 = arith.constant 0 : index
    %c1_215 = arith.constant 1 : index
    %c0_216 = arith.constant 0 : index
    %c10_217 = arith.constant 10 : index
    %354 = vector.load %arg16[%c0_214, %c1_215, %c0_216, %c10_217] : memref<2x2x12x256xbf16, #tpu.memory_space<vmem>>, vector<1x1x12x10xbf16>
    %355 = vector.shape_cast %354 : vector<1x1x12x10xbf16> to vector<12x10xbf16>
    %356 = vector.shape_cast %353 : vector<12x10xbf16> to vector<1x1x12x10xbf16>
    tpu.vector_store %arg16[%c0_214, %c1_215, %c0_216, %c10_217], %356 {strides = array<i32>} : memref<2x2x12x256xbf16, #tpu.memory_space<vmem>>, vector<1x1x12x10xbf16>,
    %c24_218 = arith.constant 24 : index
    %c0_219 = arith.constant 0 : index
    %357 = vector.load %arg15[%c24_218, %c0_219] : memref<288x128xf32, #tpu.memory_space<vmem>>, vector<12x10xf32>
    %358 = vector.broadcast %128 : vector<1x10xf32> to vector<12x10xf32>
    %359 = arith.mulf %357, %358 : vector<12x10xf32>
    %360 = vector.broadcast %129 : vector<1x10xf32> to vector<12x10xf32>
    %361 = arith.addf %359, %360 : vector<12x10xf32>
    %362 = arith.truncf %361 : vector<12x10xf32> to vector<12x10xbf16>
    %c0_220 = arith.constant 0 : index
    %c1_221 = arith.constant 1 : index
    %c0_222 = arith.constant 0 : index
    %c74_223 = arith.constant 74 : index
    %363 = vector.load %arg16[%c0_220, %c1_221, %c0_222, %c74_223] : memref<2x2x12x256xbf16, #tpu.memory_space<vmem>>, vector<1x1x12x10xbf16>
    %364 = vector.shape_cast %363 : vector<1x1x12x10xbf16> to vector<12x10xbf16>
    %365 = vector.shape_cast %362 : vector<12x10xbf16> to vector<1x1x12x10xbf16>
    tpu.vector_store %arg16[%c0_220, %c1_221, %c0_222, %c74_223], %365 {strides = array<i32>} : memref<2x2x12x256xbf16, #tpu.memory_space<vmem>>, vector<1x1x12x10xbf16>,
    %c36_224 = arith.constant 36 : index
    %c0_225 = arith.constant 0 : index
    %366 = vector.load %arg15[%c36_224, %c0_225] : memref<288x128xf32, #tpu.memory_space<vmem>>, vector<12x10xf32>
    %367 = vector.broadcast %128 : vector<1x10xf32> to vector<12x10xf32>
    %368 = arith.mulf %366, %367 : vector<12x10xf32>
    %369 = vector.broadcast %129 : vector<1x10xf32> to vector<12x10xf32>
    %370 = arith.addf %368, %369 : vector<12x10xf32>
    %371 = arith.truncf %370 : vector<12x10xf32> to vector<12x10xbf16>
    %c0_226 = arith.constant 0 : index
    %c1_227 = arith.constant 1 : index
    %c0_228 = arith.constant 0 : index
    %c138_229 = arith.constant 138 : index
    %372 = vector.load %arg16[%c0_226, %c1_227, %c0_228, %c138_229] : memref<2x2x12x256xbf16, #tpu.memory_space<vmem>>, vector<1x1x12x10xbf16>
    %373 = vector.shape_cast %372 : vector<1x1x12x10xbf16> to vector<12x10xbf16>
    %374 = vector.shape_cast %371 : vector<12x10xbf16> to vector<1x1x12x10xbf16>
    tpu.vector_store %arg16[%c0_226, %c1_227, %c0_228, %c138_229], %374 {strides = array<i32>} : memref<2x2x12x256xbf16, #tpu.memory_space<vmem>>, vector<1x1x12x10xbf16>,
    %c48_230 = arith.constant 48 : index
    %c0_231 = arith.constant 0 : index
    %375 = vector.load %arg15[%c48_230, %c0_231] : memref<288x128xf32, #tpu.memory_space<vmem>>, vector<12x10xf32>
    %376 = vector.broadcast %128 : vector<1x10xf32> to vector<12x10xf32>
    %377 = arith.mulf %375, %376 : vector<12x10xf32>
    %378 = vector.broadcast %129 : vector<1x10xf32> to vector<12x10xf32>
    %379 = arith.addf %377, %378 : vector<12x10xf32>
    %380 = arith.truncf %379 : vector<12x10xf32> to vector<12x10xbf16>
    %c0_232 = arith.constant 0 : index
    %c1_233 = arith.constant 1 : index
    %c0_234 = arith.constant 0 : index
    %c202_235 = arith.constant 202 : index
    %381 = vector.load %arg16[%c0_232, %c1_233, %c0_234, %c202_235] : memref<2x2x12x256xbf16, #tpu.memory_space<vmem>>, vector<1x1x12x10xbf16>
    %382 = vector.shape_cast %381 : vector<1x1x12x10xbf16> to vector<12x10xbf16>
    %383 = vector.shape_cast %380 : vector<12x10xbf16> to vector<1x1x12x10xbf16>
    tpu.vector_store %arg16[%c0_232, %c1_233, %c0_234, %c202_235], %383 {strides = array<i32>} : memref<2x2x12x256xbf16, #tpu.memory_space<vmem>>, vector<1x1x12x10xbf16>,
    %c84_236 = arith.constant 84 : index
    %c0_237 = arith.constant 0 : index
    %384 = vector.load %arg15[%c84_236, %c0_237] : memref<288x128xf32, #tpu.memory_space<vmem>>, vector<12x10xf32>
    %385 = vector.broadcast %128 : vector<1x10xf32> to vector<12x10xf32>
    %386 = arith.mulf %384, %385 : vector<12x10xf32>
    %387 = vector.broadcast %129 : vector<1x10xf32> to vector<12x10xf32>
    %388 = arith.addf %386, %387 : vector<12x10xf32>
    %389 = arith.truncf %388 : vector<12x10xf32> to vector<12x10xbf16>
    %c0_238 = arith.constant 0 : index
    %c1_239 = arith.constant 1 : index
    %c0_240 = arith.constant 0 : index
    %c20_241 = arith.constant 20 : index
    %390 = vector.load %arg16[%c0_238, %c1_239, %c0_240, %c20_241] : memref<2x2x12x256xbf16, #tpu.memory_space<vmem>>, vector<1x1x12x10xbf16>
    %391 = vector.shape_cast %390 : vector<1x1x12x10xbf16> to vector<12x10xbf16>
    %392 = vector.shape_cast %389 : vector<12x10xbf16> to vector<1x1x12x10xbf16>
    tpu.vector_store %arg16[%c0_238, %c1_239, %c0_240, %c20_241], %392 {strides = array<i32>} : memref<2x2x12x256xbf16, #tpu.memory_space<vmem>>, vector<1x1x12x10xbf16>,
    %c96_242 = arith.constant 96 : index
    %c0_243 = arith.constant 0 : index
    %393 = vector.load %arg15[%c96_242, %c0_243] : memref<288x128xf32, #tpu.memory_space<vmem>>, vector<12x10xf32>
    %394 = vector.broadcast %128 : vector<1x10xf32> to vector<12x10xf32>
    %395 = arith.mulf %393, %394 : vector<12x10xf32>
    %396 = vector.broadcast %129 : vector<1x10xf32> to vector<12x10xf32>
    %397 = arith.addf %395, %396 : vector<12x10xf32>
    %398 = arith.truncf %397 : vector<12x10xf32> to vector<12x10xbf16>
    %c0_244 = arith.constant 0 : index
    %c1_245 = arith.constant 1 : index
    %c0_246 = arith.constant 0 : index
    %c84_247 = arith.constant 84 : index
    %399 = vector.load %arg16[%c0_244, %c1_245, %c0_246, %c84_247] : memref<2x2x12x256xbf16, #tpu.memory_space<vmem>>, vector<1x1x12x10xbf16>
    %400 = vector.shape_cast %399 : vector<1x1x12x10xbf16> to vector<12x10xbf16>
    %401 = vector.shape_cast %398 : vector<12x10xbf16> to vector<1x1x12x10xbf16>
    tpu.vector_store %arg16[%c0_244, %c1_245, %c0_246, %c84_247], %401 {strides = array<i32>} : memref<2x2x12x256xbf16, #tpu.memory_space<vmem>>, vector<1x1x12x10xbf16>,
    %c108_248 = arith.constant 108 : index
    %c0_249 = arith.constant 0 : index
    %402 = vector.load %arg15[%c108_248, %c0_249] : memref<288x128xf32, #tpu.memory_space<vmem>>, vector<12x10xf32>
    %403 = vector.broadcast %128 : vector<1x10xf32> to vector<12x10xf32>
    %404 = arith.mulf %402, %403 : vector<12x10xf32>
    %405 = vector.broadcast %129 : vector<1x10xf32> to vector<12x10xf32>
    %406 = arith.addf %404, %405 : vector<12x10xf32>
    %407 = arith.truncf %406 : vector<12x10xf32> to vector<12x10xbf16>
    %c0_250 = arith.constant 0 : index
    %c1_251 = arith.constant 1 : index
    %c0_252 = arith.constant 0 : index
    %c148_253 = arith.constant 148 : index
    %408 = vector.load %arg16[%c0_250, %c1_251, %c0_252, %c148_253] : memref<2x2x12x256xbf16, #tpu.memory_space<vmem>>, vector<1x1x12x10xbf16>
    %409 = vector.shape_cast %408 : vector<1x1x12x10xbf16> to vector<12x10xbf16>
    %410 = vector.shape_cast %407 : vector<12x10xbf16> to vector<1x1x12x10xbf16>
    tpu.vector_store %arg16[%c0_250, %c1_251, %c0_252, %c148_253], %410 {strides = array<i32>} : memref<2x2x12x256xbf16, #tpu.memory_space<vmem>>, vector<1x1x12x10xbf16>,
    %c120_254 = arith.constant 120 : index
    %c0_255 = arith.constant 0 : index
    %411 = vector.load %arg15[%c120_254, %c0_255] : memref<288x128xf32, #tpu.memory_space<vmem>>, vector<12x10xf32>
    %412 = vector.broadcast %128 : vector<1x10xf32> to vector<12x10xf32>
    %413 = arith.mulf %411, %412 : vector<12x10xf32>
    %414 = vector.broadcast %129 : vector<1x10xf32> to vector<12x10xf32>
    %415 = arith.addf %413, %414 : vector<12x10xf32>
    %416 = arith.truncf %415 : vector<12x10xf32> to vector<12x10xbf16>
    %c0_256 = arith.constant 0 : index
    %c1_257 = arith.constant 1 : index
    %c0_258 = arith.constant 0 : index
    %c212_259 = arith.constant 212 : index
    %417 = vector.load %arg16[%c0_256, %c1_257, %c0_258, %c212_259] : memref<2x2x12x256xbf16, #tpu.memory_space<vmem>>, vector<1x1x12x10xbf16>
    %418 = vector.shape_cast %417 : vector<1x1x12x10xbf16> to vector<12x10xbf16>
    %419 = vector.shape_cast %416 : vector<12x10xbf16> to vector<1x1x12x10xbf16>
    tpu.vector_store %arg16[%c0_256, %c1_257, %c0_258, %c212_259], %419 {strides = array<i32>} : memref<2x2x12x256xbf16, #tpu.memory_space<vmem>>, vector<1x1x12x10xbf16>,
    %c24_260 = arith.constant 24 : index
    %c0_261 = arith.constant 0 : index
    %420 = vector.load %arg15[%c24_260, %c0_261] : memref<288x128xf32, #tpu.memory_space<vmem>>, vector<12x10xf32>
    %421 = vector.broadcast %128 : vector<1x10xf32> to vector<12x10xf32>
    %422 = arith.mulf %420, %421 : vector<12x10xf32>
    %423 = vector.broadcast %129 : vector<1x10xf32> to vector<12x10xf32>
    %424 = arith.addf %422, %423 : vector<12x10xf32>
    %425 = arith.truncf %424 : vector<12x10xf32> to vector<12x10xbf16>
    %c0_262 = arith.constant 0 : index
    %c1_263 = arith.constant 1 : index
    %c0_264 = arith.constant 0 : index
    %c30_265 = arith.constant 30 : index
    %426 = vector.load %arg16[%c0_262, %c1_263, %c0_264, %c30_265] : memref<2x2x12x256xbf16, #tpu.memory_space<vmem>>, vector<1x1x12x10xbf16>
    %427 = vector.shape_cast %426 : vector<1x1x12x10xbf16> to vector<12x10xbf16>
    %428 = vector.shape_cast %425 : vector<12x10xbf16> to vector<1x1x12x10xbf16>
    tpu.vector_store %arg16[%c0_262, %c1_263, %c0_264, %c30_265], %428 {strides = array<i32>} : memref<2x2x12x256xbf16, #tpu.memory_space<vmem>>, vector<1x1x12x10xbf16>,
    %c36_266 = arith.constant 36 : index
    %c0_267 = arith.constant 0 : index
    %429 = vector.load %arg15[%c36_266, %c0_267] : memref<288x128xf32, #tpu.memory_space<vmem>>, vector<12x10xf32>
    %430 = vector.broadcast %128 : vector<1x10xf32> to vector<12x10xf32>
    %431 = arith.mulf %429, %430 : vector<12x10xf32>
    %432 = vector.broadcast %129 : vector<1x10xf32> to vector<12x10xf32>
    %433 = arith.addf %431, %432 : vector<12x10xf32>
    %434 = arith.truncf %433 : vector<12x10xf32> to vector<12x10xbf16>
    %c0_268 = arith.constant 0 : index
    %c1_269 = arith.constant 1 : index
    %c0_270 = arith.constant 0 : index
    %c94_271 = arith.constant 94 : index
    %435 = vector.load %arg16[%c0_268, %c1_269, %c0_270, %c94_271] : memref<2x2x12x256xbf16, #tpu.memory_space<vmem>>, vector<1x1x12x10xbf16>
    %436 = vector.shape_cast %435 : vector<1x1x12x10xbf16> to vector<12x10xbf16>
    %437 = vector.shape_cast %434 : vector<12x10xbf16> to vector<1x1x12x10xbf16>
    tpu.vector_store %arg16[%c0_268, %c1_269, %c0_270, %c94_271], %437 {strides = array<i32>} : memref<2x2x12x256xbf16, #tpu.memory_space<vmem>>, vector<1x1x12x10xbf16>,
    %c48_272 = arith.constant 48 : index
    %c0_273 = arith.constant 0 : index
    %438 = vector.load %arg15[%c48_272, %c0_273] : memref<288x128xf32, #tpu.memory_space<vmem>>, vector<12x10xf32>
    %439 = vector.broadcast %128 : vector<1x10xf32> to vector<12x10xf32>
    %440 = arith.mulf %438, %439 : vector<12x10xf32>
    %441 = vector.broadcast %129 : vector<1x10xf32> to vector<12x10xf32>
    %442 = arith.addf %440, %441 : vector<12x10xf32>
    %443 = arith.truncf %442 : vector<12x10xf32> to vector<12x10xbf16>
    %c0_274 = arith.constant 0 : index
    %c1_275 = arith.constant 1 : index
    %c0_276 = arith.constant 0 : index
    %c158_277 = arith.constant 158 : index
    %444 = vector.load %arg16[%c0_274, %c1_275, %c0_276, %c158_277] : memref<2x2x12x256xbf16, #tpu.memory_space<vmem>>, vector<1x1x12x10xbf16>
    %445 = vector.shape_cast %444 : vector<1x1x12x10xbf16> to vector<12x10xbf16>
    %446 = vector.shape_cast %443 : vector<12x10xbf16> to vector<1x1x12x10xbf16>
    tpu.vector_store %arg16[%c0_274, %c1_275, %c0_276, %c158_277], %446 {strides = array<i32>} : memref<2x2x12x256xbf16, #tpu.memory_space<vmem>>, vector<1x1x12x10xbf16>,
    %c60_278 = arith.constant 60 : index
    %c0_279 = arith.constant 0 : index
    %447 = vector.load %arg15[%c60_278, %c0_279] : memref<288x128xf32, #tpu.memory_space<vmem>>, vector<12x10xf32>
    %448 = vector.broadcast %128 : vector<1x10xf32> to vector<12x10xf32>
    %449 = arith.mulf %447, %448 : vector<12x10xf32>
    %450 = vector.broadcast %129 : vector<1x10xf32> to vector<12x10xf32>
    %451 = arith.addf %449, %450 : vector<12x10xf32>
    %452 = arith.truncf %451 : vector<12x10xf32> to vector<12x10xbf16>
    %c0_280 = arith.constant 0 : index
    %c1_281 = arith.constant 1 : index
    %c0_282 = arith.constant 0 : index
    %c222_283 = arith.constant 222 : index
    %453 = vector.load %arg16[%c0_280, %c1_281, %c0_282, %c222_283] : memref<2x2x12x256xbf16, #tpu.memory_space<vmem>>, vector<1x1x12x10xbf16>
    %454 = vector.shape_cast %453 : vector<1x1x12x10xbf16> to vector<12x10xbf16>
    %455 = vector.shape_cast %452 : vector<12x10xbf16> to vector<1x1x12x10xbf16>
    tpu.vector_store %arg16[%c0_280, %c1_281, %c0_282, %c222_283], %455 {strides = array<i32>} : memref<2x2x12x256xbf16, #tpu.memory_space<vmem>>, vector<1x1x12x10xbf16>,
    %c96_284 = arith.constant 96 : index
    %c0_285 = arith.constant 0 : index
    %456 = vector.load %arg15[%c96_284, %c0_285] : memref<288x128xf32, #tpu.memory_space<vmem>>, vector<12x10xf32>
    %457 = vector.broadcast %128 : vector<1x10xf32> to vector<12x10xf32>
    %458 = arith.mulf %456, %457 : vector<12x10xf32>
    %459 = vector.broadcast %129 : vector<1x10xf32> to vector<12x10xf32>
    %460 = arith.addf %458, %459 : vector<12x10xf32>
    %461 = arith.truncf %460 : vector<12x10xf32> to vector<12x10xbf16>
    %c0_286 = arith.constant 0 : index
    %c1_287 = arith.constant 1 : index
    %c0_288 = arith.constant 0 : index
    %c40_289 = arith.constant 40 : index
    %462 = vector.load %arg16[%c0_286, %c1_287, %c0_288, %c40_289] : memref<2x2x12x256xbf16, #tpu.memory_space<vmem>>, vector<1x1x12x10xbf16>
    %463 = vector.shape_cast %462 : vector<1x1x12x10xbf16> to vector<12x10xbf16>
    %464 = vector.shape_cast %461 : vector<12x10xbf16> to vector<1x1x12x10xbf16>
    tpu.vector_store %arg16[%c0_286, %c1_287, %c0_288, %c40_289], %464 {strides = array<i32>} : memref<2x2x12x256xbf16, #tpu.memory_space<vmem>>, vector<1x1x12x10xbf16>,
    %c108_290 = arith.constant 108 : index
    %c0_291 = arith.constant 0 : index
    %465 = vector.load %arg15[%c108_290, %c0_291] : memref<288x128xf32, #tpu.memory_space<vmem>>, vector<12x10xf32>
    %466 = vector.broadcast %128 : vector<1x10xf32> to vector<12x10xf32>
    %467 = arith.mulf %465, %466 : vector<12x10xf32>
    %468 = vector.broadcast %129 : vector<1x10xf32> to vector<12x10xf32>
    %469 = arith.addf %467, %468 : vector<12x10xf32>
    %470 = arith.truncf %469 : vector<12x10xf32> to vector<12x10xbf16>
    %c0_292 = arith.constant 0 : index
    %c1_293 = arith.constant 1 : index
    %c0_294 = arith.constant 0 : index
    %c104_295 = arith.constant 104 : index
    %471 = vector.load %arg16[%c0_292, %c1_293, %c0_294, %c104_295] : memref<2x2x12x256xbf16, #tpu.memory_space<vmem>>, vector<1x1x12x10xbf16>
    %472 = vector.shape_cast %471 : vector<1x1x12x10xbf16> to vector<12x10xbf16>
    %473 = vector.shape_cast %470 : vector<12x10xbf16> to vector<1x1x12x10xbf16>
    tpu.vector_store %arg16[%c0_292, %c1_293, %c0_294, %c104_295], %473 {strides = array<i32>} : memref<2x2x12x256xbf16, #tpu.memory_space<vmem>>, vector<1x1x12x10xbf16>,
    %c120_296 = arith.constant 120 : index
    %c0_297 = arith.constant 0 : index
    %474 = vector.load %arg15[%c120_296, %c0_297] : memref<288x128xf32, #tpu.memory_space<vmem>>, vector<12x10xf32>
    %475 = vector.broadcast %128 : vector<1x10xf32> to vector<12x10xf32>
    %476 = arith.mulf %474, %475 : vector<12x10xf32>
    %477 = vector.broadcast %129 : vector<1x10xf32> to vector<12x10xf32>
    %478 = arith.addf %476, %477 : vector<12x10xf32>
    %479 = arith.truncf %478 : vector<12x10xf32> to vector<12x10xbf16>
    %c0_298 = arith.constant 0 : index
    %c1_299 = arith.constant 1 : index
    %c0_300 = arith.constant 0 : index
    %c168_301 = arith.constant 168 : index
    %480 = vector.load %arg16[%c0_298, %c1_299, %c0_300, %c168_301] : memref<2x2x12x256xbf16, #tpu.memory_space<vmem>>, vector<1x1x12x10xbf16>
    %481 = vector.shape_cast %480 : vector<1x1x12x10xbf16> to vector<12x10xbf16>
    %482 = vector.shape_cast %479 : vector<12x10xbf16> to vector<1x1x12x10xbf16>
    tpu.vector_store %arg16[%c0_298, %c1_299, %c0_300, %c168_301], %482 {strides = array<i32>} : memref<2x2x12x256xbf16, #tpu.memory_space<vmem>>, vector<1x1x12x10xbf16>,
    %c132 = arith.constant 132 : index
    %c0_302 = arith.constant 0 : index
    %483 = vector.load %arg15[%c132, %c0_302] : memref<288x128xf32, #tpu.memory_space<vmem>>, vector<12x10xf32>
    %484 = vector.broadcast %128 : vector<1x10xf32> to vector<12x10xf32>
    %485 = arith.mulf %483, %484 : vector<12x10xf32>
    %486 = vector.broadcast %129 : vector<1x10xf32> to vector<12x10xf32>
    %487 = arith.addf %485, %486 : vector<12x10xf32>
    %488 = arith.truncf %487 : vector<12x10xf32> to vector<12x10xbf16>
    %c0_303 = arith.constant 0 : index
    %c1_304 = arith.constant 1 : index
    %c0_305 = arith.constant 0 : index
    %c232_306 = arith.constant 232 : index
    %489 = vector.load %arg16[%c0_303, %c1_304, %c0_305, %c232_306] : memref<2x2x12x256xbf16, #tpu.memory_space<vmem>>, vector<1x1x12x10xbf16>
    %490 = vector.shape_cast %489 : vector<1x1x12x10xbf16> to vector<12x10xbf16>
    %491 = vector.shape_cast %488 : vector<12x10xbf16> to vector<1x1x12x10xbf16>
    tpu.vector_store %arg16[%c0_303, %c1_304, %c0_305, %c232_306], %491 {strides = array<i32>} : memref<2x2x12x256xbf16, #tpu.memory_space<vmem>>, vector<1x1x12x10xbf16>,
    %c144_307 = arith.constant 144 : index
    %c0_308 = arith.constant 0 : index
    %492 = vector.load %arg15[%c144_307, %c0_308] : memref<288x128xf32, #tpu.memory_space<vmem>>, vector<12x10xf32>
    %493 = vector.broadcast %128 : vector<1x10xf32> to vector<12x10xf32>
    %494 = arith.mulf %492, %493 : vector<12x10xf32>
    %495 = vector.broadcast %129 : vector<1x10xf32> to vector<12x10xf32>
    %496 = arith.addf %494, %495 : vector<12x10xf32>
    %497 = arith.truncf %496 : vector<12x10xf32> to vector<12x10xbf16>
    %c1_309 = arith.constant 1 : index
    %c0_310 = arith.constant 0 : index
    %c0_311 = arith.constant 0 : index
    %c0_312 = arith.constant 0 : index
    %498 = vector.load %arg16[%c1_309, %c0_310, %c0_311, %c0_312] : memref<2x2x12x256xbf16, #tpu.memory_space<vmem>>, vector<1x1x12x10xbf16>
    %499 = vector.shape_cast %498 : vector<1x1x12x10xbf16> to vector<12x10xbf16>
    %500 = vector.shape_cast %497 : vector<12x10xbf16> to vector<1x1x12x10xbf16>
    tpu.vector_store %arg16[%c1_309, %c0_310, %c0_311, %c0_312], %500 {strides = array<i32>} : memref<2x2x12x256xbf16, #tpu.memory_space<vmem>>, vector<1x1x12x10xbf16>,
    %c156 = arith.constant 156 : index
    %c0_313 = arith.constant 0 : index
    %501 = vector.load %arg15[%c156, %c0_313] : memref<288x128xf32, #tpu.memory_space<vmem>>, vector<12x10xf32>
    %502 = vector.broadcast %128 : vector<1x10xf32> to vector<12x10xf32>
    %503 = arith.mulf %501, %502 : vector<12x10xf32>
    %504 = vector.broadcast %129 : vector<1x10xf32> to vector<12x10xf32>
    %505 = arith.addf %503, %504 : vector<12x10xf32>
    %506 = arith.truncf %505 : vector<12x10xf32> to vector<12x10xbf16>
    %c1_314 = arith.constant 1 : index
    %c0_315 = arith.constant 0 : index
    %c0_316 = arith.constant 0 : index
    %c64_317 = arith.constant 64 : index
    %507 = vector.load %arg16[%c1_314, %c0_315, %c0_316, %c64_317] : memref<2x2x12x256xbf16, #tpu.memory_space<vmem>>, vector<1x1x12x10xbf16>
    %508 = vector.shape_cast %507 : vector<1x1x12x10xbf16> to vector<12x10xbf16>
    %509 = vector.shape_cast %506 : vector<12x10xbf16> to vector<1x1x12x10xbf16>
    tpu.vector_store %arg16[%c1_314, %c0_315, %c0_316, %c64_317], %509 {strides = array<i32>} : memref<2x2x12x256xbf16, #tpu.memory_space<vmem>>, vector<1x1x12x10xbf16>,
    %c168_318 = arith.constant 168 : index
    %c0_319 = arith.constant 0 : index
    %510 = vector.load %arg15[%c168_318, %c0_319] : memref<288x128xf32, #tpu.memory_space<vmem>>, vector<12x10xf32>
    %511 = vector.broadcast %128 : vector<1x10xf32> to vector<12x10xf32>
    %512 = arith.mulf %510, %511 : vector<12x10xf32>
    %513 = vector.broadcast %129 : vector<1x10xf32> to vector<12x10xf32>
    %514 = arith.addf %512, %513 : vector<12x10xf32>
    %515 = arith.truncf %514 : vector<12x10xf32> to vector<12x10xbf16>
    %c1_320 = arith.constant 1 : index
    %c0_321 = arith.constant 0 : index
    %c0_322 = arith.constant 0 : index
    %c128_323 = arith.constant 128 : index
    %516 = vector.load %arg16[%c1_320, %c0_321, %c0_322, %c128_323] : memref<2x2x12x256xbf16, #tpu.memory_space<vmem>>, vector<1x1x12x10xbf16>
    %517 = vector.shape_cast %516 : vector<1x1x12x10xbf16> to vector<12x10xbf16>
    %518 = vector.shape_cast %515 : vector<12x10xbf16> to vector<1x1x12x10xbf16>
    tpu.vector_store %arg16[%c1_320, %c0_321, %c0_322, %c128_323], %518 {strides = array<i32>} : memref<2x2x12x256xbf16, #tpu.memory_space<vmem>>, vector<1x1x12x10xbf16>,
    %c180 = arith.constant 180 : index
    %c0_324 = arith.constant 0 : index
    %519 = vector.load %arg15[%c180, %c0_324] : memref<288x128xf32, #tpu.memory_space<vmem>>, vector<12x10xf32>
    %520 = vector.broadcast %128 : vector<1x10xf32> to vector<12x10xf32>
    %521 = arith.mulf %519, %520 : vector<12x10xf32>
    %522 = vector.broadcast %129 : vector<1x10xf32> to vector<12x10xf32>
    %523 = arith.addf %521, %522 : vector<12x10xf32>
    %524 = arith.truncf %523 : vector<12x10xf32> to vector<12x10xbf16>
    %c1_325 = arith.constant 1 : index
    %c0_326 = arith.constant 0 : index
    %c0_327 = arith.constant 0 : index
    %c192_328 = arith.constant 192 : index
    %525 = vector.load %arg16[%c1_325, %c0_326, %c0_327, %c192_328] : memref<2x2x12x256xbf16, #tpu.memory_space<vmem>>, vector<1x1x12x10xbf16>
    %526 = vector.shape_cast %525 : vector<1x1x12x10xbf16> to vector<12x10xbf16>
    %527 = vector.shape_cast %524 : vector<12x10xbf16> to vector<1x1x12x10xbf16>
    tpu.vector_store %arg16[%c1_325, %c0_326, %c0_327, %c192_328], %527 {strides = array<i32>} : memref<2x2x12x256xbf16, #tpu.memory_space<vmem>>, vector<1x1x12x10xbf16>,
    %c216_329 = arith.constant 216 : index
    %c0_330 = arith.constant 0 : index
    %528 = vector.load %arg15[%c216_329, %c0_330] : memref<288x128xf32, #tpu.memory_space<vmem>>, vector<12x10xf32>
    %529 = vector.broadcast %128 : vector<1x10xf32> to vector<12x10xf32>
    %530 = arith.mulf %528, %529 : vector<12x10xf32>
    %531 = vector.broadcast %129 : vector<1x10xf32> to vector<12x10xf32>
    %532 = arith.addf %530, %531 : vector<12x10xf32>
    %533 = arith.truncf %532 : vector<12x10xf32> to vector<12x10xbf16>
    %c1_331 = arith.constant 1 : index
    %c0_332 = arith.constant 0 : index
    %c0_333 = arith.constant 0 : index
    %c10_334 = arith.constant 10 : index
    %534 = vector.load %arg16[%c1_331, %c0_332, %c0_333, %c10_334] : memref<2x2x12x256xbf16, #tpu.memory_space<vmem>>, vector<1x1x12x10xbf16>
    %535 = vector.shape_cast %534 : vector<1x1x12x10xbf16> to vector<12x10xbf16>
    %536 = vector.shape_cast %533 : vector<12x10xbf16> to vector<1x1x12x10xbf16>
    tpu.vector_store %arg16[%c1_331, %c0_332, %c0_333, %c10_334], %536 {strides = array<i32>} : memref<2x2x12x256xbf16, #tpu.memory_space<vmem>>, vector<1x1x12x10xbf16>,
    %c228 = arith.constant 228 : index
    %c0_335 = arith.constant 0 : index
    %537 = vector.load %arg15[%c228, %c0_335] : memref<288x128xf32, #tpu.memory_space<vmem>>, vector<12x10xf32>
    %538 = vector.broadcast %128 : vector<1x10xf32> to vector<12x10xf32>
    %539 = arith.mulf %537, %538 : vector<12x10xf32>
    %540 = vector.broadcast %129 : vector<1x10xf32> to vector<12x10xf32>
    %541 = arith.addf %539, %540 : vector<12x10xf32>
    %542 = arith.truncf %541 : vector<12x10xf32> to vector<12x10xbf16>
    %c1_336 = arith.constant 1 : index
    %c0_337 = arith.constant 0 : index
    %c0_338 = arith.constant 0 : index
    %c74_339 = arith.constant 74 : index
    %543 = vector.load %arg16[%c1_336, %c0_337, %c0_338, %c74_339] : memref<2x2x12x256xbf16, #tpu.memory_space<vmem>>, vector<1x1x12x10xbf16>
    %544 = vector.shape_cast %543 : vector<1x1x12x10xbf16> to vector<12x10xbf16>
    %545 = vector.shape_cast %542 : vector<12x10xbf16> to vector<1x1x12x10xbf16>
    tpu.vector_store %arg16[%c1_336, %c0_337, %c0_338, %c74_339], %545 {strides = array<i32>} : memref<2x2x12x256xbf16, #tpu.memory_space<vmem>>, vector<1x1x12x10xbf16>,
    %c240 = arith.constant 240 : index
    %c0_340 = arith.constant 0 : index
    %546 = vector.load %arg15[%c240, %c0_340] : memref<288x128xf32, #tpu.memory_space<vmem>>, vector<12x10xf32>
    %547 = vector.broadcast %128 : vector<1x10xf32> to vector<12x10xf32>
    %548 = arith.mulf %546, %547 : vector<12x10xf32>
    %549 = vector.broadcast %129 : vector<1x10xf32> to vector<12x10xf32>
    %550 = arith.addf %548, %549 : vector<12x10xf32>
    %551 = arith.truncf %550 : vector<12x10xf32> to vector<12x10xbf16>
    %c1_341 = arith.constant 1 : index
    %c0_342 = arith.constant 0 : index
    %c0_343 = arith.constant 0 : index
    %c138_344 = arith.constant 138 : index
    %552 = vector.load %arg16[%c1_341, %c0_342, %c0_343, %c138_344] : memref<2x2x12x256xbf16, #tpu.memory_space<vmem>>, vector<1x1x12x10xbf16>
    %553 = vector.shape_cast %552 : vector<1x1x12x10xbf16> to vector<12x10xbf16>
    %554 = vector.shape_cast %551 : vector<12x10xbf16> to vector<1x1x12x10xbf16>
    tpu.vector_store %arg16[%c1_341, %c0_342, %c0_343, %c138_344], %554 {strides = array<i32>} : memref<2x2x12x256xbf16, #tpu.memory_space<vmem>>, vector<1x1x12x10xbf16>,
    %c252 = arith.constant 252 : index
    %c0_345 = arith.constant 0 : index
    %555 = vector.load %arg15[%c252, %c0_345] : memref<288x128xf32, #tpu.memory_space<vmem>>, vector<12x10xf32>
    %556 = vector.broadcast %128 : vector<1x10xf32> to vector<12x10xf32>
    %557 = arith.mulf %555, %556 : vector<12x10xf32>
    %558 = vector.broadcast %129 : vector<1x10xf32> to vector<12x10xf32>
    %559 = arith.addf %557, %558 : vector<12x10xf32>
    %560 = arith.truncf %559 : vector<12x10xf32> to vector<12x10xbf16>
    %c1_346 = arith.constant 1 : index
    %c0_347 = arith.constant 0 : index
    %c0_348 = arith.constant 0 : index
    %c202_349 = arith.constant 202 : index
    %561 = vector.load %arg16[%c1_346, %c0_347, %c0_348, %c202_349] : memref<2x2x12x256xbf16, #tpu.memory_space<vmem>>, vector<1x1x12x10xbf16>
    %562 = vector.shape_cast %561 : vector<1x1x12x10xbf16> to vector<12x10xbf16>
    %563 = vector.shape_cast %560 : vector<12x10xbf16> to vector<1x1x12x10xbf16>
    tpu.vector_store %arg16[%c1_346, %c0_347, %c0_348, %c202_349], %563 {strides = array<i32>} : memref<2x2x12x256xbf16, #tpu.memory_space<vmem>>, vector<1x1x12x10xbf16>,
    %c156_350 = arith.constant 156 : index
    %c0_351 = arith.constant 0 : index
    %564 = vector.load %arg15[%c156_350, %c0_351] : memref<288x128xf32, #tpu.memory_space<vmem>>, vector<12x10xf32>
    %565 = vector.broadcast %128 : vector<1x10xf32> to vector<12x10xf32>
    %566 = arith.mulf %564, %565 : vector<12x10xf32>
    %567 = vector.broadcast %129 : vector<1x10xf32> to vector<12x10xf32>
    %568 = arith.addf %566, %567 : vector<12x10xf32>
    %569 = arith.truncf %568 : vector<12x10xf32> to vector<12x10xbf16>
    %c1_352 = arith.constant 1 : index
    %c0_353 = arith.constant 0 : index
    %c0_354 = arith.constant 0 : index
    %c20_355 = arith.constant 20 : index
    %570 = vector.load %arg16[%c1_352, %c0_353, %c0_354, %c20_355] : memref<2x2x12x256xbf16, #tpu.memory_space<vmem>>, vector<1x1x12x10xbf16>
    %571 = vector.shape_cast %570 : vector<1x1x12x10xbf16> to vector<12x10xbf16>
    %572 = vector.shape_cast %569 : vector<12x10xbf16> to vector<1x1x12x10xbf16>
    tpu.vector_store %arg16[%c1_352, %c0_353, %c0_354, %c20_355], %572 {strides = array<i32>} : memref<2x2x12x256xbf16, #tpu.memory_space<vmem>>, vector<1x1x12x10xbf16>,
    %c168_356 = arith.constant 168 : index
    %c0_357 = arith.constant 0 : index
    %573 = vector.load %arg15[%c168_356, %c0_357] : memref<288x128xf32, #tpu.memory_space<vmem>>, vector<12x10xf32>
    %574 = vector.broadcast %128 : vector<1x10xf32> to vector<12x10xf32>
    %575 = arith.mulf %573, %574 : vector<12x10xf32>
    %576 = vector.broadcast %129 : vector<1x10xf32> to vector<12x10xf32>
    %577 = arith.addf %575, %576 : vector<12x10xf32>
    %578 = arith.truncf %577 : vector<12x10xf32> to vector<12x10xbf16>
    %c1_358 = arith.constant 1 : index
    %c0_359 = arith.constant 0 : index
    %c0_360 = arith.constant 0 : index
    %c84_361 = arith.constant 84 : index
    %579 = vector.load %arg16[%c1_358, %c0_359, %c0_360, %c84_361] : memref<2x2x12x256xbf16, #tpu.memory_space<vmem>>, vector<1x1x12x10xbf16>
    %580 = vector.shape_cast %579 : vector<1x1x12x10xbf16> to vector<12x10xbf16>
    %581 = vector.shape_cast %578 : vector<12x10xbf16> to vector<1x1x12x10xbf16>
    tpu.vector_store %arg16[%c1_358, %c0_359, %c0_360, %c84_361], %581 {strides = array<i32>} : memref<2x2x12x256xbf16, #tpu.memory_space<vmem>>, vector<1x1x12x10xbf16>,
    %c180_362 = arith.constant 180 : index
    %c0_363 = arith.constant 0 : index
    %582 = vector.load %arg15[%c180_362, %c0_363] : memref<288x128xf32, #tpu.memory_space<vmem>>, vector<12x10xf32>
    %583 = vector.broadcast %128 : vector<1x10xf32> to vector<12x10xf32>
    %584 = arith.mulf %582, %583 : vector<12x10xf32>
    %585 = vector.broadcast %129 : vector<1x10xf32> to vector<12x10xf32>
    %586 = arith.addf %584, %585 : vector<12x10xf32>
    %587 = arith.truncf %586 : vector<12x10xf32> to vector<12x10xbf16>
    %c1_364 = arith.constant 1 : index
    %c0_365 = arith.constant 0 : index
    %c0_366 = arith.constant 0 : index
    %c148_367 = arith.constant 148 : index
    %588 = vector.load %arg16[%c1_364, %c0_365, %c0_366, %c148_367] : memref<2x2x12x256xbf16, #tpu.memory_space<vmem>>, vector<1x1x12x10xbf16>
    %589 = vector.shape_cast %588 : vector<1x1x12x10xbf16> to vector<12x10xbf16>
    %590 = vector.shape_cast %587 : vector<12x10xbf16> to vector<1x1x12x10xbf16>
    tpu.vector_store %arg16[%c1_364, %c0_365, %c0_366, %c148_367], %590 {strides = array<i32>} : memref<2x2x12x256xbf16, #tpu.memory_space<vmem>>, vector<1x1x12x10xbf16>,
    %c192_368 = arith.constant 192 : index
    %c0_369 = arith.constant 0 : index
    %591 = vector.load %arg15[%c192_368, %c0_369] : memref<288x128xf32, #tpu.memory_space<vmem>>, vector<12x10xf32>
    %592 = vector.broadcast %128 : vector<1x10xf32> to vector<12x10xf32>
    %593 = arith.mulf %591, %592 : vector<12x10xf32>
    %594 = vector.broadcast %129 : vector<1x10xf32> to vector<12x10xf32>
    %595 = arith.addf %593, %594 : vector<12x10xf32>
    %596 = arith.truncf %595 : vector<12x10xf32> to vector<12x10xbf16>
    %c1_370 = arith.constant 1 : index
    %c0_371 = arith.constant 0 : index
    %c0_372 = arith.constant 0 : index
    %c212_373 = arith.constant 212 : index
    %597 = vector.load %arg16[%c1_370, %c0_371, %c0_372, %c212_373] : memref<2x2x12x256xbf16, #tpu.memory_space<vmem>>, vector<1x1x12x10xbf16>
    %598 = vector.shape_cast %597 : vector<1x1x12x10xbf16> to vector<12x10xbf16>
    %599 = vector.shape_cast %596 : vector<12x10xbf16> to vector<1x1x12x10xbf16>
    tpu.vector_store %arg16[%c1_370, %c0_371, %c0_372, %c212_373], %599 {strides = array<i32>} : memref<2x2x12x256xbf16, #tpu.memory_space<vmem>>, vector<1x1x12x10xbf16>,
    %c228_374 = arith.constant 228 : index
    %c0_375 = arith.constant 0 : index
    %600 = vector.load %arg15[%c228_374, %c0_375] : memref<288x128xf32, #tpu.memory_space<vmem>>, vector<12x10xf32>
    %601 = vector.broadcast %128 : vector<1x10xf32> to vector<12x10xf32>
    %602 = arith.mulf %600, %601 : vector<12x10xf32>
    %603 = vector.broadcast %129 : vector<1x10xf32> to vector<12x10xf32>
    %604 = arith.addf %602, %603 : vector<12x10xf32>
    %605 = arith.truncf %604 : vector<12x10xf32> to vector<12x10xbf16>
    %c1_376 = arith.constant 1 : index
    %c0_377 = arith.constant 0 : index
    %c0_378 = arith.constant 0 : index
    %c30_379 = arith.constant 30 : index
    %606 = vector.load %arg16[%c1_376, %c0_377, %c0_378, %c30_379] : memref<2x2x12x256xbf16, #tpu.memory_space<vmem>>, vector<1x1x12x10xbf16>
    %607 = vector.shape_cast %606 : vector<1x1x12x10xbf16> to vector<12x10xbf16>
    %608 = vector.shape_cast %605 : vector<12x10xbf16> to vector<1x1x12x10xbf16>
    tpu.vector_store %arg16[%c1_376, %c0_377, %c0_378, %c30_379], %608 {strides = array<i32>} : memref<2x2x12x256xbf16, #tpu.memory_space<vmem>>, vector<1x1x12x10xbf16>,
    %c240_380 = arith.constant 240 : index
    %c0_381 = arith.constant 0 : index
    %609 = vector.load %arg15[%c240_380, %c0_381] : memref<288x128xf32, #tpu.memory_space<vmem>>, vector<12x10xf32>
    %610 = vector.broadcast %128 : vector<1x10xf32> to vector<12x10xf32>
    %611 = arith.mulf %609, %610 : vector<12x10xf32>
    %612 = vector.broadcast %129 : vector<1x10xf32> to vector<12x10xf32>
    %613 = arith.addf %611, %612 : vector<12x10xf32>
    %614 = arith.truncf %613 : vector<12x10xf32> to vector<12x10xbf16>
    %c1_382 = arith.constant 1 : index
    %c0_383 = arith.constant 0 : index
    %c0_384 = arith.constant 0 : index
    %c94_385 = arith.constant 94 : index
    %615 = vector.load %arg16[%c1_382, %c0_383, %c0_384, %c94_385] : memref<2x2x12x256xbf16, #tpu.memory_space<vmem>>, vector<1x1x12x10xbf16>
    %616 = vector.shape_cast %615 : vector<1x1x12x10xbf16> to vector<12x10xbf16>
    %617 = vector.shape_cast %614 : vector<12x10xbf16> to vector<1x1x12x10xbf16>
    tpu.vector_store %arg16[%c1_382, %c0_383, %c0_384, %c94_385], %617 {strides = array<i32>} : memref<2x2x12x256xbf16, #tpu.memory_space<vmem>>, vector<1x1x12x10xbf16>,
    %c252_386 = arith.constant 252 : index
    %c0_387 = arith.constant 0 : index
    %618 = vector.load %arg15[%c252_386, %c0_387] : memref<288x128xf32, #tpu.memory_space<vmem>>, vector<12x10xf32>
    %619 = vector.broadcast %128 : vector<1x10xf32> to vector<12x10xf32>
    %620 = arith.mulf %618, %619 : vector<12x10xf32>
    %621 = vector.broadcast %129 : vector<1x10xf32> to vector<12x10xf32>
    %622 = arith.addf %620, %621 : vector<12x10xf32>
    %623 = arith.truncf %622 : vector<12x10xf32> to vector<12x10xbf16>
    %c1_388 = arith.constant 1 : index
    %c0_389 = arith.constant 0 : index
    %c0_390 = arith.constant 0 : index
    %c158_391 = arith.constant 158 : index
    %624 = vector.load %arg16[%c1_388, %c0_389, %c0_390, %c158_391] : memref<2x2x12x256xbf16, #tpu.memory_space<vmem>>, vector<1x1x12x10xbf16>
    %625 = vector.shape_cast %624 : vector<1x1x12x10xbf16> to vector<12x10xbf16>
    %626 = vector.shape_cast %623 : vector<12x10xbf16> to vector<1x1x12x10xbf16>
    tpu.vector_store %arg16[%c1_388, %c0_389, %c0_390, %c158_391], %626 {strides = array<i32>} : memref<2x2x12x256xbf16, #tpu.memory_space<vmem>>, vector<1x1x12x10xbf16>,
    %c264 = arith.constant 264 : index
    %c0_392 = arith.constant 0 : index
    %627 = vector.load %arg15[%c264, %c0_392] : memref<288x128xf32, #tpu.memory_space<vmem>>, vector<12x10xf32>
    %628 = vector.broadcast %128 : vector<1x10xf32> to vector<12x10xf32>
    %629 = arith.mulf %627, %628 : vector<12x10xf32>
    %630 = vector.broadcast %129 : vector<1x10xf32> to vector<12x10xf32>
    %631 = arith.addf %629, %630 : vector<12x10xf32>
    %632 = arith.truncf %631 : vector<12x10xf32> to vector<12x10xbf16>
    %c1_393 = arith.constant 1 : index
    %c0_394 = arith.constant 0 : index
    %c0_395 = arith.constant 0 : index
    %c222_396 = arith.constant 222 : index
    %633 = vector.load %arg16[%c1_393, %c0_394, %c0_395, %c222_396] : memref<2x2x12x256xbf16, #tpu.memory_space<vmem>>, vector<1x1x12x10xbf16>
    %634 = vector.shape_cast %633 : vector<1x1x12x10xbf16> to vector<12x10xbf16>
    %635 = vector.shape_cast %632 : vector<12x10xbf16> to vector<1x1x12x10xbf16>
    tpu.vector_store %arg16[%c1_393, %c0_394, %c0_395, %c222_396], %635 {strides = array<i32>} : memref<2x2x12x256xbf16, #tpu.memory_space<vmem>>, vector<1x1x12x10xbf16>,
    %c168_397 = arith.constant 168 : index
    %c0_398 = arith.constant 0 : index
    %636 = vector.load %arg15[%c168_397, %c0_398] : memref<288x128xf32, #tpu.memory_space<vmem>>, vector<12x10xf32>
    %637 = vector.broadcast %128 : vector<1x10xf32> to vector<12x10xf32>
    %638 = arith.mulf %636, %637 : vector<12x10xf32>
    %639 = vector.broadcast %129 : vector<1x10xf32> to vector<12x10xf32>
    %640 = arith.addf %638, %639 : vector<12x10xf32>
    %641 = arith.truncf %640 : vector<12x10xf32> to vector<12x10xbf16>
    %c1_399 = arith.constant 1 : index
    %c0_400 = arith.constant 0 : index
    %c0_401 = arith.constant 0 : index
    %c40_402 = arith.constant 40 : index
    %642 = vector.load %arg16[%c1_399, %c0_400, %c0_401, %c40_402] : memref<2x2x12x256xbf16, #tpu.memory_space<vmem>>, vector<1x1x12x10xbf16>
    %643 = vector.shape_cast %642 : vector<1x1x12x10xbf16> to vector<12x10xbf16>
    %644 = vector.shape_cast %641 : vector<12x10xbf16> to vector<1x1x12x10xbf16>
    tpu.vector_store %arg16[%c1_399, %c0_400, %c0_401, %c40_402], %644 {strides = array<i32>} : memref<2x2x12x256xbf16, #tpu.memory_space<vmem>>, vector<1x1x12x10xbf16>,
    %c180_403 = arith.constant 180 : index
    %c0_404 = arith.constant 0 : index
    %645 = vector.load %arg15[%c180_403, %c0_404] : memref<288x128xf32, #tpu.memory_space<vmem>>, vector<12x10xf32>
    %646 = vector.broadcast %128 : vector<1x10xf32> to vector<12x10xf32>
    %647 = arith.mulf %645, %646 : vector<12x10xf32>
    %648 = vector.broadcast %129 : vector<1x10xf32> to vector<12x10xf32>
    %649 = arith.addf %647, %648 : vector<12x10xf32>
    %650 = arith.truncf %649 : vector<12x10xf32> to vector<12x10xbf16>
    %c1_405 = arith.constant 1 : index
    %c0_406 = arith.constant 0 : index
    %c0_407 = arith.constant 0 : index
    %c104_408 = arith.constant 104 : index
    %651 = vector.load %arg16[%c1_405, %c0_406, %c0_407, %c104_408] : memref<2x2x12x256xbf16, #tpu.memory_space<vmem>>, vector<1x1x12x10xbf16>
    %652 = vector.shape_cast %651 : vector<1x1x12x10xbf16> to vector<12x10xbf16>
    %653 = vector.shape_cast %650 : vector<12x10xbf16> to vector<1x1x12x10xbf16>
    tpu.vector_store %arg16[%c1_405, %c0_406, %c0_407, %c104_408], %653 {strides = array<i32>} : memref<2x2x12x256xbf16, #tpu.memory_space<vmem>>, vector<1x1x12x10xbf16>,
    %c192_409 = arith.constant 192 : index
    %c0_410 = arith.constant 0 : index
    %654 = vector.load %arg15[%c192_409, %c0_410] : memref<288x128xf32, #tpu.memory_space<vmem>>, vector<12x10xf32>
    %655 = vector.broadcast %128 : vector<1x10xf32> to vector<12x10xf32>
    %656 = arith.mulf %654, %655 : vector<12x10xf32>
    %657 = vector.broadcast %129 : vector<1x10xf32> to vector<12x10xf32>
    %658 = arith.addf %656, %657 : vector<12x10xf32>
    %659 = arith.truncf %658 : vector<12x10xf32> to vector<12x10xbf16>
    %c1_411 = arith.constant 1 : index
    %c0_412 = arith.constant 0 : index
    %c0_413 = arith.constant 0 : index
    %c168_414 = arith.constant 168 : index
    %660 = vector.load %arg16[%c1_411, %c0_412, %c0_413, %c168_414] : memref<2x2x12x256xbf16, #tpu.memory_space<vmem>>, vector<1x1x12x10xbf16>
    %661 = vector.shape_cast %660 : vector<1x1x12x10xbf16> to vector<12x10xbf16>
    %662 = vector.shape_cast %659 : vector<12x10xbf16> to vector<1x1x12x10xbf16>
    tpu.vector_store %arg16[%c1_411, %c0_412, %c0_413, %c168_414], %662 {strides = array<i32>} : memref<2x2x12x256xbf16, #tpu.memory_space<vmem>>, vector<1x1x12x10xbf16>,
    %c204 = arith.constant 204 : index
    %c0_415 = arith.constant 0 : index
    %663 = vector.load %arg15[%c204, %c0_415] : memref<288x128xf32, #tpu.memory_space<vmem>>, vector<12x10xf32>
    %664 = vector.broadcast %128 : vector<1x10xf32> to vector<12x10xf32>
    %665 = arith.mulf %663, %664 : vector<12x10xf32>
    %666 = vector.broadcast %129 : vector<1x10xf32> to vector<12x10xf32>
    %667 = arith.addf %665, %666 : vector<12x10xf32>
    %668 = arith.truncf %667 : vector<12x10xf32> to vector<12x10xbf16>
    %c1_416 = arith.constant 1 : index
    %c0_417 = arith.constant 0 : index
    %c0_418 = arith.constant 0 : index
    %c232_419 = arith.constant 232 : index
    %669 = vector.load %arg16[%c1_416, %c0_417, %c0_418, %c232_419] : memref<2x2x12x256xbf16, #tpu.memory_space<vmem>>, vector<1x1x12x10xbf16>
    %670 = vector.shape_cast %669 : vector<1x1x12x10xbf16> to vector<12x10xbf16>
    %671 = vector.shape_cast %668 : vector<12x10xbf16> to vector<1x1x12x10xbf16>
    tpu.vector_store %arg16[%c1_416, %c0_417, %c0_418, %c232_419], %671 {strides = array<i32>} : memref<2x2x12x256xbf16, #tpu.memory_space<vmem>>, vector<1x1x12x10xbf16>,
    %c216_420 = arith.constant 216 : index
    %c0_421 = arith.constant 0 : index
    %672 = vector.load %arg15[%c216_420, %c0_421] : memref<288x128xf32, #tpu.memory_space<vmem>>, vector<12x10xf32>
    %673 = vector.broadcast %128 : vector<1x10xf32> to vector<12x10xf32>
    %674 = arith.mulf %672, %673 : vector<12x10xf32>
    %675 = vector.broadcast %129 : vector<1x10xf32> to vector<12x10xf32>
    %676 = arith.addf %674, %675 : vector<12x10xf32>
    %677 = arith.truncf %676 : vector<12x10xf32> to vector<12x10xbf16>
    %c1_422 = arith.constant 1 : index
    %c1_423 = arith.constant 1 : index
    %c0_424 = arith.constant 0 : index
    %c0_425 = arith.constant 0 : index
    %678 = vector.load %arg16[%c1_422, %c1_423, %c0_424, %c0_425] : memref<2x2x12x256xbf16, #tpu.memory_space<vmem>>, vector<1x1x12x10xbf16>
    %679 = vector.shape_cast %678 : vector<1x1x12x10xbf16> to vector<12x10xbf16>
    %680 = vector.shape_cast %677 : vector<12x10xbf16> to vector<1x1x12x10xbf16>
    tpu.vector_store %arg16[%c1_422, %c1_423, %c0_424, %c0_425], %680 {strides = array<i32>} : memref<2x2x12x256xbf16, #tpu.memory_space<vmem>>, vector<1x1x12x10xbf16>,
    %c228_426 = arith.constant 228 : index
    %c0_427 = arith.constant 0 : index
    %681 = vector.load %arg15[%c228_426, %c0_427] : memref<288x128xf32, #tpu.memory_space<vmem>>, vector<12x10xf32>
    %682 = vector.broadcast %128 : vector<1x10xf32> to vector<12x10xf32>
    %683 = arith.mulf %681, %682 : vector<12x10xf32>
    %684 = vector.broadcast %129 : vector<1x10xf32> to vector<12x10xf32>
    %685 = arith.addf %683, %684 : vector<12x10xf32>
    %686 = arith.truncf %685 : vector<12x10xf32> to vector<12x10xbf16>
    %c1_428 = arith.constant 1 : index
    %c1_429 = arith.constant 1 : index
    %c0_430 = arith.constant 0 : index
    %c64_431 = arith.constant 64 : index
    %687 = vector.load %arg16[%c1_428, %c1_429, %c0_430, %c64_431] : memref<2x2x12x256xbf16, #tpu.memory_space<vmem>>, vector<1x1x12x10xbf16>
    %688 = vector.shape_cast %687 : vector<1x1x12x10xbf16> to vector<12x10xbf16>
    %689 = vector.shape_cast %686 : vector<12x10xbf16> to vector<1x1x12x10xbf16>
    tpu.vector_store %arg16[%c1_428, %c1_429, %c0_430, %c64_431], %689 {strides = array<i32>} : memref<2x2x12x256xbf16, #tpu.memory_space<vmem>>, vector<1x1x12x10xbf16>,
    %c240_432 = arith.constant 240 : index
    %c0_433 = arith.constant 0 : index
    %690 = vector.load %arg15[%c240_432, %c0_433] : memref<288x128xf32, #tpu.memory_space<vmem>>, vector<12x10xf32>
    %691 = vector.broadcast %128 : vector<1x10xf32> to vector<12x10xf32>
    %692 = arith.mulf %690, %691 : vector<12x10xf32>
    %693 = vector.broadcast %129 : vector<1x10xf32> to vector<12x10xf32>
    %694 = arith.addf %692, %693 : vector<12x10xf32>
    %695 = arith.truncf %694 : vector<12x10xf32> to vector<12x10xbf16>
    %c1_434 = arith.constant 1 : index
    %c1_435 = arith.constant 1 : index
    %c0_436 = arith.constant 0 : index
    %c128_437 = arith.constant 128 : index
    %696 = vector.load %arg16[%c1_434, %c1_435, %c0_436, %c128_437] : memref<2x2x12x256xbf16, #tpu.memory_space<vmem>>, vector<1x1x12x10xbf16>
    %697 = vector.shape_cast %696 : vector<1x1x12x10xbf16> to vector<12x10xbf16>
    %698 = vector.shape_cast %695 : vector<12x10xbf16> to vector<1x1x12x10xbf16>
    tpu.vector_store %arg16[%c1_434, %c1_435, %c0_436, %c128_437], %698 {strides = array<i32>} : memref<2x2x12x256xbf16, #tpu.memory_space<vmem>>, vector<1x1x12x10xbf16>,
    %c252_438 = arith.constant 252 : index
    %c0_439 = arith.constant 0 : index
    %699 = vector.load %arg15[%c252_438, %c0_439] : memref<288x128xf32, #tpu.memory_space<vmem>>, vector<12x10xf32>
    %700 = vector.broadcast %128 : vector<1x10xf32> to vector<12x10xf32>
    %701 = arith.mulf %699, %700 : vector<12x10xf32>
    %702 = vector.broadcast %129 : vector<1x10xf32> to vector<12x10xf32>
    %703 = arith.addf %701, %702 : vector<12x10xf32>
    %704 = arith.truncf %703 : vector<12x10xf32> to vector<12x10xbf16>
    %c1_440 = arith.constant 1 : index
    %c1_441 = arith.constant 1 : index
    %c0_442 = arith.constant 0 : index
    %c192_443 = arith.constant 192 : index
    %705 = vector.load %arg16[%c1_440, %c1_441, %c0_442, %c192_443] : memref<2x2x12x256xbf16, #tpu.memory_space<vmem>>, vector<1x1x12x10xbf16>
    %706 = vector.shape_cast %705 : vector<1x1x12x10xbf16> to vector<12x10xbf16>
    %707 = vector.shape_cast %704 : vector<12x10xbf16> to vector<1x1x12x10xbf16>
    tpu.vector_store %arg16[%c1_440, %c1_441, %c0_442, %c192_443], %707 {strides = array<i32>} : memref<2x2x12x256xbf16, #tpu.memory_space<vmem>>, vector<1x1x12x10xbf16>,
    %c156_444 = arith.constant 156 : index
    %c0_445 = arith.constant 0 : index
    %708 = vector.load %arg15[%c156_444, %c0_445] : memref<288x128xf32, #tpu.memory_space<vmem>>, vector<12x10xf32>
    %709 = vector.broadcast %128 : vector<1x10xf32> to vector<12x10xf32>
    %710 = arith.mulf %708, %709 : vector<12x10xf32>
    %711 = vector.broadcast %129 : vector<1x10xf32> to vector<12x10xf32>
    %712 = arith.addf %710, %711 : vector<12x10xf32>
    %713 = arith.truncf %712 : vector<12x10xf32> to vector<12x10xbf16>
    %c1_446 = arith.constant 1 : index
    %c1_447 = arith.constant 1 : index
    %c0_448 = arith.constant 0 : index
    %c10_449 = arith.constant 10 : index
    %714 = vector.load %arg16[%c1_446, %c1_447, %c0_448, %c10_449] : memref<2x2x12x256xbf16, #tpu.memory_space<vmem>>, vector<1x1x12x10xbf16>
    %715 = vector.shape_cast %714 : vector<1x1x12x10xbf16> to vector<12x10xbf16>
    %716 = vector.shape_cast %713 : vector<12x10xbf16> to vector<1x1x12x10xbf16>
    tpu.vector_store %arg16[%c1_446, %c1_447, %c0_448, %c10_449], %716 {strides = array<i32>} : memref<2x2x12x256xbf16, #tpu.memory_space<vmem>>, vector<1x1x12x10xbf16>,
    %c168_450 = arith.constant 168 : index
    %c0_451 = arith.constant 0 : index
    %717 = vector.load %arg15[%c168_450, %c0_451] : memref<288x128xf32, #tpu.memory_space<vmem>>, vector<12x10xf32>
    %718 = vector.broadcast %128 : vector<1x10xf32> to vector<12x10xf32>
    %719 = arith.mulf %717, %718 : vector<12x10xf32>
    %720 = vector.broadcast %129 : vector<1x10xf32> to vector<12x10xf32>
    %721 = arith.addf %719, %720 : vector<12x10xf32>
    %722 = arith.truncf %721 : vector<12x10xf32> to vector<12x10xbf16>
    %c1_452 = arith.constant 1 : index
    %c1_453 = arith.constant 1 : index
    %c0_454 = arith.constant 0 : index
    %c74_455 = arith.constant 74 : index
    %723 = vector.load %arg16[%c1_452, %c1_453, %c0_454, %c74_455] : memref<2x2x12x256xbf16, #tpu.memory_space<vmem>>, vector<1x1x12x10xbf16>
    %724 = vector.shape_cast %723 : vector<1x1x12x10xbf16> to vector<12x10xbf16>
    %725 = vector.shape_cast %722 : vector<12x10xbf16> to vector<1x1x12x10xbf16>
    tpu.vector_store %arg16[%c1_452, %c1_453, %c0_454, %c74_455], %725 {strides = array<i32>} : memref<2x2x12x256xbf16, #tpu.memory_space<vmem>>, vector<1x1x12x10xbf16>,
    %c180_456 = arith.constant 180 : index
    %c0_457 = arith.constant 0 : index
    %726 = vector.load %arg15[%c180_456, %c0_457] : memref<288x128xf32, #tpu.memory_space<vmem>>, vector<12x10xf32>
    %727 = vector.broadcast %128 : vector<1x10xf32> to vector<12x10xf32>
    %728 = arith.mulf %726, %727 : vector<12x10xf32>
    %729 = vector.broadcast %129 : vector<1x10xf32> to vector<12x10xf32>
    %730 = arith.addf %728, %729 : vector<12x10xf32>
    %731 = arith.truncf %730 : vector<12x10xf32> to vector<12x10xbf16>
    %c1_458 = arith.constant 1 : index
    %c1_459 = arith.constant 1 : index
    %c0_460 = arith.constant 0 : index
    %c138_461 = arith.constant 138 : index
    %732 = vector.load %arg16[%c1_458, %c1_459, %c0_460, %c138_461] : memref<2x2x12x256xbf16, #tpu.memory_space<vmem>>, vector<1x1x12x10xbf16>
    %733 = vector.shape_cast %732 : vector<1x1x12x10xbf16> to vector<12x10xbf16>
    %734 = vector.shape_cast %731 : vector<12x10xbf16> to vector<1x1x12x10xbf16>
    tpu.vector_store %arg16[%c1_458, %c1_459, %c0_460, %c138_461], %734 {strides = array<i32>} : memref<2x2x12x256xbf16, #tpu.memory_space<vmem>>, vector<1x1x12x10xbf16>,
    %c192_462 = arith.constant 192 : index
    %c0_463 = arith.constant 0 : index
    %735 = vector.load %arg15[%c192_462, %c0_463] : memref<288x128xf32, #tpu.memory_space<vmem>>, vector<12x10xf32>
    %736 = vector.broadcast %128 : vector<1x10xf32> to vector<12x10xf32>
    %737 = arith.mulf %735, %736 : vector<12x10xf32>
    %738 = vector.broadcast %129 : vector<1x10xf32> to vector<12x10xf32>
    %739 = arith.addf %737, %738 : vector<12x10xf32>
    %740 = arith.truncf %739 : vector<12x10xf32> to vector<12x10xbf16>
    %c1_464 = arith.constant 1 : index
    %c1_465 = arith.constant 1 : index
    %c0_466 = arith.constant 0 : index
    %c202_467 = arith.constant 202 : index
    %741 = vector.load %arg16[%c1_464, %c1_465, %c0_466, %c202_467] : memref<2x2x12x256xbf16, #tpu.memory_space<vmem>>, vector<1x1x12x10xbf16>
    %742 = vector.shape_cast %741 : vector<1x1x12x10xbf16> to vector<12x10xbf16>
    %743 = vector.shape_cast %740 : vector<12x10xbf16> to vector<1x1x12x10xbf16>
    tpu.vector_store %arg16[%c1_464, %c1_465, %c0_466, %c202_467], %743 {strides = array<i32>} : memref<2x2x12x256xbf16, #tpu.memory_space<vmem>>, vector<1x1x12x10xbf16>,
    %c228_468 = arith.constant 228 : index
    %c0_469 = arith.constant 0 : index
    %744 = vector.load %arg15[%c228_468, %c0_469] : memref<288x128xf32, #tpu.memory_space<vmem>>, vector<12x10xf32>
    %745 = vector.broadcast %128 : vector<1x10xf32> to vector<12x10xf32>
    %746 = arith.mulf %744, %745 : vector<12x10xf32>
    %747 = vector.broadcast %129 : vector<1x10xf32> to vector<12x10xf32>
    %748 = arith.addf %746, %747 : vector<12x10xf32>
    %749 = arith.truncf %748 : vector<12x10xf32> to vector<12x10xbf16>
    %c1_470 = arith.constant 1 : index
    %c1_471 = arith.constant 1 : index
    %c0_472 = arith.constant 0 : index
    %c20_473 = arith.constant 20 : index
    %750 = vector.load %arg16[%c1_470, %c1_471, %c0_472, %c20_473] : memref<2x2x12x256xbf16, #tpu.memory_space<vmem>>, vector<1x1x12x10xbf16>
    %751 = vector.shape_cast %750 : vector<1x1x12x10xbf16> to vector<12x10xbf16>
    %752 = vector.shape_cast %749 : vector<12x10xbf16> to vector<1x1x12x10xbf16>
    tpu.vector_store %arg16[%c1_470, %c1_471, %c0_472, %c20_473], %752 {strides = array<i32>} : memref<2x2x12x256xbf16, #tpu.memory_space<vmem>>, vector<1x1x12x10xbf16>,
    %c240_474 = arith.constant 240 : index
    %c0_475 = arith.constant 0 : index
    %753 = vector.load %arg15[%c240_474, %c0_475] : memref<288x128xf32, #tpu.memory_space<vmem>>, vector<12x10xf32>
    %754 = vector.broadcast %128 : vector<1x10xf32> to vector<12x10xf32>
    %755 = arith.mulf %753, %754 : vector<12x10xf32>
    %756 = vector.broadcast %129 : vector<1x10xf32> to vector<12x10xf32>
    %757 = arith.addf %755, %756 : vector<12x10xf32>
    %758 = arith.truncf %757 : vector<12x10xf32> to vector<12x10xbf16>
    %c1_476 = arith.constant 1 : index
    %c1_477 = arith.constant 1 : index
    %c0_478 = arith.constant 0 : index
    %c84_479 = arith.constant 84 : index
    %759 = vector.load %arg16[%c1_476, %c1_477, %c0_478, %c84_479] : memref<2x2x12x256xbf16, #tpu.memory_space<vmem>>, vector<1x1x12x10xbf16>
    %760 = vector.shape_cast %759 : vector<1x1x12x10xbf16> to vector<12x10xbf16>
    %761 = vector.shape_cast %758 : vector<12x10xbf16> to vector<1x1x12x10xbf16>
    tpu.vector_store %arg16[%c1_476, %c1_477, %c0_478, %c84_479], %761 {strides = array<i32>} : memref<2x2x12x256xbf16, #tpu.memory_space<vmem>>, vector<1x1x12x10xbf16>,
    %c252_480 = arith.constant 252 : index
    %c0_481 = arith.constant 0 : index
    %762 = vector.load %arg15[%c252_480, %c0_481] : memref<288x128xf32, #tpu.memory_space<vmem>>, vector<12x10xf32>
    %763 = vector.broadcast %128 : vector<1x10xf32> to vector<12x10xf32>
    %764 = arith.mulf %762, %763 : vector<12x10xf32>
    %765 = vector.broadcast %129 : vector<1x10xf32> to vector<12x10xf32>
    %766 = arith.addf %764, %765 : vector<12x10xf32>
    %767 = arith.truncf %766 : vector<12x10xf32> to vector<12x10xbf16>
    %c1_482 = arith.constant 1 : index
    %c1_483 = arith.constant 1 : index
    %c0_484 = arith.constant 0 : index
    %c148_485 = arith.constant 148 : index
    %768 = vector.load %arg16[%c1_482, %c1_483, %c0_484, %c148_485] : memref<2x2x12x256xbf16, #tpu.memory_space<vmem>>, vector<1x1x12x10xbf16>
    %769 = vector.shape_cast %768 : vector<1x1x12x10xbf16> to vector<12x10xbf16>
    %770 = vector.shape_cast %767 : vector<12x10xbf16> to vector<1x1x12x10xbf16>
    tpu.vector_store %arg16[%c1_482, %c1_483, %c0_484, %c148_485], %770 {strides = array<i32>} : memref<2x2x12x256xbf16, #tpu.memory_space<vmem>>, vector<1x1x12x10xbf16>,
    %c264_486 = arith.constant 264 : index
    %c0_487 = arith.constant 0 : index
    %771 = vector.load %arg15[%c264_486, %c0_487] : memref<288x128xf32, #tpu.memory_space<vmem>>, vector<12x10xf32>
    %772 = vector.broadcast %128 : vector<1x10xf32> to vector<12x10xf32>
    %773 = arith.mulf %771, %772 : vector<12x10xf32>
    %774 = vector.broadcast %129 : vector<1x10xf32> to vector<12x10xf32>
    %775 = arith.addf %773, %774 : vector<12x10xf32>
    %776 = arith.truncf %775 : vector<12x10xf32> to vector<12x10xbf16>
    %c1_488 = arith.constant 1 : index
    %c1_489 = arith.constant 1 : index
    %c0_490 = arith.constant 0 : index
    %c212_491 = arith.constant 212 : index
    %777 = vector.load %arg16[%c1_488, %c1_489, %c0_490, %c212_491] : memref<2x2x12x256xbf16, #tpu.memory_space<vmem>>, vector<1x1x12x10xbf16>
    %778 = vector.shape_cast %777 : vector<1x1x12x10xbf16> to vector<12x10xbf16>
    %779 = vector.shape_cast %776 : vector<12x10xbf16> to vector<1x1x12x10xbf16>
    tpu.vector_store %arg16[%c1_488, %c1_489, %c0_490, %c212_491], %779 {strides = array<i32>} : memref<2x2x12x256xbf16, #tpu.memory_space<vmem>>, vector<1x1x12x10xbf16>,
    %c168_492 = arith.constant 168 : index
    %c0_493 = arith.constant 0 : index
    %780 = vector.load %arg15[%c168_492, %c0_493] : memref<288x128xf32, #tpu.memory_space<vmem>>, vector<12x10xf32>
    %781 = vector.broadcast %128 : vector<1x10xf32> to vector<12x10xf32>
    %782 = arith.mulf %780, %781 : vector<12x10xf32>
    %783 = vector.broadcast %129 : vector<1x10xf32> to vector<12x10xf32>
    %784 = arith.addf %782, %783 : vector<12x10xf32>
    %785 = arith.truncf %784 : vector<12x10xf32> to vector<12x10xbf16>
    %c1_494 = arith.constant 1 : index
    %c1_495 = arith.constant 1 : index
    %c0_496 = arith.constant 0 : index
    %c30_497 = arith.constant 30 : index
    %786 = vector.load %arg16[%c1_494, %c1_495, %c0_496, %c30_497] : memref<2x2x12x256xbf16, #tpu.memory_space<vmem>>, vector<1x1x12x10xbf16>
    %787 = vector.shape_cast %786 : vector<1x1x12x10xbf16> to vector<12x10xbf16>
    %788 = vector.shape_cast %785 : vector<12x10xbf16> to vector<1x1x12x10xbf16>
    tpu.vector_store %arg16[%c1_494, %c1_495, %c0_496, %c30_497], %788 {strides = array<i32>} : memref<2x2x12x256xbf16, #tpu.memory_space<vmem>>, vector<1x1x12x10xbf16>,
    %c180_498 = arith.constant 180 : index
    %c0_499 = arith.constant 0 : index
    %789 = vector.load %arg15[%c180_498, %c0_499] : memref<288x128xf32, #tpu.memory_space<vmem>>, vector<12x10xf32>
    %790 = vector.broadcast %128 : vector<1x10xf32> to vector<12x10xf32>
    %791 = arith.mulf %789, %790 : vector<12x10xf32>
    %792 = vector.broadcast %129 : vector<1x10xf32> to vector<12x10xf32>
    %793 = arith.addf %791, %792 : vector<12x10xf32>
    %794 = arith.truncf %793 : vector<12x10xf32> to vector<12x10xbf16>
    %c1_500 = arith.constant 1 : index
    %c1_501 = arith.constant 1 : index
    %c0_502 = arith.constant 0 : index
    %c94_503 = arith.constant 94 : index
    %795 = vector.load %arg16[%c1_500, %c1_501, %c0_502, %c94_503] : memref<2x2x12x256xbf16, #tpu.memory_space<vmem>>, vector<1x1x12x10xbf16>
    %796 = vector.shape_cast %795 : vector<1x1x12x10xbf16> to vector<12x10xbf16>
    %797 = vector.shape_cast %794 : vector<12x10xbf16> to vector<1x1x12x10xbf16>
    tpu.vector_store %arg16[%c1_500, %c1_501, %c0_502, %c94_503], %797 {strides = array<i32>} : memref<2x2x12x256xbf16, #tpu.memory_space<vmem>>, vector<1x1x12x10xbf16>,
    %c192_504 = arith.constant 192 : index
    %c0_505 = arith.constant 0 : index
    %798 = vector.load %arg15[%c192_504, %c0_505] : memref<288x128xf32, #tpu.memory_space<vmem>>, vector<12x10xf32>
    %799 = vector.broadcast %128 : vector<1x10xf32> to vector<12x10xf32>
    %800 = arith.mulf %798, %799 : vector<12x10xf32>
    %801 = vector.broadcast %129 : vector<1x10xf32> to vector<12x10xf32>
    %802 = arith.addf %800, %801 : vector<12x10xf32>
    %803 = arith.truncf %802 : vector<12x10xf32> to vector<12x10xbf16>
    %c1_506 = arith.constant 1 : index
    %c1_507 = arith.constant 1 : index
    %c0_508 = arith.constant 0 : index
    %c158_509 = arith.constant 158 : index
    %804 = vector.load %arg16[%c1_506, %c1_507, %c0_508, %c158_509] : memref<2x2x12x256xbf16, #tpu.memory_space<vmem>>, vector<1x1x12x10xbf16>
    %805 = vector.shape_cast %804 : vector<1x1x12x10xbf16> to vector<12x10xbf16>
    %806 = vector.shape_cast %803 : vector<12x10xbf16> to vector<1x1x12x10xbf16>
    tpu.vector_store %arg16[%c1_506, %c1_507, %c0_508, %c158_509], %806 {strides = array<i32>} : memref<2x2x12x256xbf16, #tpu.memory_space<vmem>>, vector<1x1x12x10xbf16>,
    %c204_510 = arith.constant 204 : index
    %c0_511 = arith.constant 0 : index
    %807 = vector.load %arg15[%c204_510, %c0_511] : memref<288x128xf32, #tpu.memory_space<vmem>>, vector<12x10xf32>
    %808 = vector.broadcast %128 : vector<1x10xf32> to vector<12x10xf32>
    %809 = arith.mulf %807, %808 : vector<12x10xf32>
    %810 = vector.broadcast %129 : vector<1x10xf32> to vector<12x10xf32>
    %811 = arith.addf %809, %810 : vector<12x10xf32>
    %812 = arith.truncf %811 : vector<12x10xf32> to vector<12x10xbf16>
    %c1_512 = arith.constant 1 : index
    %c1_513 = arith.constant 1 : index
    %c0_514 = arith.constant 0 : index
    %c222_515 = arith.constant 222 : index
    %813 = vector.load %arg16[%c1_512, %c1_513, %c0_514, %c222_515] : memref<2x2x12x256xbf16, #tpu.memory_space<vmem>>, vector<1x1x12x10xbf16>
    %814 = vector.shape_cast %813 : vector<1x1x12x10xbf16> to vector<12x10xbf16>
    %815 = vector.shape_cast %812 : vector<12x10xbf16> to vector<1x1x12x10xbf16>
    tpu.vector_store %arg16[%c1_512, %c1_513, %c0_514, %c222_515], %815 {strides = array<i32>} : memref<2x2x12x256xbf16, #tpu.memory_space<vmem>>, vector<1x1x12x10xbf16>,
    %c240_516 = arith.constant 240 : index
    %c0_517 = arith.constant 0 : index
    %816 = vector.load %arg15[%c240_516, %c0_517] : memref<288x128xf32, #tpu.memory_space<vmem>>, vector<12x10xf32>
    %817 = vector.broadcast %128 : vector<1x10xf32> to vector<12x10xf32>
    %818 = arith.mulf %816, %817 : vector<12x10xf32>
    %819 = vector.broadcast %129 : vector<1x10xf32> to vector<12x10xf32>
    %820 = arith.addf %818, %819 : vector<12x10xf32>
    %821 = arith.truncf %820 : vector<12x10xf32> to vector<12x10xbf16>
    %c1_518 = arith.constant 1 : index
    %c1_519 = arith.constant 1 : index
    %c0_520 = arith.constant 0 : index
    %c40_521 = arith.constant 40 : index
    %822 = vector.load %arg16[%c1_518, %c1_519, %c0_520, %c40_521] : memref<2x2x12x256xbf16, #tpu.memory_space<vmem>>, vector<1x1x12x10xbf16>
    %823 = vector.shape_cast %822 : vector<1x1x12x10xbf16> to vector<12x10xbf16>
    %824 = vector.shape_cast %821 : vector<12x10xbf16> to vector<1x1x12x10xbf16>
    tpu.vector_store %arg16[%c1_518, %c1_519, %c0_520, %c40_521], %824 {strides = array<i32>} : memref<2x2x12x256xbf16, #tpu.memory_space<vmem>>, vector<1x1x12x10xbf16>,
    %c252_522 = arith.constant 252 : index
    %c0_523 = arith.constant 0 : index
    %825 = vector.load %arg15[%c252_522, %c0_523] : memref<288x128xf32, #tpu.memory_space<vmem>>, vector<12x10xf32>
    %826 = vector.broadcast %128 : vector<1x10xf32> to vector<12x10xf32>
    %827 = arith.mulf %825, %826 : vector<12x10xf32>
    %828 = vector.broadcast %129 : vector<1x10xf32> to vector<12x10xf32>
    %829 = arith.addf %827, %828 : vector<12x10xf32>
    %830 = arith.truncf %829 : vector<12x10xf32> to vector<12x10xbf16>
    %c1_524 = arith.constant 1 : index
    %c1_525 = arith.constant 1 : index
    %c0_526 = arith.constant 0 : index
    %c104_527 = arith.constant 104 : index
    %831 = vector.load %arg16[%c1_524, %c1_525, %c0_526, %c104_527] : memref<2x2x12x256xbf16, #tpu.memory_space<vmem>>, vector<1x1x12x10xbf16>
    %832 = vector.shape_cast %831 : vector<1x1x12x10xbf16> to vector<12x10xbf16>
    %833 = vector.shape_cast %830 : vector<12x10xbf16> to vector<1x1x12x10xbf16>
    tpu.vector_store %arg16[%c1_524, %c1_525, %c0_526, %c104_527], %833 {strides = array<i32>} : memref<2x2x12x256xbf16, #tpu.memory_space<vmem>>, vector<1x1x12x10xbf16>,
    %c264_528 = arith.constant 264 : index
    %c0_529 = arith.constant 0 : index
    %834 = vector.load %arg15[%c264_528, %c0_529] : memref<288x128xf32, #tpu.memory_space<vmem>>, vector<12x10xf32>
    %835 = vector.broadcast %128 : vector<1x10xf32> to vector<12x10xf32>
    %836 = arith.mulf %834, %835 : vector<12x10xf32>
    %837 = vector.broadcast %129 : vector<1x10xf32> to vector<12x10xf32>
    %838 = arith.addf %836, %837 : vector<12x10xf32>
    %839 = arith.truncf %838 : vector<12x10xf32> to vector<12x10xbf16>
    %c1_530 = arith.constant 1 : index
    %c1_531 = arith.constant 1 : index
    %c0_532 = arith.constant 0 : index
    %c168_533 = arith.constant 168 : index
    %840 = vector.load %arg16[%c1_530, %c1_531, %c0_532, %c168_533] : memref<2x2x12x256xbf16, #tpu.memory_space<vmem>>, vector<1x1x12x10xbf16>
    %841 = vector.shape_cast %840 : vector<1x1x12x10xbf16> to vector<12x10xbf16>
    %842 = vector.shape_cast %839 : vector<12x10xbf16> to vector<1x1x12x10xbf16>
    tpu.vector_store %arg16[%c1_530, %c1_531, %c0_532, %c168_533], %842 {strides = array<i32>} : memref<2x2x12x256xbf16, #tpu.memory_space<vmem>>, vector<1x1x12x10xbf16>,
    %c276 = arith.constant 276 : index
    %c0_534 = arith.constant 0 : index
    %843 = vector.load %arg15[%c276, %c0_534] : memref<288x128xf32, #tpu.memory_space<vmem>>, vector<12x10xf32>
    %844 = vector.broadcast %128 : vector<1x10xf32> to vector<12x10xf32>
    %845 = arith.mulf %843, %844 : vector<12x10xf32>
    %846 = vector.broadcast %129 : vector<1x10xf32> to vector<12x10xf32>
    %847 = arith.addf %845, %846 : vector<12x10xf32>
    %848 = arith.truncf %847 : vector<12x10xf32> to vector<12x10xbf16>
    %c1_535 = arith.constant 1 : index
    %c1_536 = arith.constant 1 : index
    %c0_537 = arith.constant 0 : index
    %c232_538 = arith.constant 232 : index
    %849 = vector.load %arg16[%c1_535, %c1_536, %c0_537, %c232_538] : memref<2x2x12x256xbf16, #tpu.memory_space<vmem>>, vector<1x1x12x10xbf16>
    %850 = vector.shape_cast %849 : vector<1x1x12x10xbf16> to vector<12x10xbf16>
    %851 = vector.shape_cast %848 : vector<12x10xbf16> to vector<1x1x12x10xbf16>
    tpu.vector_store %arg16[%c1_535, %c1_536, %c0_537, %c232_538], %851 {strides = array<i32>} : memref<2x2x12x256xbf16, #tpu.memory_space<vmem>>, vector<1x1x12x10xbf16>,
    %c0_539 = arith.constant 0 : index
    %c0_540 = arith.constant 0 : index
    %c0_541 = arith.constant 0 : index
    %c0_542 = arith.constant 0 : index
    %852 = vector.load %arg16[%c0_539, %c0_540, %c0_541, %c0_542] : memref<2x2x12x256xbf16, #tpu.memory_space<vmem>>, vector<1x1x8x256xbf16>
    %853 = vector.shape_cast %852 : vector<1x1x8x256xbf16> to vector<8x256xbf16>
    %c0_543 = arith.constant 0 : index
    %c0_544 = arith.constant 0 : index
    %c0_545 = arith.constant 0 : index
    %854 = vector.load %arg6[%c0_543, %c0_544, %c0_545] : memref<5x256x128xbf16, #tpu.memory_space<vmem>>, vector<1x256x128xbf16>
    %855 = vector.shape_cast %854 : vector<1x256x128xbf16> to vector<256x128xbf16>
    %cst_546 = arith.constant dense<0.000000e+00> : vector<8x128xf32>
    %856 = tpu.matmul %853, %855, %cst_546 {dimension_numbers = #tpu.dot_dimension_numbers<[1], [0], [0], [1], [0, 0, 1, 1], [], []>} : vector<8x256xbf16>, vector<256x128xbf16>, vector<8x128xf32> -> vector<8x128xf32>
    %c1_547 = arith.constant 1 : index
    %c0_548 = arith.constant 0 : index
    %c0_549 = arith.constant 0 : index
    %c0_550 = arith.constant 0 : index
    %857 = vector.load %arg16[%c1_547, %c0_548, %c0_549, %c0_550] : memref<2x2x12x256xbf16, #tpu.memory_space<vmem>>, vector<1x1x8x256xbf16>
    %858 = vector.shape_cast %857 : vector<1x1x8x256xbf16> to vector<8x256xbf16>
    %c1_551 = arith.constant 1 : index
    %c0_552 = arith.constant 0 : index
    %c0_553 = arith.constant 0 : index
    %859 = vector.load %arg6[%c1_551, %c0_552, %c0_553] : memref<5x256x128xbf16, #tpu.memory_space<vmem>>, vector<1x256x128xbf16>
    %860 = vector.shape_cast %859 : vector<1x256x128xbf16> to vector<256x128xbf16>
    %cst_554 = arith.constant dense<0.000000e+00> : vector<8x128xf32>
    %861 = tpu.matmul %858, %860, %cst_554 {dimension_numbers = #tpu.dot_dimension_numbers<[1], [0], [0], [1], [0, 0, 1, 1], [], []>} : vector<8x256xbf16>, vector<256x128xbf16>, vector<8x128xf32> -> vector<8x128xf32>
    %862 = arith.addf %856, %861 : vector<8x128xf32>
    %c0_555 = arith.constant 0 : index
    %c0_556 = arith.constant 0 : index
    %c2_557 = arith.constant 2 : index
    %c0_558 = arith.constant 0 : index
    %863 = vector.load %arg16[%c0_555, %c0_556, %c2_557, %c0_558] : memref<2x2x12x256xbf16, #tpu.memory_space<vmem>>, vector<1x1x8x256xbf16>
    %864 = vector.shape_cast %863 : vector<1x1x8x256xbf16> to vector<8x256xbf16>
    %c2_559 = arith.constant 2 : index
    %c0_560 = arith.constant 0 : index
    %c0_561 = arith.constant 0 : index
    %865 = vector.load %arg6[%c2_559, %c0_560, %c0_561] : memref<5x256x128xbf16, #tpu.memory_space<vmem>>, vector<1x256x128xbf16>
    %866 = vector.shape_cast %865 : vector<1x256x128xbf16> to vector<256x128xbf16>
    %cst_562 = arith.constant dense<0.000000e+00> : vector<8x128xf32>
    %867 = tpu.matmul %864, %866, %cst_562 {dimension_numbers = #tpu.dot_dimension_numbers<[1], [0], [0], [1], [0, 0, 1, 1], [], []>} : vector<8x256xbf16>, vector<256x128xbf16>, vector<8x128xf32> -> vector<8x128xf32>
    %868 = arith.addf %862, %867 : vector<8x128xf32>
    %c1_563 = arith.constant 1 : index
    %c0_564 = arith.constant 0 : index
    %c2_565 = arith.constant 2 : index
    %c0_566 = arith.constant 0 : index
    %869 = vector.load %arg16[%c1_563, %c0_564, %c2_565, %c0_566] : memref<2x2x12x256xbf16, #tpu.memory_space<vmem>>, vector<1x1x8x256xbf16>
    %870 = vector.shape_cast %869 : vector<1x1x8x256xbf16> to vector<8x256xbf16>
    %c3_567 = arith.constant 3 : index
    %c0_568 = arith.constant 0 : index
    %c0_569 = arith.constant 0 : index
    %871 = vector.load %arg6[%c3_567, %c0_568, %c0_569] : memref<5x256x128xbf16, #tpu.memory_space<vmem>>, vector<1x256x128xbf16>
    %872 = vector.shape_cast %871 : vector<1x256x128xbf16> to vector<256x128xbf16>
    %cst_570 = arith.constant dense<0.000000e+00> : vector<8x128xf32>
    %873 = tpu.matmul %870, %872, %cst_570 {dimension_numbers = #tpu.dot_dimension_numbers<[1], [0], [0], [1], [0, 0, 1, 1], [], []>} : vector<8x256xbf16>, vector<256x128xbf16>, vector<8x128xf32> -> vector<8x128xf32>
    %874 = arith.addf %868, %873 : vector<8x128xf32>
    %c0_571 = arith.constant 0 : index
    %c0_572 = arith.constant 0 : index
    %c4 = arith.constant 4 : index
    %c0_573 = arith.constant 0 : index
    %875 = vector.load %arg16[%c0_571, %c0_572, %c4, %c0_573] : memref<2x2x12x256xbf16, #tpu.memory_space<vmem>>, vector<1x1x8x256xbf16>
    %876 = vector.shape_cast %875 : vector<1x1x8x256xbf16> to vector<8x256xbf16>
    %c4_574 = arith.constant 4 : index
    %c0_575 = arith.constant 0 : index
    %c0_576 = arith.constant 0 : index
    %877 = vector.load %arg6[%c4_574, %c0_575, %c0_576] : memref<5x256x128xbf16, #tpu.memory_space<vmem>>, vector<1x256x128xbf16>
    %878 = vector.shape_cast %877 : vector<1x256x128xbf16> to vector<256x128xbf16>
    %cst_577 = arith.constant dense<0.000000e+00> : vector<8x128xf32>
    %879 = tpu.matmul %876, %878, %cst_577 {dimension_numbers = #tpu.dot_dimension_numbers<[1], [0], [0], [1], [0, 0, 1, 1], [], []>} : vector<8x256xbf16>, vector<256x128xbf16>, vector<8x128xf32> -> vector<8x128xf32>
    %880 = arith.addf %874, %879 : vector<8x128xf32>
    %c0_578 = arith.constant 0 : index
    %c1_579 = arith.constant 1 : index
    %c0_580 = arith.constant 0 : index
    %c0_581 = arith.constant 0 : index
    %881 = vector.load %arg16[%c0_578, %c1_579, %c0_580, %c0_581] : memref<2x2x12x256xbf16, #tpu.memory_space<vmem>>, vector<1x1x8x256xbf16>
    %882 = vector.shape_cast %881 : vector<1x1x8x256xbf16> to vector<8x256xbf16>
    %c0_582 = arith.constant 0 : index
    %c0_583 = arith.constant 0 : index
    %c0_584 = arith.constant 0 : index
    %883 = vector.load %arg6[%c0_582, %c0_583, %c0_584] : memref<5x256x128xbf16, #tpu.memory_space<vmem>>, vector<1x256x128xbf16>
    %884 = vector.shape_cast %883 : vector<1x256x128xbf16> to vector<256x128xbf16>
    %cst_585 = arith.constant dense<0.000000e+00> : vector<8x128xf32>
    %885 = tpu.matmul %882, %884, %cst_585 {dimension_numbers = #tpu.dot_dimension_numbers<[1], [0], [0], [1], [0, 0, 1, 1], [], []>} : vector<8x256xbf16>, vector<256x128xbf16>, vector<8x128xf32> -> vector<8x128xf32>
    %c1_586 = arith.constant 1 : index
    %c1_587 = arith.constant 1 : index
    %c0_588 = arith.constant 0 : index
    %c0_589 = arith.constant 0 : index
    %886 = vector.load %arg16[%c1_586, %c1_587, %c0_588, %c0_589] : memref<2x2x12x256xbf16, #tpu.memory_space<vmem>>, vector<1x1x8x256xbf16>
    %887 = vector.shape_cast %886 : vector<1x1x8x256xbf16> to vector<8x256xbf16>
    %c1_590 = arith.constant 1 : index
    %c0_591 = arith.constant 0 : index
    %c0_592 = arith.constant 0 : index
    %888 = vector.load %arg6[%c1_590, %c0_591, %c0_592] : memref<5x256x128xbf16, #tpu.memory_space<vmem>>, vector<1x256x128xbf16>
    %889 = vector.shape_cast %888 : vector<1x256x128xbf16> to vector<256x128xbf16>
    %cst_593 = arith.constant dense<0.000000e+00> : vector<8x128xf32>
    %890 = tpu.matmul %887, %889, %cst_593 {dimension_numbers = #tpu.dot_dimension_numbers<[1], [0], [0], [1], [0, 0, 1, 1], [], []>} : vector<8x256xbf16>, vector<256x128xbf16>, vector<8x128xf32> -> vector<8x128xf32>
    %891 = arith.addf %885, %890 : vector<8x128xf32>
    %c0_594 = arith.constant 0 : index
    %c1_595 = arith.constant 1 : index
    %c2_596 = arith.constant 2 : index
    %c0_597 = arith.constant 0 : index
    %892 = vector.load %arg16[%c0_594, %c1_595, %c2_596, %c0_597] : memref<2x2x12x256xbf16, #tpu.memory_space<vmem>>, vector<1x1x8x256xbf16>
    %893 = vector.shape_cast %892 : vector<1x1x8x256xbf16> to vector<8x256xbf16>
    %c2_598 = arith.constant 2 : index
    %c0_599 = arith.constant 0 : index
    %c0_600 = arith.constant 0 : index
    %894 = vector.load %arg6[%c2_598, %c0_599, %c0_600] : memref<5x256x128xbf16, #tpu.memory_space<vmem>>, vector<1x256x128xbf16>
    %895 = vector.shape_cast %894 : vector<1x256x128xbf16> to vector<256x128xbf16>
    %cst_601 = arith.constant dense<0.000000e+00> : vector<8x128xf32>
    %896 = tpu.matmul %893, %895, %cst_601 {dimension_numbers = #tpu.dot_dimension_numbers<[1], [0], [0], [1], [0, 0, 1, 1], [], []>} : vector<8x256xbf16>, vector<256x128xbf16>, vector<8x128xf32> -> vector<8x128xf32>
    %897 = arith.addf %891, %896 : vector<8x128xf32>
    %c1_602 = arith.constant 1 : index
    %c1_603 = arith.constant 1 : index
    %c2_604 = arith.constant 2 : index
    %c0_605 = arith.constant 0 : index
    %898 = vector.load %arg16[%c1_602, %c1_603, %c2_604, %c0_605] : memref<2x2x12x256xbf16, #tpu.memory_space<vmem>>, vector<1x1x8x256xbf16>
    %899 = vector.shape_cast %898 : vector<1x1x8x256xbf16> to vector<8x256xbf16>
    %c3_606 = arith.constant 3 : index
    %c0_607 = arith.constant 0 : index
    %c0_608 = arith.constant 0 : index
    %900 = vector.load %arg6[%c3_606, %c0_607, %c0_608] : memref<5x256x128xbf16, #tpu.memory_space<vmem>>, vector<1x256x128xbf16>
    %901 = vector.shape_cast %900 : vector<1x256x128xbf16> to vector<256x128xbf16>
    %cst_609 = arith.constant dense<0.000000e+00> : vector<8x128xf32>
    %902 = tpu.matmul %899, %901, %cst_609 {dimension_numbers = #tpu.dot_dimension_numbers<[1], [0], [0], [1], [0, 0, 1, 1], [], []>} : vector<8x256xbf16>, vector<256x128xbf16>, vector<8x128xf32> -> vector<8x128xf32>
    %903 = arith.addf %897, %902 : vector<8x128xf32>
    %c0_610 = arith.constant 0 : index
    %c1_611 = arith.constant 1 : index
    %c4_612 = arith.constant 4 : index
    %c0_613 = arith.constant 0 : index
    %904 = vector.load %arg16[%c0_610, %c1_611, %c4_612, %c0_613] : memref<2x2x12x256xbf16, #tpu.memory_space<vmem>>, vector<1x1x8x256xbf16>
    %905 = vector.shape_cast %904 : vector<1x1x8x256xbf16> to vector<8x256xbf16>
    %c4_614 = arith.constant 4 : index
    %c0_615 = arith.constant 0 : index
    %c0_616 = arith.constant 0 : index
    %906 = vector.load %arg6[%c4_614, %c0_615, %c0_616] : memref<5x256x128xbf16, #tpu.memory_space<vmem>>, vector<1x256x128xbf16>
    %907 = vector.shape_cast %906 : vector<1x256x128xbf16> to vector<256x128xbf16>
    %cst_617 = arith.constant dense<0.000000e+00> : vector<8x128xf32>
    %908 = tpu.matmul %905, %907, %cst_617 {dimension_numbers = #tpu.dot_dimension_numbers<[1], [0], [0], [1], [0, 0, 1, 1], [], []>} : vector<8x256xbf16>, vector<256x128xbf16>, vector<8x128xf32> -> vector<8x128xf32>
    %909 = arith.addf %903, %908 : vector<8x128xf32>
    %910 = arith.maximumf %880, %909 : vector<8x128xf32>
    %c1_618 = arith.constant 1 : index
    %c0_619 = arith.constant 0 : index
    %c0_620 = arith.constant 0 : index
    %c0_621 = arith.constant 0 : index
    %911 = vector.load %arg16[%c1_618, %c0_619, %c0_620, %c0_621] : memref<2x2x12x256xbf16, #tpu.memory_space<vmem>>, vector<1x1x8x256xbf16>
    %912 = vector.shape_cast %911 : vector<1x1x8x256xbf16> to vector<8x256xbf16>
    %c0_622 = arith.constant 0 : index
    %c0_623 = arith.constant 0 : index
    %c0_624 = arith.constant 0 : index
    %913 = vector.load %arg6[%c0_622, %c0_623, %c0_624] : memref<5x256x128xbf16, #tpu.memory_space<vmem>>, vector<1x256x128xbf16>
    %914 = vector.shape_cast %913 : vector<1x256x128xbf16> to vector<256x128xbf16>
    %cst_625 = arith.constant dense<0.000000e+00> : vector<8x128xf32>
    %915 = tpu.matmul %912, %914, %cst_625 {dimension_numbers = #tpu.dot_dimension_numbers<[1], [0], [0], [1], [0, 0, 1, 1], [], []>} : vector<8x256xbf16>, vector<256x128xbf16>, vector<8x128xf32> -> vector<8x128xf32>
    %c0_626 = arith.constant 0 : index
    %c0_627 = arith.constant 0 : index
    %c2_628 = arith.constant 2 : index
    %c0_629 = arith.constant 0 : index
    %916 = vector.load %arg16[%c0_626, %c0_627, %c2_628, %c0_629] : memref<2x2x12x256xbf16, #tpu.memory_space<vmem>>, vector<1x1x8x256xbf16>
    %917 = vector.shape_cast %916 : vector<1x1x8x256xbf16> to vector<8x256xbf16>
    %c1_630 = arith.constant 1 : index
    %c0_631 = arith.constant 0 : index
    %c0_632 = arith.constant 0 : index
    %918 = vector.load %arg6[%c1_630, %c0_631, %c0_632] : memref<5x256x128xbf16, #tpu.memory_space<vmem>>, vector<1x256x128xbf16>
    %919 = vector.shape_cast %918 : vector<1x256x128xbf16> to vector<256x128xbf16>
    %cst_633 = arith.constant dense<0.000000e+00> : vector<8x128xf32>
    %920 = tpu.matmul %917, %919, %cst_633 {dimension_numbers = #tpu.dot_dimension_numbers<[1], [0], [0], [1], [0, 0, 1, 1], [], []>} : vector<8x256xbf16>, vector<256x128xbf16>, vector<8x128xf32> -> vector<8x128xf32>
    %921 = arith.addf %915, %920 : vector<8x128xf32>
    %c1_634 = arith.constant 1 : index
    %c0_635 = arith.constant 0 : index
    %c2_636 = arith.constant 2 : index
    %c0_637 = arith.constant 0 : index
    %922 = vector.load %arg16[%c1_634, %c0_635, %c2_636, %c0_637] : memref<2x2x12x256xbf16, #tpu.memory_space<vmem>>, vector<1x1x8x256xbf16>
    %923 = vector.shape_cast %922 : vector<1x1x8x256xbf16> to vector<8x256xbf16>
    %c2_638 = arith.constant 2 : index
    %c0_639 = arith.constant 0 : index
    %c0_640 = arith.constant 0 : index
    %924 = vector.load %arg6[%c2_638, %c0_639, %c0_640] : memref<5x256x128xbf16, #tpu.memory_space<vmem>>, vector<1x256x128xbf16>
    %925 = vector.shape_cast %924 : vector<1x256x128xbf16> to vector<256x128xbf16>
    %cst_641 = arith.constant dense<0.000000e+00> : vector<8x128xf32>
    %926 = tpu.matmul %923, %925, %cst_641 {dimension_numbers = #tpu.dot_dimension_numbers<[1], [0], [0], [1], [0, 0, 1, 1], [], []>} : vector<8x256xbf16>, vector<256x128xbf16>, vector<8x128xf32> -> vector<8x128xf32>
    %927 = arith.addf %921, %926 : vector<8x128xf32>
    %c0_642 = arith.constant 0 : index
    %c0_643 = arith.constant 0 : index
    %c4_644 = arith.constant 4 : index
    %c0_645 = arith.constant 0 : index
    %928 = vector.load %arg16[%c0_642, %c0_643, %c4_644, %c0_645] : memref<2x2x12x256xbf16, #tpu.memory_space<vmem>>, vector<1x1x8x256xbf16>
    %929 = vector.shape_cast %928 : vector<1x1x8x256xbf16> to vector<8x256xbf16>
    %c3_646 = arith.constant 3 : index
    %c0_647 = arith.constant 0 : index
    %c0_648 = arith.constant 0 : index
    %930 = vector.load %arg6[%c3_646, %c0_647, %c0_648] : memref<5x256x128xbf16, #tpu.memory_space<vmem>>, vector<1x256x128xbf16>
    %931 = vector.shape_cast %930 : vector<1x256x128xbf16> to vector<256x128xbf16>
    %cst_649 = arith.constant dense<0.000000e+00> : vector<8x128xf32>
    %932 = tpu.matmul %929, %931, %cst_649 {dimension_numbers = #tpu.dot_dimension_numbers<[1], [0], [0], [1], [0, 0, 1, 1], [], []>} : vector<8x256xbf16>, vector<256x128xbf16>, vector<8x128xf32> -> vector<8x128xf32>
    %933 = arith.addf %927, %932 : vector<8x128xf32>
    %c1_650 = arith.constant 1 : index
    %c0_651 = arith.constant 0 : index
    %c4_652 = arith.constant 4 : index
    %c0_653 = arith.constant 0 : index
    %934 = vector.load %arg16[%c1_650, %c0_651, %c4_652, %c0_653] : memref<2x2x12x256xbf16, #tpu.memory_space<vmem>>, vector<1x1x8x256xbf16>
    %935 = vector.shape_cast %934 : vector<1x1x8x256xbf16> to vector<8x256xbf16>
    %c4_654 = arith.constant 4 : index
    %c0_655 = arith.constant 0 : index
    %c0_656 = arith.constant 0 : index
    %936 = vector.load %arg6[%c4_654, %c0_655, %c0_656] : memref<5x256x128xbf16, #tpu.memory_space<vmem>>, vector<1x256x128xbf16>
    %937 = vector.shape_cast %936 : vector<1x256x128xbf16> to vector<256x128xbf16>
    %cst_657 = arith.constant dense<0.000000e+00> : vector<8x128xf32>
    %938 = tpu.matmul %935, %937, %cst_657 {dimension_numbers = #tpu.dot_dimension_numbers<[1], [0], [0], [1], [0, 0, 1, 1], [], []>} : vector<8x256xbf16>, vector<256x128xbf16>, vector<8x128xf32> -> vector<8x128xf32>
    %939 = arith.addf %933, %938 : vector<8x128xf32>
    %940 = arith.maximumf %910, %939 : vector<8x128xf32>
    %c1_658 = arith.constant 1 : index
    %c1_659 = arith.constant 1 : index
    %c0_660 = arith.constant 0 : index
    %c0_661 = arith.constant 0 : index
    %941 = vector.load %arg16[%c1_658, %c1_659, %c0_660, %c0_661] : memref<2x2x12x256xbf16, #tpu.memory_space<vmem>>, vector<1x1x8x256xbf16>
    %942 = vector.shape_cast %941 : vector<1x1x8x256xbf16> to vector<8x256xbf16>
    %c0_662 = arith.constant 0 : index
    %c0_663 = arith.constant 0 : index
    %c0_664 = arith.constant 0 : index
    %943 = vector.load %arg6[%c0_662, %c0_663, %c0_664] : memref<5x256x128xbf16, #tpu.memory_space<vmem>>, vector<1x256x128xbf16>
    %944 = vector.shape_cast %943 : vector<1x256x128xbf16> to vector<256x128xbf16>
    %cst_665 = arith.constant dense<0.000000e+00> : vector<8x128xf32>
    %945 = tpu.matmul %942, %944, %cst_665 {dimension_numbers = #tpu.dot_dimension_numbers<[1], [0], [0], [1], [0, 0, 1, 1], [], []>} : vector<8x256xbf16>, vector<256x128xbf16>, vector<8x128xf32> -> vector<8x128xf32>
    %c0_666 = arith.constant 0 : index
    %c1_667 = arith.constant 1 : index
    %c2_668 = arith.constant 2 : index
    %c0_669 = arith.constant 0 : index
    %946 = vector.load %arg16[%c0_666, %c1_667, %c2_668, %c0_669] : memref<2x2x12x256xbf16, #tpu.memory_space<vmem>>, vector<1x1x8x256xbf16>
    %947 = vector.shape_cast %946 : vector<1x1x8x256xbf16> to vector<8x256xbf16>
    %c1_670 = arith.constant 1 : index
    %c0_671 = arith.constant 0 : index
    %c0_672 = arith.constant 0 : index
    %948 = vector.load %arg6[%c1_670, %c0_671, %c0_672] : memref<5x256x128xbf16, #tpu.memory_space<vmem>>, vector<1x256x128xbf16>
    %949 = vector.shape_cast %948 : vector<1x256x128xbf16> to vector<256x128xbf16>
    %cst_673 = arith.constant dense<0.000000e+00> : vector<8x128xf32>
    %950 = tpu.matmul %947, %949, %cst_673 {dimension_numbers = #tpu.dot_dimension_numbers<[1], [0], [0], [1], [0, 0, 1, 1], [], []>} : vector<8x256xbf16>, vector<256x128xbf16>, vector<8x128xf32> -> vector<8x128xf32>
    %951 = arith.addf %945, %950 : vector<8x128xf32>
    %c1_674 = arith.constant 1 : index
    %c1_675 = arith.constant 1 : index
    %c2_676 = arith.constant 2 : index
    %c0_677 = arith.constant 0 : index
    %952 = vector.load %arg16[%c1_674, %c1_675, %c2_676, %c0_677] : memref<2x2x12x256xbf16, #tpu.memory_space<vmem>>, vector<1x1x8x256xbf16>
    %953 = vector.shape_cast %952 : vector<1x1x8x256xbf16> to vector<8x256xbf16>
    %c2_678 = arith.constant 2 : index
    %c0_679 = arith.constant 0 : index
    %c0_680 = arith.constant 0 : index
    %954 = vector.load %arg6[%c2_678, %c0_679, %c0_680] : memref<5x256x128xbf16, #tpu.memory_space<vmem>>, vector<1x256x128xbf16>
    %955 = vector.shape_cast %954 : vector<1x256x128xbf16> to vector<256x128xbf16>
    %cst_681 = arith.constant dense<0.000000e+00> : vector<8x128xf32>
    %956 = tpu.matmul %953, %955, %cst_681 {dimension_numbers = #tpu.dot_dimension_numbers<[1], [0], [0], [1], [0, 0, 1, 1], [], []>} : vector<8x256xbf16>, vector<256x128xbf16>, vector<8x128xf32> -> vector<8x128xf32>
    %957 = arith.addf %951, %956 : vector<8x128xf32>
    %c0_682 = arith.constant 0 : index
    %c1_683 = arith.constant 1 : index
    %c4_684 = arith.constant 4 : index
    %c0_685 = arith.constant 0 : index
    %958 = vector.load %arg16[%c0_682, %c1_683, %c4_684, %c0_685] : memref<2x2x12x256xbf16, #tpu.memory_space<vmem>>, vector<1x1x8x256xbf16>
    %959 = vector.shape_cast %958 : vector<1x1x8x256xbf16> to vector<8x256xbf16>
    %c3_686 = arith.constant 3 : index
    %c0_687 = arith.constant 0 : index
    %c0_688 = arith.constant 0 : index
    %960 = vector.load %arg6[%c3_686, %c0_687, %c0_688] : memref<5x256x128xbf16, #tpu.memory_space<vmem>>, vector<1x256x128xbf16>
    %961 = vector.shape_cast %960 : vector<1x256x128xbf16> to vector<256x128xbf16>
    %cst_689 = arith.constant dense<0.000000e+00> : vector<8x128xf32>
    %962 = tpu.matmul %959, %961, %cst_689 {dimension_numbers = #tpu.dot_dimension_numbers<[1], [0], [0], [1], [0, 0, 1, 1], [], []>} : vector<8x256xbf16>, vector<256x128xbf16>, vector<8x128xf32> -> vector<8x128xf32>
    %963 = arith.addf %957, %962 : vector<8x128xf32>
    %c1_690 = arith.constant 1 : index
    %c1_691 = arith.constant 1 : index
    %c4_692 = arith.constant 4 : index
    %c0_693 = arith.constant 0 : index
    %964 = vector.load %arg16[%c1_690, %c1_691, %c4_692, %c0_693] : memref<2x2x12x256xbf16, #tpu.memory_space<vmem>>, vector<1x1x8x256xbf16>
    %965 = vector.shape_cast %964 : vector<1x1x8x256xbf16> to vector<8x256xbf16>
    %c4_694 = arith.constant 4 : index
    %c0_695 = arith.constant 0 : index
    %c0_696 = arith.constant 0 : index
    %966 = vector.load %arg6[%c4_694, %c0_695, %c0_696] : memref<5x256x128xbf16, #tpu.memory_space<vmem>>, vector<1x256x128xbf16>
    %967 = vector.shape_cast %966 : vector<1x256x128xbf16> to vector<256x128xbf16>
    %cst_697 = arith.constant dense<0.000000e+00> : vector<8x128xf32>
    %968 = tpu.matmul %965, %967, %cst_697 {dimension_numbers = #tpu.dot_dimension_numbers<[1], [0], [0], [1], [0, 0, 1, 1], [], []>} : vector<8x256xbf16>, vector<256x128xbf16>, vector<8x128xf32> -> vector<8x128xf32>
    %969 = arith.addf %963, %968 : vector<8x128xf32>
    %970 = arith.maximumf %940, %969 : vector<8x128xf32>
    %c0_698 = arith.constant 0 : index
    %c0_699 = arith.constant 0 : index
    %971 = vector.load %arg7[%c0_698, %c0_699] : memref<1x128xf32, #tpu.memory_space<vmem>>, vector<1x128xf32>
    %972 = vector.broadcast %971 : vector<1x128xf32> to vector<8x128xf32>
    %973 = arith.addf %970, %972 : vector<8x128xf32>
    %cst_700 = arith.constant 0.000000e+00 : f32
    %974 = vector.broadcast %cst_700 : f32 to vector<8x128xf32>
    %975 = arith.maximumf %973, %974 : vector<8x128xf32>
    %cst_701 = arith.constant dense<0.000000e+00> : vector<128xf32>
    %976 = vector.multi_reduction <add>, %975, %cst_701 [0] : vector<8x128xf32> to vector<128xf32>
    %977 = vector.shape_cast %976 : vector<128xf32> to vector<1x128xf32>
    %978 = arith.mulf %975, %975 : vector<8x128xf32>
    %cst_702 = arith.constant dense<0.000000e+00> : vector<128xf32>
    %979 = vector.multi_reduction <add>, %978, %cst_702 [0] : vector<8x128xf32> to vector<128xf32>
    %980 = vector.shape_cast %979 : vector<128xf32> to vector<1x128xf32>
    %981 = vector.extract_strided_slice %977 {offsets = [0, 0], sizes = [1, 32], strides = [1, 1]} : vector<1x128xf32> to vector<1x32xf32>
    %982 = vector.extract_strided_slice %977 {offsets = [0, 32], sizes = [1, 32], strides = [1, 1]} : vector<1x128xf32> to vector<1x32xf32>
    %983 = arith.addf %981, %982 : vector<1x32xf32>
    %984 = vector.extract_strided_slice %977 {offsets = [0, 64], sizes = [1, 32], strides = [1, 1]} : vector<1x128xf32> to vector<1x32xf32>
    %985 = arith.addf %983, %984 : vector<1x32xf32>
    %986 = vector.extract_strided_slice %977 {offsets = [0, 96], sizes = [1, 32], strides = [1, 1]} : vector<1x128xf32> to vector<1x32xf32>
    %987 = arith.addf %985, %986 : vector<1x32xf32>
    %cst_703 = arith.constant 3.200000e+01 : f32
    %988 = vector.broadcast %cst_703 : f32 to vector<1x32xf32>
    %989 = arith.divf %987, %988 : vector<1x32xf32>
    %990 = vector.extract_strided_slice %980 {offsets = [0, 0], sizes = [1, 32], strides = [1, 1]} : vector<1x128xf32> to vector<1x32xf32>
    %991 = vector.extract_strided_slice %980 {offsets = [0, 32], sizes = [1, 32], strides = [1, 1]} : vector<1x128xf32> to vector<1x32xf32>
    %992 = arith.addf %990, %991 : vector<1x32xf32>
    %993 = vector.extract_strided_slice %980 {offsets = [0, 64], sizes = [1, 32], strides = [1, 1]} : vector<1x128xf32> to vector<1x32xf32>
    %994 = arith.addf %992, %993 : vector<1x32xf32>
    %995 = vector.extract_strided_slice %980 {offsets = [0, 96], sizes = [1, 32], strides = [1, 1]} : vector<1x128xf32> to vector<1x32xf32>
    %996 = arith.addf %994, %995 : vector<1x32xf32>
    %cst_704 = arith.constant 3.200000e+01 : f32
    %997 = vector.broadcast %cst_704 : f32 to vector<1x32xf32>
    %998 = arith.divf %996, %997 : vector<1x32xf32>
    %999 = arith.mulf %989, %989 : vector<1x32xf32>
    %1000 = arith.subf %998, %999 : vector<1x32xf32>
    %cst_705 = arith.constant 0.000000e+00 : f32
    %1001 = vector.broadcast %cst_705 : f32 to vector<1x32xf32>
    %1002 = arith.maximumf %1000, %1001 : vector<1x32xf32>
    %c0_706 = arith.constant 0 : index
    %c0_707 = arith.constant 0 : index
    %1003 = vector.load %arg8[%c0_706, %c0_707] : memref<1x128xf32, #tpu.memory_space<vmem>>, vector<1x32xf32>
    %cst_708 = arith.constant 9.99999974E-6 : f32
    %1004 = vector.broadcast %cst_708 : f32 to vector<1x32xf32>
    %1005 = arith.addf %1002, %1004 : vector<1x32xf32>
    %1006 = math.rsqrt %1005 : vector<1x32xf32>
    %1007 = arith.mulf %1003, %1006 : vector<1x32xf32>
    %c0_709 = arith.constant 0 : index
    %c0_710 = arith.constant 0 : index
    %1008 = vector.load %arg9[%c0_709, %c0_710] : memref<1x128xf32, #tpu.memory_space<vmem>>, vector<1x32xf32>
    %1009 = arith.mulf %989, %1007 : vector<1x32xf32>
    %1010 = arith.subf %1008, %1009 : vector<1x32xf32>
    %1011 = vector.extract_strided_slice %975 {offsets = [0, 0], sizes = [8, 32], strides = [1, 1]} : vector<8x128xf32> to vector<8x32xf32>
    %1012 = vector.broadcast %1007 : vector<1x32xf32> to vector<8x32xf32>
    %1013 = arith.mulf %1011, %1012 : vector<8x32xf32>
    %1014 = vector.broadcast %1010 : vector<1x32xf32> to vector<8x32xf32>
    %1015 = arith.addf %1013, %1014 : vector<8x32xf32>
    %c0_711 = arith.constant 0 : index
    %c0_712 = arith.constant 0 : index
    %1016 = vector.load %arg17[%c0_711, %c0_712] : memref<8x128xf32, #tpu.memory_space<vmem>>, vector<8x32xf32>
    tpu.vector_store %arg17[%c0_711, %c0_712], %1015 {strides = array<i32>} : memref<8x128xf32, #tpu.memory_space<vmem>>, vector<8x32xf32>,
    %1017 = vector.extract_strided_slice %975 {offsets = [0, 32], sizes = [8, 32], strides = [1, 1]} : vector<8x128xf32> to vector<8x32xf32>
    %1018 = vector.broadcast %1007 : vector<1x32xf32> to vector<8x32xf32>
    %1019 = arith.mulf %1017, %1018 : vector<8x32xf32>
    %1020 = vector.broadcast %1010 : vector<1x32xf32> to vector<8x32xf32>
    %1021 = arith.addf %1019, %1020 : vector<8x32xf32>
    %c0_713 = arith.constant 0 : index
    %c32 = arith.constant 32 : index
    %1022 = vector.load %arg17[%c0_713, %c32] : memref<8x128xf32, #tpu.memory_space<vmem>>, vector<8x32xf32>
    tpu.vector_store %arg17[%c0_713, %c32], %1021 {strides = array<i32>} : memref<8x128xf32, #tpu.memory_space<vmem>>, vector<8x32xf32>,
    %1023 = vector.extract_strided_slice %975 {offsets = [0, 64], sizes = [8, 32], strides = [1, 1]} : vector<8x128xf32> to vector<8x32xf32>
    %1024 = vector.broadcast %1007 : vector<1x32xf32> to vector<8x32xf32>
    %1025 = arith.mulf %1023, %1024 : vector<8x32xf32>
    %1026 = vector.broadcast %1010 : vector<1x32xf32> to vector<8x32xf32>
    %1027 = arith.addf %1025, %1026 : vector<8x32xf32>
    %c0_714 = arith.constant 0 : index
    %c64_715 = arith.constant 64 : index
    %1028 = vector.load %arg17[%c0_714, %c64_715] : memref<8x128xf32, #tpu.memory_space<vmem>>, vector<8x32xf32>
    tpu.vector_store %arg17[%c0_714, %c64_715], %1027 {strides = array<i32>} : memref<8x128xf32, #tpu.memory_space<vmem>>, vector<8x32xf32>,
    %1029 = vector.extract_strided_slice %975 {offsets = [0, 96], sizes = [8, 32], strides = [1, 1]} : vector<8x128xf32> to vector<8x32xf32>
    %1030 = vector.broadcast %1007 : vector<1x32xf32> to vector<8x32xf32>
    %1031 = arith.mulf %1029, %1030 : vector<8x32xf32>
    %1032 = vector.broadcast %1010 : vector<1x32xf32> to vector<8x32xf32>
    %1033 = arith.addf %1031, %1032 : vector<8x32xf32>
    %c0_716 = arith.constant 0 : index
    %c96_717 = arith.constant 96 : index
    %1034 = vector.load %arg17[%c0_716, %c96_717] : memref<8x128xf32, #tpu.memory_space<vmem>>, vector<8x32xf32>
    tpu.vector_store %arg17[%c0_716, %c96_717], %1033 {strides = array<i32>} : memref<8x128xf32, #tpu.memory_space<vmem>>, vector<8x32xf32>,
    %c0_718 = arith.constant 0 : index
    %c0_719 = arith.constant 0 : index
    %1035 = vector.load %arg17[%c0_718, %c0_719] : memref<8x128xf32, #tpu.memory_space<vmem>>, vector<2x128xf32>
    %1036 = arith.truncf %1035 : vector<2x128xf32> to vector<2x128xbf16>
    %c0_720 = arith.constant 0 : index
    %c0_721 = arith.constant 0 : index
    %c0_722 = arith.constant 0 : index
    %1037 = vector.load %arg10[%c0_720, %c0_721, %c0_722] : memref<4x128x128xbf16, #tpu.memory_space<vmem>>, vector<1x128x128xbf16>
    %1038 = vector.shape_cast %1037 : vector<1x128x128xbf16> to vector<128x128xbf16>
    %cst_723 = arith.constant dense<0.000000e+00> : vector<2x128xf32>
    %1039 = tpu.matmul %1036, %1038, %cst_723 {dimension_numbers = #tpu.dot_dimension_numbers<[1], [0], [0], [1], [0, 0, 1, 1], [], []>} : vector<2x128xbf16>, vector<128x128xbf16>, vector<2x128xf32> -> vector<2x128xf32>
    %c2_724 = arith.constant 2 : index
    %c0_725 = arith.constant 0 : index
    %1040 = vector.load %arg17[%c2_724, %c0_725] : memref<8x128xf32, #tpu.memory_space<vmem>>, vector<2x128xf32>
    %1041 = arith.truncf %1040 : vector<2x128xf32> to vector<2x128xbf16>
    %c1_726 = arith.constant 1 : index
    %c0_727 = arith.constant 0 : index
    %c0_728 = arith.constant 0 : index
    %1042 = vector.load %arg10[%c1_726, %c0_727, %c0_728] : memref<4x128x128xbf16, #tpu.memory_space<vmem>>, vector<1x128x128xbf16>
    %1043 = vector.shape_cast %1042 : vector<1x128x128xbf16> to vector<128x128xbf16>
    %cst_729 = arith.constant dense<0.000000e+00> : vector<2x128xf32>
    %1044 = tpu.matmul %1041, %1043, %cst_729 {dimension_numbers = #tpu.dot_dimension_numbers<[1], [0], [0], [1], [0, 0, 1, 1], [], []>} : vector<2x128xbf16>, vector<128x128xbf16>, vector<2x128xf32> -> vector<2x128xf32>
    %1045 = arith.addf %1039, %1044 : vector<2x128xf32>
    %c4_730 = arith.constant 4 : index
    %c0_731 = arith.constant 0 : index
    %1046 = vector.load %arg17[%c4_730, %c0_731] : memref<8x128xf32, #tpu.memory_space<vmem>>, vector<2x128xf32>
    %1047 = arith.truncf %1046 : vector<2x128xf32> to vector<2x128xbf16>
    %c2_732 = arith.constant 2 : index
    %c0_733 = arith.constant 0 : index
    %c0_734 = arith.constant 0 : index
    %1048 = vector.load %arg10[%c2_732, %c0_733, %c0_734] : memref<4x128x128xbf16, #tpu.memory_space<vmem>>, vector<1x128x128xbf16>
    %1049 = vector.shape_cast %1048 : vector<1x128x128xbf16> to vector<128x128xbf16>
    %cst_735 = arith.constant dense<0.000000e+00> : vector<2x128xf32>
    %1050 = tpu.matmul %1047, %1049, %cst_735 {dimension_numbers = #tpu.dot_dimension_numbers<[1], [0], [0], [1], [0, 0, 1, 1], [], []>} : vector<2x128xbf16>, vector<128x128xbf16>, vector<2x128xf32> -> vector<2x128xf32>
    %1051 = arith.addf %1045, %1050 : vector<2x128xf32>
    %c6 = arith.constant 6 : index
    %c0_736 = arith.constant 0 : index
    %1052 = vector.load %arg17[%c6, %c0_736] : memref<8x128xf32, #tpu.memory_space<vmem>>, vector<2x128xf32>
    %1053 = arith.truncf %1052 : vector<2x128xf32> to vector<2x128xbf16>
    %c3_737 = arith.constant 3 : index
    %c0_738 = arith.constant 0 : index
    %c0_739 = arith.constant 0 : index
    %1054 = vector.load %arg10[%c3_737, %c0_738, %c0_739] : memref<4x128x128xbf16, #tpu.memory_space<vmem>>, vector<1x128x128xbf16>
    %1055 = vector.shape_cast %1054 : vector<1x128x128xbf16> to vector<128x128xbf16>
    %cst_740 = arith.constant dense<0.000000e+00> : vector<2x128xf32>
    %1056 = tpu.matmul %1053, %1055, %cst_740 {dimension_numbers = #tpu.dot_dimension_numbers<[1], [0], [0], [1], [0, 0, 1, 1], [], []>} : vector<2x128xbf16>, vector<128x128xbf16>, vector<2x128xf32> -> vector<2x128xf32>
    %1057 = arith.addf %1051, %1056 : vector<2x128xf32>
    %c0_741 = arith.constant 0 : index
    %c0_742 = arith.constant 0 : index
    %1058 = vector.load %arg11[%c0_741, %c0_742] : memref<1x128xf32, #tpu.memory_space<vmem>>, vector<1x128xf32>
    %1059 = vector.broadcast %1058 : vector<1x128xf32> to vector<2x128xf32>
    %1060 = arith.addf %1057, %1059 : vector<2x128xf32>
    %cst_743 = arith.constant 0.000000e+00 : f32
    %1061 = vector.broadcast %cst_743 : f32 to vector<2x128xf32>
    %1062 = arith.maximumf %1060, %1061 : vector<2x128xf32>
    %1063 = arith.truncf %1062 : vector<2x128xf32> to vector<2x128xbf16>
    %c0_744 = arith.constant 0 : index
    %c0_745 = arith.constant 0 : index
    %1064 = vector.load %arg12[%c0_744, %c0_745] : memref<128x128xbf16, #tpu.memory_space<vmem>>, vector<128x128xbf16>
    %cst_746 = arith.constant dense<0.000000e+00> : vector<2x128xf32>
    %1065 = tpu.matmul %1063, %1064, %cst_746 {dimension_numbers = #tpu.dot_dimension_numbers<[1], [0], [0], [1], [0, 0, 1, 1], [], []>} : vector<2x128xbf16>, vector<128x128xbf16>, vector<2x128xf32> -> vector<2x128xf32>
    %c0_747 = arith.constant 0 : index
    %c0_748 = arith.constant 0 : index
    %1066 = vector.load %arg13[%c0_747, %c0_748] : memref<1x128xf32, #tpu.memory_space<vmem>>, vector<1x128xf32>
    %1067 = vector.broadcast %1066 : vector<1x128xf32> to vector<2x128xf32>
    %1068 = arith.addf %1065, %1067 : vector<2x128xf32>
    %1069 = tpu.iota {dimensions = array<i32: 1>} : vector<2x128xi32>
    %c10_i32 = arith.constant 10 : i32
    %1070 = vector.broadcast %c10_i32 : i32 to vector<2x128xi32>
    %1071 = arith.cmpi slt, %1069, %1070 : vector<2x128xi32>
    %cst_749 = arith.constant -1.000000e+30 : f32
    %1072 = vector.broadcast %cst_749 : f32 to vector<2x128xf32>
    %1073 = arith.select %1071, %1068, %1072 : vector<2x128xi1>, vector<2x128xf32>
    %cst_750 = arith.constant dense<0xFF800000> : vector<2xf32>
    %1074 = vector.multi_reduction <maximumf>, %1073, %cst_750 [1] : vector<2x128xf32> to vector<2xf32>
    %1075 = vector.shape_cast %1074 : vector<2xf32> to vector<2x1xf32>
    %1076 = vector.broadcast %1075 : vector<2x1xf32> to vector<2x128xf32>
    %1077 = arith.subf %1073, %1076 : vector<2x128xf32>
    %1078 = math.exp %1077 : vector<2x128xf32>
    %cst_751 = arith.constant dense<0.000000e+00> : vector<2xf32>
    %1079 = vector.multi_reduction <add>, %1078, %cst_751 [1] : vector<2x128xf32> to vector<2xf32>
    %1080 = vector.shape_cast %1079 : vector<2xf32> to vector<2x1xf32>
    %1081 = math.log %1080 : vector<2x1xf32>
    %c10_i32_752 = arith.constant 10 : i32
    %1082 = vector.broadcast %c10_i32_752 : i32 to vector<2x128xi32>
    %1083 = arith.cmpi slt, %1069, %1082 : vector<2x128xi32>
    %1084 = vector.broadcast %1075 : vector<2x1xf32> to vector<2x128xf32>
    %1085 = arith.subf %1073, %1084 : vector<2x128xf32>
    %1086 = vector.broadcast %1081 : vector<2x1xf32> to vector<2x128xf32>
    %1087 = arith.subf %1085, %1086 : vector<2x128xf32>
    %cst_753 = arith.constant 0.000000e+00 : f32
    %1088 = vector.broadcast %cst_753 : f32 to vector<2x128xf32>
    %1089 = arith.select %1083, %1087, %1088 : vector<2x128xi1>, vector<2x128xf32>
    %c0_754 = arith.constant 0 : index
    %c0_755 = arith.constant 0 : index
    %1090 = vector.load %arg14[%c0_754, %c0_755] : memref<2x128xf32, #tpu.memory_space<vmem>>, vector<2x128xf32>
    tpu.vector_store %arg14[%c0_754, %c0_755], %1089 {strides = array<i32>} : memref<2x128xf32, #tpu.memory_space<vmem>>, vector<2x128xf32>,
    return
  }
  func.func @transform_0(%arg0: i32) -> (i32, i32, i32) {
    %c0_i32 = arith.constant 0 : i32
    %c0_i32_0 = arith.constant 0 : i32
    %c0_i32_1 = arith.constant 0 : i32
    %c0_i32_2 = arith.constant 0 : i32
    return %c0_i32, %c0_i32_0, %c0_i32_1 : i32, i32, i32
  }
  func.func @transform_1(%arg0: i32) -> (i32, i32) {
    %c0_i32 = arith.constant 0 : i32
    %c0_i32_0 = arith.constant 0 : i32
    %c0_i32_1 = arith.constant 0 : i32
    return %c0_i32, %c0_i32_0 : i32, i32
  }
  func.func @transform_2(%arg0: i32) -> (i32, i32) {
    %c0_i32 = arith.constant 0 : i32
    %c0_i32_0 = arith.constant 0 : i32
    %c0_i32_1 = arith.constant 0 : i32
    return %c0_i32, %c0_i32_0 : i32, i32
  }
  func.func @transform_3(%arg0: i32) -> (i32, i32) {
    %c0_i32 = arith.constant 0 : i32
    %c0_i32_0 = arith.constant 0 : i32
    %c0_i32_1 = arith.constant 0 : i32
    return %c0_i32, %c0_i32_0 : i32, i32
  }
  func.func @transform_4(%arg0: i32) -> (i32, i32) {
    %c0_i32 = arith.constant 0 : i32
    %c0_i32_0 = arith.constant 0 : i32
    %c0_i32_1 = arith.constant 0 : i32
    return %c0_i32, %c0_i32_0 : i32, i32
  }
  func.func @transform_5(%arg0: i32) -> (i32, i32, i32) {
    %c0_i32 = arith.constant 0 : i32
    %c0_i32_0 = arith.constant 0 : i32
    %c0_i32_1 = arith.constant 0 : i32
    %c0_i32_2 = arith.constant 0 : i32
    return %c0_i32, %c0_i32_0, %c0_i32_1 : i32, i32, i32
  }
  func.func @transform_6(%arg0: i32) -> (i32, i32) {
    %c0_i32 = arith.constant 0 : i32
    %c0_i32_0 = arith.constant 0 : i32
    %c0_i32_1 = arith.constant 0 : i32
    return %c0_i32, %c0_i32_0 : i32, i32
  }
  func.func @transform_7(%arg0: i32) -> (i32, i32) {
    %c0_i32 = arith.constant 0 : i32
    %c0_i32_0 = arith.constant 0 : i32
    %c0_i32_1 = arith.constant 0 : i32
    return %c0_i32, %c0_i32_0 : i32, i32
  }
  func.func @transform_8(%arg0: i32) -> (i32, i32) {
    %c0_i32 = arith.constant 0 : i32
    %c0_i32_0 = arith.constant 0 : i32
    %c0_i32_1 = arith.constant 0 : i32
    return %c0_i32, %c0_i32_0 : i32, i32
  }
  func.func @transform_9(%arg0: i32) -> (i32, i32, i32) {
    %c0_i32 = arith.constant 0 : i32
    %c0_i32_0 = arith.constant 0 : i32
    %c0_i32_1 = arith.constant 0 : i32
    %c0_i32_2 = arith.constant 0 : i32
    return %c0_i32, %c0_i32_0, %c0_i32_1 : i32, i32, i32
  }
  func.func @transform_10(%arg0: i32) -> (i32, i32) {
    %c0_i32 = arith.constant 0 : i32
    %c0_i32_0 = arith.constant 0 : i32
    %c0_i32_1 = arith.constant 0 : i32
    return %c0_i32, %c0_i32_0 : i32, i32
  }
  func.func @transform_11(%arg0: i32) -> (i32, i32) {
    %c0_i32 = arith.constant 0 : i32
    %c0_i32_0 = arith.constant 0 : i32
    %c0_i32_1 = arith.constant 0 : i32
    return %c0_i32, %c0_i32_0 : i32, i32
  }
  func.func @transform_12(%arg0: i32) -> (i32, i32) {
    %c0_i32 = arith.constant 0 : i32
    %c0_i32_0 = arith.constant 0 : i32
    %c0_i32_1 = arith.constant 0 : i32
    return %c0_i32, %c0_i32_0 : i32, i32
  }
  func.func @transform_13(%arg0: i32) -> (i32, i32) {
    %c0_i32 = arith.constant 0 : i32
    %c0_i32_0 = arith.constant 0 : i32
    %c0_i32_1 = arith.constant 0 : i32
    return %c0_i32, %c0_i32_0 : i32, i32
  }
}

</mosaic_0001>

<llo_original>
// kernel: mnist_forward.1
$region0: #{mnist_forward.1}
  #allocation0 [shape = 'u32[]', space=smem, size = 0x4, offset = 0x4, fixed_abs, tag = 'smem constant byte address 0x4 - core index']
  #allocation1 [shape = 'u32[144,128]{1,0:T(1,128)}', space=vmem, size = 0x12000, scoped, tag = 'internal scratch']
  #allocation2 [shape = 'f32[288,128]{1,0:T(8,128)}', space=vmem, size = 0x24000, scoped, tag = 'scratch operand']
  #allocation3 [shape = 'bf16[2,2,12,256]{3,2,1,0:T(8,128)(2,1)}', space=vmem, size = 0x8000, scoped, tag = 'scratch operand']
  #allocation4 [shape = 'f32[8,128]{1,0:T(8,128)}', space=vmem, size = 0x1000, scoped, tag = 'scratch operand']
  %s0 = inlined_call_operand.vmem [shape: bf16[4,288,32], index: 0, kind: input, shape index: {}]
  %s1 = inlined_call_operand.vmem [shape: bf16[32,128], index: 1, kind: input, shape index: {}]
  %s2 = inlined_call_operand.vmem [shape: f32[1,128], index: 2, kind: input, shape index: {}]
  %s3 = inlined_call_operand.vmem [shape: f32[1,128], index: 3, kind: input, shape index: {}]
  %s4 = inlined_call_operand.vmem [shape: f32[1,128], index: 4, kind: input, shape index: {}]
  %s5 = inlined_call_operand.vmem [shape: bf16[5,256,128], index: 5, kind: input, shape index: {}]
  %s6 = inlined_call_operand.vmem [shape: f32[1,128], index: 6, kind: input, shape index: {}]
  %s7 = inlined_call_operand.vmem [shape: f32[1,128], index: 7, kind: input, shape index: {}]
  %s8 = inlined_call_operand.vmem [shape: f32[1,128], index: 8, kind: input, shape index: {}]
  %s9 = inlined_call_operand.vmem [shape: bf16[4,128,128], index: 9, kind: input, shape index: {}]
  %s10 = inlined_call_operand.vmem [shape: f32[1,128], index: 10, kind: input, shape index: {}]
  %s11 = inlined_call_operand.vmem [shape: bf16[128,128], index: 11, kind: input, shape index: {}]
  %s12 = inlined_call_operand.vmem [shape: f32[1,128], index: 12, kind: input, shape index: {}]
  %s13 = inlined_call_operand.hbm [shape: f32[2,128], index: 13, kind: output, shape index: {}]
  %s14 = sld [smem:[#allocation0]]
  $region62: #{mnist_forward.1} parent=0
    _
  %s16 = ssub.s32 1, %s14
  %s17 = scalar_select 0, %s16, %s14
  $region1: #{mnist_forward.1} parent=0
    #allocation5 [shape = 'u8[1024]{0}', space=vmem, size = 0x400, scoped, tag = 'output window, operand 0, single buffered']
    #allocation6 [shape = 's32[1]{0}', space=sflag, size = 0x4, scoped, tag = 'scoped memory for mnist_forward.1']
    %18 = vsyncpa [#allocation6], 0
    // Predicated region
    $region2: #{mnist_forward.1} parent=1 // pred_check
      _
    $region3: #{mnist_forward.1} parent=1 // pred_check_branch
      %20 = sbr.rel (0) target = $region5
    $region4: #{mnist_forward.1} parent=1 // pred_region
      _
    $region5: #{mnist_forward.1} parent=1 // pred_fallthru
      _
    // Predicated region
    $region6: #{mnist_forward.1} parent=1 // pred_check
      _
    $region7: #{mnist_forward.1} parent=1 // pred_check_branch
      %22 = sbr.rel (0) target = $region9
    $region8: #{mnist_forward.1} parent=1 // pred_region
      _
    $region9: #{mnist_forward.1} parent=1 // pred_fallthru
      _
    // Predicated region
    $region10: #{mnist_forward.1} parent=1 // pred_check
      _
    $region11: #{mnist_forward.1} parent=1 // pred_check_branch
      %24 = sbr.rel (0) target = $region13
    $region12: #{mnist_forward.1} parent=1 // pred_region
      _
    $region13: #{mnist_forward.1} parent=1 // pred_fallthru
      _
    // Predicated region
    $region14: #{mnist_forward.1} parent=1 // pred_check
      _
    $region15: #{mnist_forward.1} parent=1 // pred_check_branch
      %26 = sbr.rel (0) target = $region17
    $region16: #{mnist_forward.1} parent=1 // pred_region
      _
    $region17: #{mnist_forward.1} parent=1 // pred_fallthru
      _
    // Predicated region
    $region18: #{mnist_forward.1} parent=1 // pred_check
      _
    $region19: #{mnist_forward.1} parent=1 // pred_check_branch
      %28 = sbr.rel (0) target = $region21
    $region20: #{mnist_forward.1} parent=1 // pred_region
      _
    $region21: #{mnist_forward.1} parent=1 // pred_fallthru
      _
    // Predicated region
    $region22: #{mnist_forward.1} parent=1 // pred_check
      _
    $region23: #{mnist_forward.1} parent=1 // pred_check_branch
      %30 = sbr.rel (0) target = $region25
    $region24: #{mnist_forward.1} parent=1 // pred_region
      _
    $region25: #{mnist_forward.1} parent=1 // pred_fallthru
      _
    // Predicated region
    $region26: #{mnist_forward.1} parent=1 // pred_check
      _
    $region27: #{mnist_forward.1} parent=1 // pred_check_branch
      %32 = sbr.rel (0) target = $region29
    $region28: #{mnist_forward.1} parent=1 // pred_region
      _
    $region29: #{mnist_forward.1} parent=1 // pred_fallthru
      _
    // Predicated region
    $region30: #{mnist_forward.1} parent=1 // pred_check
      _
    $region31: #{mnist_forward.1} parent=1 // pred_check_branch
      %34 = sbr.rel (0) target = $region33
    $region32: #{mnist_forward.1} parent=1 // pred_region
      _
    $region33: #{mnist_forward.1} parent=1 // pred_fallthru
      _
    // Predicated region
    $region34: #{mnist_forward.1} parent=1 // pred_check
      _
    $region35: #{mnist_forward.1} parent=1 // pred_check_branch
      %36 = sbr.rel (0) target = $region37
    $region36: #{mnist_forward.1} parent=1 // pred_region
      _
    $region37: #{mnist_forward.1} parent=1 // pred_fallthru
      _
    // Predicated region
    $region38: #{mnist_forward.1} parent=1 // pred_check
      _
    $region39: #{mnist_forward.1} parent=1 // pred_check_branch
      %38 = sbr.rel (0) target = $region41
    $region40: #{mnist_forward.1} parent=1 // pred_region
      _
    $region41: #{mnist_forward.1} parent=1 // pred_fallthru
      _
    // Predicated region
    $region42: #{mnist_forward.1} parent=1 // pred_check
      _
    $region43: #{mnist_forward.1} parent=1 // pred_check_branch
      %40 = sbr.rel (0) target = $region45
    $region44: #{mnist_forward.1} parent=1 // pred_region
      _
    $region45: #{mnist_forward.1} parent=1 // pred_fallthru
      _
    // Predicated region
    $region46: #{mnist_forward.1} parent=1 // pred_check
      _
    $region47: #{mnist_forward.1} parent=1 // pred_check_branch
      %42 = sbr.rel (0) target = $region49
    $region48: #{mnist_forward.1} parent=1 // pred_region
      _
    $region49: #{mnist_forward.1} parent=1 // pred_fallthru
      _
    // Predicated region
    $region50: #{mnist_forward.1} parent=1 // pred_check
      _
    $region51: #{mnist_forward.1} parent=1 // pred_check_branch
      %44 = sbr.rel (0) target = $region53
    $region52: #{mnist_forward.1} parent=1 // pred_region
      _
    $region53: #{mnist_forward.1} parent=1 // pred_fallthru
      _
    %v46 = vld [vmem:[%s1] sm:$0xf]
    %v47 = vld [vmem:[%s1 + $0x4] sm:$0xf]
    %v48 = vld [vmem:[%s1 + $0x8] sm:$0xf]
    %v49 = vld [vmem:[%s1 + $0xc] sm:$0xf]
    %v50 = vld [vmem:[%s2] sm:$0x1]
    %v51 = vld [vmem:[%s0] sm:$0xf]
    %v52 = vld [vmem:[%s0 + $0x4] sm:$0xf]
    %v53 = vld [vmem:[%s0 + $0x8] sm:$0xf]
    %v54 = vld [vmem:[%s0 + $0xc] sm:$0xf]
    %v55 = vld [vmem:[%s0 + $0x10] sm:$0xf]
    %v56 = vld [vmem:[%s0 + $0x14] sm:$0xf]
    %v57 = vld [vmem:[%s0 + $0x18] sm:$0xf]
    %v58 = vld [vmem:[%s0 + $0x1c] sm:$0xf]
    %v59 = vld [vmem:[%s0 + $0x20] sm:$0xf]
    %v69 = vunpack.c.l.b16 %v51
    %v70 = vunpack.c.l.b16 %v52
    %v71 = vunpack.c.l.b16 %v53
    %v72 = vunpack.c.l.b16 %v54
    %v73 = vunpack.c.l.b16 %v55
    %v74 = vunpack.c.l.b16 %v56
    %v75 = vunpack.c.l.b16 %v57
    %v76 = vunpack.c.l.b16 %v58
    %v77 = vunpack.c.l.b16 %v59
    %v78 = vpack.c.b16 %v70, %v69
    %v79 = vpack.c.b16 %v72, %v71
    %v80 = vpack.c.b16 %v74, %v73
    %v81 = vpack.c.b16 %v76, %v75
    %v82 = vpack.c.b16 %v77, %v77
    %v87 = vunpack.c.l.b16 %v46
    %v88 = vunpack.c.l.b16 %v47
    %v89 = vunpack.c.l.b16 %v48
    %v90 = vunpack.c.l.b16 %v49
    %v91 = vpack.c.b16 %v88, %v87
    %v92 = vpack.c.b16 %v90, %v89
    %vm95 = vcmask 261120
    %v97 = vsel %vm95, %v78, 0
    %v100 = vsel %vm95, %v79, 0
    %v103 = vsel %vm95, %v80, 0
    %v106 = vsel %vm95, %v81, 0
    %v109 = vsel %vm95, %v82, 0
    %111 = vmatprep.subr.bf16.mxu0 0
    %112 = vmatpush1.bf16.msra.mxu0 0
    %113 = vmatprep.subr.bf16.mxu0 0
    %114 = vmatpush1.bf16.msra.mxu0 0
    %115 = vmatprep.subr.bf16.mxu0 0
    %116 = vmatpush1.bf16.msra.mxu0 0
    %117 = vmatprep.subr.bf16.mxu0 0
    %118 = vmatpush1.bf16.msra.mxu0 0
    %119 = vmatprep.subr.bf16.mxu0 0
    %120 = vmatpush1.bf16.msra.mxu0 0
    %121 = vmatprep.subr.bf16.mxu0 0
    %122 = vmatpush1.bf16.msra.mxu0 0
    %123 = vmatprep.subr.bf16.mxu0 0
    %124 = vmatpush1.bf16.msra.mxu0 %v92
    %125 = vmatprep.subr.bf16.mxu0 0
    %126 = vmatpush1.bf16.msra.mxu0 %v91
    %127 = vmatprep.subr.bf16.mxu0 0
    %128 = vmatpush2.bf16.msra.mxu0 0
    %129 = vmatprep.subr.bf16.mxu0 0
    %130 = vmatpush2.bf16.msra.mxu0 0
    %131 = vmatprep.subr.bf16.mxu0 0
    %132 = vmatpush2.bf16.msra.mxu0 0
    %133 = vmatprep.subr.bf16.mxu0 0
    %134 = vmatpush2.bf16.msra.mxu0 0
    %135 = vmatprep.subr.bf16.mxu0 0
    %136 = vmatpush2.bf16.msra.mxu0 0
    %137 = vmatprep.subr.bf16.mxu0 0
    %138 = vmatpush2.bf16.msra.mxu0 0
    %139 = vmatprep.subr.bf16.mxu0 0
    %140 = vmatpush2.bf16.msra.mxu0 0
    %141 = vmatprep.subr.bf16.mxu0 0
    %142 = vmatpush2.bf16.msra.mxu0 0
    %143 = vmatprep.mubr.bf16.mxu0 0
    %144 = vmatmul.mubr.bf16.gmra.mxu0 %v97
    %v145 = vpop.f32.mrf.mxu0
    %v146 = vadd.f32 0.0, %v145
    %v147 = vpop.f32.mrf.mxu0
    %v148 = vpop.f32.mrf.mxu0
    %v149 = vadd.f32 0.0, %v148
    %v150 = vpop.f32.mrf.mxu0
    %151 = vmatprep.mubr.bf16.mxu0 0
    %152 = vmatmul.mubr.bf16.gmra.mxu0 %v100
    %v153 = vpop.f32.mrf.mxu0
    %v154 = vadd.f32 0.0, %v153
    %v155 = vpop.f32.mrf.mxu0
    %v156 = vpop.f32.mrf.mxu0
    %v157 = vadd.f32 0.0, %v156
    %v158 = vpop.f32.mrf.mxu0
    %159 = vmatprep.mubr.bf16.mxu0 0
    %160 = vmatmul.mubr.bf16.gmra.mxu0 %v103
    %v161 = vpop.f32.mrf.mxu0
    %v162 = vadd.f32 0.0, %v161
    %v163 = vpop.f32.mrf.mxu0
    %v164 = vpop.f32.mrf.mxu0
    %v165 = vadd.f32 0.0, %v164
    %v166 = vpop.f32.mrf.mxu0
    %167 = vmatprep.mubr.bf16.mxu0 0
    %168 = vmatmul.mubr.bf16.gmra.mxu0 %v106
    %v169 = vpop.f32.mrf.mxu0
    %v170 = vadd.f32 0.0, %v169
    %v171 = vpop.f32.mrf.mxu0
    %v172 = vpop.f32.mrf.mxu0
    %v173 = vadd.f32 0.0, %v172
    %v174 = vpop.f32.mrf.mxu0
    %175 = vmatprep.mubr.bf16.mxu0 0
    %176 = vmatmul.mubr.bf16.gmra.mxu0 %v109
    %v177 = vpop.f32.mrf.mxu0
    %v178 = vadd.f32 0.0, %v177
    %v179 = vpop.f32.mrf.mxu0
    %v180 = vpop.f32.mrf.mxu0
    %v181 = vpop.f32.mrf.mxu0
    %182 = vdwg.mxu0
    %s183 = scalar_lea.vmem %s0, 144
    %v184 = vld [vmem:[%s183] sm:$0xf]
    %v185 = vld [vmem:[%s183 + $0x4] sm:$0xf]
    %v186 = vld [vmem:[%s183 + $0x8] sm:$0xf]
    %v187 = vld [vmem:[%s183 + $0xc] sm:$0xf]
    %v188 = vld [vmem:[%s183 + $0x10] sm:$0xf]
    %v189 = vld [vmem:[%s183 + $0x14] sm:$0xf]
    %v190 = vld [vmem:[%s183 + $0x18] sm:$0xf]
    %v191 = vld [vmem:[%s183 + $0x1c] sm:$0xf]
    %v192 = vld [vmem:[%s183 + $0x20] sm:$0xf]
    %v202 = vunpack.c.l.b16 %v184
    %v203 = vunpack.c.l.b16 %v185
    %v204 = vunpack.c.l.b16 %v186
    %v205 = vunpack.c.l.b16 %v187
    %v206 = vunpack.c.l.b16 %v188
    %v207 = vunpack.c.l.b16 %v189
    %v208 = vunpack.c.l.b16 %v190
    %v209 = vunpack.c.l.b16 %v191
    %v210 = vunpack.c.l.b16 %v192
    %v211 = vpack.c.b16 %v203, %v202
    %v212 = vpack.c.b16 %v205, %v204
    %v213 = vpack.c.b16 %v207, %v206
    %v214 = vpack.c.b16 %v209, %v208
    %v215 = vpack.c.b16 %v210, %v210
    %v217 = vsel %vm95, %v211, 0
    %v220 = vsel %vm95, %v212, 0
    %v223 = vsel %vm95, %v213, 0
    %v226 = vsel %vm95, %v214, 0
    %v229 = vsel %vm95, %v215, 0
    %231 = vmatprep.subr.bf16.mxu0 0
    %232 = vmatpush1.bf16.msra.mxu0 0
    %233 = vmatprep.subr.bf16.mxu0 0
    %234 = vmatpush1.bf16.msra.mxu0 0
    %235 = vmatprep.subr.bf16.mxu0 0
    %236 = vmatpush1.bf16.msra.mxu0 0
    %237 = vmatprep.subr.bf16.mxu0 0
    %238 = vmatpush1.bf16.msra.mxu0 0
    %239 = vmatprep.subr.bf16.mxu0 0
    %240 = vmatpush1.bf16.msra.mxu0 0
    %241 = vmatprep.subr.bf16.mxu0 0
    %242 = vmatpush1.bf16.msra.mxu0 0
    %243 = vmatprep.subr.bf16.mxu0 0
    %244 = vmatpush1.bf16.msra.mxu0 %v92
    %245 = vmatprep.subr.bf16.mxu0 0
    %246 = vmatpush1.bf16.msra.mxu0 %v91
    %247 = vmatprep.subr.bf16.mxu0 0
    %248 = vmatpush2.bf16.msra.mxu0 0
    %249 = vmatprep.subr.bf16.mxu0 0
    %250 = vmatpush2.bf16.msra.mxu0 0
    %251 = vmatprep.subr.bf16.mxu0 0
    %252 = vmatpush2.bf16.msra.mxu0 0
    %253 = vmatprep.subr.bf16.mxu0 0
    %254 = vmatpush2.bf16.msra.mxu0 0
    %255 = vmatprep.subr.bf16.mxu0 0
    %256 = vmatpush2.bf16.msra.mxu0 0
    %257 = vmatprep.subr.bf16.mxu0 0
    %258 = vmatpush2.bf16.msra.mxu0 0
    %259 = vmatprep.subr.bf16.mxu0 0
    %260 = vmatpush2.bf16.msra.mxu0 0
    %261 = vmatprep.subr.bf16.mxu0 0
    %262 = vmatpush2.bf16.msra.mxu0 0
    %263 = vmatprep.mubr.bf16.mxu0 0
    %264 = vmatmul.mubr.bf16.gmra.mxu0 %v217
    %v265 = vpop.f32.mrf.mxu0
    %v266 = vadd.f32 0.0, %v265
    %v267 = vpop.f32.mrf.mxu0
    %v268 = vpop.f32.mrf.mxu0
    %v269 = vadd.f32 0.0, %v268
    %v270 = vpop.f32.mrf.mxu0
    %271 = vmatprep.mubr.bf16.mxu0 0
    %272 = vmatmul.mubr.bf16.gmra.mxu0 %v220
    %v273 = vpop.f32.mrf.mxu0
    %v274 = vadd.f32 0.0, %v273
    %v275 = vpop.f32.mrf.mxu0
    %v276 = vpop.f32.mrf.mxu0
    %v277 = vadd.f32 0.0, %v276
    %v278 = vpop.f32.mrf.mxu0
    %279 = vmatprep.mubr.bf16.mxu0 0
    %280 = vmatmul.mubr.bf16.gmra.mxu0 %v223
    %v281 = vpop.f32.mrf.mxu0
    %v282 = vadd.f32 0.0, %v281
    %v283 = vpop.f32.mrf.mxu0
    %v284 = vpop.f32.mrf.mxu0
    %v285 = vadd.f32 0.0, %v284
    %v286 = vpop.f32.mrf.mxu0
    %287 = vmatprep.mubr.bf16.mxu0 0
    %288 = vmatmul.mubr.bf16.gmra.mxu0 %v226
    %v289 = vpop.f32.mrf.mxu0
    %v290 = vadd.f32 0.0, %v289
    %v291 = vpop.f32.mrf.mxu0
    %v292 = vpop.f32.mrf.mxu0
    %v293 = vadd.f32 0.0, %v292
    %v294 = vpop.f32.mrf.mxu0
    %295 = vmatprep.mubr.bf16.mxu0 0
    %296 = vmatmul.mubr.bf16.gmra.mxu0 %v229
    %v297 = vpop.f32.mrf.mxu0
    %v298 = vadd.f32 0.0, %v297
    %v299 = vpop.f32.mrf.mxu0
    %v300 = vpop.f32.mrf.mxu0
    %v301 = vpop.f32.mrf.mxu0
    %302 = vdwg.mxu0
    %v303 = vmax.f32 %v146, %v266
    %v304 = vmax.f32 %v149, %v269
    %v305 = vmax.f32 %v154, %v274
    %v306 = vmax.f32 %v157, %v277
    %v307 = vmax.f32 %v162, %v282
    %v308 = vmax.f32 %v165, %v285
    %v309 = vmax.f32 %v170, %v290
    %v310 = vmax.f32 %v173, %v293
    %v311 = vmax.f32 %v178, %v298
    %s312 = scalar_lea.vmem %s0, 288
    %v313 = vld [vmem:[%s312] sm:$0xf]
    %v314 = vld [vmem:[%s312 + $0x4] sm:$0xf]
    %v315 = vld [vmem:[%s312 + $0x8] sm:$0xf]
    %v316 = vld [vmem:[%s312 + $0xc] sm:$0xf]
    %v317 = vld [vmem:[%s312 + $0x10] sm:$0xf]
    %v318 = vld [vmem:[%s312 + $0x14] sm:$0xf]
    %v319 = vld [vmem:[%s312 + $0x18] sm:$0xf]
    %v320 = vld [vmem:[%s312 + $0x1c] sm:$0xf]
    %v321 = vld [vmem:[%s312 + $0x20] sm:$0xf]
    %v331 = vunpack.c.l.b16 %v313
    %v332 = vunpack.c.l.b16 %v314
    %v333 = vunpack.c.l.b16 %v315
    %v334 = vunpack.c.l.b16 %v316
    %v335 = vunpack.c.l.b16 %v317
    %v336 = vunpack.c.l.b16 %v318
    %v337 = vunpack.c.l.b16 %v319
    %v338 = vunpack.c.l.b16 %v320
    %v339 = vunpack.c.l.b16 %v321
    %v340 = vpack.c.b16 %v332, %v331
    %v341 = vpack.c.b16 %v334, %v333
    %v342 = vpack.c.b16 %v336, %v335
    %v343 = vpack.c.b16 %v338, %v337
    %v344 = vpack.c.b16 %v339, %v339
    %v346 = vsel %vm95, %v340, 0
    %v349 = vsel %vm95, %v341, 0
    %v352 = vsel %vm95, %v342, 0
    %v355 = vsel %vm95, %v343, 0
    %v358 = vsel %vm95, %v344, 0
    %360 = vmatprep.subr.bf16.mxu0 0
    %361 = vmatpush1.bf16.msra.mxu0 0
    %362 = vmatprep.subr.bf16.mxu0 0
    %363 = vmatpush1.bf16.msra.mxu0 0
    %364 = vmatprep.subr.bf16.mxu0 0
    %365 = vmatpush1.bf16.msra.mxu0 0
    %366 = vmatprep.subr.bf16.mxu0 0
    %367 = vmatpush1.bf16.msra.mxu0 0
    %368 = vmatprep.subr.bf16.mxu0 0
    %369 = vmatpush1.bf16.msra.mxu0 0
    %370 = vmatprep.subr.bf16.mxu0 0
    %371 = vmatpush1.bf16.msra.mxu0 0
    %372 = vmatprep.subr.bf16.mxu0 0
    %373 = vmatpush1.bf16.msra.mxu0 %v92
    %374 = vmatprep.subr.bf16.mxu0 0
    %375 = vmatpush1.bf16.msra.mxu0 %v91
    %376 = vmatprep.subr.bf16.mxu0 0
    %377 = vmatpush2.bf16.msra.mxu0 0
    %378 = vmatprep.subr.bf16.mxu0 0
    %379 = vmatpush2.bf16.msra.mxu0 0
    %380 = vmatprep.subr.bf16.mxu0 0
    %381 = vmatpush2.bf16.msra.mxu0 0
    %382 = vmatprep.subr.bf16.mxu0 0
    %383 = vmatpush2.bf16.msra.mxu0 0
    %384 = vmatprep.subr.bf16.mxu0 0
    %385 = vmatpush2.bf16.msra.mxu0 0
    %386 = vmatprep.subr.bf16.mxu0 0
    %387 = vmatpush2.bf16.msra.mxu0 0
    %388 = vmatprep.subr.bf16.mxu0 0
    %389 = vmatpush2.bf16.msra.mxu0 0
    %390 = vmatprep.subr.bf16.mxu0 0
    %391 = vmatpush2.bf16.msra.mxu0 0
    %392 = vmatprep.mubr.bf16.mxu0 0
    %393 = vmatmul.mubr.bf16.gmra.mxu0 %v346
    %v394 = vpop.f32.mrf.mxu0
    %v395 = vadd.f32 0.0, %v394
    %v396 = vpop.f32.mrf.mxu0
    %v397 = vpop.f32.mrf.mxu0
    %v398 = vadd.f32 0.0, %v397
    %v399 = vpop.f32.mrf.mxu0
    %400 = vmatprep.mubr.bf16.mxu0 0
    %401 = vmatmul.mubr.bf16.gmra.mxu0 %v349
    %v402 = vpop.f32.mrf.mxu0
    %v403 = vadd.f32 0.0, %v402
    %v404 = vpop.f32.mrf.mxu0
    %v405 = vpop.f32.mrf.mxu0
    %v406 = vadd.f32 0.0, %v405
    %v407 = vpop.f32.mrf.mxu0
    %408 = vmatprep.mubr.bf16.mxu0 0
    %409 = vmatmul.mubr.bf16.gmra.mxu0 %v352
    %v410 = vpop.f32.mrf.mxu0
    %v411 = vadd.f32 0.0, %v410
    %v412 = vpop.f32.mrf.mxu0
    %v413 = vpop.f32.mrf.mxu0
    %v414 = vadd.f32 0.0, %v413
    %v415 = vpop.f32.mrf.mxu0
    %416 = vmatprep.mubr.bf16.mxu0 0
    %417 = vmatmul.mubr.bf16.gmra.mxu0 %v355
    %v418 = vpop.f32.mrf.mxu0
    %v419 = vadd.f32 0.0, %v418
    %v420 = vpop.f32.mrf.mxu0
    %v421 = vpop.f32.mrf.mxu0
    %v422 = vadd.f32 0.0, %v421
    %v423 = vpop.f32.mrf.mxu0
    %424 = vmatprep.mubr.bf16.mxu0 0
    %425 = vmatmul.mubr.bf16.gmra.mxu0 %v358
    %v426 = vpop.f32.mrf.mxu0
    %v427 = vadd.f32 0.0, %v426
    %v428 = vpop.f32.mrf.mxu0
    %v429 = vpop.f32.mrf.mxu0
    %v430 = vpop.f32.mrf.mxu0
    %431 = vdwg.mxu0
    %v432 = vmax.f32 %v303, %v395
    %v433 = vmax.f32 %v304, %v398
    %v434 = vmax.f32 %v305, %v403
    %v435 = vmax.f32 %v306, %v406
    %v436 = vmax.f32 %v307, %v411
    %v437 = vmax.f32 %v308, %v414
    %v438 = vmax.f32 %v309, %v419
    %v439 = vmax.f32 %v310, %v422
    %v440 = vmax.f32 %v311, %v427
    %s441 = scalar_lea.vmem %s0, 432
    %v442 = vld [vmem:[%s441] sm:$0xf]
    %v443 = vld [vmem:[%s441 + $0x4] sm:$0xf]
    %v444 = vld [vmem:[%s441 + $0x8] sm:$0xf]
    %v445 = vld [vmem:[%s441 + $0xc] sm:$0xf]
    %v446 = vld [vmem:[%s441 + $0x10] sm:$0xf]
    %v447 = vld [vmem:[%s441 + $0x14] sm:$0xf]
    %v448 = vld [vmem:[%s441 + $0x18] sm:$0xf]
    %v449 = vld [vmem:[%s441 + $0x1c] sm:$0xf]
    %v450 = vld [vmem:[%s441 + $0x20] sm:$0xf]
    %v460 = vunpack.c.l.b16 %v442
    %v461 = vunpack.c.l.b16 %v443
    %v462 = vunpack.c.l.b16 %v444
    %v463 = vunpack.c.l.b16 %v445
    %v464 = vunpack.c.l.b16 %v446
    %v465 = vunpack.c.l.b16 %v447
    %v466 = vunpack.c.l.b16 %v448
    %v467 = vunpack.c.l.b16 %v449
    %v468 = vunpack.c.l.b16 %v450
    %v469 = vpack.c.b16 %v461, %v460
    %v470 = vpack.c.b16 %v463, %v462
    %v471 = vpack.c.b16 %v465, %v464
    %v472 = vpack.c.b16 %v467, %v466
    %v473 = vpack.c.b16 %v468, %v468
    %v475 = vsel %vm95, %v469, 0
    %v478 = vsel %vm95, %v470, 0
    %v481 = vsel %vm95, %v471, 0
    %v484 = vsel %vm95, %v472, 0
    %v487 = vsel %vm95, %v473, 0
    %489 = vmatprep.subr.bf16.mxu0 0
    %490 = vmatpush1.bf16.msra.mxu0 0
    %491 = vmatprep.subr.bf16.mxu0 0
    %492 = vmatpush1.bf16.msra.mxu0 0
    %493 = vmatprep.subr.bf16.mxu0 0
    %494 = vmatpush1.bf16.msra.mxu0 0
    %495 = vmatprep.subr.bf16.mxu0 0
    %496 = vmatpush1.bf16.msra.mxu0 0
    %497 = vmatprep.subr.bf16.mxu0 0
    %498 = vmatpush1.bf16.msra.mxu0 0
    %499 = vmatprep.subr.bf16.mxu0 0
    %500 = vmatpush1.bf16.msra.mxu0 0
    %501 = vmatprep.subr.bf16.mxu0 0
    %502 = vmatpush1.bf16.msra.mxu0 %v92
    %503 = vmatprep.subr.bf16.mxu0 0
    %504 = vmatpush1.bf16.msra.mxu0 %v91
    %505 = vmatprep.subr.bf16.mxu0 0
    %506 = vmatpush2.bf16.msra.mxu0 0
    %507 = vmatprep.subr.bf16.mxu0 0
    %508 = vmatpush2.bf16.msra.mxu0 0
    %509 = vmatprep.subr.bf16.mxu0 0
    %510 = vmatpush2.bf16.msra.mxu0 0
    %511 = vmatprep.subr.bf16.mxu0 0
    %512 = vmatpush2.bf16.msra.mxu0 0
    %513 = vmatprep.subr.bf16.mxu0 0
    %514 = vmatpush2.bf16.msra.mxu0 0
    %515 = vmatprep.subr.bf16.mxu0 0
    %516 = vmatpush2.bf16.msra.mxu0 0
    %517 = vmatprep.subr.bf16.mxu0 0
    %518 = vmatpush2.bf16.msra.mxu0 0
    %519 = vmatprep.subr.bf16.mxu0 0
    %520 = vmatpush2.bf16.msra.mxu0 0
    %521 = vmatprep.mubr.bf16.mxu0 0
    %522 = vmatmul.mubr.bf16.gmra.mxu0 %v475
    %v523 = vpop.f32.mrf.mxu0
    %v524 = vadd.f32 0.0, %v523
    %v525 = vpop.f32.mrf.mxu0
    %v526 = vpop.f32.mrf.mxu0
    %v527 = vadd.f32 0.0, %v526
    %v528 = vpop.f32.mrf.mxu0
    %529 = vmatprep.mubr.bf16.mxu0 0
    %530 = vmatmul.mubr.bf16.gmra.mxu0 %v478
    %v531 = vpop.f32.mrf.mxu0
    %v532 = vadd.f32 0.0, %v531
    %v533 = vpop.f32.mrf.mxu0
    %v534 = vpop.f32.mrf.mxu0
    %v535 = vadd.f32 0.0, %v534
    %v536 = vpop.f32.mrf.mxu0
    %537 = vmatprep.mubr.bf16.mxu0 0
    %538 = vmatmul.mubr.bf16.gmra.mxu0 %v481
    %v539 = vpop.f32.mrf.mxu0
    %v540 = vadd.f32 0.0, %v539
    %v541 = vpop.f32.mrf.mxu0
    %v542 = vpop.f32.mrf.mxu0
    %v543 = vadd.f32 0.0, %v542
    %v544 = vpop.f32.mrf.mxu0
    %545 = vmatprep.mubr.bf16.mxu0 0
    %546 = vmatmul.mubr.bf16.gmra.mxu0 %v484
    %v547 = vpop.f32.mrf.mxu0
    %v548 = vadd.f32 0.0, %v547
    %v549 = vpop.f32.mrf.mxu0
    %v550 = vpop.f32.mrf.mxu0
    %v551 = vadd.f32 0.0, %v550
    %v552 = vpop.f32.mrf.mxu0
    %553 = vmatprep.mubr.bf16.mxu0 0
    %554 = vmatmul.mubr.bf16.gmra.mxu0 %v487
    %v555 = vpop.f32.mrf.mxu0
    %v556 = vadd.f32 0.0, %v555
    %v557 = vpop.f32.mrf.mxu0
    %v558 = vpop.f32.mrf.mxu0
    %v559 = vpop.f32.mrf.mxu0
    %560 = vdwg.mxu0
    %v561 = vmax.f32 %v432, %v524
    %v562 = vmax.f32 %v433, %v527
    %v563 = vmax.f32 %v434, %v532
    %v564 = vmax.f32 %v435, %v535
    %v565 = vmax.f32 %v436, %v540
    %v566 = vmax.f32 %v437, %v543
    %v567 = vmax.f32 %v438, %v548
    %v568 = vmax.f32 %v439, %v551
    %v569 = vmax.f32 %v440, %v556
    %v571 = vlaneseq
    %v572 = vshrl.u32 %v571, 7
    %v573 = vsub.s32 0, %v572
    %v574 = vrot.slane %v50, %v573
    %v576 = vadd.f32 %v561, %v574
    %v577 = vadd.f32 %v562, %v574
    %v578 = vadd.f32 %v563, %v574
    %v579 = vadd.f32 %v564, %v574
    %v580 = vadd.f32 %v565, %v574
    %v581 = vadd.f32 %v566, %v574
    %v582 = vadd.f32 %v567, %v574
    %v583 = vadd.f32 %v568, %v574
    %v584 = vadd.f32 %v569, %v574
    %v585 = vmax.f32 %v576, 0.0
    %v586 = vmax.f32 %v577, 0.0
    %v587 = vmax.f32 %v578, 0.0
    %v588 = vmax.f32 %v579, 0.0
    %v589 = vmax.f32 %v580, 0.0
    %v590 = vmax.f32 %v581, 0.0
    %v591 = vmax.f32 %v582, 0.0
    %v592 = vmax.f32 %v583, 0.0
    %v593 = vmax.f32 %v584, 0.0
    %594 = vst [vmem:[#allocation2] sm:$0xff] %v585
    %595 = vst [vmem:[#allocation2 + $0x8] sm:$0xff] %v586
    %596 = vst [vmem:[#allocation2 + $0x10] sm:$0xff] %v587
    %597 = vst [vmem:[#allocation2 + $0x18] sm:$0xff] %v588
    %598 = vst [vmem:[#allocation2 + $0x20] sm:$0xff] %v589
    %599 = vst [vmem:[#allocation2 + $0x28] sm:$0xff] %v590
    %600 = vst [vmem:[#allocation2 + $0x30] sm:$0xff] %v591
    %601 = vst [vmem:[#allocation2 + $0x38] sm:$0xff] %v592
    %602 = vst [vmem:[#allocation2 + $0x40] sm:$0xff] %v593
    %v603 = vadd.f32 %v585, %v586
    %v604 = vadd.f32 %v603, %v587
    %v605 = vadd.f32 %v604, %v588
    %v606 = vadd.f32 %v605, %v589
    %v607 = vadd.f32 %v606, %v590
    %v608 = vadd.f32 %v607, %v591
    %v609 = vadd.f32 %v608, %v592
    %v610 = vadd.f32 %v609, %v593
    %v611 = vrot.slane %v610, 4
    %v612 = vadd.f32 %v610, %v611
    %v613 = vrot.slane %v612, 2
    %v614 = vadd.f32 %v612, %v613
    %v615 = vrot.slane %v614, 1
    %v616 = vadd.f32 %v614, %v615
    %v617 = vadd.f32 %v616, 0.0
    %v618 = vmul.f32 %v585, %v585
    %v619 = vmul.f32 %v586, %v586
    %v620 = vmul.f32 %v587, %v587
    %v621 = vmul.f32 %v588, %v588
    %v622 = vmul.f32 %v589, %v589
    %v623 = vmul.f32 %v590, %v590
    %v624 = vmul.f32 %v591, %v591
    %v625 = vmul.f32 %v592, %v592
    %v626 = vmul.f32 %v593, %v593
    %v627 = vadd.f32 %v618, %v619
    %v628 = vadd.f32 %v627, %v620
    %v629 = vadd.f32 %v628, %v621
    %v630 = vadd.f32 %v629, %v622
    %v631 = vadd.f32 %v630, %v623
    %v632 = vadd.f32 %v631, %v624
    %v633 = vadd.f32 %v632, %v625
    %v634 = vadd.f32 %v633, %v626
    %v635 = vrot.slane %v634, 4
    %v636 = vadd.f32 %v634, %v635
    %v637 = vrot.slane %v636, 2
    %v638 = vadd.f32 %v636, %v637
    %v639 = vrot.slane %v638, 1
    %v640 = vadd.f32 %v638, %v639
    %v641 = vadd.f32 %v640, 0.0
    %v642 = vld [vmem:[%s0 + $0x24] sm:$0xf]
    %v643 = vld [vmem:[%s0 + $0x28] sm:$0xf]
    %v644 = vld [vmem:[%s0 + $0x2c] sm:$0xf]
    %v645 = vld [vmem:[%s0 + $0x30] sm:$0xf]
    %v646 = vld [vmem:[%s0 + $0x34] sm:$0xf]
    %v647 = vld [vmem:[%s0 + $0x38] sm:$0xf]
    %v648 = vld [vmem:[%s0 + $0x3c] sm:$0xf]
    %v649 = vld [vmem:[%s0 + $0x40] sm:$0xf]
    %v650 = vld [vmem:[%s0 + $0x44] sm:$0xf]
    %v660 = vunpack.c.l.b16 %v642
    %v661 = vunpack.c.l.b16 %v643
    %v662 = vunpack.c.l.b16 %v644
    %v663 = vunpack.c.l.b16 %v645
    %v664 = vunpack.c.l.b16 %v646
    %v665 = vunpack.c.l.b16 %v647
    %v666 = vunpack.c.l.b16 %v648
    %v667 = vunpack.c.l.b16 %v649
    %v668 = vunpack.c.l.b16 %v650
    %v669 = vpack.c.b16 %v661, %v660
    %v670 = vpack.c.b16 %v663, %v662
    %v671 = vpack.c.b16 %v665, %v664
    %v672 = vpack.c.b16 %v667, %v666
    %v673 = vpack.c.b16 %v668, %v668
    %v675 = vsel %vm95, %v669, 0
    %v678 = vsel %vm95, %v670, 0
    %v681 = vsel %vm95, %v671, 0
    %v684 = vsel %vm95, %v672, 0
    %v687 = vsel %vm95, %v673, 0
    %689 = vmatprep.subr.bf16.mxu0 0
    %690 = vmatpush1.bf16.msra.mxu0 0
    %691 = vmatprep.subr.bf16.mxu0 0
    %692 = vmatpush1.bf16.msra.mxu0 0
    %693 = vmatprep.subr.bf16.mxu0 0
    %694 = vmatpush1.bf16.msra.mxu0 0
    %695 = vmatprep.subr.bf16.mxu0 0
    %696 = vmatpush1.bf16.msra.mxu0 0
    %697 = vmatprep.subr.bf16.mxu0 0
    %698 = vmatpush1.bf16.msra.mxu0 0
    %699 = vmatprep.subr.bf16.mxu0 0
    %700 = vmatpush1.bf16.msra.mxu0 0
    %701 = vmatprep.subr.bf16.mxu0 0
    %702 = vmatpush1.bf16.msra.mxu0 %v92
    %703 = vmatprep.subr.bf16.mxu0 0
    %704 = vmatpush1.bf16.msra.mxu0 %v91
    %705 = vmatprep.subr.bf16.mxu0 0
    %706 = vmatpush2.bf16.msra.mxu0 0
    %707 = vmatprep.subr.bf16.mxu0 0
    %708 = vmatpush2.bf16.msra.mxu0 0
    %709 = vmatprep.subr.bf16.mxu0 0
    %710 = vmatpush2.bf16.msra.mxu0 0
    %711 = vmatprep.subr.bf16.mxu0 0
    %712 = vmatpush2.bf16.msra.mxu0 0
    %713 = vmatprep.subr.bf16.mxu0 0
    %714 = vmatpush2.bf16.msra.mxu0 0
    %715 = vmatprep.subr.bf16.mxu0 0
    %716 = vmatpush2.bf16.msra.mxu0 0
    %717 = vmatprep.subr.bf16.mxu0 0
    %718 = vmatpush2.bf16.msra.mxu0 0
    %719 = vmatprep.subr.bf16.mxu0 0
    %720 = vmatpush2.bf16.msra.mxu0 0
    %721 = vmatprep.mubr.bf16.mxu0 0
    %722 = vmatmul.mubr.bf16.gmra.mxu0 %v675
    %v723 = vpop.f32.mrf.mxu0
    %v724 = vadd.f32 0.0, %v723
    %v725 = vpop.f32.mrf.mxu0
    %v726 = vpop.f32.mrf.mxu0
    %v727 = vadd.f32 0.0, %v726
    %v728 = vpop.f32.mrf.mxu0
    %729 = vmatprep.mubr.bf16.mxu0 0
    %730 = vmatmul.mubr.bf16.gmra.mxu0 %v678
    %v731 = vpop.f32.mrf.mxu0
    %v732 = vadd.f32 0.0, %v731
    %v733 = vpop.f32.mrf.mxu0
    %v734 = vpop.f32.mrf.mxu0
    %v735 = vadd.f32 0.0, %v734
    %v736 = vpop.f32.mrf.mxu0
    %737 = vmatprep.mubr.bf16.mxu0 0
    %738 = vmatmul.mubr.bf16.gmra.mxu0 %v681
    %v739 = vpop.f32.mrf.mxu0
    %v740 = vadd.f32 0.0, %v739
    %v741 = vpop.f32.mrf.mxu0
    %v742 = vpop.f32.mrf.mxu0
    %v743 = vadd.f32 0.0, %v742
    %v744 = vpop.f32.mrf.mxu0
    %745 = vmatprep.mubr.bf16.mxu0 0
    %746 = vmatmul.mubr.bf16.gmra.mxu0 %v684
    %v747 = vpop.f32.mrf.mxu0
    %v748 = vadd.f32 0.0, %v747
    %v749 = vpop.f32.mrf.mxu0
    %v750 = vpop.f32.mrf.mxu0
    %v751 = vadd.f32 0.0, %v750
    %v752 = vpop.f32.mrf.mxu0
    %753 = vmatprep.mubr.bf16.mxu0 0
    %754 = vmatmul.mubr.bf16.gmra.mxu0 %v687
    %v755 = vpop.f32.mrf.mxu0
    %v756 = vadd.f32 0.0, %v755
    %v757 = vpop.f32.mrf.mxu0
    %v758 = vpop.f32.mrf.mxu0
    %v759 = vpop.f32.mrf.mxu0
    %760 = vdwg.mxu0
    %v761 = vld [vmem:[%s183 + $0x24] sm:$0xf]
    %v762 = vld [vmem:[%s183 + $0x28] sm:$0xf]
    %v763 = vld [vmem:[%s183 + $0x2c] sm:$0xf]
    %v764 = vld [vmem:[%s183 + $0x30] sm:$0xf]
    %v765 = vld [vmem:[%s183 + $0x34] sm:$0xf]
    %v766 = vld [vmem:[%s183 + $0x38] sm:$0xf]
    %v767 = vld [vmem:[%s183 + $0x3c] sm:$0xf]
    %v768 = vld [vmem:[%s183 + $0x40] sm:$0xf]
    %v769 = vld [vmem:[%s183 + $0x44] sm:$0xf]
    %v779 = vunpack.c.l.b16 %v761
    %v780 = vunpack.c.l.b16 %v762
    %v781 = vunpack.c.l.b16 %v763
    %v782 = vunpack.c.l.b16 %v764
    %v783 = vunpack.c.l.b16 %v765
    %v784 = vunpack.c.l.b16 %v766
    %v785 = vunpack.c.l.b16 %v767
    %v786 = vunpack.c.l.b16 %v768
    %v787 = vunpack.c.l.b16 %v769
    %v788 = vpack.c.b16 %v780, %v779
    %v789 = vpack.c.b16 %v782, %v781
    %v790 = vpack.c.b16 %v784, %v783
    %v791 = vpack.c.b16 %v786, %v785
    %v792 = vpack.c.b16 %v787, %v787
    %v794 = vsel %vm95, %v788, 0
    %v797 = vsel %vm95, %v789, 0
    %v800 = vsel %vm95, %v790, 0
    %v803 = vsel %vm95, %v791, 0
    %v806 = vsel %vm95, %v792, 0
    %808 = vmatprep.subr.bf16.mxu0 0
    %809 = vmatpush1.bf16.msra.mxu0 0
    %810 = vmatprep.subr.bf16.mxu0 0
    %811 = vmatpush1.bf16.msra.mxu0 0
    %812 = vmatprep.subr.bf16.mxu0 0
    %813 = vmatpush1.bf16.msra.mxu0 0
    %814 = vmatprep.subr.bf16.mxu0 0
    %815 = vmatpush1.bf16.msra.mxu0 0
    %816 = vmatprep.subr.bf16.mxu0 0
    %817 = vmatpush1.bf16.msra.mxu0 0
    %818 = vmatprep.subr.bf16.mxu0 0
    %819 = vmatpush1.bf16.msra.mxu0 0
    %820 = vmatprep.subr.bf16.mxu0 0
    %821 = vmatpush1.bf16.msra.mxu0 %v92
    %822 = vmatprep.subr.bf16.mxu0 0
    %823 = vmatpush1.bf16.msra.mxu0 %v91
    %824 = vmatprep.subr.bf16.mxu0 0
    %825 = vmatpush2.bf16.msra.mxu0 0
    %826 = vmatprep.subr.bf16.mxu0 0
    %827 = vmatpush2.bf16.msra.mxu0 0
    %828 = vmatprep.subr.bf16.mxu0 0
    %829 = vmatpush2.bf16.msra.mxu0 0
    %830 = vmatprep.subr.bf16.mxu0 0
    %831 = vmatpush2.bf16.msra.mxu0 0
    %832 = vmatprep.subr.bf16.mxu0 0
    %833 = vmatpush2.bf16.msra.mxu0 0
    %834 = vmatprep.subr.bf16.mxu0 0
    %835 = vmatpush2.bf16.msra.mxu0 0
    %836 = vmatprep.subr.bf16.mxu0 0
    %837 = vmatpush2.bf16.msra.mxu0 0
    %838 = vmatprep.subr.bf16.mxu0 0
    %839 = vmatpush2.bf16.msra.mxu0 0
    %840 = vmatprep.mubr.bf16.mxu0 0
    %841 = vmatmul.mubr.bf16.gmra.mxu0 %v794
    %v842 = vpop.f32.mrf.mxu0
    %v843 = vadd.f32 0.0, %v842
    %v844 = vpop.f32.mrf.mxu0
    %v845 = vpop.f32.mrf.mxu0
    %v846 = vadd.f32 0.0, %v845
    %v847 = vpop.f32.mrf.mxu0
    %848 = vmatprep.mubr.bf16.mxu0 0
    %849 = vmatmul.mubr.bf16.gmra.mxu0 %v797
    %v850 = vpop.f32.mrf.mxu0
    %v851 = vadd.f32 0.0, %v850
    %v852 = vpop.f32.mrf.mxu0
    %v853 = vpop.f32.mrf.mxu0
    %v854 = vadd.f32 0.0, %v853
    %v855 = vpop.f32.mrf.mxu0
    %856 = vmatprep.mubr.bf16.mxu0 0
    %857 = vmatmul.mubr.bf16.gmra.mxu0 %v800
    %v858 = vpop.f32.mrf.mxu0
    %v859 = vadd.f32 0.0, %v858
    %v860 = vpop.f32.mrf.mxu0
    %v861 = vpop.f32.mrf.mxu0
    %v862 = vadd.f32 0.0, %v861
    %v863 = vpop.f32.mrf.mxu0
    %864 = vmatprep.mubr.bf16.mxu0 0
    %865 = vmatmul.mubr.bf16.gmra.mxu0 %v803
    %v866 = vpop.f32.mrf.mxu0
    %v867 = vadd.f32 0.0, %v866
    %v868 = vpop.f32.mrf.mxu0
    %v869 = vpop.f32.mrf.mxu0
    %v870 = vadd.f32 0.0, %v869
    %v871 = vpop.f32.mrf.mxu0
    %872 = vmatprep.mubr.bf16.mxu0 0
    %873 = vmatmul.mubr.bf16.gmra.mxu0 %v806
    %v874 = vpop.f32.mrf.mxu0
    %v875 = vadd.f32 0.0, %v874
    %v876 = vpop.f32.mrf.mxu0
    %v877 = vpop.f32.mrf.mxu0
    %v878 = vpop.f32.mrf.mxu0
    %879 = vdwg.mxu0
    %v880 = vmax.f32 %v724, %v843
    %v881 = vmax.f32 %v727, %v846
    %v882 = vmax.f32 %v732, %v851
    %v883 = vmax.f32 %v735, %v854
    %v884 = vmax.f32 %v740, %v859
    %v885 = vmax.f32 %v743, %v862
    %v886 = vmax.f32 %v748, %v867
    %v887 = vmax.f32 %v751, %v870
    %v888 = vmax.f32 %v756, %v875
    %v889 = vld [vmem:[%s312 + $0x24] sm:$0xf]
    %v890 = vld [vmem:[%s312 + $0x28] sm:$0xf]
    %v891 = vld [vmem:[%s312 + $0x2c] sm:$0xf]
    %v892 = vld [vmem:[%s312 + $0x30] sm:$0xf]
    %v893 = vld [vmem:[%s312 + $0x34] sm:$0xf]
    %v894 = vld [vmem:[%s312 + $0x38] sm:$0xf]
    %v895 = vld [vmem:[%s312 + $0x3c] sm:$0xf]
    %v896 = vld [vmem:[%s312 + $0x40] sm:$0xf]
    %v897 = vld [vmem:[%s312 + $0x44] sm:$0xf]
    %v907 = vunpack.c.l.b16 %v889
    %v908 = vunpack.c.l.b16 %v890
    %v909 = vunpack.c.l.b16 %v891
    %v910 = vunpack.c.l.b16 %v892
    %v911 = vunpack.c.l.b16 %v893
    %v912 = vunpack.c.l.b16 %v894
    %v913 = vunpack.c.l.b16 %v895
    %v914 = vunpack.c.l.b16 %v896
    %v915 = vunpack.c.l.b16 %v897
    %v916 = vpack.c.b16 %v908, %v907
    %v917 = vpack.c.b16 %v910, %v909
    %v918 = vpack.c.b16 %v912, %v911
    %v919 = vpack.c.b16 %v914, %v913
    %v920 = vpack.c.b16 %v915, %v915
    %v922 = vsel %vm95, %v916, 0
    %v925 = vsel %vm95, %v917, 0
    %v928 = vsel %vm95, %v918, 0
    %v931 = vsel %vm95, %v919, 0
    %v934 = vsel %vm95, %v920, 0
    %936 = vmatprep.subr.bf16.mxu0 0
    %937 = vmatpush1.bf16.msra.mxu0 0
    %938 = vmatprep.subr.bf16.mxu0 0
    %939 = vmatpush1.bf16.msra.mxu0 0
    %940 = vmatprep.subr.bf16.mxu0 0
    %941 = vmatpush1.bf16.msra.mxu0 0
    %942 = vmatprep.subr.bf16.mxu0 0
    %943 = vmatpush1.bf16.msra.mxu0 0
    %944 = vmatprep.subr.bf16.mxu0 0
    %945 = vmatpush1.bf16.msra.mxu0 0
    %946 = vmatprep.subr.bf16.mxu0 0
    %947 = vmatpush1.bf16.msra.mxu0 0
    %948 = vmatprep.subr.bf16.mxu0 0
    %949 = vmatpush1.bf16.msra.mxu0 %v92
    %950 = vmatprep.subr.bf16.mxu0 0
    %951 = vmatpush1.bf16.msra.mxu0 %v91
    %952 = vmatprep.subr.bf16.mxu0 0
    %953 = vmatpush2.bf16.msra.mxu0 0
    %954 = vmatprep.subr.bf16.mxu0 0
    %955 = vmatpush2.bf16.msra.mxu0 0
    %956 = vmatprep.subr.bf16.mxu0 0
    %957 = vmatpush2.bf16.msra.mxu0 0
    %958 = vmatprep.subr.bf16.mxu0 0
    %959 = vmatpush2.bf16.msra.mxu0 0
    %960 = vmatprep.subr.bf16.mxu0 0
    %961 = vmatpush2.bf16.msra.mxu0 0
    %962 = vmatprep.subr.bf16.mxu0 0
    %963 = vmatpush2.bf16.msra.mxu0 0
    %964 = vmatprep.subr.bf16.mxu0 0
    %965 = vmatpush2.bf16.msra.mxu0 0
    %966 = vmatprep.subr.bf16.mxu0 0
    %967 = vmatpush2.bf16.msra.mxu0 0
    %968 = vmatprep.mubr.bf16.mxu0 0
    %969 = vmatmul.mubr.bf16.gmra.mxu0 %v922
    %v970 = vpop.f32.mrf.mxu0
    %v971 = vadd.f32 0.0, %v970
    %v972 = vpop.f32.mrf.mxu0
    %v973 = vpop.f32.mrf.mxu0
    %v974 = vadd.f32 0.0, %v973
    %v975 = vpop.f32.mrf.mxu0
    %976 = vmatprep.mubr.bf16.mxu0 0
    %977 = vmatmul.mubr.bf16.gmra.mxu0 %v925
    %v978 = vpop.f32.mrf.mxu0
    %v979 = vadd.f32 0.0, %v978
    %v980 = vpop.f32.mrf.mxu0
    %v981 = vpop.f32.mrf.mxu0
    %v982 = vadd.f32 0.0, %v981
    %v983 = vpop.f32.mrf.mxu0
    %984 = vmatprep.mubr.bf16.mxu0 0
    %985 = vmatmul.mubr.bf16.gmra.mxu0 %v928
    %v986 = vpop.f32.mrf.mxu0
    %v987 = vadd.f32 0.0, %v986
    %v988 = vpop.f32.mrf.mxu0
    %v989 = vpop.f32.mrf.mxu0
    %v990 = vadd.f32 0.0, %v989
    %v991 = vpop.f32.mrf.mxu0
    %992 = vmatprep.mubr.bf16.mxu0 0
    %993 = vmatmul.mubr.bf16.gmra.mxu0 %v931
    %v994 = vpop.f32.mrf.mxu0
    %v995 = vadd.f32 0.0, %v994
    %v996 = vpop.f32.mrf.mxu0
    %v997 = vpop.f32.mrf.mxu0
    %v998 = vadd.f32 0.0, %v997
    %v999 = vpop.f32.mrf.mxu0
    %1000 = vmatprep.mubr.bf16.mxu0 0
    %1001 = vmatmul.mubr.bf16.gmra.mxu0 %v934
    %v1002 = vpop.f32.mrf.mxu0
    %v1003 = vadd.f32 0.0, %v1002
    %v1004 = vpop.f32.mrf.mxu0
    %v1005 = vpop.f32.mrf.mxu0
    %v1006 = vpop.f32.mrf.mxu0
    %1007 = vdwg.mxu0
    %v1008 = vmax.f32 %v880, %v971
    %v1009 = vmax.f32 %v881, %v974
    %v1010 = vmax.f32 %v882, %v979
    %v1011 = vmax.f32 %v883, %v982
    %v1012 = vmax.f32 %v884, %v987
    %v1013 = vmax.f32 %v885, %v990
    %v1014 = vmax.f32 %v886, %v995
    %v1015 = vmax.f32 %v887, %v998
    %v1016 = vmax.f32 %v888, %v1003
    %v1017 = vld [vmem:[%s441 + $0x24] sm:$0xf]
    %v1018 = vld [vmem:[%s441 + $0x28] sm:$0xf]
    %v1019 = vld [vmem:[%s441 + $0x2c] sm:$0xf]
    %v1020 = vld [vmem:[%s441 + $0x30] sm:$0xf]
    %v1021 = vld [vmem:[%s441 + $0x34] sm:$0xf]
    %v1022 = vld [vmem:[%s441 + $0x38] sm:$0xf]
    %v1023 = vld [vmem:[%s441 + $0x3c] sm:$0xf]
    %v1024 = vld [vmem:[%s441 + $0x40] sm:$0xf]
    %v1025 = vld [vmem:[%s441 + $0x44] sm:$0xf]
    %v1035 = vunpack.c.l.b16 %v1017
    %v1036 = vunpack.c.l.b16 %v1018
    %v1037 = vunpack.c.l.b16 %v1019
    %v1038 = vunpack.c.l.b16 %v1020
    %v1039 = vunpack.c.l.b16 %v1021
    %v1040 = vunpack.c.l.b16 %v1022
    %v1041 = vunpack.c.l.b16 %v1023
    %v1042 = vunpack.c.l.b16 %v1024
    %v1043 = vunpack.c.l.b16 %v1025
    %v1044 = vpack.c.b16 %v1036, %v1035
    %v1045 = vpack.c.b16 %v1038, %v1037
    %v1046 = vpack.c.b16 %v1040, %v1039
    %v1047 = vpack.c.b16 %v1042, %v1041
    %v1048 = vpack.c.b16 %v1043, %v1043
    %v1050 = vsel %vm95, %v1044, 0
    %v1053 = vsel %vm95, %v1045, 0
    %v1056 = vsel %vm95, %v1046, 0
    %v1059 = vsel %vm95, %v1047, 0
    %v1062 = vsel %vm95, %v1048, 0
    %1064 = vmatprep.subr.bf16.mxu0 0
    %1065 = vmatpush1.bf16.msra.mxu0 0
    %1066 = vmatprep.subr.bf16.mxu0 0
    %1067 = vmatpush1.bf16.msra.mxu0 0
    %1068 = vmatprep.subr.bf16.mxu0 0
    %1069 = vmatpush1.bf16.msra.mxu0 0
    %1070 = vmatprep.subr.bf16.mxu0 0
    %1071 = vmatpush1.bf16.msra.mxu0 0
    %1072 = vmatprep.subr.bf16.mxu0 0
    %1073 = vmatpush1.bf16.msra.mxu0 0
    %1074 = vmatprep.subr.bf16.mxu0 0
    %1075 = vmatpush1.bf16.msra.mxu0 0
    %1076 = vmatprep.subr.bf16.mxu0 0
    %1077 = vmatpush1.bf16.msra.mxu0 %v92
    %1078 = vmatprep.subr.bf16.mxu0 0
    %1079 = vmatpush1.bf16.msra.mxu0 %v91
    %1080 = vmatprep.subr.bf16.mxu0 0
    %1081 = vmatpush2.bf16.msra.mxu0 0
    %1082 = vmatprep.subr.bf16.mxu0 0
    %1083 = vmatpush2.bf16.msra.mxu0 0
    %1084 = vmatprep.subr.bf16.mxu0 0
    %1085 = vmatpush2.bf16.msra.mxu0 0
    %1086 = vmatprep.subr.bf16.mxu0 0
    %1087 = vmatpush2.bf16.msra.mxu0 0
    %1088 = vmatprep.subr.bf16.mxu0 0
    %1089 = vmatpush2.bf16.msra.mxu0 0
    %1090 = vmatprep.subr.bf16.mxu0 0
    %1091 = vmatpush2.bf16.msra.mxu0 0
    %1092 = vmatprep.subr.bf16.mxu0 0
    %1093 = vmatpush2.bf16.msra.mxu0 0
    %1094 = vmatprep.subr.bf16.mxu0 0
    %1095 = vmatpush2.bf16.msra.mxu0 0
    %1096 = vmatprep.mubr.bf16.mxu0 0
    %1097 = vmatmul.mubr.bf16.gmra.mxu0 %v1050
    %v1098 = vpop.f32.mrf.mxu0
    %v1099 = vadd.f32 0.0, %v1098
    %v1100 = vpop.f32.mrf.mxu0
    %v1101 = vpop.f32.mrf.mxu0
    %v1102 = vadd.f32 0.0, %v1101
    %v1103 = vpop.f32.mrf.mxu0
    %1104 = vmatprep.mubr.bf16.mxu0 0
    %1105 = vmatmul.mubr.bf16.gmra.mxu0 %v1053
    %v1106 = vpop.f32.mrf.mxu0
    %v1107 = vadd.f32 0.0, %v1106
    %v1108 = vpop.f32.mrf.mxu0
    %v1109 = vpop.f32.mrf.mxu0
    %v1110 = vadd.f32 0.0, %v1109
    %v1111 = vpop.f32.mrf.mxu0
    %1112 = vmatprep.mubr.bf16.mxu0 0
    %1113 = vmatmul.mubr.bf16.gmra.mxu0 %v1056
    %v1114 = vpop.f32.mrf.mxu0
    %v1115 = vadd.f32 0.0, %v1114
    %v1116 = vpop.f32.mrf.mxu0
    %v1117 = vpop.f32.mrf.mxu0
    %v1118 = vadd.f32 0.0, %v1117
    %v1119 = vpop.f32.mrf.mxu0
    %1120 = vmatprep.mubr.bf16.mxu0 0
    %1121 = vmatmul.mubr.bf16.gmra.mxu0 %v1059
    %v1122 = vpop.f32.mrf.mxu0
    %v1123 = vadd.f32 0.0, %v1122
    %v1124 = vpop.f32.mrf.mxu0
    %v1125 = vpop.f32.mrf.mxu0
    %v1126 = vadd.f32 0.0, %v1125
    %v1127 = vpop.f32.mrf.mxu0
    %1128 = vmatprep.mubr.bf16.mxu0 0
    %1129 = vmatmul.mubr.bf16.gmra.mxu0 %v1062
    %v1130 = vpop.f32.mrf.mxu0
    %v1131 = vadd.f32 0.0, %v1130
    %v1132 = vpop.f32.mrf.mxu0
    %v1133 = vpop.f32.mrf.mxu0
    %v1134 = vpop.f32.mrf.mxu0
    %1135 = vdwg.mxu0
    %v1136 = vmax.f32 %v1008, %v1099
    %v1137 = vmax.f32 %v1009, %v1102
    %v1138 = vmax.f32 %v1010, %v1107
    %v1139 = vmax.f32 %v1011, %v1110
    %v1140 = vmax.f32 %v1012, %v1115
    %v1141 = vmax.f32 %v1013, %v1118
    %v1142 = vmax.f32 %v1014, %v1123
    %v1143 = vmax.f32 %v1015, %v1126
    %v1144 = vmax.f32 %v1016, %v1131
    %v1145 = vadd.f32 %v1136, %v574
    %v1146 = vadd.f32 %v1137, %v574
    %v1147 = vadd.f32 %v1138, %v574
    %v1148 = vadd.f32 %v1139, %v574
    %v1149 = vadd.f32 %v1140, %v574
    %v1150 = vadd.f32 %v1141, %v574
    %v1151 = vadd.f32 %v1142, %v574
    %v1152 = vadd.f32 %v1143, %v574
    %v1153 = vadd.f32 %v1144, %v574
    %v1154 = vmax.f32 %v1145, 0.0
    %v1155 = vmax.f32 %v1146, 0.0
    %v1156 = vmax.f32 %v1147, 0.0
    %v1157 = vmax.f32 %v1148, 0.0
    %v1158 = vmax.f32 %v1149, 0.0
    %v1159 = vmax.f32 %v1150, 0.0
    %v1160 = vmax.f32 %v1151, 0.0
    %v1161 = vmax.f32 %v1152, 0.0
    %v1162 = vmax.f32 %v1153, 0.0
    %1163 = vst [vmem:[#allocation2 + $0x48] sm:$0xff] %v1154
    %1164 = vst [vmem:[#allocation2 + $0x50] sm:$0xff] %v1155
    %1165 = vst [vmem:[#allocation2 + $0x58] sm:$0xff] %v1156
    %1166 = vst [vmem:[#allocation2 + $0x60] sm:$0xff] %v1157
    %1167 = vst [vmem:[#allocation2 + $0x68] sm:$0xff] %v1158
    %1168 = vst [vmem:[#allocation2 + $0x70] sm:$0xff] %v1159
    %1169 = vst [vmem:[#allocation2 + $0x78] sm:$0xff] %v1160
    %1170 = vst [vmem:[#allocation2 + $0x80] sm:$0xff] %v1161
    %1171 = vst [vmem:[#allocation2 + $0x88] sm:$0xff] %v1162
    %v1172 = vadd.f32 %v1154, %v1155
    %v1173 = vadd.f32 %v1172, %v1156
    %v1174 = vadd.f32 %v1173, %v1157
    %v1175 = vadd.f32 %v1174, %v1158
    %v1176 = vadd.f32 %v1175, %v1159
    %v1177 = vadd.f32 %v1176, %v1160
    %v1178 = vadd.f32 %v1177, %v1161
    %v1179 = vadd.f32 %v1178, %v1162
    %v1180 = vrot.slane %v1179, 4
    %v1181 = vadd.f32 %v1179, %v1180
    %v1182 = vrot.slane %v1181, 2
    %v1183 = vadd.f32 %v1181, %v1182
    %v1184 = vrot.slane %v1183, 1
    %v1185 = vadd.f32 %v1183, %v1184
    %v1186 = vadd.f32 %v617, %v1185
    %v1187 = vmul.f32 %v1154, %v1154
    %v1188 = vmul.f32 %v1155, %v1155
    %v1189 = vmul.f32 %v1156, %v1156
    %v1190 = vmul.f32 %v1157, %v1157
    %v1191 = vmul.f32 %v1158, %v1158
    %v1192 = vmul.f32 %v1159, %v1159
    %v1193 = vmul.f32 %v1160, %v1160
    %v1194 = vmul.f32 %v1161, %v1161
    %v1195 = vmul.f32 %v1162, %v1162
    %v1196 = vadd.f32 %v1187, %v1188
    %v1197 = vadd.f32 %v1196, %v1189
    %v1198 = vadd.f32 %v1197, %v1190
    %v1199 = vadd.f32 %v1198, %v1191
    %v1200 = vadd.f32 %v1199, %v1192
    %v1201 = vadd.f32 %v1200, %v1193
    %v1202 = vadd.f32 %v1201, %v1194
    %v1203 = vadd.f32 %v1202, %v1195
    %v1204 = vrot.slane %v1203, 4
    %v1205 = vadd.f32 %v1203, %v1204
    %v1206 = vrot.slane %v1205, 2
    %v1207 = vadd.f32 %v1205, %v1206
    %v1208 = vrot.slane %v1207, 1
    %v1209 = vadd.f32 %v1207, %v1208
    %v1210 = vadd.f32 %v641, %v1209
    %v1211 = vld [vmem:[%s0 + $0x48] sm:$0xf]
    %v1212 = vld [vmem:[%s0 + $0x4c] sm:$0xf]
    %v1213 = vld [vmem:[%s0 + $0x50] sm:$0xf]
    %v1214 = vld [vmem:[%s0 + $0x54] sm:$0xf]
    %v1215 = vld [vmem:[%s0 + $0x58] sm:$0xf]
    %v1216 = vld [vmem:[%s0 + $0x5c] sm:$0xf]
    %v1217 = vld [vmem:[%s0 + $0x60] sm:$0xf]
    %v1218 = vld [vmem:[%s0 + $0x64] sm:$0xf]
    %v1219 = vld [vmem:[%s0 + $0x68] sm:$0xf]
    %v1229 = vunpack.c.l.b16 %v1211
    %v1230 = vunpack.c.l.b16 %v1212
    %v1231 = vunpack.c.l.b16 %v1213
    %v1232 = vunpack.c.l.b16 %v1214
    %v1233 = vunpack.c.l.b16 %v1215
    %v1234 = vunpack.c.l.b16 %v1216
    %v1235 = vunpack.c.l.b16 %v1217
    %v1236 = vunpack.c.l.b16 %v1218
    %v1237 = vunpack.c.l.b16 %v1219
    %v1238 = vpack.c.b16 %v1230, %v1229
    %v1239 = vpack.c.b16 %v1232, %v1231
    %v1240 = vpack.c.b16 %v1234, %v1233
    %v1241 = vpack.c.b16 %v1236, %v1235
    %v1242 = vpack.c.b16 %v1237, %v1237
    %v1244 = vsel %vm95, %v1238, 0
    %v1247 = vsel %vm95, %v1239, 0
    %v1250 = vsel %vm95, %v1240, 0
    %v1253 = vsel %vm95, %v1241, 0
    %v1256 = vsel %vm95, %v1242, 0
    %1258 = vmatprep.subr.bf16.mxu0 0
    %1259 = vmatpush1.bf16.msra.mxu0 0
    %1260 = vmatprep.subr.bf16.mxu0 0
    %1261 = vmatpush1.bf16.msra.mxu0 0
    %1262 = vmatprep.subr.bf16.mxu0 0
    %1263 = vmatpush1.bf16.msra.mxu0 0
    %1264 = vmatprep.subr.bf16.mxu0 0
    %1265 = vmatpush1.bf16.msra.mxu0 0
    %1266 = vmatprep.subr.bf16.mxu0 0
    %1267 = vmatpush1.bf16.msra.mxu0 0
    %1268 = vmatprep.subr.bf16.mxu0 0
    %1269 = vmatpush1.bf16.msra.mxu0 0
    %1270 = vmatprep.subr.bf16.mxu0 0
    %1271 = vmatpush1.bf16.msra.mxu0 %v92
    %1272 = vmatprep.subr.bf16.mxu0 0
    %1273 = vmatpush1.bf16.msra.mxu0 %v91
    %1274 = vmatprep.subr.bf16.mxu0 0
    %1275 = vmatpush2.bf16.msra.mxu0 0
    %1276 = vmatprep.subr.bf16.mxu0 0
    %1277 = vmatpush2.bf16.msra.mxu0 0
    %1278 = vmatprep.subr.bf16.mxu0 0
    %1279 = vmatpush2.bf16.msra.mxu0 0
    %1280 = vmatprep.subr.bf16.mxu0 0
    %1281 = vmatpush2.bf16.msra.mxu0 0
    %1282 = vmatprep.subr.bf16.mxu0 0
    %1283 = vmatpush2.bf16.msra.mxu0 0
    %1284 = vmatprep.subr.bf16.mxu0 0
    %1285 = vmatpush2.bf16.msra.mxu0 0
    %1286 = vmatprep.subr.bf16.mxu0 0
    %1287 = vmatpush2.bf16.msra.mxu0 0
    %1288 = vmatprep.subr.bf16.mxu0 0
    %1289 = vmatpush2.bf16.msra.mxu0 0
    %1290 = vmatprep.mubr.bf16.mxu0 0
    %1291 = vmatmul.mubr.bf16.gmra.mxu0 %v1244
    %v1292 = vpop.f32.mrf.mxu0
    %v1293 = vadd.f32 0.0, %v1292
    %v1294 = vpop.f32.mrf.mxu0
    %v1295 = vpop.f32.mrf.mxu0
    %v1296 = vadd.f32 0.0, %v1295
    %v1297 = vpop.f32.mrf.mxu0
    %1298 = vmatprep.mubr.bf16.mxu0 0
    %1299 = vmatmul.mubr.bf16.gmra.mxu0 %v1247
    %v1300 = vpop.f32.mrf.mxu0
    %v1301 = vadd.f32 0.0, %v1300
    %v1302 = vpop.f32.mrf.mxu0
    %v1303 = vpop.f32.mrf.mxu0
    %v1304 = vadd.f32 0.0, %v1303
    %v1305 = vpop.f32.mrf.mxu0
    %1306 = vmatprep.mubr.bf16.mxu0 0
    %1307 = vmatmul.mubr.bf16.gmra.mxu0 %v1250
    %v1308 = vpop.f32.mrf.mxu0
    %v1309 = vadd.f32 0.0, %v1308
    %v1310 = vpop.f32.mrf.mxu0
    %v1311 = vpop.f32.mrf.mxu0
    %v1312 = vadd.f32 0.0, %v1311
    %v1313 = vpop.f32.mrf.mxu0
    %1314 = vmatprep.mubr.bf16.mxu0 0
    %1315 = vmatmul.mubr.bf16.gmra.mxu0 %v1253
    %v1316 = vpop.f32.mrf.mxu0
    %v1317 = vadd.f32 0.0, %v1316
    %v1318 = vpop.f32.mrf.mxu0
    %v1319 = vpop.f32.mrf.mxu0
    %v1320 = vadd.f32 0.0, %v1319
    %v1321 = vpop.f32.mrf.mxu0
    %1322 = vmatprep.mubr.bf16.mxu0 0
    %1323 = vmatmul.mubr.bf16.gmra.mxu0 %v1256
    %v1324 = vpop.f32.mrf.mxu0
    %v1325 = vadd.f32 0.0, %v1324
    %v1326 = vpop.f32.mrf.mxu0
    %v1327 = vpop.f32.mrf.mxu0
    %v1328 = vpop.f32.mrf.mxu0
    %1329 = vdwg.mxu0
    %v1330 = vld [vmem:[%s183 + $0x48] sm:$0xf]
    %v1331 = vld [vmem:[%s183 + $0x4c] sm:$0xf]
    %v1332 = vld [vmem:[%s183 + $0x50] sm:$0xf]
    %v1333 = vld [vmem:[%s183 + $0x54] sm:$0xf]
    %v1334 = vld [vmem:[%s183 + $0x58] sm:$0xf]
    %v1335 = vld [vmem:[%s183 + $0x5c] sm:$0xf]
    %v1336 = vld [vmem:[%s183 + $0x60] sm:$0xf]
    %v1337 = vld [vmem:[%s183 + $0x64] sm:$0xf]
    %v1338 = vld [vmem:[%s183 + $0x68] sm:$0xf]
    %v1348 = vunpack.c.l.b16 %v1330
    %v1349 = vunpack.c.l.b16 %v1331
    %v1350 = vunpack.c.l.b16 %v1332
    %v1351 = vunpack.c.l.b16 %v1333
    %v1352 = vunpack.c.l.b16 %v1334
    %v1353 = vunpack.c.l.b16 %v1335
    %v1354 = vunpack.c.l.b16 %v1336
    %v1355 = vunpack.c.l.b16 %v1337
    %v1356 = vunpack.c.l.b16 %v1338
    %v1357 = vpack.c.b16 %v1349, %v1348
    %v1358 = vpack.c.b16 %v1351, %v1350
    %v1359 = vpack.c.b16 %v1353, %v1352
    %v1360 = vpack.c.b16 %v1355, %v1354
    %v1361 = vpack.c.b16 %v1356, %v1356
    %v1363 = vsel %vm95, %v1357, 0
    %v1366 = vsel %vm95, %v1358, 0
    %v1369 = vsel %vm95, %v1359, 0
    %v1372 = vsel %vm95, %v1360, 0
    %v1375 = vsel %vm95, %v1361, 0
    %1377 = vmatprep.subr.bf16.mxu0 0
    %1378 = vmatpush1.bf16.msra.mxu0 0
    %1379 = vmatprep.subr.bf16.mxu0 0
    %1380 = vmatpush1.bf16.msra.mxu0 0
    %1381 = vmatprep.subr.bf16.mxu0 0
    %1382 = vmatpush1.bf16.msra.mxu0 0
    %1383 = vmatprep.subr.bf16.mxu0 0
    %1384 = vmatpush1.bf16.msra.mxu0 0
    %1385 = vmatprep.subr.bf16.mxu0 0
    %1386 = vmatpush1.bf16.msra.mxu0 0
    %1387 = vmatprep.subr.bf16.mxu0 0
    %1388 = vmatpush1.bf16.msra.mxu0 0
    %1389 = vmatprep.subr.bf16.mxu0 0
    %1390 = vmatpush1.bf16.msra.mxu0 %v92
    %1391 = vmatprep.subr.bf16.mxu0 0
    %1392 = vmatpush1.bf16.msra.mxu0 %v91
    %1393 = vmatprep.subr.bf16.mxu0 0
    %1394 = vmatpush2.bf16.msra.mxu0 0
    %1395 = vmatprep.subr.bf16.mxu0 0
    %1396 = vmatpush2.bf16.msra.mxu0 0
    %1397 = vmatprep.subr.bf16.mxu0 0
    %1398 = vmatpush2.bf16.msra.mxu0 0
    %1399 = vmatprep.subr.bf16.mxu0 0
    %1400 = vmatpush2.bf16.msra.mxu0 0
    %1401 = vmatprep.subr.bf16.mxu0 0
    %1402 = vmatpush2.bf16.msra.mxu0 0
    %1403 = vmatprep.subr.bf16.mxu0 0
    %1404 = vmatpush2.bf16.msra.mxu0 0
    %1405 = vmatprep.subr.bf16.mxu0 0
    %1406 = vmatpush2.bf16.msra.mxu0 0
    %1407 = vmatprep.subr.bf16.mxu0 0
    %1408 = vmatpush2.bf16.msra.mxu0 0
    %1409 = vmatprep.mubr.bf16.mxu0 0
    %1410 = vmatmul.mubr.bf16.gmra.mxu0 %v1363
    %v1411 = vpop.f32.mrf.mxu0
    %v1412 = vadd.f32 0.0, %v1411
    %v1413 = vpop.f32.mrf.mxu0
    %v1414 = vpop.f32.mrf.mxu0
    %v1415 = vadd.f32 0.0, %v1414
    %v1416 = vpop.f32.mrf.mxu0
    %1417 = vmatprep.mubr.bf16.mxu0 0
    %1418 = vmatmul.mubr.bf16.gmra.mxu0 %v1366
    %v1419 = vpop.f32.mrf.mxu0
    %v1420 = vadd.f32 0.0, %v1419
    %v1421 = vpop.f32.mrf.mxu0
    %v1422 = vpop.f32.mrf.mxu0
    %v1423 = vadd.f32 0.0, %v1422
    %v1424 = vpop.f32.mrf.mxu0
    %1425 = vmatprep.mubr.bf16.mxu0 0
    %1426 = vmatmul.mubr.bf16.gmra.mxu0 %v1369
    %v1427 = vpop.f32.mrf.mxu0
    %v1428 = vadd.f32 0.0, %v1427
    %v1429 = vpop.f32.mrf.mxu0
    %v1430 = vpop.f32.mrf.mxu0
    %v1431 = vadd.f32 0.0, %v1430
    %v1432 = vpop.f32.mrf.mxu0
    %1433 = vmatprep.mubr.bf16.mxu0 0
    %1434 = vmatmul.mubr.bf16.gmra.mxu0 %v1372
    %v1435 = vpop.f32.mrf.mxu0
    %v1436 = vadd.f32 0.0, %v1435
    %v1437 = vpop.f32.mrf.mxu0
    %v1438 = vpop.f32.mrf.mxu0
    %v1439 = vadd.f32 0.0, %v1438
    %v1440 = vpop.f32.mrf.mxu0
    %1441 = vmatprep.mubr.bf16.mxu0 0
    %1442 = vmatmul.mubr.bf16.gmra.mxu0 %v1375
    %v1443 = vpop.f32.mrf.mxu0
    %v1444 = vadd.f32 0.0, %v1443
    %v1445 = vpop.f32.mrf.mxu0
    %v1446 = vpop.f32.mrf.mxu0
    %v1447 = vpop.f32.mrf.mxu0
    %1448 = vdwg.mxu0
    %v1449 = vmax.f32 %v1293, %v1412
    %v1450 = vmax.f32 %v1296, %v1415
    %v1451 = vmax.f32 %v1301, %v1420
    %v1452 = vmax.f32 %v1304, %v1423
    %v1453 = vmax.f32 %v1309, %v1428
    %v1454 = vmax.f32 %v1312, %v1431
    %v1455 = vmax.f32 %v1317, %v1436
    %v1456 = vmax.f32 %v1320, %v1439
    %v1457 = vmax.f32 %v1325, %v1444
    %v1458 = vld [vmem:[%s312 + $0x48] sm:$0xf]
    %v1459 = vld [vmem:[%s312 + $0x4c] sm:$0xf]
    %v1460 = vld [vmem:[%s312 + $0x50] sm:$0xf]
    %v1461 = vld [vmem:[%s312 + $0x54] sm:$0xf]
    %v1462 = vld [vmem:[%s312 + $0x58] sm:$0xf]
    %v1463 = vld [vmem:[%s312 + $0x5c] sm:$0xf]
    %v1464 = vld [vmem:[%s312 + $0x60] sm:$0xf]
    %v1465 = vld [vmem:[%s312 + $0x64] sm:$0xf]
    %v1466 = vld [vmem:[%s312 + $0x68] sm:$0xf]
    %v1476 = vunpack.c.l.b16 %v1458
    %v1477 = vunpack.c.l.b16 %v1459
    %v1478 = vunpack.c.l.b16 %v1460
    %v1479 = vunpack.c.l.b16 %v1461
    %v1480 = vunpack.c.l.b16 %v1462
    %v1481 = vunpack.c.l.b16 %v1463
    %v1482 = vunpack.c.l.b16 %v1464
    %v1483 = vunpack.c.l.b16 %v1465
    %v1484 = vunpack.c.l.b16 %v1466
    %v1485 = vpack.c.b16 %v1477, %v1476
    %v1486 = vpack.c.b16 %v1479, %v1478
    %v1487 = vpack.c.b16 %v1481, %v1480
    %v1488 = vpack.c.b16 %v1483, %v1482
    %v1489 = vpack.c.b16 %v1484, %v1484
    %v1491 = vsel %vm95, %v1485, 0
    %v1494 = vsel %vm95, %v1486, 0
    %v1497 = vsel %vm95, %v1487, 0
    %v1500 = vsel %vm95, %v1488, 0
    %v1503 = vsel %vm95, %v1489, 0
    %1505 = vmatprep.subr.bf16.mxu0 0
    %1506 = vmatpush1.bf16.msra.mxu0 0
    %1507 = vmatprep.subr.bf16.mxu0 0
    %1508 = vmatpush1.bf16.msra.mxu0 0
    %1509 = vmatprep.subr.bf16.mxu0 0
    %1510 = vmatpush1.bf16.msra.mxu0 0
    %1511 = vmatprep.subr.bf16.mxu0 0
    %1512 = vmatpush1.bf16.msra.mxu0 0
    %1513 = vmatprep.subr.bf16.mxu0 0
    %1514 = vmatpush1.bf16.msra.mxu0 0
    %1515 = vmatprep.subr.bf16.mxu0 0
    %1516 = vmatpush1.bf16.msra.mxu0 0
    %1517 = vmatprep.subr.bf16.mxu0 0
    %1518 = vmatpush1.bf16.msra.mxu0 %v92
    %1519 = vmatprep.subr.bf16.mxu0 0
    %1520 = vmatpush1.bf16.msra.mxu0 %v91
    %1521 = vmatprep.subr.bf16.mxu0 0
    %1522 = vmatpush2.bf16.msra.mxu0 0
    %1523 = vmatprep.subr.bf16.mxu0 0
    %1524 = vmatpush2.bf16.msra.mxu0 0
    %1525 = vmatprep.subr.bf16.mxu0 0
    %1526 = vmatpush2.bf16.msra.mxu0 0
    %1527 = vmatprep.subr.bf16.mxu0 0
    %1528 = vmatpush2.bf16.msra.mxu0 0
    %1529 = vmatprep.subr.bf16.mxu0 0
    %1530 = vmatpush2.bf16.msra.mxu0 0
    %1531 = vmatprep.subr.bf16.mxu0 0
    %1532 = vmatpush2.bf16.msra.mxu0 0
    %1533 = vmatprep.subr.bf16.mxu0 0
    %1534 = vmatpush2.bf16.msra.mxu0 0
    %1535 = vmatprep.subr.bf16.mxu0 0
    %1536 = vmatpush2.bf16.msra.mxu0 0
    %1537 = vmatprep.mubr.bf16.mxu0 0
    %1538 = vmatmul.mubr.bf16.gmra.mxu0 %v1491
    %v1539 = vpop.f32.mrf.mxu0
    %v1540 = vadd.f32 0.0, %v1539
    %v1541 = vpop.f32.mrf.mxu0
    %v1542 = vpop.f32.mrf.mxu0
    %v1543 = vadd.f32 0.0, %v1542
    %v1544 = vpop.f32.mrf.mxu0
    %1545 = vmatprep.mubr.bf16.mxu0 0
    %1546 = vmatmul.mubr.bf16.gmra.mxu0 %v1494
    %v1547 = vpop.f32.mrf.mxu0
    %v1548 = vadd.f32 0.0, %v1547
    %v1549 = vpop.f32.mrf.mxu0
    %v1550 = vpop.f32.mrf.mxu0
    %v1551 = vadd.f32 0.0, %v1550
    %v1552 = vpop.f32.mrf.mxu0
    %1553 = vmatprep.mubr.bf16.mxu0 0
    %1554 = vmatmul.mubr.bf16.gmra.mxu0 %v1497
    %v1555 = vpop.f32.mrf.mxu0
    %v1556 = vadd.f32 0.0, %v1555
    %v1557 = vpop.f32.mrf.mxu0
    %v1558 = vpop.f32.mrf.mxu0
    %v1559 = vadd.f32 0.0, %v1558
    %v1560 = vpop.f32.mrf.mxu0
    %1561 = vmatprep.mubr.bf16.mxu0 0
    %1562 = vmatmul.mubr.bf16.gmra.mxu0 %v1500
    %v1563 = vpop.f32.mrf.mxu0
    %v1564 = vadd.f32 0.0, %v1563
    %v1565 = vpop.f32.mrf.mxu0
    %v1566 = vpop.f32.mrf.mxu0
    %v1567 = vadd.f32 0.0, %v1566
    %v1568 = vpop.f32.mrf.mxu0
    %1569 = vmatprep.mubr.bf16.mxu0 0
    %1570 = vmatmul.mubr.bf16.gmra.mxu0 %v1503
    %v1571 = vpop.f32.mrf.mxu0
    %v1572 = vadd.f32 0.0, %v1571
    %v1573 = vpop.f32.mrf.mxu0
    %v1574 = vpop.f32.mrf.mxu0
    %v1575 = vpop.f32.mrf.mxu0
    %1576 = vdwg.mxu0
    %v1577 = vmax.f32 %v1449, %v1540
    %v1578 = vmax.f32 %v1450, %v1543
    %v1579 = vmax.f32 %v1451, %v1548
    %v1580 = vmax.f32 %v1452, %v1551
    %v1581 = vmax.f32 %v1453, %v1556
    %v1582 = vmax.f32 %v1454, %v1559
    %v1583 = vmax.f32 %v1455, %v1564
    %v1584 = vmax.f32 %v1456, %v1567
    %v1585 = vmax.f32 %v1457, %v1572
    %v1586 = vld [vmem:[%s441 + $0x48] sm:$0xf]
    %v1587 = vld [vmem:[%s441 + $0x4c] sm:$0xf]
    %v1588 = vld [vmem:[%s441 + $0x50] sm:$0xf]
    %v1589 = vld [vmem:[%s441 + $0x54] sm:$0xf]
    %v1590 = vld [vmem:[%s441 + $0x58] sm:$0xf]
    %v1591 = vld [vmem:[%s441 + $0x5c] sm:$0xf]
    %v1592 = vld [vmem:[%s441 + $0x60] sm:$0xf]
    %v1593 = vld [vmem:[%s441 + $0x64] sm:$0xf]
    %v1594 = vld [vmem:[%s441 + $0x68] sm:$0xf]
    %v1604 = vunpack.c.l.b16 %v1586
    %v1605 = vunpack.c.l.b16 %v1587
    %v1606 = vunpack.c.l.b16 %v1588
    %v1607 = vunpack.c.l.b16 %v1589
    %v1608 = vunpack.c.l.b16 %v1590
    %v1609 = vunpack.c.l.b16 %v1591
    %v1610 = vunpack.c.l.b16 %v1592
    %v1611 = vunpack.c.l.b16 %v1593
    %v1612 = vunpack.c.l.b16 %v1594
    %v1613 = vpack.c.b16 %v1605, %v1604
    %v1614 = vpack.c.b16 %v1607, %v1606
    %v1615 = vpack.c.b16 %v1609, %v1608
    %v1616 = vpack.c.b16 %v1611, %v1610
    %v1617 = vpack.c.b16 %v1612, %v1612
    %v1619 = vsel %vm95, %v1613, 0
    %v1622 = vsel %vm95, %v1614, 0
    %v1625 = vsel %vm95, %v1615, 0
    %v1628 = vsel %vm95, %v1616, 0
    %v1631 = vsel %vm95, %v1617, 0
    %1633 = vmatprep.subr.bf16.mxu0 0
    %1634 = vmatpush1.bf16.msra.mxu0 0
    %1635 = vmatprep.subr.bf16.mxu0 0
    %1636 = vmatpush1.bf16.msra.mxu0 0
    %1637 = vmatprep.subr.bf16.mxu0 0
    %1638 = vmatpush1.bf16.msra.mxu0 0
    %1639 = vmatprep.subr.bf16.mxu0 0
    %1640 = vmatpush1.bf16.msra.mxu0 0
    %1641 = vmatprep.subr.bf16.mxu0 0
    %1642 = vmatpush1.bf16.msra.mxu0 0
    %1643 = vmatprep.subr.bf16.mxu0 0
    %1644 = vmatpush1.bf16.msra.mxu0 0
    %1645 = vmatprep.subr.bf16.mxu0 0
    %1646 = vmatpush1.bf16.msra.mxu0 %v92
    %1647 = vmatprep.subr.bf16.mxu0 0
    %1648 = vmatpush1.bf16.msra.mxu0 %v91
    %1649 = vmatprep.subr.bf16.mxu0 0
    %1650 = vmatpush2.bf16.msra.mxu0 0
    %1651 = vmatprep.subr.bf16.mxu0 0
    %1652 = vmatpush2.bf16.msra.mxu0 0
    %1653 = vmatprep.subr.bf16.mxu0 0
    %1654 = vmatpush2.bf16.msra.mxu0 0
    %1655 = vmatprep.subr.bf16.mxu0 0
    %1656 = vmatpush2.bf16.msra.mxu0 0
    %1657 = vmatprep.subr.bf16.mxu0 0
    %1658 = vmatpush2.bf16.msra.mxu0 0
    %1659 = vmatprep.subr.bf16.mxu0 0
    %1660 = vmatpush2.bf16.msra.mxu0 0
    %1661 = vmatprep.subr.bf16.mxu0 0
    %1662 = vmatpush2.bf16.msra.mxu0 0
    %1663 = vmatprep.subr.bf16.mxu0 0
    %1664 = vmatpush2.bf16.msra.mxu0 0
    %1665 = vmatprep.mubr.bf16.mxu0 0
    %1666 = vmatmul.mubr.bf16.gmra.mxu0 %v1619
    %v1667 = vpop.f32.mrf.mxu0
    %v1668 = vadd.f32 0.0, %v1667
    %v1669 = vpop.f32.mrf.mxu0
    %v1670 = vpop.f32.mrf.mxu0
    %v1671 = vadd.f32 0.0, %v1670
    %v1672 = vpop.f32.mrf.mxu0
    %1673 = vmatprep.mubr.bf16.mxu0 0
    %1674 = vmatmul.mubr.bf16.gmra.mxu0 %v1622
    %v1675 = vpop.f32.mrf.mxu0
    %v1676 = vadd.f32 0.0, %v1675
    %v1677 = vpop.f32.mrf.mxu0
    %v1678 = vpop.f32.mrf.mxu0
    %v1679 = vadd.f32 0.0, %v1678
    %v1680 = vpop.f32.mrf.mxu0
    %1681 = vmatprep.mubr.bf16.mxu0 0
    %1682 = vmatmul.mubr.bf16.gmra.mxu0 %v1625
    %v1683 = vpop.f32.mrf.mxu0
    %v1684 = vadd.f32 0.0, %v1683
    %v1685 = vpop.f32.mrf.mxu0
    %v1686 = vpop.f32.mrf.mxu0
    %v1687 = vadd.f32 0.0, %v1686
    %v1688 = vpop.f32.mrf.mxu0
    %1689 = vmatprep.mubr.bf16.mxu0 0
    %1690 = vmatmul.mubr.bf16.gmra.mxu0 %v1628
    %v1691 = vpop.f32.mrf.mxu0
    %v1692 = vadd.f32 0.0, %v1691
    %v1693 = vpop.f32.mrf.mxu0
    %v1694 = vpop.f32.mrf.mxu0
    %v1695 = vadd.f32 0.0, %v1694
    %v1696 = vpop.f32.mrf.mxu0
    %1697 = vmatprep.mubr.bf16.mxu0 0
    %1698 = vmatmul.mubr.bf16.gmra.mxu0 %v1631
    %v1699 = vpop.f32.mrf.mxu0
    %v1700 = vadd.f32 0.0, %v1699
    %v1701 = vpop.f32.mrf.mxu0
    %v1702 = vpop.f32.mrf.mxu0
    %v1703 = vpop.f32.mrf.mxu0
    %1704 = vdwg.mxu0
    %v1705 = vmax.f32 %v1577, %v1668
    %v1706 = vmax.f32 %v1578, %v1671
    %v1707 = vmax.f32 %v1579, %v1676
    %v1708 = vmax.f32 %v1580, %v1679
    %v1709 = vmax.f32 %v1581, %v1684
    %v1710 = vmax.f32 %v1582, %v1687
    %v1711 = vmax.f32 %v1583, %v1692
    %v1712 = vmax.f32 %v1584, %v1695
    %v1713 = vmax.f32 %v1585, %v1700
    %v1714 = vadd.f32 %v1705, %v574
    %v1715 = vadd.f32 %v1706, %v574
    %v1716 = vadd.f32 %v1707, %v574
    %v1717 = vadd.f32 %v1708, %v574
    %v1718 = vadd.f32 %v1709, %v574
    %v1719 = vadd.f32 %v1710, %v574
    %v1720 = vadd.f32 %v1711, %v574
    %v1721 = vadd.f32 %v1712, %v574
    %v1722 = vadd.f32 %v1713, %v574
    %v1723 = vmax.f32 %v1714, 0.0
    %v1724 = vmax.f32 %v1715, 0.0
    %v1725 = vmax.f32 %v1716, 0.0
    %v1726 = vmax.f32 %v1717, 0.0
    %v1727 = vmax.f32 %v1718, 0.0
    %v1728 = vmax.f32 %v1719, 0.0
    %v1729 = vmax.f32 %v1720, 0.0
    %v1730 = vmax.f32 %v1721, 0.0
    %v1731 = vmax.f32 %v1722, 0.0
    %1732 = vst [vmem:[#allocation2 + $0x90] sm:$0xff] %v1723
    %1733 = vst [vmem:[#allocation2 + $0x98] sm:$0xff] %v1724
    %1734 = vst [vmem:[#allocation2 + $0xa0] sm:$0xff] %v1725
    %1735 = vst [vmem:[#allocation2 + $0xa8] sm:$0xff] %v1726
    %1736 = vst [vmem:[#allocation2 + $0xb0] sm:$0xff] %v1727
    %1737 = vst [vmem:[#allocation2 + $0xb8] sm:$0xff] %v1728
    %1738 = vst [vmem:[#allocation2 + $0xc0] sm:$0xff] %v1729
    %1739 = vst [vmem:[#allocation2 + $0xc8] sm:$0xff] %v1730
    %1740 = vst [vmem:[#allocation2 + $0xd0] sm:$0xff] %v1731
    %v1741 = vadd.f32 %v1723, %v1724
    %v1742 = vadd.f32 %v1741, %v1725
    %v1743 = vadd.f32 %v1742, %v1726
    %v1744 = vadd.f32 %v1743, %v1727
    %v1745 = vadd.f32 %v1744, %v1728
    %v1746 = vadd.f32 %v1745, %v1729
    %v1747 = vadd.f32 %v1746, %v1730
    %v1748 = vadd.f32 %v1747, %v1731
    %v1749 = vrot.slane %v1748, 4
    %v1750 = vadd.f32 %v1748, %v1749
    %v1751 = vrot.slane %v1750, 2
    %v1752 = vadd.f32 %v1750, %v1751
    %v1753 = vrot.slane %v1752, 1
    %v1754 = vadd.f32 %v1752, %v1753
    %v1755 = vadd.f32 %v1186, %v1754
    %v1756 = vmul.f32 %v1723, %v1723
    %v1757 = vmul.f32 %v1724, %v1724
    %v1758 = vmul.f32 %v1725, %v1725
    %v1759 = vmul.f32 %v1726, %v1726
    %v1760 = vmul.f32 %v1727, %v1727
    %v1761 = vmul.f32 %v1728, %v1728
    %v1762 = vmul.f32 %v1729, %v1729
    %v1763 = vmul.f32 %v1730, %v1730
    %v1764 = vmul.f32 %v1731, %v1731
    %v1765 = vadd.f32 %v1756, %v1757
    %v1766 = vadd.f32 %v1765, %v1758
    %v1767 = vadd.f32 %v1766, %v1759
    %v1768 = vadd.f32 %v1767, %v1760
    %v1769 = vadd.f32 %v1768, %v1761
    %v1770 = vadd.f32 %v1769, %v1762
    %v1771 = vadd.f32 %v1770, %v1763
    %v1772 = vadd.f32 %v1771, %v1764
    %v1773 = vrot.slane %v1772, 4
    %v1774 = vadd.f32 %v1772, %v1773
    %v1775 = vrot.slane %v1774, 2
    %v1776 = vadd.f32 %v1774, %v1775
    %v1777 = vrot.slane %v1776, 1
    %v1778 = vadd.f32 %v1776, %v1777
    %v1779 = vadd.f32 %v1210, %v1778
    %v1780 = vld [vmem:[%s0 + $0x6c] sm:$0xf]
    %v1781 = vld [vmem:[%s0 + $0x70] sm:$0xf]
    %v1782 = vld [vmem:[%s0 + $0x74] sm:$0xf]
    %v1783 = vld [vmem:[%s0 + $0x78] sm:$0xf]
    %v1784 = vld [vmem:[%s0 + $0x7c] sm:$0xf]
    %v1785 = vld [vmem:[%s0 + $0x80] sm:$0xf]
    %v1786 = vld [vmem:[%s0 + $0x84] sm:$0xf]
    %v1787 = vld [vmem:[%s0 + $0x88] sm:$0xf]
    %v1788 = vld [vmem:[%s0 + $0x8c] sm:$0xf]
    %v1798 = vunpack.c.l.b16 %v1780
    %v1799 = vunpack.c.l.b16 %v1781
    %v1800 = vunpack.c.l.b16 %v1782
    %v1801 = vunpack.c.l.b16 %v1783
    %v1802 = vunpack.c.l.b16 %v1784
    %v1803 = vunpack.c.l.b16 %v1785
    %v1804 = vunpack.c.l.b16 %v1786
    %v1805 = vunpack.c.l.b16 %v1787
    %v1806 = vunpack.c.l.b16 %v1788
    %v1807 = vpack.c.b16 %v1799, %v1798
    %v1808 = vpack.c.b16 %v1801, %v1800
    %v1809 = vpack.c.b16 %v1803, %v1802
    %v1810 = vpack.c.b16 %v1805, %v1804
    %v1811 = vpack.c.b16 %v1806, %v1806
    %v1813 = vsel %vm95, %v1807, 0
    %v1816 = vsel %vm95, %v1808, 0
    %v1819 = vsel %vm95, %v1809, 0
    %v1822 = vsel %vm95, %v1810, 0
    %v1825 = vsel %vm95, %v1811, 0
    %1827 = vmatprep.subr.bf16.mxu0 0
    %1828 = vmatpush1.bf16.msra.mxu0 0
    %1829 = vmatprep.subr.bf16.mxu0 0
    %1830 = vmatpush1.bf16.msra.mxu0 0
    %1831 = vmatprep.subr.bf16.mxu0 0
    %1832 = vmatpush1.bf16.msra.mxu0 0
    %1833 = vmatprep.subr.bf16.mxu0 0
    %1834 = vmatpush1.bf16.msra.mxu0 0
    %1835 = vmatprep.subr.bf16.mxu0 0
    %1836 = vmatpush1.bf16.msra.mxu0 0
    %1837 = vmatprep.subr.bf16.mxu0 0
    %1838 = vmatpush1.bf16.msra.mxu0 0
    %1839 = vmatprep.subr.bf16.mxu0 0
    %1840 = vmatpush1.bf16.msra.mxu0 %v92
    %1841 = vmatprep.subr.bf16.mxu0 0
    %1842 = vmatpush1.bf16.msra.mxu0 %v91
    %1843 = vmatprep.subr.bf16.mxu0 0
    %1844 = vmatpush2.bf16.msra.mxu0 0
    %1845 = vmatprep.subr.bf16.mxu0 0
    %1846 = vmatpush2.bf16.msra.mxu0 0
    %1847 = vmatprep.subr.bf16.mxu0 0
    %1848 = vmatpush2.bf16.msra.mxu0 0
    %1849 = vmatprep.subr.bf16.mxu0 0
    %1850 = vmatpush2.bf16.msra.mxu0 0
    %1851 = vmatprep.subr.bf16.mxu0 0
    %1852 = vmatpush2.bf16.msra.mxu0 0
    %1853 = vmatprep.subr.bf16.mxu0 0
    %1854 = vmatpush2.bf16.msra.mxu0 0
    %1855 = vmatprep.subr.bf16.mxu0 0
    %1856 = vmatpush2.bf16.msra.mxu0 0
    %1857 = vmatprep.subr.bf16.mxu0 0
    %1858 = vmatpush2.bf16.msra.mxu0 0
    %1859 = vmatprep.mubr.bf16.mxu0 0
    %1860 = vmatmul.mubr.bf16.gmra.mxu0 %v1813
    %v1861 = vpop.f32.mrf.mxu0
    %v1862 = vadd.f32 0.0, %v1861
    %v1863 = vpop.f32.mrf.mxu0
    %v1864 = vpop.f32.mrf.mxu0
    %v1865 = vadd.f32 0.0, %v1864
    %v1866 = vpop.f32.mrf.mxu0
    %1867 = vmatprep.mubr.bf16.mxu0 0
    %1868 = vmatmul.mubr.bf16.gmra.mxu0 %v1816
    %v1869 = vpop.f32.mrf.mxu0
    %v1870 = vadd.f32 0.0, %v1869
    %v1871 = vpop.f32.mrf.mxu0
    %v1872 = vpop.f32.mrf.mxu0
    %v1873 = vadd.f32 0.0, %v1872
    %v1874 = vpop.f32.mrf.mxu0
    %1875 = vmatprep.mubr.bf16.mxu0 0
    %1876 = vmatmul.mubr.bf16.gmra.mxu0 %v1819
    %v1877 = vpop.f32.mrf.mxu0
    %v1878 = vadd.f32 0.0, %v1877
    %v1879 = vpop.f32.mrf.mxu0
    %v1880 = vpop.f32.mrf.mxu0
    %v1881 = vadd.f32 0.0, %v1880
    %v1882 = vpop.f32.mrf.mxu0
    %1883 = vmatprep.mubr.bf16.mxu0 0
    %1884 = vmatmul.mubr.bf16.gmra.mxu0 %v1822
    %v1885 = vpop.f32.mrf.mxu0
    %v1886 = vadd.f32 0.0, %v1885
    %v1887 = vpop.f32.mrf.mxu0
    %v1888 = vpop.f32.mrf.mxu0
    %v1889 = vadd.f32 0.0, %v1888
    %v1890 = vpop.f32.mrf.mxu0
    %1891 = vmatprep.mubr.bf16.mxu0 0
    %1892 = vmatmul.mubr.bf16.gmra.mxu0 %v1825
    %v1893 = vpop.f32.mrf.mxu0
    %v1894 = vadd.f32 0.0, %v1893
    %v1895 = vpop.f32.mrf.mxu0
    %v1896 = vpop.f32.mrf.mxu0
    %v1897 = vpop.f32.mrf.mxu0
    %1898 = vdwg.mxu0
    %v1899 = vld [vmem:[%s183 + $0x6c] sm:$0xf]
    %v1900 = vld [vmem:[%s183 + $0x70] sm:$0xf]
    %v1901 = vld [vmem:[%s183 + $0x74] sm:$0xf]
    %v1902 = vld [vmem:[%s183 + $0x78] sm:$0xf]
    %v1903 = vld [vmem:[%s183 + $0x7c] sm:$0xf]
    %v1904 = vld [vmem:[%s183 + $0x80] sm:$0xf]
    %v1905 = vld [vmem:[%s183 + $0x84] sm:$0xf]
    %v1906 = vld [vmem:[%s183 + $0x88] sm:$0xf]
    %v1907 = vld [vmem:[%s183 + $0x8c] sm:$0xf]
    %v1917 = vunpack.c.l.b16 %v1899
    %v1918 = vunpack.c.l.b16 %v1900
    %v1919 = vunpack.c.l.b16 %v1901
    %v1920 = vunpack.c.l.b16 %v1902
    %v1921 = vunpack.c.l.b16 %v1903
    %v1922 = vunpack.c.l.b16 %v1904
    %v1923 = vunpack.c.l.b16 %v1905
    %v1924 = vunpack.c.l.b16 %v1906
    %v1925 = vunpack.c.l.b16 %v1907
    %v1926 = vpack.c.b16 %v1918, %v1917
    %v1927 = vpack.c.b16 %v1920, %v1919
    %v1928 = vpack.c.b16 %v1922, %v1921
    %v1929 = vpack.c.b16 %v1924, %v1923
    %v1930 = vpack.c.b16 %v1925, %v1925
    %v1932 = vsel %vm95, %v1926, 0
    %v1935 = vsel %vm95, %v1927, 0
    %v1938 = vsel %vm95, %v1928, 0
    %v1941 = vsel %vm95, %v1929, 0
    %v1944 = vsel %vm95, %v1930, 0
    %1946 = vmatprep.subr.bf16.mxu0 0
    %1947 = vmatpush1.bf16.msra.mxu0 0
    %1948 = vmatprep.subr.bf16.mxu0 0
    %1949 = vmatpush1.bf16.msra.mxu0 0
    %1950 = vmatprep.subr.bf16.mxu0 0
    %1951 = vmatpush1.bf16.msra.mxu0 0
    %1952 = vmatprep.subr.bf16.mxu0 0
    %1953 = vmatpush1.bf16.msra.mxu0 0
    %1954 = vmatprep.subr.bf16.mxu0 0
    %1955 = vmatpush1.bf16.msra.mxu0 0
    %1956 = vmatprep.subr.bf16.mxu0 0
    %1957 = vmatpush1.bf16.msra.mxu0 0
    %1958 = vmatprep.subr.bf16.mxu0 0
    %1959 = vmatpush1.bf16.msra.mxu0 %v92
    %1960 = vmatprep.subr.bf16.mxu0 0
    %1961 = vmatpush1.bf16.msra.mxu0 %v91
    %1962 = vmatprep.subr.bf16.mxu0 0
    %1963 = vmatpush2.bf16.msra.mxu0 0
    %1964 = vmatprep.subr.bf16.mxu0 0
    %1965 = vmatpush2.bf16.msra.mxu0 0
    %1966 = vmatprep.subr.bf16.mxu0 0
    %1967 = vmatpush2.bf16.msra.mxu0 0
    %1968 = vmatprep.subr.bf16.mxu0 0
    %1969 = vmatpush2.bf16.msra.mxu0 0
    %1970 = vmatprep.subr.bf16.mxu0 0
    %1971 = vmatpush2.bf16.msra.mxu0 0
    %1972 = vmatprep.subr.bf16.mxu0 0
    %1973 = vmatpush2.bf16.msra.mxu0 0
    %1974 = vmatprep.subr.bf16.mxu0 0
    %1975 = vmatpush2.bf16.msra.mxu0 0
    %1976 = vmatprep.subr.bf16.mxu0 0
    %1977 = vmatpush2.bf16.msra.mxu0 0
    %1978 = vmatprep.mubr.bf16.mxu0 0
    %1979 = vmatmul.mubr.bf16.gmra.mxu0 %v1932
    %v1980 = vpop.f32.mrf.mxu0
    %v1981 = vadd.f32 0.0, %v1980
    %v1982 = vpop.f32.mrf.mxu0
    %v1983 = vpop.f32.mrf.mxu0
    %v1984 = vadd.f32 0.0, %v1983
    %v1985 = vpop.f32.mrf.mxu0
    %1986 = vmatprep.mubr.bf16.mxu0 0
    %1987 = vmatmul.mubr.bf16.gmra.mxu0 %v1935
    %v1988 = vpop.f32.mrf.mxu0
    %v1989 = vadd.f32 0.0, %v1988
    %v1990 = vpop.f32.mrf.mxu0
    %v1991 = vpop.f32.mrf.mxu0
    %v1992 = vadd.f32 0.0, %v1991
    %v1993 = vpop.f32.mrf.mxu0
    %1994 = vmatprep.mubr.bf16.mxu0 0
    %1995 = vmatmul.mubr.bf16.gmra.mxu0 %v1938
    %v1996 = vpop.f32.mrf.mxu0
    %v1997 = vadd.f32 0.0, %v1996
    %v1998 = vpop.f32.mrf.mxu0
    %v1999 = vpop.f32.mrf.mxu0
    %v2000 = vadd.f32 0.0, %v1999
    %v2001 = vpop.f32.mrf.mxu0
    %2002 = vmatprep.mubr.bf16.mxu0 0
    %2003 = vmatmul.mubr.bf16.gmra.mxu0 %v1941
    %v2004 = vpop.f32.mrf.mxu0
    %v2005 = vadd.f32 0.0, %v2004
    %v2006 = vpop.f32.mrf.mxu0
    %v2007 = vpop.f32.mrf.mxu0
    %v2008 = vadd.f32 0.0, %v2007
    %v2009 = vpop.f32.mrf.mxu0
    %2010 = vmatprep.mubr.bf16.mxu0 0
    %2011 = vmatmul.mubr.bf16.gmra.mxu0 %v1944
    %v2012 = vpop.f32.mrf.mxu0
    %v2013 = vadd.f32 0.0, %v2012
    %v2014 = vpop.f32.mrf.mxu0
    %v2015 = vpop.f32.mrf.mxu0
    %v2016 = vpop.f32.mrf.mxu0
    %2017 = vdwg.mxu0
    %v2018 = vmax.f32 %v1862, %v1981
    %v2019 = vmax.f32 %v1865, %v1984
    %v2020 = vmax.f32 %v1870, %v1989
    %v2021 = vmax.f32 %v1873, %v1992
    %v2022 = vmax.f32 %v1878, %v1997
    %v2023 = vmax.f32 %v1881, %v2000
    %v2024 = vmax.f32 %v1886, %v2005
    %v2025 = vmax.f32 %v1889, %v2008
    %v2026 = vmax.f32 %v1894, %v2013
    %v2027 = vld [vmem:[%s312 + $0x6c] sm:$0xf]
    %v2028 = vld [vmem:[%s312 + $0x70] sm:$0xf]
    %v2029 = vld [vmem:[%s312 + $0x74] sm:$0xf]
    %v2030 = vld [vmem:[%s312 + $0x78] sm:$0xf]
    %v2031 = vld [vmem:[%s312 + $0x7c] sm:$0xf]
    %v2032 = vld [vmem:[%s312 + $0x80] sm:$0xf]
    %v2033 = vld [vmem:[%s312 + $0x84] sm:$0xf]
    %v2034 = vld [vmem:[%s312 + $0x88] sm:$0xf]
    %v2035 = vld [vmem:[%s312 + $0x8c] sm:$0xf]
    %v2045 = vunpack.c.l.b16 %v2027
    %v2046 = vunpack.c.l.b16 %v2028
    %v2047 = vunpack.c.l.b16 %v2029
    %v2048 = vunpack.c.l.b16 %v2030
    %v2049 = vunpack.c.l.b16 %v2031
    %v2050 = vunpack.c.l.b16 %v2032
    %v2051 = vunpack.c.l.b16 %v2033
    %v2052 = vunpack.c.l.b16 %v2034
    %v2053 = vunpack.c.l.b16 %v2035
    %v2054 = vpack.c.b16 %v2046, %v2045
    %v2055 = vpack.c.b16 %v2048, %v2047
    %v2056 = vpack.c.b16 %v2050, %v2049
    %v2057 = vpack.c.b16 %v2052, %v2051
    %v2058 = vpack.c.b16 %v2053, %v2053
    %v2060 = vsel %vm95, %v2054, 0
    %v2063 = vsel %vm95, %v2055, 0
    %v2066 = vsel %vm95, %v2056, 0
    %v2069 = vsel %vm95, %v2057, 0
    %v2072 = vsel %vm95, %v2058, 0
    %2074 = vmatprep.subr.bf16.mxu0 0
    %2075 = vmatpush1.bf16.msra.mxu0 0
    %2076 = vmatprep.subr.bf16.mxu0 0
    %2077 = vmatpush1.bf16.msra.mxu0 0
    %2078 = vmatprep.subr.bf16.mxu0 0
    %2079 = vmatpush1.bf16.msra.mxu0 0
    %2080 = vmatprep.subr.bf16.mxu0 0
    %2081 = vmatpush1.bf16.msra.mxu0 0
    %2082 = vmatprep.subr.bf16.mxu0 0
    %2083 = vmatpush1.bf16.msra.mxu0 0
    %2084 = vmatprep.subr.bf16.mxu0 0
    %2085 = vmatpush1.bf16.msra.mxu0 0
    %2086 = vmatprep.subr.bf16.mxu0 0
    %2087 = vmatpush1.bf16.msra.mxu0 %v92
    %2088 = vmatprep.subr.bf16.mxu0 0
    %2089 = vmatpush1.bf16.msra.mxu0 %v91
    %2090 = vmatprep.subr.bf16.mxu0 0
    %2091 = vmatpush2.bf16.msra.mxu0 0
    %2092 = vmatprep.subr.bf16.mxu0 0
    %2093 = vmatpush2.bf16.msra.mxu0 0
    %2094 = vmatprep.subr.bf16.mxu0 0
    %2095 = vmatpush2.bf16.msra.mxu0 0
    %2096 = vmatprep.subr.bf16.mxu0 0
    %2097 = vmatpush2.bf16.msra.mxu0 0
    %2098 = vmatprep.subr.bf16.mxu0 0
    %2099 = vmatpush2.bf16.msra.mxu0 0
    %2100 = vmatprep.subr.bf16.mxu0 0
    %2101 = vmatpush2.bf16.msra.mxu0 0
    %2102 = vmatprep.subr.bf16.mxu0 0
    %2103 = vmatpush2.bf16.msra.mxu0 0
    %2104 = vmatprep.subr.bf16.mxu0 0
    %2105 = vmatpush2.bf16.msra.mxu0 0
    %2106 = vmatprep.mubr.bf16.mxu0 0
    %2107 = vmatmul.mubr.bf16.gmra.mxu0 %v2060
    %v2108 = vpop.f32.mrf.mxu0
    %v2109 = vadd.f32 0.0, %v2108
    %v2110 = vpop.f32.mrf.mxu0
    %v2111 = vpop.f32.mrf.mxu0
    %v2112 = vadd.f32 0.0, %v2111
    %v2113 = vpop.f32.mrf.mxu0
    %2114 = vmatprep.mubr.bf16.mxu0 0
    %2115 = vmatmul.mubr.bf16.gmra.mxu0 %v2063
    %v2116 = vpop.f32.mrf.mxu0
    %v2117 = vadd.f32 0.0, %v2116
    %v2118 = vpop.f32.mrf.mxu0
    %v2119 = vpop.f32.mrf.mxu0
    %v2120 = vadd.f32 0.0, %v2119
    %v2121 = vpop.f32.mrf.mxu0
    %2122 = vmatprep.mubr.bf16.mxu0 0
    %2123 = vmatmul.mubr.bf16.gmra.mxu0 %v2066
    %v2124 = vpop.f32.mrf.mxu0
    %v2125 = vadd.f32 0.0, %v2124
    %v2126 = vpop.f32.mrf.mxu0
    %v2127 = vpop.f32.mrf.mxu0
    %v2128 = vadd.f32 0.0, %v2127
    %v2129 = vpop.f32.mrf.mxu0
    %2130 = vmatprep.mubr.bf16.mxu0 0
    %2131 = vmatmul.mubr.bf16.gmra.mxu0 %v2069
    %v2132 = vpop.f32.mrf.mxu0
    %v2133 = vadd.f32 0.0, %v2132
    %v2134 = vpop.f32.mrf.mxu0
    %v2135 = vpop.f32.mrf.mxu0
    %v2136 = vadd.f32 0.0, %v2135
    %v2137 = vpop.f32.mrf.mxu0
    %2138 = vmatprep.mubr.bf16.mxu0 0
    %2139 = vmatmul.mubr.bf16.gmra.mxu0 %v2072
    %v2140 = vpop.f32.mrf.mxu0
    %v2141 = vadd.f32 0.0, %v2140
    %v2142 = vpop.f32.mrf.mxu0
    %v2143 = vpop.f32.mrf.mxu0
    %v2144 = vpop.f32.mrf.mxu0
    %2145 = vdwg.mxu0
    %v2146 = vmax.f32 %v2018, %v2109
    %v2147 = vmax.f32 %v2019, %v2112
    %v2148 = vmax.f32 %v2020, %v2117
    %v2149 = vmax.f32 %v2021, %v2120
    %v2150 = vmax.f32 %v2022, %v2125
    %v2151 = vmax.f32 %v2023, %v2128
    %v2152 = vmax.f32 %v2024, %v2133
    %v2153 = vmax.f32 %v2025, %v2136
    %v2154 = vmax.f32 %v2026, %v2141
    %v2155 = vld [vmem:[%s441 + $0x6c] sm:$0xf]
    %v2156 = vld [vmem:[%s441 + $0x70] sm:$0xf]
    %v2157 = vld [vmem:[%s441 + $0x74] sm:$0xf]
    %v2158 = vld [vmem:[%s441 + $0x78] sm:$0xf]
    %v2159 = vld [vmem:[%s441 + $0x7c] sm:$0xf]
    %v2160 = vld [vmem:[%s441 + $0x80] sm:$0xf]
    %v2161 = vld [vmem:[%s441 + $0x84] sm:$0xf]
    %v2162 = vld [vmem:[%s441 + $0x88] sm:$0xf]
    %v2163 = vld [vmem:[%s441 + $0x8c] sm:$0xf]
    %v2173 = vunpack.c.l.b16 %v2155
    %v2174 = vunpack.c.l.b16 %v2156
    %v2175 = vunpack.c.l.b16 %v2157
    %v2176 = vunpack.c.l.b16 %v2158
    %v2177 = vunpack.c.l.b16 %v2159
    %v2178 = vunpack.c.l.b16 %v2160
    %v2179 = vunpack.c.l.b16 %v2161
    %v2180 = vunpack.c.l.b16 %v2162
    %v2181 = vunpack.c.l.b16 %v2163
    %v2182 = vpack.c.b16 %v2174, %v2173
    %v2183 = vpack.c.b16 %v2176, %v2175
    %v2184 = vpack.c.b16 %v2178, %v2177
    %v2185 = vpack.c.b16 %v2180, %v2179
    %v2186 = vpack.c.b16 %v2181, %v2181
    %v2188 = vsel %vm95, %v2182, 0
    %v2191 = vsel %vm95, %v2183, 0
    %v2194 = vsel %vm95, %v2184, 0
    %v2197 = vsel %vm95, %v2185, 0
    %v2200 = vsel %vm95, %v2186, 0
    %2202 = vmatprep.subr.bf16.mxu0 0
    %2203 = vmatpush1.bf16.msra.mxu0 0
    %2204 = vmatprep.subr.bf16.mxu0 0
    %2205 = vmatpush1.bf16.msra.mxu0 0
    %2206 = vmatprep.subr.bf16.mxu0 0
    %2207 = vmatpush1.bf16.msra.mxu0 0
    %2208 = vmatprep.subr.bf16.mxu0 0
    %2209 = vmatpush1.bf16.msra.mxu0 0
    %2210 = vmatprep.subr.bf16.mxu0 0
    %2211 = vmatpush1.bf16.msra.mxu0 0
    %2212 = vmatprep.subr.bf16.mxu0 0
    %2213 = vmatpush1.bf16.msra.mxu0 0
    %2214 = vmatprep.subr.bf16.mxu0 0
    %2215 = vmatpush1.bf16.msra.mxu0 %v92
    %2216 = vmatprep.subr.bf16.mxu0 0
    %2217 = vmatpush1.bf16.msra.mxu0 %v91
    %2218 = vmatprep.subr.bf16.mxu0 0
    %2219 = vmatpush2.bf16.msra.mxu0 0
    %2220 = vmatprep.subr.bf16.mxu0 0
    %2221 = vmatpush2.bf16.msra.mxu0 0
    %2222 = vmatprep.subr.bf16.mxu0 0
    %2223 = vmatpush2.bf16.msra.mxu0 0
    %2224 = vmatprep.subr.bf16.mxu0 0
    %2225 = vmatpush2.bf16.msra.mxu0 0
    %2226 = vmatprep.subr.bf16.mxu0 0
    %2227 = vmatpush2.bf16.msra.mxu0 0
    %2228 = vmatprep.subr.bf16.mxu0 0
    %2229 = vmatpush2.bf16.msra.mxu0 0
    %2230 = vmatprep.subr.bf16.mxu0 0
    %2231 = vmatpush2.bf16.msra.mxu0 0
    %2232 = vmatprep.subr.bf16.mxu0 0
    %2233 = vmatpush2.bf16.msra.mxu0 0
    %2234 = vmatprep.mubr.bf16.mxu0 0
    %2235 = vmatmul.mubr.bf16.gmra.mxu0 %v2188
    %v2236 = vpop.f32.mrf.mxu0
    %v2237 = vadd.f32 0.0, %v2236
    %v2238 = vpop.f32.mrf.mxu0
    %v2239 = vpop.f32.mrf.mxu0
    %v2240 = vadd.f32 0.0, %v2239
    %v2241 = vpop.f32.mrf.mxu0
    %2242 = vmatprep.mubr.bf16.mxu0 0
    %2243 = vmatmul.mubr.bf16.gmra.mxu0 %v2191
    %v2244 = vpop.f32.mrf.mxu0
    %v2245 = vadd.f32 0.0, %v2244
    %v2246 = vpop.f32.mrf.mxu0
    %v2247 = vpop.f32.mrf.mxu0
    %v2248 = vadd.f32 0.0, %v2247
    %v2249 = vpop.f32.mrf.mxu0
    %2250 = vmatprep.mubr.bf16.mxu0 0
    %2251 = vmatmul.mubr.bf16.gmra.mxu0 %v2194
    %v2252 = vpop.f32.mrf.mxu0
    %v2253 = vadd.f32 0.0, %v2252
    %v2254 = vpop.f32.mrf.mxu0
    %v2255 = vpop.f32.mrf.mxu0
    %v2256 = vadd.f32 0.0, %v2255
    %v2257 = vpop.f32.mrf.mxu0
    %2258 = vmatprep.mubr.bf16.mxu0 0
    %2259 = vmatmul.mubr.bf16.gmra.mxu0 %v2197
    %v2260 = vpop.f32.mrf.mxu0
    %v2261 = vadd.f32 0.0, %v2260
    %v2262 = vpop.f32.mrf.mxu0
    %v2263 = vpop.f32.mrf.mxu0
    %v2264 = vadd.f32 0.0, %v2263
    %v2265 = vpop.f32.mrf.mxu0
    %2266 = vmatprep.mubr.bf16.mxu0 0
    %2267 = vmatmul.mubr.bf16.gmra.mxu0 %v2200
    %v2268 = vpop.f32.mrf.mxu0
    %v2269 = vadd.f32 0.0, %v2268
    %v2270 = vpop.f32.mrf.mxu0
    %v2271 = vpop.f32.mrf.mxu0
    %v2272 = vpop.f32.mrf.mxu0
    %2273 = vdwg.mxu0
    %v2274 = vmax.f32 %v2146, %v2237
    %v2275 = vmax.f32 %v2147, %v2240
    %v2276 = vmax.f32 %v2148, %v2245
    %v2277 = vmax.f32 %v2149, %v2248
    %v2278 = vmax.f32 %v2150, %v2253
    %v2279 = vmax.f32 %v2151, %v2256
    %v2280 = vmax.f32 %v2152, %v2261
    %v2281 = vmax.f32 %v2153, %v2264
    %v2282 = vmax.f32 %v2154, %v2269
    %v2283 = vadd.f32 %v2274, %v574
    %v2284 = vadd.f32 %v2275, %v574
    %v2285 = vadd.f32 %v2276, %v574
    %v2286 = vadd.f32 %v2277, %v574
    %v2287 = vadd.f32 %v2278, %v574
    %v2288 = vadd.f32 %v2279, %v574
    %v2289 = vadd.f32 %v2280, %v574
    %v2290 = vadd.f32 %v2281, %v574
    %v2291 = vadd.f32 %v2282, %v574
    %v2292 = vmax.f32 %v2283, 0.0
    %v2293 = vmax.f32 %v2284, 0.0
    %v2294 = vmax.f32 %v2285, 0.0
    %v2295 = vmax.f32 %v2286, 0.0
    %v2296 = vmax.f32 %v2287, 0.0
    %v2297 = vmax.f32 %v2288, 0.0
    %v2298 = vmax.f32 %v2289, 0.0
    %v2299 = vmax.f32 %v2290, 0.0
    %v2300 = vmax.f32 %v2291, 0.0
    %2301 = vst [vmem:[#allocation2 + $0xd8] sm:$0xff] %v2292
    %2302 = vst [vmem:[#allocation2 + $0xe0] sm:$0xff] %v2293
    %2303 = vst [vmem:[#allocation2 + $0xe8] sm:$0xff] %v2294
    %2304 = vst [vmem:[#allocation2 + $0xf0] sm:$0xff] %v2295
    %2305 = vst [vmem:[#allocation2 + $0xf8] sm:$0xff] %v2296
    %2306 = vst [vmem:[#allocation2 + $0x100] sm:$0xff] %v2297
    %2307 = vst [vmem:[#allocation2 + $0x108] sm:$0xff] %v2298
    %2308 = vst [vmem:[#allocation2 + $0x110] sm:$0xff] %v2299
    %2309 = vst [vmem:[#allocation2 + $0x118] sm:$0xff] %v2300
    %v2310 = vadd.f32 %v2292, %v2293
    %v2311 = vadd.f32 %v2310, %v2294
    %v2312 = vadd.f32 %v2311, %v2295
    %v2313 = vadd.f32 %v2312, %v2296
    %v2314 = vadd.f32 %v2313, %v2297
    %v2315 = vadd.f32 %v2314, %v2298
    %v2316 = vadd.f32 %v2315, %v2299
    %v2317 = vadd.f32 %v2316, %v2300
    %v2318 = vrot.slane %v2317, 4
    %v2319 = vadd.f32 %v2317, %v2318
    %v2320 = vrot.slane %v2319, 2
    %v2321 = vadd.f32 %v2319, %v2320
    %v2322 = vrot.slane %v2321, 1
    %v2323 = vadd.f32 %v2321, %v2322
    %v2324 = vadd.f32 %v1755, %v2323
    %v2325 = vmul.f32 %v2292, %v2292
    %v2326 = vmul.f32 %v2293, %v2293
    %v2327 = vmul.f32 %v2294, %v2294
    %v2328 = vmul.f32 %v2295, %v2295
    %v2329 = vmul.f32 %v2296, %v2296
    %v2330 = vmul.f32 %v2297, %v2297
    %v2331 = vmul.f32 %v2298, %v2298
    %v2332 = vmul.f32 %v2299, %v2299
    %v2333 = vmul.f32 %v2300, %v2300
    %v2334 = vadd.f32 %v2325, %v2326
    %v2335 = vadd.f32 %v2334, %v2327
    %v2336 = vadd.f32 %v2335, %v2328
    %v2337 = vadd.f32 %v2336, %v2329
    %v2338 = vadd.f32 %v2337, %v2330
    %v2339 = vadd.f32 %v2338, %v2331
    %v2340 = vadd.f32 %v2339, %v2332
    %v2341 = vadd.f32 %v2340, %v2333
    %v2342 = vrot.slane %v2341, 4
    %v2343 = vadd.f32 %v2341, %v2342
    %v2344 = vrot.slane %v2343, 2
    %v2345 = vadd.f32 %v2343, %v2344
    %v2346 = vrot.slane %v2345, 1
    %v2347 = vadd.f32 %v2345, %v2346
    %v2348 = vadd.f32 %v1779, %v2347
    %v2349 = vrcp.pop 288.0
    %v2350 = vmul.f32 %v2324, %v2349
    %v2351 = vmul.f32 %v2348, %v2349
    %v2352 = vmul.f32 %v2350, %v2350
    %v2353 = vsub.f32 %v2351, %v2352
    %v2354 = vmax.f32 %v2353, 0.0
    %v2355 = vld [vmem:[%s3] sm:$0x1]
    %v2356 = vadd.f32 %v2354, 1e-05
    %v2357 = vrsqrt.pop %v2356
    %v2358 = vmul.f32 %v2355, %v2357
    %v2359 = vld [vmem:[%s4] sm:$0x1]
    %v2360 = vmul.f32 %v2350, %v2358
    %v2361 = vsub.f32 %v2359, %v2360
    %2362 = vst [vmem:[#allocation3] sm:$0xff] 0
    %2363 = vst [vmem:[#allocation3 + $0x8] sm:$0x33] 0
    %2364 = vst [vmem:[#allocation3 + $0x10] sm:$0xff] 0
    %2365 = vst [vmem:[#allocation3 + $0x18] sm:$0x33] 0
    %2366 = vst [vmem:[#allocation3 + $0x20] sm:$0xff] 0
    %2367 = vst [vmem:[#allocation3 + $0x28] sm:$0x33] 0
    %2368 = vst [vmem:[#allocation3 + $0x30] sm:$0xff] 0
    %2369 = vst [vmem:[#allocation3 + $0x38] sm:$0x33] 0
    %v2370 = vld [vmem:[#allocation2] sm:$0xff]
    %v2371 = vld [vmem:[#allocation2 + $0x8] sm:$0xf]
    %v2373 = vlaneseq
    %v2374 = vshrl.u32 %v2373, 7
    %v2375 = vsub.s32 0, %v2374
    %v2376 = vrot.slane %v2358, %v2375
    %v2378 = vmul.f32 %v2370, %v2376
    %v2379 = vmul.f32 %v2371, %v2376
    %v2381 = vlaneseq
    %v2382 = vshrl.u32 %v2381, 7
    %v2383 = vsub.s32 0, %v2382
    %v2384 = vrot.slane %v2361, %v2383
    %v2386 = vadd.f32 %v2378, %v2384
    %v2387 = vadd.f32 %v2379, %v2384
    %v2388 = vpack.c.bf16 %v2387, %v2386
    %v2390 = vunpack.c.l.b16 %v2388
    %v2391 = vunpack.c.h.b16 %v2388
    %v2392 = vpack.c.b16 %v2390, %v2390
    %v2393 = vpack.c.b16 %v2391, %v2391
    %vm2396 = vcmask 76800
    %2397 = vst.msk [vmem:[#allocation3] sm:$0xf] %vm2396, %v2392
    %vm2398 = vcmask 74752
    %2399 = vst.msk [vmem:[#allocation3 + $0x8] sm:$0x3] %vm2398, %v2393
    %v2400 = vld [vmem:[#allocation2 + $0xc] sm:$0xff]
    %v2401 = vld [vmem:[#allocation2 + $0x14] sm:$0xf]
    %v2402 = vmul.f32 %v2400, %v2376
    %v2403 = vmul.f32 %v2401, %v2376
    %v2404 = vadd.f32 %v2402, %v2384
    %v2405 = vadd.f32 %v2403, %v2384
    %v2406 = vpack.c.bf16 %v2405, %v2404
    %v2408 = vunpack.c.l.b16 %v2406
    %v2409 = vunpack.c.h.b16 %v2406
    %v2410 = vpack.c.b16 %v2408, %v2408
    %v2411 = vpack.c.b16 %v2409, %v2409
    %2412 = vrot.lane.b32.xlu0 %v2410, 64
    %v2413 = vpop.permute.xlu0 %2412
    %2414 = vrot.lane.b32.xlu0 %v2411, 64
    %v2415 = vpop.permute.xlu0 %2414
    %vm2418 = vcmask 601600
    %2419 = vst.msk [vmem:[#allocation3] sm:$0xf] %vm2418, %v2413
    %vm2420 = vcmask 599552
    %2421 = vst.msk [vmem:[#allocation3 + $0x8] sm:$0x3] %vm2420, %v2415
    %v2422 = vld [vmem:[#allocation2 + $0x18] sm:$0xff]
    %v2423 = vld [vmem:[#allocation2 + $0x20] sm:$0xf]
    %v2424 = vmul.f32 %v2422, %v2376
    %v2425 = vmul.f32 %v2423, %v2376
    %v2426 = vadd.f32 %v2424, %v2384
    %v2427 = vadd.f32 %v2425, %v2384
    %v2428 = vpack.c.bf16 %v2427, %v2426
    %v2430 = vunpack.c.l.b16 %v2428
    %v2431 = vunpack.c.h.b16 %v2428
    %v2432 = vpack.c.b16 %v2430, %v2430
    %v2433 = vpack.c.b16 %v2431, %v2431
    %2436 = vst.msk [vmem:[#allocation3 + $0x4] sm:$0xf] %vm2396, %v2432
    %2437 = vst.msk [vmem:[#allocation3 + $0xc] sm:$0x3] %vm2398, %v2433
    %v2438 = vld [vmem:[#allocation2 + $0x24] sm:$0xff]
    %v2439 = vld [vmem:[#allocation2 + $0x2c] sm:$0xf]
    %v2440 = vmul.f32 %v2438, %v2376
    %v2441 = vmul.f32 %v2439, %v2376
    %v2442 = vadd.f32 %v2440, %v2384
    %v2443 = vadd.f32 %v2441, %v2384
    %v2444 = vpack.c.bf16 %v2443, %v2442
    %v2446 = vunpack.c.l.b16 %v2444
    %v2447 = vunpack.c.h.b16 %v2444
    %v2448 = vpack.c.b16 %v2446, %v2446
    %v2449 = vpack.c.b16 %v2447, %v2447
    %2450 = vrot.lane.b32.xlu0 %v2448, 64
    %v2451 = vpop.permute.xlu0 %2450
    %2452 = vrot.lane.b32.xlu0 %v2449, 64
    %v2453 = vpop.permute.xlu0 %2452
    %2456 = vst.msk [vmem:[#allocation3 + $0x4] sm:$0xf] %vm2418, %v2451
    %2457 = vst.msk [vmem:[#allocation3 + $0xc] sm:$0x3] %vm2420, %v2453
    %v2458 = vld [vmem:[#allocation2 + $0x48] sm:$0xff]
    %v2459 = vld [vmem:[#allocation2 + $0x50] sm:$0xf]
    %v2460 = vmul.f32 %v2458, %v2376
    %v2461 = vmul.f32 %v2459, %v2376
    %v2462 = vadd.f32 %v2460, %v2384
    %v2463 = vadd.f32 %v2461, %v2384
    %v2464 = vpack.c.bf16 %v2463, %v2462
    %v2466 = vunpack.c.l.b16 %v2464
    %v2467 = vunpack.c.h.b16 %v2464
    %v2468 = vpack.c.b16 %v2466, %v2466
    %v2469 = vpack.c.b16 %v2467, %v2467
    %2470 = vrot.lane.b32.xlu0 %v2468, 10
    %v2471 = vpop.permute.xlu0 %2470
    %2472 = vrot.lane.b32.xlu0 %v2469, 10
    %v2473 = vpop.permute.xlu0 %2472
    %vm2476 = vcmask 158800
    %2477 = vst.msk [vmem:[#allocation3] sm:$0xf] %vm2476, %v2471
    %vm2478 = vcmask 156752
    %2479 = vst.msk [vmem:[#allocation3 + $0x8] sm:$0x3] %vm2478, %v2473
    %v2480 = vld [vmem:[#allocation2 + $0x54] sm:$0xff]
    %v2481 = vld [vmem:[#allocation2 + $0x5c] sm:$0xf]
    %v2482 = vmul.f32 %v2480, %v2376
    %v2483 = vmul.f32 %v2481, %v2376
    %v2484 = vadd.f32 %v2482, %v2384
    %v2485 = vadd.f32 %v2483, %v2384
    %v2486 = vpack.c.bf16 %v2485, %v2484
    %v2488 = vunpack.c.l.b16 %v2486
    %v2489 = vunpack.c.h.b16 %v2486
    %v2490 = vpack.c.b16 %v2488, %v2488
    %v2491 = vpack.c.b16 %v2489, %v2489
    %2492 = vrot.lane.b32.xlu0 %v2490, 74
    %v2493 = vpop.permute.xlu0 %2492
    %2494 = vrot.lane.b32.xlu0 %v2491, 74
    %v2495 = vpop.permute.xlu0 %2494
    %vm2498 = vcmask 683600
    %2499 = vst.msk [vmem:[#allocation3] sm:$0xf] %vm2498, %v2493
    %vm2500 = vcmask 681552
    %2501 = vst.msk [vmem:[#allocation3 + $0x8] sm:$0x3] %vm2500, %v2495
    %v2502 = vld [vmem:[#allocation2 + $0x60] sm:$0xff]
    %v2503 = vld [vmem:[#allocation2 + $0x68] sm:$0xf]
    %v2504 = vmul.f32 %v2502, %v2376
    %v2505 = vmul.f32 %v2503, %v2376
    %v2506 = vadd.f32 %v2504, %v2384
    %v2507 = vadd.f32 %v2505, %v2384
    %v2508 = vpack.c.bf16 %v2507, %v2506
    %v2510 = vunpack.c.l.b16 %v2508
    %v2511 = vunpack.c.h.b16 %v2508
    %v2512 = vpack.c.b16 %v2510, %v2510
    %v2513 = vpack.c.b16 %v2511, %v2511
    %2514 = vrot.lane.b32.xlu0 %v2512, 10
    %v2515 = vpop.permute.xlu0 %2514
    %2516 = vrot.lane.b32.xlu0 %v2513, 10
    %v2517 = vpop.permute.xlu0 %2516
    %2520 = vst.msk [vmem:[#allocation3 + $0x4] sm:$0xf] %vm2476, %v2515
    %2521 = vst.msk [vmem:[#allocation3 + $0xc] sm:$0x3] %vm2478, %v2517
    %v2522 = vld [vmem:[#allocation2 + $0x6c] sm:$0xff]
    %v2523 = vld [vmem:[#allocation2 + $0x74] sm:$0xf]
    %v2524 = vmul.f32 %v2522, %v2376
    %v2525 = vmul.f32 %v2523, %v2376
    %v2526 = vadd.f32 %v2524, %v2384
    %v2527 = vadd.f32 %v2525, %v2384
    %v2528 = vpack.c.bf16 %v2527, %v2526
    %v2530 = vunpack.c.l.b16 %v2528
    %v2531 = vunpack.c.h.b16 %v2528
    %v2532 = vpack.c.b16 %v2530, %v2530
    %v2533 = vpack.c.b16 %v2531, %v2531
    %2534 = vrot.lane.b32.xlu0 %v2532, 74
    %v2535 = vpop.permute.xlu0 %2534
    %2536 = vrot.lane.b32.xlu0 %v2533, 74
    %v2537 = vpop.permute.xlu0 %2536
    %2540 = vst.msk [vmem:[#allocation3 + $0x4] sm:$0xf] %vm2498, %v2535
    %2541 = vst.msk [vmem:[#allocation3 + $0xc] sm:$0x3] %vm2500, %v2537
    %v2542 = vld [vmem:[#allocation2 + $0xc] sm:$0xff]
    %v2543 = vld [vmem:[#allocation2 + $0x14] sm:$0xf]
    %v2544 = vmul.f32 %v2542, %v2376
    %v2545 = vmul.f32 %v2543, %v2376
    %v2546 = vadd.f32 %v2544, %v2384
    %v2547 = vadd.f32 %v2545, %v2384
    %v2548 = vpack.c.bf16 %v2547, %v2546
    %v2550 = vunpack.c.l.b16 %v2548
    %v2551 = vunpack.c.h.b16 %v2548
    %v2552 = vpack.c.b16 %v2550, %v2550
    %v2553 = vpack.c.b16 %v2551, %v2551
    %2554 = vrot.lane.b32.xlu0 %v2552, 20
    %v2555 = vpop.permute.xlu0 %2554
    %2556 = vrot.lane.b32.xlu0 %v2553, 20
    %v2557 = vpop.permute.xlu0 %2556
    %vm2560 = vcmask 240800
    %2561 = vst.msk [vmem:[#allocation3] sm:$0xf] %vm2560, %v2555
    %vm2562 = vcmask 238752
    %2563 = vst.msk [vmem:[#allocation3 + $0x8] sm:$0x3] %vm2562, %v2557
    %v2564 = vld [vmem:[#allocation2 + $0x18] sm:$0xff]
    %v2565 = vld [vmem:[#allocation2 + $0x20] sm:$0xf]
    %v2566 = vmul.f32 %v2564, %v2376
    %v2567 = vmul.f32 %v2565, %v2376
    %v2568 = vadd.f32 %v2566, %v2384
    %v2569 = vadd.f32 %v2567, %v2384
    %v2570 = vpack.c.bf16 %v2569, %v2568
    %v2572 = vunpack.c.l.b16 %v2570
    %v2573 = vunpack.c.h.b16 %v2570
    %v2574 = vpack.c.b16 %v2572, %v2572
    %v2575 = vpack.c.b16 %v2573, %v2573
    %2576 = vrot.lane.b32.xlu0 %v2574, 84
    %v2577 = vpop.permute.xlu0 %2576
    %2578 = vrot.lane.b32.xlu0 %v2575, 84
    %v2579 = vpop.permute.xlu0 %2578
    %vm2582 = vcmask 765600
    %2583 = vst.msk [vmem:[#allocation3] sm:$0xf] %vm2582, %v2577
    %vm2584 = vcmask 763552
    %2585 = vst.msk [vmem:[#allocation3 + $0x8] sm:$0x3] %vm2584, %v2579
    %v2586 = vld [vmem:[#allocation2 + $0x24] sm:$0xff]
    %v2587 = vld [vmem:[#allocation2 + $0x2c] sm:$0xf]
    %v2588 = vmul.f32 %v2586, %v2376
    %v2589 = vmul.f32 %v2587, %v2376
    %v2590 = vadd.f32 %v2588, %v2384
    %v2591 = vadd.f32 %v2589, %v2384
    %v2592 = vpack.c.bf16 %v2591, %v2590
    %v2594 = vunpack.c.l.b16 %v2592
    %v2595 = vunpack.c.h.b16 %v2592
    %v2596 = vpack.c.b16 %v2594, %v2594
    %v2597 = vpack.c.b16 %v2595, %v2595
    %2598 = vrot.lane.b32.xlu0 %v2596, 20
    %v2599 = vpop.permute.xlu0 %2598
    %2600 = vrot.lane.b32.xlu0 %v2597, 20
    %v2601 = vpop.permute.xlu0 %2600
    %2604 = vst.msk [vmem:[#allocation3 + $0x4] sm:$0xf] %vm2560, %v2599
    %2605 = vst.msk [vmem:[#allocation3 + $0xc] sm:$0x3] %vm2562, %v2601
    %v2606 = vld [vmem:[#allocation2 + $0x30] sm:$0xff]
    %v2607 = vld [vmem:[#allocation2 + $0x38] sm:$0xf]
    %v2608 = vmul.f32 %v2606, %v2376
    %v2609 = vmul.f32 %v2607, %v2376
    %v2610 = vadd.f32 %v2608, %v2384
    %v2611 = vadd.f32 %v2609, %v2384
    %v2612 = vpack.c.bf16 %v2611, %v2610
    %v2614 = vunpack.c.l.b16 %v2612
    %v2615 = vunpack.c.h.b16 %v2612
    %v2616 = vpack.c.b16 %v2614, %v2614
    %v2617 = vpack.c.b16 %v2615, %v2615
    %2618 = vrot.lane.b32.xlu0 %v2616, 84
    %v2619 = vpop.permute.xlu0 %2618
    %2620 = vrot.lane.b32.xlu0 %v2617, 84
    %v2621 = vpop.permute.xlu0 %2620
    %2624 = vst.msk [vmem:[#allocation3 + $0x4] sm:$0xf] %vm2582, %v2619
    %2625 = vst.msk [vmem:[#allocation3 + $0xc] sm:$0x3] %vm2584, %v2621
    %v2626 = vld [vmem:[#allocation2 + $0x54] sm:$0xff]
    %v2627 = vld [vmem:[#allocation2 + $0x5c] sm:$0xf]
    %v2628 = vmul.f32 %v2626, %v2376
    %v2629 = vmul.f32 %v2627, %v2376
    %v2630 = vadd.f32 %v2628, %v2384
    %v2631 = vadd.f32 %v2629, %v2384
    %v2632 = vpack.c.bf16 %v2631, %v2630
    %v2634 = vunpack.c.l.b16 %v2632
    %v2635 = vunpack.c.h.b16 %v2632
    %v2636 = vpack.c.b16 %v2634, %v2634
    %v2637 = vpack.c.b16 %v2635, %v2635
    %2638 = vrot.lane.b32.xlu0 %v2636, 30
    %v2639 = vpop.permute.xlu0 %2638
    %2640 = vrot.lane.b32.xlu0 %v2637, 30
    %v2641 = vpop.permute.xlu0 %2640
    %vm2644 = vcmask 322800
    %2645 = vst.msk [vmem:[#allocation3] sm:$0xf] %vm2644, %v2639
    %vm2646 = vcmask 320752
    %2647 = vst.msk [vmem:[#allocation3 + $0x8] sm:$0x3] %vm2646, %v2641
    %v2648 = vld [vmem:[#allocation2 + $0x60] sm:$0xff]
    %v2649 = vld [vmem:[#allocation2 + $0x68] sm:$0xf]
    %v2650 = vmul.f32 %v2648, %v2376
    %v2651 = vmul.f32 %v2649, %v2376
    %v2652 = vadd.f32 %v2650, %v2384
    %v2653 = vadd.f32 %v2651, %v2384
    %v2654 = vpack.c.bf16 %v2653, %v2652
    %v2656 = vunpack.c.l.b16 %v2654
    %v2657 = vunpack.c.h.b16 %v2654
    %v2658 = vpack.c.b16 %v2656, %v2656
    %v2659 = vpack.c.b16 %v2657, %v2657
    %2660 = vrot.lane.b32.xlu0 %v2658, 94
    %v2661 = vpop.permute.xlu0 %2660
    %2662 = vrot.lane.b32.xlu0 %v2659, 94
    %v2663 = vpop.permute.xlu0 %2662
    %vm2666 = vcmask 847600
    %2667 = vst.msk [vmem:[#allocation3] sm:$0xf] %vm2666, %v2661
    %vm2668 = vcmask 845552
    %2669 = vst.msk [vmem:[#allocation3 + $0x8] sm:$0x3] %vm2668, %v2663
    %v2670 = vld [vmem:[#allocation2 + $0x6c] sm:$0xff]
    %v2671 = vld [vmem:[#allocation2 + $0x74] sm:$0xf]
    %v2672 = vmul.f32 %v2670, %v2376
    %v2673 = vmul.f32 %v2671, %v2376
    %v2674 = vadd.f32 %v2672, %v2384
    %v2675 = vadd.f32 %v2673, %v2384
    %v2676 = vpack.c.bf16 %v2675, %v2674
    %v2678 = vunpack.c.l.b16 %v2676
    %v2679 = vunpack.c.h.b16 %v2676
    %v2680 = vpack.c.b16 %v2678, %v2678
    %v2681 = vpack.c.b16 %v2679, %v2679
    %2682 = vrot.lane.b32.xlu0 %v2680, 30
    %v2683 = vpop.permute.xlu0 %2682
    %2684 = vrot.lane.b32.xlu0 %v2681, 30
    %v2685 = vpop.permute.xlu0 %2684
    %2688 = vst.msk [vmem:[#allocation3 + $0x4] sm:$0xf] %vm2644, %v2683
    %2689 = vst.msk [vmem:[#allocation3 + $0xc] sm:$0x3] %vm2646, %v2685
    %v2690 = vld [vmem:[#allocation2 + $0x78] sm:$0xff]
    %v2691 = vld [vmem:[#allocation2 + $0x80] sm:$0xf]
    %v2692 = vmul.f32 %v2690, %v2376
    %v2693 = vmul.f32 %v2691, %v2376
    %v2694 = vadd.f32 %v2692, %v2384
    %v2695 = vadd.f32 %v2693, %v2384
    %v2696 = vpack.c.bf16 %v2695, %v2694
    %v2698 = vunpack.c.l.b16 %v2696
    %v2699 = vunpack.c.h.b16 %v2696
    %v2700 = vpack.c.b16 %v2698, %v2698
    %v2701 = vpack.c.b16 %v2699, %v2699
    %2702 = vrot.lane.b32.xlu0 %v2700, 94
    %v2703 = vpop.permute.xlu0 %2702
    %2704 = vrot.lane.b32.xlu0 %v2701, 94
    %v2705 = vpop.permute.xlu0 %2704
    %2708 = vst.msk [vmem:[#allocation3 + $0x4] sm:$0xf] %vm2666, %v2703
    %2709 = vst.msk [vmem:[#allocation3 + $0xc] sm:$0x3] %vm2668, %v2705
    %v2710 = vld [vmem:[#allocation2 + $0x18] sm:$0xff]
    %v2711 = vld [vmem:[#allocation2 + $0x20] sm:$0xf]
    %v2712 = vmul.f32 %v2710, %v2376
    %v2713 = vmul.f32 %v2711, %v2376
    %v2714 = vadd.f32 %v2712, %v2384
    %v2715 = vadd.f32 %v2713, %v2384
    %v2716 = vpack.c.bf16 %v2715, %v2714
    %v2718 = vunpack.c.l.b16 %v2716
    %v2719 = vunpack.c.h.b16 %v2716
    %v2720 = vpack.c.b16 %v2718, %v2718
    %v2721 = vpack.c.b16 %v2719, %v2719
    %2722 = vrot.lane.b32.xlu0 %v2720, 40
    %v2723 = vpop.permute.xlu0 %2722
    %2724 = vrot.lane.b32.xlu0 %v2721, 40
    %v2725 = vpop.permute.xlu0 %2724
    %vm2728 = vcmask 404800
    %2729 = vst.msk [vmem:[#allocation3] sm:$0xf] %vm2728, %v2723
    %vm2730 = vcmask 402752
    %2731 = vst.msk [vmem:[#allocation3 + $0x8] sm:$0x3] %vm2730, %v2725
    %v2732 = vld [vmem:[#allocation2 + $0x24] sm:$0xff]
    %v2733 = vld [vmem:[#allocation2 + $0x2c] sm:$0xf]
    %v2734 = vmul.f32 %v2732, %v2376
    %v2735 = vmul.f32 %v2733, %v2376
    %v2736 = vadd.f32 %v2734, %v2384
    %v2737 = vadd.f32 %v2735, %v2384
    %v2738 = vpack.c.bf16 %v2737, %v2736
    %v2740 = vunpack.c.l.b16 %v2738
    %v2741 = vunpack.c.h.b16 %v2738
    %v2742 = vpack.c.b16 %v2740, %v2740
    %v2743 = vpack.c.b16 %v2741, %v2741
    %2744 = vrot.lane.b32.xlu0 %v2742, 104
    %v2745 = vpop.permute.xlu0 %2744
    %2746 = vrot.lane.b32.xlu0 %v2743, 104
    %v2747 = vpop.permute.xlu0 %2746
    %vm2750 = vcmask 929600
    %2751 = vst.msk [vmem:[#allocation3] sm:$0xf] %vm2750, %v2745
    %vm2752 = vcmask 927552
    %2753 = vst.msk [vmem:[#allocation3 + $0x8] sm:$0x3] %vm2752, %v2747
    %v2754 = vld [vmem:[#allocation2 + $0x30] sm:$0xff]
    %v2755 = vld [vmem:[#allocation2 + $0x38] sm:$0xf]
    %v2756 = vmul.f32 %v2754, %v2376
    %v2757 = vmul.f32 %v2755, %v2376
    %v2758 = vadd.f32 %v2756, %v2384
    %v2759 = vadd.f32 %v2757, %v2384
    %v2760 = vpack.c.bf16 %v2759, %v2758
    %v2762 = vunpack.c.l.b16 %v2760
    %v2763 = vunpack.c.h.b16 %v2760
    %v2764 = vpack.c.b16 %v2762, %v2762
    %v2765 = vpack.c.b16 %v2763, %v2763
    %2766 = vrot.lane.b32.xlu0 %v2764, 40
    %v2767 = vpop.permute.xlu0 %2766
    %2768 = vrot.lane.b32.xlu0 %v2765, 40
    %v2769 = vpop.permute.xlu0 %2768
    %2772 = vst.msk [vmem:[#allocation3 + $0x4] sm:$0xf] %vm2728, %v2767
    %2773 = vst.msk [vmem:[#allocation3 + $0xc] sm:$0x3] %vm2730, %v2769
    %v2774 = vld [vmem:[#allocation2 + $0x3c] sm:$0xff]
    %v2775 = vld [vmem:[#allocation2 + $0x44] sm:$0xf]
    %v2776 = vmul.f32 %v2774, %v2376
    %v2777 = vmul.f32 %v2775, %v2376
    %v2778 = vadd.f32 %v2776, %v2384
    %v2779 = vadd.f32 %v2777, %v2384
    %v2780 = vpack.c.bf16 %v2779, %v2778
    %v2782 = vunpack.c.l.b16 %v2780
    %v2783 = vunpack.c.h.b16 %v2780
    %v2784 = vpack.c.b16 %v2782, %v2782
    %v2785 = vpack.c.b16 %v2783, %v2783
    %2786 = vrot.lane.b32.xlu0 %v2784, 104
    %v2787 = vpop.permute.xlu0 %2786
    %2788 = vrot.lane.b32.xlu0 %v2785, 104
    %v2789 = vpop.permute.xlu0 %2788
    %2792 = vst.msk [vmem:[#allocation3 + $0x4] sm:$0xf] %vm2750, %v2787
    %2793 = vst.msk [vmem:[#allocation3 + $0xc] sm:$0x3] %vm2752, %v2789
    %v2794 = vld [vmem:[#allocation2 + $0x48] sm:$0xff]
    %v2795 = vld [vmem:[#allocation2 + $0x50] sm:$0xf]
    %v2796 = vmul.f32 %v2794, %v2376
    %v2797 = vmul.f32 %v2795, %v2376
    %v2798 = vadd.f32 %v2796, %v2384
    %v2799 = vadd.f32 %v2797, %v2384
    %v2800 = vpack.c.bf16 %v2799, %v2798
    %v2802 = vunpack.c.l.b16 %v2800
    %v2803 = vunpack.c.h.b16 %v2800
    %v2804 = vpack.c.b16 %v2802, %v2802
    %v2805 = vpack.c.b16 %v2803, %v2803
    %s2808 = scalar_lea.vmem [#allocation3], 16
    %2809 = vst.msk [vmem:[%s2808] sm:$0xf] %vm2396, %v2804
    %2810 = vst.msk [vmem:[%s2808 + $0x8] sm:$0x3] %vm2398, %v2805
    %v2811 = vld [vmem:[#allocation2 + $0x54] sm:$0xff]
    %v2812 = vld [vmem:[#allocation2 + $0x5c] sm:$0xf]
    %v2813 = vmul.f32 %v2811, %v2376
    %v2814 = vmul.f32 %v2812, %v2376
    %v2815 = vadd.f32 %v2813, %v2384
    %v2816 = vadd.f32 %v2814, %v2384
    %v2817 = vpack.c.bf16 %v2816, %v2815
    %v2819 = vunpack.c.l.b16 %v2817
    %v2820 = vunpack.c.h.b16 %v2817
    %v2821 = vpack.c.b16 %v2819, %v2819
    %v2822 = vpack.c.b16 %v2820, %v2820
    %2823 = vrot.lane.b32.xlu0 %v2821, 64
    %v2824 = vpop.permute.xlu0 %2823
    %2825 = vrot.lane.b32.xlu0 %v2822, 64
    %v2826 = vpop.permute.xlu0 %2825
    %2829 = vst.msk [vmem:[%s2808] sm:$0xf] %vm2418, %v2824
    %2830 = vst.msk [vmem:[%s2808 + $0x8] sm:$0x3] %vm2420, %v2826
    %v2831 = vld [vmem:[#allocation2 + $0x60] sm:$0xff]
    %v2832 = vld [vmem:[#allocation2 + $0x68] sm:$0xf]
    %v2833 = vmul.f32 %v2831, %v2376
    %v2834 = vmul.f32 %v2832, %v2376
    %v2835 = vadd.f32 %v2833, %v2384
    %v2836 = vadd.f32 %v2834, %v2384
    %v2837 = vpack.c.bf16 %v2836, %v2835
    %v2839 = vunpack.c.l.b16 %v2837
    %v2840 = vunpack.c.h.b16 %v2837
    %v2841 = vpack.c.b16 %v2839, %v2839
    %v2842 = vpack.c.b16 %v2840, %v2840
    %2845 = vst.msk [vmem:[%s2808 + $0x4] sm:$0xf] %vm2396, %v2841
    %2846 = vst.msk [vmem:[%s2808 + $0xc] sm:$0x3] %vm2398, %v2842
    %v2847 = vld [vmem:[#allocation2 + $0x6c] sm:$0xff]
    %v2848 = vld [vmem:[#allocation2 + $0x74] sm:$0xf]
    %v2849 = vmul.f32 %v2847, %v2376
    %v2850 = vmul.f32 %v2848, %v2376
    %v2851 = vadd.f32 %v2849, %v2384
    %v2852 = vadd.f32 %v2850, %v2384
    %v2853 = vpack.c.bf16 %v2852, %v2851
    %v2855 = vunpack.c.l.b16 %v2853
    %v2856 = vunpack.c.h.b16 %v2853
    %v2857 = vpack.c.b16 %v2855, %v2855
    %v2858 = vpack.c.b16 %v2856, %v2856
    %2859 = vrot.lane.b32.xlu0 %v2857, 64
    %v2860 = vpop.permute.xlu0 %2859
    %2861 = vrot.lane.b32.xlu0 %v2858, 64
    %v2862 = vpop.permute.xlu0 %2861
    %2865 = vst.msk [vmem:[%s2808 + $0x4] sm:$0xf] %vm2418, %v2860
    %2866 = vst.msk [vmem:[%s2808 + $0xc] sm:$0x3] %vm2420, %v2862
    %v2867 = vld [vmem:[#allocation2 + $0xc] sm:$0xff]
    %v2868 = vld [vmem:[#allocation2 + $0x14] sm:$0xf]
    %v2869 = vmul.f32 %v2867, %v2376
    %v2870 = vmul.f32 %v2868, %v2376
    %v2871 = vadd.f32 %v2869, %v2384
    %v2872 = vadd.f32 %v2870, %v2384
    %v2873 = vpack.c.bf16 %v2872, %v2871
    %v2875 = vunpack.c.l.b16 %v2873
    %v2876 = vunpack.c.h.b16 %v2873
    %v2877 = vpack.c.b16 %v2875, %v2875
    %v2878 = vpack.c.b16 %v2876, %v2876
    %2879 = vrot.lane.b32.xlu0 %v2877, 10
    %v2880 = vpop.permute.xlu0 %2879
    %2881 = vrot.lane.b32.xlu0 %v2878, 10
    %v2882 = vpop.permute.xlu0 %2881
    %2885 = vst.msk [vmem:[%s2808] sm:$0xf] %vm2476, %v2880
    %2886 = vst.msk [vmem:[%s2808 + $0x8] sm:$0x3] %vm2478, %v2882
    %v2887 = vld [vmem:[#allocation2 + $0x18] sm:$0xff]
    %v2888 = vld [vmem:[#allocation2 + $0x20] sm:$0xf]
    %v2889 = vmul.f32 %v2887, %v2376
    %v2890 = vmul.f32 %v2888, %v2376
    %v2891 = vadd.f32 %v2889, %v2384
    %v2892 = vadd.f32 %v2890, %v2384
    %v2893 = vpack.c.bf16 %v2892, %v2891
    %v2895 = vunpack.c.l.b16 %v2893
    %v2896 = vunpack.c.h.b16 %v2893
    %v2897 = vpack.c.b16 %v2895, %v2895
    %v2898 = vpack.c.b16 %v2896, %v2896
    %2899 = vrot.lane.b32.xlu0 %v2897, 74
    %v2900 = vpop.permute.xlu0 %2899
    %2901 = vrot.lane.b32.xlu0 %v2898, 74
    %v2902 = vpop.permute.xlu0 %2901
    %2905 = vst.msk [vmem:[%s2808] sm:$0xf] %vm2498, %v2900
    %2906 = vst.msk [vmem:[%s2808 + $0x8] sm:$0x3] %vm2500, %v2902
    %v2907 = vld [vmem:[#allocation2 + $0x24] sm:$0xff]
    %v2908 = vld [vmem:[#allocation2 + $0x2c] sm:$0xf]
    %v2909 = vmul.f32 %v2907, %v2376
    %v2910 = vmul.f32 %v2908, %v2376
    %v2911 = vadd.f32 %v2909, %v2384
    %v2912 = vadd.f32 %v2910, %v2384
    %v2913 = vpack.c.bf16 %v2912, %v2911
    %v2915 = vunpack.c.l.b16 %v2913
    %v2916 = vunpack.c.h.b16 %v2913
    %v2917 = vpack.c.b16 %v2915, %v2915
    %v2918 = vpack.c.b16 %v2916, %v2916
    %2919 = vrot.lane.b32.xlu0 %v2917, 10
    %v2920 = vpop.permute.xlu0 %2919
    %2921 = vrot.lane.b32.xlu0 %v2918, 10
    %v2922 = vpop.permute.xlu0 %2921
    %2925 = vst.msk [vmem:[%s2808 + $0x4] sm:$0xf] %vm2476, %v2920
    %2926 = vst.msk [vmem:[%s2808 + $0xc] sm:$0x3] %vm2478, %v2922
    %v2927 = vld [vmem:[#allocation2 + $0x30] sm:$0xff]
    %v2928 = vld [vmem:[#allocation2 + $0x38] sm:$0xf]
    %v2929 = vmul.f32 %v2927, %v2376
    %v2930 = vmul.f32 %v2928, %v2376
    %v2931 = vadd.f32 %v2929, %v2384
    %v2932 = vadd.f32 %v2930, %v2384
    %v2933 = vpack.c.bf16 %v2932, %v2931
    %v2935 = vunpack.c.l.b16 %v2933
    %v2936 = vunpack.c.h.b16 %v2933
    %v2937 = vpack.c.b16 %v2935, %v2935
    %v2938 = vpack.c.b16 %v2936, %v2936
    %2939 = vrot.lane.b32.xlu0 %v2937, 74
    %v2940 = vpop.permute.xlu0 %2939
    %2941 = vrot.lane.b32.xlu0 %v2938, 74
    %v2942 = vpop.permute.xlu0 %2941
    %2945 = vst.msk [vmem:[%s2808 + $0x4] sm:$0xf] %vm2498, %v2940
    %2946 = vst.msk [vmem:[%s2808 + $0xc] sm:$0x3] %vm2500, %v2942
    %v2947 = vld [vmem:[#allocation2 + $0x54] sm:$0xff]
    %v2948 = vld [vmem:[#allocation2 + $0x5c] sm:$0xf]
    %v2949 = vmul.f32 %v2947, %v2376
    %v2950 = vmul.f32 %v2948, %v2376
    %v2951 = vadd.f32 %v2949, %v2384
    %v2952 = vadd.f32 %v2950, %v2384
    %v2953 = vpack.c.bf16 %v2952, %v2951
    %v2955 = vunpack.c.l.b16 %v2953
    %v2956 = vunpack.c.h.b16 %v2953
    %v2957 = vpack.c.b16 %v2955, %v2955
    %v2958 = vpack.c.b16 %v2956, %v2956
    %2959 = vrot.lane.b32.xlu0 %v2957, 20
    %v2960 = vpop.permute.xlu0 %2959
    %2961 = vrot.lane.b32.xlu0 %v2958, 20
    %v2962 = vpop.permute.xlu0 %2961
    %2965 = vst.msk [vmem:[%s2808] sm:$0xf] %vm2560, %v2960
    %2966 = vst.msk [vmem:[%s2808 + $0x8] sm:$0x3] %vm2562, %v2962
    %v2967 = vld [vmem:[#allocation2 + $0x60] sm:$0xff]
    %v2968 = vld [vmem:[#allocation2 + $0x68] sm:$0xf]
    %v2969 = vmul.f32 %v2967, %v2376
    %v2970 = vmul.f32 %v2968, %v2376
    %v2971 = vadd.f32 %v2969, %v2384
    %v2972 = vadd.f32 %v2970, %v2384
    %v2973 = vpack.c.bf16 %v2972, %v2971
    %v2975 = vunpack.c.l.b16 %v2973
    %v2976 = vunpack.c.h.b16 %v2973
    %v2977 = vpack.c.b16 %v2975, %v2975
    %v2978 = vpack.c.b16 %v2976, %v2976
    %2979 = vrot.lane.b32.xlu0 %v2977, 84
    %v2980 = vpop.permute.xlu0 %2979
    %2981 = vrot.lane.b32.xlu0 %v2978, 84
    %v2982 = vpop.permute.xlu0 %2981
    %2985 = vst.msk [vmem:[%s2808] sm:$0xf] %vm2582, %v2980
    %2986 = vst.msk [vmem:[%s2808 + $0x8] sm:$0x3] %vm2584, %v2982
    %v2987 = vld [vmem:[#allocation2 + $0x6c] sm:$0xff]
    %v2988 = vld [vmem:[#allocation2 + $0x74] sm:$0xf]
    %v2989 = vmul.f32 %v2987, %v2376
    %v2990 = vmul.f32 %v2988, %v2376
    %v2991 = vadd.f32 %v2989, %v2384
    %v2992 = vadd.f32 %v2990, %v2384
    %v2993 = vpack.c.bf16 %v2992, %v2991
    %v2995 = vunpack.c.l.b16 %v2993
    %v2996 = vunpack.c.h.b16 %v2993
    %v2997 = vpack.c.b16 %v2995, %v2995
    %v2998 = vpack.c.b16 %v2996, %v2996
    %2999 = vrot.lane.b32.xlu0 %v2997, 20
    %v3000 = vpop.permute.xlu0 %2999
    %3001 = vrot.lane.b32.xlu0 %v2998, 20
    %v3002 = vpop.permute.xlu0 %3001
    %3005 = vst.msk [vmem:[%s2808 + $0x4] sm:$0xf] %vm2560, %v3000
    %3006 = vst.msk [vmem:[%s2808 + $0xc] sm:$0x3] %vm2562, %v3002
    %v3007 = vld [vmem:[#allocation2 + $0x78] sm:$0xff]
    %v3008 = vld [vmem:[#allocation2 + $0x80] sm:$0xf]
    %v3009 = vmul.f32 %v3007, %v2376
    %v3010 = vmul.f32 %v3008, %v2376
    %v3011 = vadd.f32 %v3009, %v2384
    %v3012 = vadd.f32 %v3010, %v2384
    %v3013 = vpack.c.bf16 %v3012, %v3011
    %v3015 = vunpack.c.l.b16 %v3013
    %v3016 = vunpack.c.h.b16 %v3013
    %v3017 = vpack.c.b16 %v3015, %v3015
    %v3018 = vpack.c.b16 %v3016, %v3016
    %3019 = vrot.lane.b32.xlu0 %v3017, 84
    %v3020 = vpop.permute.xlu0 %3019
    %3021 = vrot.lane.b32.xlu0 %v3018, 84
    %v3022 = vpop.permute.xlu0 %3021
    %3025 = vst.msk [vmem:[%s2808 + $0x4] sm:$0xf] %vm2582, %v3020
    %3026 = vst.msk [vmem:[%s2808 + $0xc] sm:$0x3] %vm2584, %v3022
    %v3027 = vld [vmem:[#allocation2 + $0x18] sm:$0xff]
    %v3028 = vld [vmem:[#allocation2 + $0x20] sm:$0xf]
    %v3029 = vmul.f32 %v3027, %v2376
    %v3030 = vmul.f32 %v3028, %v2376
    %v3031 = vadd.f32 %v3029, %v2384
    %v3032 = vadd.f32 %v3030, %v2384
    %v3033 = vpack.c.bf16 %v3032, %v3031
    %v3035 = vunpack.c.l.b16 %v3033
    %v3036 = vunpack.c.h.b16 %v3033
    %v3037 = vpack.c.b16 %v3035, %v3035
    %v3038 = vpack.c.b16 %v3036, %v3036
    %3039 = vrot.lane.b32.xlu0 %v3037, 30
    %v3040 = vpop.permute.xlu0 %3039
    %3041 = vrot.lane.b32.xlu0 %v3038, 30
    %v3042 = vpop.permute.xlu0 %3041
    %3045 = vst.msk [vmem:[%s2808] sm:$0xf] %vm2644, %v3040
    %3046 = vst.msk [vmem:[%s2808 + $0x8] sm:$0x3] %vm2646, %v3042
    %v3047 = vld [vmem:[#allocation2 + $0x24] sm:$0xff]
    %v3048 = vld [vmem:[#allocation2 + $0x2c] sm:$0xf]
    %v3049 = vmul.f32 %v3047, %v2376
    %v3050 = vmul.f32 %v3048, %v2376
    %v3051 = vadd.f32 %v3049, %v2384
    %v3052 = vadd.f32 %v3050, %v2384
    %v3053 = vpack.c.bf16 %v3052, %v3051
    %v3055 = vunpack.c.l.b16 %v3053
    %v3056 = vunpack.c.h.b16 %v3053
    %v3057 = vpack.c.b16 %v3055, %v3055
    %v3058 = vpack.c.b16 %v3056, %v3056
    %3059 = vrot.lane.b32.xlu0 %v3057, 94
    %v3060 = vpop.permute.xlu0 %3059
    %3061 = vrot.lane.b32.xlu0 %v3058, 94
    %v3062 = vpop.permute.xlu0 %3061
    %3065 = vst.msk [vmem:[%s2808] sm:$0xf] %vm2666, %v3060
    %3066 = vst.msk [vmem:[%s2808 + $0x8] sm:$0x3] %vm2668, %v3062
    %v3067 = vld [vmem:[#allocation2 + $0x30] sm:$0xff]
    %v3068 = vld [vmem:[#allocation2 + $0x38] sm:$0xf]
    %v3069 = vmul.f32 %v3067, %v2376
    %v3070 = vmul.f32 %v3068, %v2376
    %v3071 = vadd.f32 %v3069, %v2384
    %v3072 = vadd.f32 %v3070, %v2384
    %v3073 = vpack.c.bf16 %v3072, %v3071
    %v3075 = vunpack.c.l.b16 %v3073
    %v3076 = vunpack.c.h.b16 %v3073
    %v3077 = vpack.c.b16 %v3075, %v3075
    %v3078 = vpack.c.b16 %v3076, %v3076
    %3079 = vrot.lane.b32.xlu0 %v3077, 30
    %v3080 = vpop.permute.xlu0 %3079
    %3081 = vrot.lane.b32.xlu0 %v3078, 30
    %v3082 = vpop.permute.xlu0 %3081
    %3085 = vst.msk [vmem:[%s2808 + $0x4] sm:$0xf] %vm2644, %v3080
    %3086 = vst.msk [vmem:[%s2808 + $0xc] sm:$0x3] %vm2646, %v3082
    %v3087 = vld [vmem:[#allocation2 + $0x3c] sm:$0xff]
    %v3088 = vld [vmem:[#allocation2 + $0x44] sm:$0xf]
    %v3089 = vmul.f32 %v3087, %v2376
    %v3090 = vmul.f32 %v3088, %v2376
    %v3091 = vadd.f32 %v3089, %v2384
    %v3092 = vadd.f32 %v3090, %v2384
    %v3093 = vpack.c.bf16 %v3092, %v3091
    %v3095 = vunpack.c.l.b16 %v3093
    %v3096 = vunpack.c.h.b16 %v3093
    %v3097 = vpack.c.b16 %v3095, %v3095
    %v3098 = vpack.c.b16 %v3096, %v3096
    %3099 = vrot.lane.b32.xlu0 %v3097, 94
    %v3100 = vpop.permute.xlu0 %3099
    %3101 = vrot.lane.b32.xlu0 %v3098, 94
    %v3102 = vpop.permute.xlu0 %3101
    %3105 = vst.msk [vmem:[%s2808 + $0x4] sm:$0xf] %vm2666, %v3100
    %3106 = vst.msk [vmem:[%s2808 + $0xc] sm:$0x3] %vm2668, %v3102
    %v3107 = vld [vmem:[#allocation2 + $0x60] sm:$0xff]
    %v3108 = vld [vmem:[#allocation2 + $0x68] sm:$0xf]
    %v3109 = vmul.f32 %v3107, %v2376
    %v3110 = vmul.f32 %v3108, %v2376
    %v3111 = vadd.f32 %v3109, %v2384
    %v3112 = vadd.f32 %v3110, %v2384
    %v3113 = vpack.c.bf16 %v3112, %v3111
    %v3115 = vunpack.c.l.b16 %v3113
    %v3116 = vunpack.c.h.b16 %v3113
    %v3117 = vpack.c.b16 %v3115, %v3115
    %v3118 = vpack.c.b16 %v3116, %v3116
    %3119 = vrot.lane.b32.xlu0 %v3117, 40
    %v3120 = vpop.permute.xlu0 %3119
    %3121 = vrot.lane.b32.xlu0 %v3118, 40
    %v3122 = vpop.permute.xlu0 %3121
    %3125 = vst.msk [vmem:[%s2808] sm:$0xf] %vm2728, %v3120
    %3126 = vst.msk [vmem:[%s2808 + $0x8] sm:$0x3] %vm2730, %v3122
    %v3127 = vld [vmem:[#allocation2 + $0x6c] sm:$0xff]
    %v3128 = vld [vmem:[#allocation2 + $0x74] sm:$0xf]
    %v3129 = vmul.f32 %v3127, %v2376
    %v3130 = vmul.f32 %v3128, %v2376
    %v3131 = vadd.f32 %v3129, %v2384
    %v3132 = vadd.f32 %v3130, %v2384
    %v3133 = vpack.c.bf16 %v3132, %v3131
    %v3135 = vunpack.c.l.b16 %v3133
    %v3136 = vunpack.c.h.b16 %v3133
    %v3137 = vpack.c.b16 %v3135, %v3135
    %v3138 = vpack.c.b16 %v3136, %v3136
    %3139 = vrot.lane.b32.xlu0 %v3137, 104
    %v3140 = vpop.permute.xlu0 %3139
    %3141 = vrot.lane.b32.xlu0 %v3138, 104
    %v3142 = vpop.permute.xlu0 %3141
    %3145 = vst.msk [vmem:[%s2808] sm:$0xf] %vm2750, %v3140
    %3146 = vst.msk [vmem:[%s2808 + $0x8] sm:$0x3] %vm2752, %v3142
    %v3147 = vld [vmem:[#allocation2 + $0x78] sm:$0xff]
    %v3148 = vld [vmem:[#allocation2 + $0x80] sm:$0xf]
    %v3149 = vmul.f32 %v3147, %v2376
    %v3150 = vmul.f32 %v3148, %v2376
    %v3151 = vadd.f32 %v3149, %v2384
    %v3152 = vadd.f32 %v3150, %v2384
    %v3153 = vpack.c.bf16 %v3152, %v3151
    %v3155 = vunpack.c.l.b16 %v3153
    %v3156 = vunpack.c.h.b16 %v3153
    %v3157 = vpack.c.b16 %v3155, %v3155
    %v3158 = vpack.c.b16 %v3156, %v3156
    %3159 = vrot.lane.b32.xlu0 %v3157, 40
    %v3160 = vpop.permute.xlu0 %3159
    %3161 = vrot.lane.b32.xlu0 %v3158, 40
    %v3162 = vpop.permute.xlu0 %3161
    %3165 = vst.msk [vmem:[%s2808 + $0x4] sm:$0xf] %vm2728, %v3160
    %3166 = vst.msk [vmem:[%s2808 + $0xc] sm:$0x3] %vm2730, %v3162
    %v3167 = vld [vmem:[#allocation2 + $0x84] sm:$0xff]
    %v3168 = vld [vmem:[#allocation2 + $0x8c] sm:$0xf]
    %v3169 = vmul.f32 %v3167, %v2376
    %v3170 = vmul.f32 %v3168, %v2376
    %v3171 = vadd.f32 %v3169, %v2384
    %v3172 = vadd.f32 %v3170, %v2384
    %v3173 = vpack.c.bf16 %v3172, %v3171
    %v3175 = vunpack.c.l.b16 %v3173
    %v3176 = vunpack.c.h.b16 %v3173
    %v3177 = vpack.c.b16 %v3175, %v3175
    %v3178 = vpack.c.b16 %v3176, %v3176
    %3179 = vrot.lane.b32.xlu0 %v3177, 104
    %v3180 = vpop.permute.xlu0 %3179
    %3181 = vrot.lane.b32.xlu0 %v3178, 104
    %v3182 = vpop.permute.xlu0 %3181
    %3185 = vst.msk [vmem:[%s2808 + $0x4] sm:$0xf] %vm2750, %v3180
    %3186 = vst.msk [vmem:[%s2808 + $0xc] sm:$0x3] %vm2752, %v3182
    %v3187 = vld [vmem:[#allocation2 + $0x90] sm:$0xff]
    %v3188 = vld [vmem:[#allocation2 + $0x98] sm:$0xf]
    %v3189 = vmul.f32 %v3187, %v2376
    %v3190 = vmul.f32 %v3188, %v2376
    %v3191 = vadd.f32 %v3189, %v2384
    %v3192 = vadd.f32 %v3190, %v2384
    %v3193 = vpack.c.bf16 %v3192, %v3191
    %v3195 = vunpack.c.l.b16 %v3193
    %v3196 = vunpack.c.h.b16 %v3193
    %v3197 = vpack.c.b16 %v3195, %v3195
    %v3198 = vpack.c.b16 %v3196, %v3196
    %s3201 = scalar_lea.vmem [#allocation3], 32
    %3202 = vst.msk [vmem:[%s3201] sm:$0xf] %vm2396, %v3197
    %3203 = vst.msk [vmem:[%s3201 + $0x8] sm:$0x3] %vm2398, %v3198
    %v3204 = vld [vmem:[#allocation2 + $0x9c] sm:$0xff]
    %v3205 = vld [vmem:[#allocation2 + $0xa4] sm:$0xf]
    %v3206 = vmul.f32 %v3204, %v2376
    %v3207 = vmul.f32 %v3205, %v2376
    %v3208 = vadd.f32 %v3206, %v2384
    %v3209 = vadd.f32 %v3207, %v2384
    %v3210 = vpack.c.bf16 %v3209, %v3208
    %v3212 = vunpack.c.l.b16 %v3210
    %v3213 = vunpack.c.h.b16 %v3210
    %v3214 = vpack.c.b16 %v3212, %v3212
    %v3215 = vpack.c.b16 %v3213, %v3213
    %3216 = vrot.lane.b32.xlu0 %v3214, 64
    %v3217 = vpop.permute.xlu0 %3216
    %3218 = vrot.lane.b32.xlu0 %v3215, 64
    %v3219 = vpop.permute.xlu0 %3218
    %3222 = vst.msk [vmem:[%s3201] sm:$0xf] %vm2418, %v3217
    %3223 = vst.msk [vmem:[%s3201 + $0x8] sm:$0x3] %vm2420, %v3219
    %v3224 = vld [vmem:[#allocation2 + $0xa8] sm:$0xff]
    %v3225 = vld [vmem:[#allocation2 + $0xb0] sm:$0xf]
    %v3226 = vmul.f32 %v3224, %v2376
    %v3227 = vmul.f32 %v3225, %v2376
    %v3228 = vadd.f32 %v3226, %v2384
    %v3229 = vadd.f32 %v3227, %v2384
    %v3230 = vpack.c.bf16 %v3229, %v3228
    %v3232 = vunpack.c.l.b16 %v3230
    %v3233 = vunpack.c.h.b16 %v3230
    %v3234 = vpack.c.b16 %v3232, %v3232
    %v3235 = vpack.c.b16 %v3233, %v3233
    %3238 = vst.msk [vmem:[%s3201 + $0x4] sm:$0xf] %vm2396, %v3234
    %3239 = vst.msk [vmem:[%s3201 + $0xc] sm:$0x3] %vm2398, %v3235
    %v3240 = vld [vmem:[#allocation2 + $0xb4] sm:$0xff]
    %v3241 = vld [vmem:[#allocation2 + $0xbc] sm:$0xf]
    %v3242 = vmul.f32 %v3240, %v2376
    %v3243 = vmul.f32 %v3241, %v2376
    %v3244 = vadd.f32 %v3242, %v2384
    %v3245 = vadd.f32 %v3243, %v2384
    %v3246 = vpack.c.bf16 %v3245, %v3244
    %v3248 = vunpack.c.l.b16 %v3246
    %v3249 = vunpack.c.h.b16 %v3246
    %v3250 = vpack.c.b16 %v3248, %v3248
    %v3251 = vpack.c.b16 %v3249, %v3249
    %3252 = vrot.lane.b32.xlu0 %v3250, 64
    %v3253 = vpop.permute.xlu0 %3252
    %3254 = vrot.lane.b32.xlu0 %v3251, 64
    %v3255 = vpop.permute.xlu0 %3254
    %3258 = vst.msk [vmem:[%s3201 + $0x4] sm:$0xf] %vm2418, %v3253
    %3259 = vst.msk [vmem:[%s3201 + $0xc] sm:$0x3] %vm2420, %v3255
    %v3260 = vld [vmem:[#allocation2 + $0xd8] sm:$0xff]
    %v3261 = vld [vmem:[#allocation2 + $0xe0] sm:$0xf]
    %v3262 = vmul.f32 %v3260, %v2376
    %v3263 = vmul.f32 %v3261, %v2376
    %v3264 = vadd.f32 %v3262, %v2384
    %v3265 = vadd.f32 %v3263, %v2384
    %v3266 = vpack.c.bf16 %v3265, %v3264
    %v3268 = vunpack.c.l.b16 %v3266
    %v3269 = vunpack.c.h.b16 %v3266
    %v3270 = vpack.c.b16 %v3268, %v3268
    %v3271 = vpack.c.b16 %v3269, %v3269
    %3272 = vrot.lane.b32.xlu0 %v3270, 10
    %v3273 = vpop.permute.xlu0 %3272
    %3274 = vrot.lane.b32.xlu0 %v3271, 10
    %v3275 = vpop.permute.xlu0 %3274
    %3278 = vst.msk [vmem:[%s3201] sm:$0xf] %vm2476, %v3273
    %3279 = vst.msk [vmem:[%s3201 + $0x8] sm:$0x3] %vm2478, %v3275
    %v3280 = vld [vmem:[#allocation2 + $0xe4] sm:$0xff]
    %v3281 = vld [vmem:[#allocation2 + $0xec] sm:$0xf]
    %v3282 = vmul.f32 %v3280, %v2376
    %v3283 = vmul.f32 %v3281, %v2376
    %v3284 = vadd.f32 %v3282, %v2384
    %v3285 = vadd.f32 %v3283, %v2384
    %v3286 = vpack.c.bf16 %v3285, %v3284
    %v3288 = vunpack.c.l.b16 %v3286
    %v3289 = vunpack.c.h.b16 %v3286
    %v3290 = vpack.c.b16 %v3288, %v3288
    %v3291 = vpack.c.b16 %v3289, %v3289
    %3292 = vrot.lane.b32.xlu0 %v3290, 74
    %v3293 = vpop.permute.xlu0 %3292
    %3294 = vrot.lane.b32.xlu0 %v3291, 74
    %v3295 = vpop.permute.xlu0 %3294
    %3298 = vst.msk [vmem:[%s3201] sm:$0xf] %vm2498, %v3293
    %3299 = vst.msk [vmem:[%s3201 + $0x8] sm:$0x3] %vm2500, %v3295
    %v3300 = vld [vmem:[#allocation2 + $0xf0] sm:$0xff]
    %v3301 = vld [vmem:[#allocation2 + $0xf8] sm:$0xf]
    %v3302 = vmul.f32 %v3300, %v2376
    %v3303 = vmul.f32 %v3301, %v2376
    %v3304 = vadd.f32 %v3302, %v2384
    %v3305 = vadd.f32 %v3303, %v2384
    %v3306 = vpack.c.bf16 %v3305, %v3304
    %v3308 = vunpack.c.l.b16 %v3306
    %v3309 = vunpack.c.h.b16 %v3306
    %v3310 = vpack.c.b16 %v3308, %v3308
    %v3311 = vpack.c.b16 %v3309, %v3309
    %3312 = vrot.lane.b32.xlu0 %v3310, 10
    %v3313 = vpop.permute.xlu0 %3312
    %3314 = vrot.lane.b32.xlu0 %v3311, 10
    %v3315 = vpop.permute.xlu0 %3314
    %3318 = vst.msk [vmem:[%s3201 + $0x4] sm:$0xf] %vm2476, %v3313
    %3319 = vst.msk [vmem:[%s3201 + $0xc] sm:$0x3] %vm2478, %v3315
    %v3320 = vld [vmem:[#allocation2 + $0xfc] sm:$0xff]
    %v3321 = vld [vmem:[#allocation2 + $0x104] sm:$0xf]
    %v3322 = vmul.f32 %v3320, %v2376
    %v3323 = vmul.f32 %v3321, %v2376
    %v3324 = vadd.f32 %v3322, %v2384
    %v3325 = vadd.f32 %v3323, %v2384
    %v3326 = vpack.c.bf16 %v3325, %v3324
    %v3328 = vunpack.c.l.b16 %v3326
    %v3329 = vunpack.c.h.b16 %v3326
    %v3330 = vpack.c.b16 %v3328, %v3328
    %v3331 = vpack.c.b16 %v3329, %v3329
    %3332 = vrot.lane.b32.xlu0 %v3330, 74
    %v3333 = vpop.permute.xlu0 %3332
    %3334 = vrot.lane.b32.xlu0 %v3331, 74
    %v3335 = vpop.permute.xlu0 %3334
    %3338 = vst.msk [vmem:[%s3201 + $0x4] sm:$0xf] %vm2498, %v3333
    %3339 = vst.msk [vmem:[%s3201 + $0xc] sm:$0x3] %vm2500, %v3335
    %v3340 = vld [vmem:[#allocation2 + $0x9c] sm:$0xff]
    %v3341 = vld [vmem:[#allocation2 + $0xa4] sm:$0xf]
    %v3342 = vmul.f32 %v3340, %v2376
    %v3343 = vmul.f32 %v3341, %v2376
    %v3344 = vadd.f32 %v3342, %v2384
    %v3345 = vadd.f32 %v3343, %v2384
    %v3346 = vpack.c.bf16 %v3345, %v3344
    %v3348 = vunpack.c.l.b16 %v3346
    %v3349 = vunpack.c.h.b16 %v3346
    %v3350 = vpack.c.b16 %v3348, %v3348
    %v3351 = vpack.c.b16 %v3349, %v3349
    %3352 = vrot.lane.b32.xlu0 %v3350, 20
    %v3353 = vpop.permute.xlu0 %3352
    %3354 = vrot.lane.b32.xlu0 %v3351, 20
    %v3355 = vpop.permute.xlu0 %3354
    %3358 = vst.msk [vmem:[%s3201] sm:$0xf] %vm2560, %v3353
    %3359 = vst.msk [vmem:[%s3201 + $0x8] sm:$0x3] %vm2562, %v3355
    %v3360 = vld [vmem:[#allocation2 + $0xa8] sm:$0xff]
    %v3361 = vld [vmem:[#allocation2 + $0xb0] sm:$0xf]
    %v3362 = vmul.f32 %v3360, %v2376
    %v3363 = vmul.f32 %v3361, %v2376
    %v3364 = vadd.f32 %v3362, %v2384
    %v3365 = vadd.f32 %v3363, %v2384
    %v3366 = vpack.c.bf16 %v3365, %v3364
    %v3368 = vunpack.c.l.b16 %v3366
    %v3369 = vunpack.c.h.b16 %v3366
    %v3370 = vpack.c.b16 %v3368, %v3368
    %v3371 = vpack.c.b16 %v3369, %v3369
    %3372 = vrot.lane.b32.xlu0 %v3370, 84
    %v3373 = vpop.permute.xlu0 %3372
    %3374 = vrot.lane.b32.xlu0 %v3371, 84
    %v3375 = vpop.permute.xlu0 %3374
    %3378 = vst.msk [vmem:[%s3201] sm:$0xf] %vm2582, %v3373
    %3379 = vst.msk [vmem:[%s3201 + $0x8] sm:$0x3] %vm2584, %v3375
    %v3380 = vld [vmem:[#allocation2 + $0xb4] sm:$0xff]
    %v3381 = vld [vmem:[#allocation2 + $0xbc] sm:$0xf]
    %v3382 = vmul.f32 %v3380, %v2376
    %v3383 = vmul.f32 %v3381, %v2376
    %v3384 = vadd.f32 %v3382, %v2384
    %v3385 = vadd.f32 %v3383, %v2384
    %v3386 = vpack.c.bf16 %v3385, %v3384
    %v3388 = vunpack.c.l.b16 %v3386
    %v3389 = vunpack.c.h.b16 %v3386
    %v3390 = vpack.c.b16 %v3388, %v3388
    %v3391 = vpack.c.b16 %v3389, %v3389
    %3392 = vrot.lane.b32.xlu0 %v3390, 20
    %v3393 = vpop.permute.xlu0 %3392
    %3394 = vrot.lane.b32.xlu0 %v3391, 20
    %v3395 = vpop.permute.xlu0 %3394
    %3398 = vst.msk [vmem:[%s3201 + $0x4] sm:$0xf] %vm2560, %v3393
    %3399 = vst.msk [vmem:[%s3201 + $0xc] sm:$0x3] %vm2562, %v3395
    %v3400 = vld [vmem:[#allocation2 + $0xc0] sm:$0xff]
    %v3401 = vld [vmem:[#allocation2 + $0xc8] sm:$0xf]
    %v3402 = vmul.f32 %v3400, %v2376
    %v3403 = vmul.f32 %v3401, %v2376
    %v3404 = vadd.f32 %v3402, %v2384
    %v3405 = vadd.f32 %v3403, %v2384
    %v3406 = vpack.c.bf16 %v3405, %v3404
    %v3408 = vunpack.c.l.b16 %v3406
    %v3409 = vunpack.c.h.b16 %v3406
    %v3410 = vpack.c.b16 %v3408, %v3408
    %v3411 = vpack.c.b16 %v3409, %v3409
    %3412 = vrot.lane.b32.xlu0 %v3410, 84
    %v3413 = vpop.permute.xlu0 %3412
    %3414 = vrot.lane.b32.xlu0 %v3411, 84
    %v3415 = vpop.permute.xlu0 %3414
    %3418 = vst.msk [vmem:[%s3201 + $0x4] sm:$0xf] %vm2582, %v3413
    %3419 = vst.msk [vmem:[%s3201 + $0xc] sm:$0x3] %vm2584, %v3415
    %v3420 = vld [vmem:[#allocation2 + $0xe4] sm:$0xff]
    %v3421 = vld [vmem:[#allocation2 + $0xec] sm:$0xf]
    %v3422 = vmul.f32 %v3420, %v2376
    %v3423 = vmul.f32 %v3421, %v2376
    %v3424 = vadd.f32 %v3422, %v2384
    %v3425 = vadd.f32 %v3423, %v2384
    %v3426 = vpack.c.bf16 %v3425, %v3424
    %v3428 = vunpack.c.l.b16 %v3426
    %v3429 = vunpack.c.h.b16 %v3426
    %v3430 = vpack.c.b16 %v3428, %v3428
    %v3431 = vpack.c.b16 %v3429, %v3429
    %3432 = vrot.lane.b32.xlu0 %v3430, 30
    %v3433 = vpop.permute.xlu0 %3432
    %3434 = vrot.lane.b32.xlu0 %v3431, 30
    %v3435 = vpop.permute.xlu0 %3434
    %3438 = vst.msk [vmem:[%s3201] sm:$0xf] %vm2644, %v3433
    %3439 = vst.msk [vmem:[%s3201 + $0x8] sm:$0x3] %vm2646, %v3435
    %v3440 = vld [vmem:[#allocation2 + $0xf0] sm:$0xff]
    %v3441 = vld [vmem:[#allocation2 + $0xf8] sm:$0xf]
    %v3442 = vmul.f32 %v3440, %v2376
    %v3443 = vmul.f32 %v3441, %v2376
    %v3444 = vadd.f32 %v3442, %v2384
    %v3445 = vadd.f32 %v3443, %v2384
    %v3446 = vpack.c.bf16 %v3445, %v3444
    %v3448 = vunpack.c.l.b16 %v3446
    %v3449 = vunpack.c.h.b16 %v3446
    %v3450 = vpack.c.b16 %v3448, %v3448
    %v3451 = vpack.c.b16 %v3449, %v3449
    %3452 = vrot.lane.b32.xlu0 %v3450, 94
    %v3453 = vpop.permute.xlu0 %3452
    %3454 = vrot.lane.b32.xlu0 %v3451, 94
    %v3455 = vpop.permute.xlu0 %3454
    %3458 = vst.msk [vmem:[%s3201] sm:$0xf] %vm2666, %v3453
    %3459 = vst.msk [vmem:[%s3201 + $0x8] sm:$0x3] %vm2668, %v3455
    %v3460 = vld [vmem:[#allocation2 + $0xfc] sm:$0xff]
    %v3461 = vld [vmem:[#allocation2 + $0x104] sm:$0xf]
    %v3462 = vmul.f32 %v3460, %v2376
    %v3463 = vmul.f32 %v3461, %v2376
    %v3464 = vadd.f32 %v3462, %v2384
    %v3465 = vadd.f32 %v3463, %v2384
    %v3466 = vpack.c.bf16 %v3465, %v3464
    %v3468 = vunpack.c.l.b16 %v3466
    %v3469 = vunpack.c.h.b16 %v3466
    %v3470 = vpack.c.b16 %v3468, %v3468
    %v3471 = vpack.c.b16 %v3469, %v3469
    %3472 = vrot.lane.b32.xlu0 %v3470, 30
    %v3473 = vpop.permute.xlu0 %3472
    %3474 = vrot.lane.b32.xlu0 %v3471, 30
    %v3475 = vpop.permute.xlu0 %3474
    %3478 = vst.msk [vmem:[%s3201 + $0x4] sm:$0xf] %vm2644, %v3473
    %3479 = vst.msk [vmem:[%s3201 + $0xc] sm:$0x3] %vm2646, %v3475
    %v3480 = vld [vmem:[#allocation2 + $0x108] sm:$0xff]
    %v3481 = vld [vmem:[#allocation2 + $0x110] sm:$0xf]
    %v3482 = vmul.f32 %v3480, %v2376
    %v3483 = vmul.f32 %v3481, %v2376
    %v3484 = vadd.f32 %v3482, %v2384
    %v3485 = vadd.f32 %v3483, %v2384
    %v3486 = vpack.c.bf16 %v3485, %v3484
    %v3488 = vunpack.c.l.b16 %v3486
    %v3489 = vunpack.c.h.b16 %v3486
    %v3490 = vpack.c.b16 %v3488, %v3488
    %v3491 = vpack.c.b16 %v3489, %v3489
    %3492 = vrot.lane.b32.xlu0 %v3490, 94
    %v3493 = vpop.permute.xlu0 %3492
    %3494 = vrot.lane.b32.xlu0 %v3491, 94
    %v3495 = vpop.permute.xlu0 %3494
    %3498 = vst.msk [vmem:[%s3201 + $0x4] sm:$0xf] %vm2666, %v3493
    %3499 = vst.msk [vmem:[%s3201 + $0xc] sm:$0x3] %vm2668, %v3495
    %v3500 = vld [vmem:[#allocation2 + $0xa8] sm:$0xff]
    %v3501 = vld [vmem:[#allocation2 + $0xb0] sm:$0xf]
    %v3502 = vmul.f32 %v3500, %v2376
    %v3503 = vmul.f32 %v3501, %v2376
    %v3504 = vadd.f32 %v3502, %v2384
    %v3505 = vadd.f32 %v3503, %v2384
    %v3506 = vpack.c.bf16 %v3505, %v3504
    %v3508 = vunpack.c.l.b16 %v3506
    %v3509 = vunpack.c.h.b16 %v3506
    %v3510 = vpack.c.b16 %v3508, %v3508
    %v3511 = vpack.c.b16 %v3509, %v3509
    %3512 = vrot.lane.b32.xlu0 %v3510, 40
    %v3513 = vpop.permute.xlu0 %3512
    %3514 = vrot.lane.b32.xlu0 %v3511, 40
    %v3515 = vpop.permute.xlu0 %3514
    %3518 = vst.msk [vmem:[%s3201] sm:$0xf] %vm2728, %v3513
    %3519 = vst.msk [vmem:[%s3201 + $0x8] sm:$0x3] %vm2730, %v3515
    %v3520 = vld [vmem:[#allocation2 + $0xb4] sm:$0xff]
    %v3521 = vld [vmem:[#allocation2 + $0xbc] sm:$0xf]
    %v3522 = vmul.f32 %v3520, %v2376
    %v3523 = vmul.f32 %v3521, %v2376
    %v3524 = vadd.f32 %v3522, %v2384
    %v3525 = vadd.f32 %v3523, %v2384
    %v3526 = vpack.c.bf16 %v3525, %v3524
    %v3528 = vunpack.c.l.b16 %v3526
    %v3529 = vunpack.c.h.b16 %v3526
    %v3530 = vpack.c.b16 %v3528, %v3528
    %v3531 = vpack.c.b16 %v3529, %v3529
    %3532 = vrot.lane.b32.xlu0 %v3530, 104
    %v3533 = vpop.permute.xlu0 %3532
    %3534 = vrot.lane.b32.xlu0 %v3531, 104
    %v3535 = vpop.permute.xlu0 %3534
    %3538 = vst.msk [vmem:[%s3201] sm:$0xf] %vm2750, %v3533
    %3539 = vst.msk [vmem:[%s3201 + $0x8] sm:$0x3] %vm2752, %v3535
    %v3540 = vld [vmem:[#allocation2 + $0xc0] sm:$0xff]
    %v3541 = vld [vmem:[#allocation2 + $0xc8] sm:$0xf]
    %v3542 = vmul.f32 %v3540, %v2376
    %v3543 = vmul.f32 %v3541, %v2376
    %v3544 = vadd.f32 %v3542, %v2384
    %v3545 = vadd.f32 %v3543, %v2384
    %v3546 = vpack.c.bf16 %v3545, %v3544
    %v3548 = vunpack.c.l.b16 %v3546
    %v3549 = vunpack.c.h.b16 %v3546
    %v3550 = vpack.c.b16 %v3548, %v3548
    %v3551 = vpack.c.b16 %v3549, %v3549
    %3552 = vrot.lane.b32.xlu0 %v3550, 40
    %v3553 = vpop.permute.xlu0 %3552
    %3554 = vrot.lane.b32.xlu0 %v3551, 40
    %v3555 = vpop.permute.xlu0 %3554
    %3558 = vst.msk [vmem:[%s3201 + $0x4] sm:$0xf] %vm2728, %v3553
    %3559 = vst.msk [vmem:[%s3201 + $0xc] sm:$0x3] %vm2730, %v3555
    %v3560 = vld [vmem:[#allocation2 + $0xcc] sm:$0xff]
    %v3561 = vld [vmem:[#allocation2 + $0xd4] sm:$0xf]
    %v3562 = vmul.f32 %v3560, %v2376
    %v3563 = vmul.f32 %v3561, %v2376
    %v3564 = vadd.f32 %v3562, %v2384
    %v3565 = vadd.f32 %v3563, %v2384
    %v3566 = vpack.c.bf16 %v3565, %v3564
    %v3568 = vunpack.c.l.b16 %v3566
    %v3569 = vunpack.c.h.b16 %v3566
    %v3570 = vpack.c.b16 %v3568, %v3568
    %v3571 = vpack.c.b16 %v3569, %v3569
    %3572 = vrot.lane.b32.xlu0 %v3570, 104
    %v3573 = vpop.permute.xlu0 %3572
    %3574 = vrot.lane.b32.xlu0 %v3571, 104
    %v3575 = vpop.permute.xlu0 %3574
    %3578 = vst.msk [vmem:[%s3201 + $0x4] sm:$0xf] %vm2750, %v3573
    %3579 = vst.msk [vmem:[%s3201 + $0xc] sm:$0x3] %vm2752, %v3575
    %v3580 = vld [vmem:[#allocation2 + $0xd8] sm:$0xff]
    %v3581 = vld [vmem:[#allocation2 + $0xe0] sm:$0xf]
    %v3582 = vmul.f32 %v3580, %v2376
    %v3583 = vmul.f32 %v3581, %v2376
    %v3584 = vadd.f32 %v3582, %v2384
    %v3585 = vadd.f32 %v3583, %v2384
    %v3586 = vpack.c.bf16 %v3585, %v3584
    %v3588 = vunpack.c.l.b16 %v3586
    %v3589 = vunpack.c.h.b16 %v3586
    %v3590 = vpack.c.b16 %v3588, %v3588
    %v3591 = vpack.c.b16 %v3589, %v3589
    %s3594 = scalar_lea.vmem [#allocation3], 48
    %3595 = vst.msk [vmem:[%s3594] sm:$0xf] %vm2396, %v3590
    %3596 = vst.msk [vmem:[%s3594 + $0x8] sm:$0x3] %vm2398, %v3591
    %v3597 = vld [vmem:[#allocation2 + $0xe4] sm:$0xff]
    %v3598 = vld [vmem:[#allocation2 + $0xec] sm:$0xf]
    %v3599 = vmul.f32 %v3597, %v2376
    %v3600 = vmul.f32 %v3598, %v2376
    %v3601 = vadd.f32 %v3599, %v2384
    %v3602 = vadd.f32 %v3600, %v2384
    %v3603 = vpack.c.bf16 %v3602, %v3601
    %v3605 = vunpack.c.l.b16 %v3603
    %v3606 = vunpack.c.h.b16 %v3603
    %v3607 = vpack.c.b16 %v3605, %v3605
    %v3608 = vpack.c.b16 %v3606, %v3606
    %3609 = vrot.lane.b32.xlu0 %v3607, 64
    %v3610 = vpop.permute.xlu0 %3609
    %3611 = vrot.lane.b32.xlu0 %v3608, 64
    %v3612 = vpop.permute.xlu0 %3611
    %3615 = vst.msk [vmem:[%s3594] sm:$0xf] %vm2418, %v3610
    %3616 = vst.msk [vmem:[%s3594 + $0x8] sm:$0x3] %vm2420, %v3612
    %v3617 = vld [vmem:[#allocation2 + $0xf0] sm:$0xff]
    %v3618 = vld [vmem:[#allocation2 + $0xf8] sm:$0xf]
    %v3619 = vmul.f32 %v3617, %v2376
    %v3620 = vmul.f32 %v3618, %v2376
    %v3621 = vadd.f32 %v3619, %v2384
    %v3622 = vadd.f32 %v3620, %v2384
    %v3623 = vpack.c.bf16 %v3622, %v3621
    %v3625 = vunpack.c.l.b16 %v3623
    %v3626 = vunpack.c.h.b16 %v3623
    %v3627 = vpack.c.b16 %v3625, %v3625
    %v3628 = vpack.c.b16 %v3626, %v3626
    %3631 = vst.msk [vmem:[%s3594 + $0x4] sm:$0xf] %vm2396, %v3627
    %3632 = vst.msk [vmem:[%s3594 + $0xc] sm:$0x3] %vm2398, %v3628
    %v3633 = vld [vmem:[#allocation2 + $0xfc] sm:$0xff]
    %v3634 = vld [vmem:[#allocation2 + $0x104] sm:$0xf]
    %v3635 = vmul.f32 %v3633, %v2376
    %v3636 = vmul.f32 %v3634, %v2376
    %v3637 = vadd.f32 %v3635, %v2384
    %v3638 = vadd.f32 %v3636, %v2384
    %v3639 = vpack.c.bf16 %v3638, %v3637
    %v3641 = vunpack.c.l.b16 %v3639
    %v3642 = vunpack.c.h.b16 %v3639
    %v3643 = vpack.c.b16 %v3641, %v3641
    %v3644 = vpack.c.b16 %v3642, %v3642
    %3645 = vrot.lane.b32.xlu0 %v3643, 64
    %v3646 = vpop.permute.xlu0 %3645
    %3647 = vrot.lane.b32.xlu0 %v3644, 64
    %v3648 = vpop.permute.xlu0 %3647
    %3651 = vst.msk [vmem:[%s3594 + $0x4] sm:$0xf] %vm2418, %v3646
    %3652 = vst.msk [vmem:[%s3594 + $0xc] sm:$0x3] %vm2420, %v3648
    %v3653 = vld [vmem:[#allocation2 + $0x9c] sm:$0xff]
    %v3654 = vld [vmem:[#allocation2 + $0xa4] sm:$0xf]
    %v3655 = vmul.f32 %v3653, %v2376
    %v3656 = vmul.f32 %v3654, %v2376
    %v3657 = vadd.f32 %v3655, %v2384
    %v3658 = vadd.f32 %v3656, %v2384
    %v3659 = vpack.c.bf16 %v3658, %v3657
    %v3661 = vunpack.c.l.b16 %v3659
    %v3662 = vunpack.c.h.b16 %v3659
    %v3663 = vpack.c.b16 %v3661, %v3661
    %v3664 = vpack.c.b16 %v3662, %v3662
    %3665 = vrot.lane.b32.xlu0 %v3663, 10
    %v3666 = vpop.permute.xlu0 %3665
    %3667 = vrot.lane.b32.xlu0 %v3664, 10
    %v3668 = vpop.permute.xlu0 %3667
    %3671 = vst.msk [vmem:[%s3594] sm:$0xf] %vm2476, %v3666
    %3672 = vst.msk [vmem:[%s3594 + $0x8] sm:$0x3] %vm2478, %v3668
    %v3673 = vld [vmem:[#allocation2 + $0xa8] sm:$0xff]
    %v3674 = vld [vmem:[#allocation2 + $0xb0] sm:$0xf]
    %v3675 = vmul.f32 %v3673, %v2376
    %v3676 = vmul.f32 %v3674, %v2376
    %v3677 = vadd.f32 %v3675, %v2384
    %v3678 = vadd.f32 %v3676, %v2384
    %v3679 = vpack.c.bf16 %v3678, %v3677
    %v3681 = vunpack.c.l.b16 %v3679
    %v3682 = vunpack.c.h.b16 %v3679
    %v3683 = vpack.c.b16 %v3681, %v3681
    %v3684 = vpack.c.b16 %v3682, %v3682
    %3685 = vrot.lane.b32.xlu0 %v3683, 74
    %v3686 = vpop.permute.xlu0 %3685
    %3687 = vrot.lane.b32.xlu0 %v3684, 74
    %v3688 = vpop.permute.xlu0 %3687
    %3691 = vst.msk [vmem:[%s3594] sm:$0xf] %vm2498, %v3686
    %3692 = vst.msk [vmem:[%s3594 + $0x8] sm:$0x3] %vm2500, %v3688
    %v3693 = vld [vmem:[#allocation2 + $0xb4] sm:$0xff]
    %v3694 = vld [vmem:[#allocation2 + $0xbc] sm:$0xf]
    %v3695 = vmul.f32 %v3693, %v2376
    %v3696 = vmul.f32 %v3694, %v2376
    %v3697 = vadd.f32 %v3695, %v2384
    %v3698 = vadd.f32 %v3696, %v2384
    %v3699 = vpack.c.bf16 %v3698, %v3697
    %v3701 = vunpack.c.l.b16 %v3699
    %v3702 = vunpack.c.h.b16 %v3699
    %v3703 = vpack.c.b16 %v3701, %v3701
    %v3704 = vpack.c.b16 %v3702, %v3702
    %3705 = vrot.lane.b32.xlu0 %v3703, 10
    %v3706 = vpop.permute.xlu0 %3705
    %3707 = vrot.lane.b32.xlu0 %v3704, 10
    %v3708 = vpop.permute.xlu0 %3707
    %3711 = vst.msk [vmem:[%s3594 + $0x4] sm:$0xf] %vm2476, %v3706
    %3712 = vst.msk [vmem:[%s3594 + $0xc] sm:$0x3] %vm2478, %v3708
    %v3713 = vld [vmem:[#allocation2 + $0xc0] sm:$0xff]
    %v3714 = vld [vmem:[#allocation2 + $0xc8] sm:$0xf]
    %v3715 = vmul.f32 %v3713, %v2376
    %v3716 = vmul.f32 %v3714, %v2376
    %v3717 = vadd.f32 %v3715, %v2384
    %v3718 = vadd.f32 %v3716, %v2384
    %v3719 = vpack.c.bf16 %v3718, %v3717
    %v3721 = vunpack.c.l.b16 %v3719
    %v3722 = vunpack.c.h.b16 %v3719
    %v3723 = vpack.c.b16 %v3721, %v3721
    %v3724 = vpack.c.b16 %v3722, %v3722
    %3725 = vrot.lane.b32.xlu0 %v3723, 74
    %v3726 = vpop.permute.xlu0 %3725
    %3727 = vrot.lane.b32.xlu0 %v3724, 74
    %v3728 = vpop.permute.xlu0 %3727
    %3731 = vst.msk [vmem:[%s3594 + $0x4] sm:$0xf] %vm2498, %v3726
    %3732 = vst.msk [vmem:[%s3594 + $0xc] sm:$0x3] %vm2500, %v3728
    %v3733 = vld [vmem:[#allocation2 + $0xe4] sm:$0xff]
    %v3734 = vld [vmem:[#allocation2 + $0xec] sm:$0xf]
    %v3735 = vmul.f32 %v3733, %v2376
    %v3736 = vmul.f32 %v3734, %v2376
    %v3737 = vadd.f32 %v3735, %v2384
    %v3738 = vadd.f32 %v3736, %v2384
    %v3739 = vpack.c.bf16 %v3738, %v3737
    %v3741 = vunpack.c.l.b16 %v3739
    %v3742 = vunpack.c.h.b16 %v3739
    %v3743 = vpack.c.b16 %v3741, %v3741
    %v3744 = vpack.c.b16 %v3742, %v3742
    %3745 = vrot.lane.b32.xlu0 %v3743, 20
    %v3746 = vpop.permute.xlu0 %3745
    %3747 = vrot.lane.b32.xlu0 %v3744, 20
    %v3748 = vpop.permute.xlu0 %3747
    %3751 = vst.msk [vmem:[%s3594] sm:$0xf] %vm2560, %v3746
    %3752 = vst.msk [vmem:[%s3594 + $0x8] sm:$0x3] %vm2562, %v3748
    %v3753 = vld [vmem:[#allocation2 + $0xf0] sm:$0xff]
    %v3754 = vld [vmem:[#allocation2 + $0xf8] sm:$0xf]
    %v3755 = vmul.f32 %v3753, %v2376
    %v3756 = vmul.f32 %v3754, %v2376
    %v3757 = vadd.f32 %v3755, %v2384
    %v3758 = vadd.f32 %v3756, %v2384
    %v3759 = vpack.c.bf16 %v3758, %v3757
    %v3761 = vunpack.c.l.b16 %v3759
    %v3762 = vunpack.c.h.b16 %v3759
    %v3763 = vpack.c.b16 %v3761, %v3761
    %v3764 = vpack.c.b16 %v3762, %v3762
    %3765 = vrot.lane.b32.xlu0 %v3763, 84
    %v3766 = vpop.permute.xlu0 %3765
    %3767 = vrot.lane.b32.xlu0 %v3764, 84
    %v3768 = vpop.permute.xlu0 %3767
    %3771 = vst.msk [vmem:[%s3594] sm:$0xf] %vm2582, %v3766
    %3772 = vst.msk [vmem:[%s3594 + $0x8] sm:$0x3] %vm2584, %v3768
    %v3773 = vld [vmem:[#allocation2 + $0xfc] sm:$0xff]
    %v3774 = vld [vmem:[#allocation2 + $0x104] sm:$0xf]
    %v3775 = vmul.f32 %v3773, %v2376
    %v3776 = vmul.f32 %v3774, %v2376
    %v3777 = vadd.f32 %v3775, %v2384
    %v3778 = vadd.f32 %v3776, %v2384
    %v3779 = vpack.c.bf16 %v3778, %v3777
    %v3781 = vunpack.c.l.b16 %v3779
    %v3782 = vunpack.c.h.b16 %v3779
    %v3783 = vpack.c.b16 %v3781, %v3781
    %v3784 = vpack.c.b16 %v3782, %v3782
    %3785 = vrot.lane.b32.xlu0 %v3783, 20
    %v3786 = vpop.permute.xlu0 %3785
    %3787 = vrot.lane.b32.xlu0 %v3784, 20
    %v3788 = vpop.permute.xlu0 %3787
    %3791 = vst.msk [vmem:[%s3594 + $0x4] sm:$0xf] %vm2560, %v3786
    %3792 = vst.msk [vmem:[%s3594 + $0xc] sm:$0x3] %vm2562, %v3788
    %v3793 = vld [vmem:[#allocation2 + $0x108] sm:$0xff]
    %v3794 = vld [vmem:[#allocation2 + $0x110] sm:$0xf]
    %v3795 = vmul.f32 %v3793, %v2376
    %v3796 = vmul.f32 %v3794, %v2376
    %v3797 = vadd.f32 %v3795, %v2384
    %v3798 = vadd.f32 %v3796, %v2384
    %v3799 = vpack.c.bf16 %v3798, %v3797
    %v3801 = vunpack.c.l.b16 %v3799
    %v3802 = vunpack.c.h.b16 %v3799
    %v3803 = vpack.c.b16 %v3801, %v3801
    %v3804 = vpack.c.b16 %v3802, %v3802
    %3805 = vrot.lane.b32.xlu0 %v3803, 84
    %v3806 = vpop.permute.xlu0 %3805
    %3807 = vrot.lane.b32.xlu0 %v3804, 84
    %v3808 = vpop.permute.xlu0 %3807
    %3811 = vst.msk [vmem:[%s3594 + $0x4] sm:$0xf] %vm2582, %v3806
    %3812 = vst.msk [vmem:[%s3594 + $0xc] sm:$0x3] %vm2584, %v3808
    %v3813 = vld [vmem:[#allocation2 + $0xa8] sm:$0xff]
    %v3814 = vld [vmem:[#allocation2 + $0xb0] sm:$0xf]
    %v3815 = vmul.f32 %v3813, %v2376
    %v3816 = vmul.f32 %v3814, %v2376
    %v3817 = vadd.f32 %v3815, %v2384
    %v3818 = vadd.f32 %v3816, %v2384
    %v3819 = vpack.c.bf16 %v3818, %v3817
    %v3821 = vunpack.c.l.b16 %v3819
    %v3822 = vunpack.c.h.b16 %v3819
    %v3823 = vpack.c.b16 %v3821, %v3821
    %v3824 = vpack.c.b16 %v3822, %v3822
    %3825 = vrot.lane.b32.xlu0 %v3823, 30
    %v3826 = vpop.permute.xlu0 %3825
    %3827 = vrot.lane.b32.xlu0 %v3824, 30
    %v3828 = vpop.permute.xlu0 %3827
    %3831 = vst.msk [vmem:[%s3594] sm:$0xf] %vm2644, %v3826
    %3832 = vst.msk [vmem:[%s3594 + $0x8] sm:$0x3] %vm2646, %v3828
    %v3833 = vld [vmem:[#allocation2 + $0xb4] sm:$0xff]
    %v3834 = vld [vmem:[#allocation2 + $0xbc] sm:$0xf]
    %v3835 = vmul.f32 %v3833, %v2376
    %v3836 = vmul.f32 %v3834, %v2376
    %v3837 = vadd.f32 %v3835, %v2384
    %v3838 = vadd.f32 %v3836, %v2384
    %v3839 = vpack.c.bf16 %v3838, %v3837
    %v3841 = vunpack.c.l.b16 %v3839
    %v3842 = vunpack.c.h.b16 %v3839
    %v3843 = vpack.c.b16 %v3841, %v3841
    %v3844 = vpack.c.b16 %v3842, %v3842
    %3845 = vrot.lane.b32.xlu0 %v3843, 94
    %v3846 = vpop.permute.xlu0 %3845
    %3847 = vrot.lane.b32.xlu0 %v3844, 94
    %v3848 = vpop.permute.xlu0 %3847
    %3851 = vst.msk [vmem:[%s3594] sm:$0xf] %vm2666, %v3846
    %3852 = vst.msk [vmem:[%s3594 + $0x8] sm:$0x3] %vm2668, %v3848
    %v3853 = vld [vmem:[#allocation2 + $0xc0] sm:$0xff]
    %v3854 = vld [vmem:[#allocation2 + $0xc8] sm:$0xf]
    %v3855 = vmul.f32 %v3853, %v2376
    %v3856 = vmul.f32 %v3854, %v2376
    %v3857 = vadd.f32 %v3855, %v2384
    %v3858 = vadd.f32 %v3856, %v2384
    %v3859 = vpack.c.bf16 %v3858, %v3857
    %v3861 = vunpack.c.l.b16 %v3859
    %v3862 = vunpack.c.h.b16 %v3859
    %v3863 = vpack.c.b16 %v3861, %v3861
    %v3864 = vpack.c.b16 %v3862, %v3862
    %3865 = vrot.lane.b32.xlu0 %v3863, 30
    %v3866 = vpop.permute.xlu0 %3865
    %3867 = vrot.lane.b32.xlu0 %v3864, 30
    %v3868 = vpop.permute.xlu0 %3867
    %3871 = vst.msk [vmem:[%s3594 + $0x4] sm:$0xf] %vm2644, %v3866
    %3872 = vst.msk [vmem:[%s3594 + $0xc] sm:$0x3] %vm2646, %v3868
    %v3873 = vld [vmem:[#allocation2 + $0xcc] sm:$0xff]
    %v3874 = vld [vmem:[#allocation2 + $0xd4] sm:$0xf]
    %v3875 = vmul.f32 %v3873, %v2376
    %v3876 = vmul.f32 %v3874, %v2376
    %v3877 = vadd.f32 %v3875, %v2384
    %v3878 = vadd.f32 %v3876, %v2384
    %v3879 = vpack.c.bf16 %v3878, %v3877
    %v3881 = vunpack.c.l.b16 %v3879
    %v3882 = vunpack.c.h.b16 %v3879
    %v3883 = vpack.c.b16 %v3881, %v3881
    %v3884 = vpack.c.b16 %v3882, %v3882
    %3885 = vrot.lane.b32.xlu0 %v3883, 94
    %v3886 = vpop.permute.xlu0 %3885
    %3887 = vrot.lane.b32.xlu0 %v3884, 94
    %v3888 = vpop.permute.xlu0 %3887
    %3891 = vst.msk [vmem:[%s3594 + $0x4] sm:$0xf] %vm2666, %v3886
    %3892 = vst.msk [vmem:[%s3594 + $0xc] sm:$0x3] %vm2668, %v3888
    %v3893 = vld [vmem:[#allocation2 + $0xf0] sm:$0xff]
    %v3894 = vld [vmem:[#allocation2 + $0xf8] sm:$0xf]
    %v3895 = vmul.f32 %v3893, %v2376
    %v3896 = vmul.f32 %v3894, %v2376
    %v3897 = vadd.f32 %v3895, %v2384
    %v3898 = vadd.f32 %v3896, %v2384
    %v3899 = vpack.c.bf16 %v3898, %v3897
    %v3901 = vunpack.c.l.b16 %v3899
    %v3902 = vunpack.c.h.b16 %v3899
    %v3903 = vpack.c.b16 %v3901, %v3901
    %v3904 = vpack.c.b16 %v3902, %v3902
    %3905 = vrot.lane.b32.xlu0 %v3903, 40
    %v3906 = vpop.permute.xlu0 %3905
    %3907 = vrot.lane.b32.xlu0 %v3904, 40
    %v3908 = vpop.permute.xlu0 %3907
    %3911 = vst.msk [vmem:[%s3594] sm:$0xf] %vm2728, %v3906
    %3912 = vst.msk [vmem:[%s3594 + $0x8] sm:$0x3] %vm2730, %v3908
    %v3913 = vld [vmem:[#allocation2 + $0xfc] sm:$0xff]
    %v3914 = vld [vmem:[#allocation2 + $0x104] sm:$0xf]
    %v3915 = vmul.f32 %v3913, %v2376
    %v3916 = vmul.f32 %v3914, %v2376
    %v3917 = vadd.f32 %v3915, %v2384
    %v3918 = vadd.f32 %v3916, %v2384
    %v3919 = vpack.c.bf16 %v3918, %v3917
    %v3921 = vunpack.c.l.b16 %v3919
    %v3922 = vunpack.c.h.b16 %v3919
    %v3923 = vpack.c.b16 %v3921, %v3921
    %v3924 = vpack.c.b16 %v3922, %v3922
    %3925 = vrot.lane.b32.xlu0 %v3923, 104
    %v3926 = vpop.permute.xlu0 %3925
    %3927 = vrot.lane.b32.xlu0 %v3924, 104
    %v3928 = vpop.permute.xlu0 %3927
    %3931 = vst.msk [vmem:[%s3594] sm:$0xf] %vm2750, %v3926
    %3932 = vst.msk [vmem:[%s3594 + $0x8] sm:$0x3] %vm2752, %v3928
    %v3933 = vld [vmem:[#allocation2 + $0x108] sm:$0xff]
    %v3934 = vld [vmem:[#allocation2 + $0x110] sm:$0xf]
    %v3935 = vmul.f32 %v3933, %v2376
    %v3936 = vmul.f32 %v3934, %v2376
    %v3937 = vadd.f32 %v3935, %v2384
    %v3938 = vadd.f32 %v3936, %v2384
    %v3939 = vpack.c.bf16 %v3938, %v3937
    %v3941 = vunpack.c.l.b16 %v3939
    %v3942 = vunpack.c.h.b16 %v3939
    %v3943 = vpack.c.b16 %v3941, %v3941
    %v3944 = vpack.c.b16 %v3942, %v3942
    %3945 = vrot.lane.b32.xlu0 %v3943, 40
    %v3946 = vpop.permute.xlu0 %3945
    %3947 = vrot.lane.b32.xlu0 %v3944, 40
    %v3948 = vpop.permute.xlu0 %3947
    %3951 = vst.msk [vmem:[%s3594 + $0x4] sm:$0xf] %vm2728, %v3946
    %3952 = vst.msk [vmem:[%s3594 + $0xc] sm:$0x3] %vm2730, %v3948
    %v3953 = vld [vmem:[#allocation2 + $0x114] sm:$0xff]
    %v3954 = vld [vmem:[#allocation2 + $0x11c] sm:$0xf]
    %v3955 = vmul.f32 %v3953, %v2376
    %v3956 = vmul.f32 %v3954, %v2376
    %v3957 = vadd.f32 %v3955, %v2384
    %v3958 = vadd.f32 %v3956, %v2384
    %v3959 = vpack.c.bf16 %v3958, %v3957
    %v3961 = vunpack.c.l.b16 %v3959
    %v3962 = vunpack.c.h.b16 %v3959
    %v3963 = vpack.c.b16 %v3961, %v3961
    %v3964 = vpack.c.b16 %v3962, %v3962
    %3965 = vrot.lane.b32.xlu0 %v3963, 104
    %v3966 = vpop.permute.xlu0 %3965
    %3967 = vrot.lane.b32.xlu0 %v3964, 104
    %v3968 = vpop.permute.xlu0 %3967
    %3971 = vst.msk [vmem:[%s3594 + $0x4] sm:$0xf] %vm2750, %v3966
    %3972 = vst.msk [vmem:[%s3594 + $0xc] sm:$0x3] %vm2752, %v3968
    %v3973 = vld [vmem:[#allocation3] sm:$0xff]
    %v3974 = vld [vmem:[%s5] sm:$0xf]
    %v3975 = vld [vmem:[%s5 + $0x4] sm:$0xf]
    %v3976 = vld [vmem:[%s5 + $0x8] sm:$0xf]
    %v3977 = vld [vmem:[%s5 + $0xc] sm:$0xf]
    %v3978 = vld [vmem:[%s5 + $0x10] sm:$0xf]
    %v3979 = vld [vmem:[%s5 + $0x14] sm:$0xf]
    %v3980 = vld [vmem:[%s5 + $0x18] sm:$0xf]
    %v3981 = vld [vmem:[%s5 + $0x1c] sm:$0xf]
    %v3982 = vld [vmem:[%s5 + $0x20] sm:$0xf]
    %v3983 = vld [vmem:[%s5 + $0x24] sm:$0xf]
    %v3984 = vld [vmem:[%s5 + $0x28] sm:$0xf]
    %v3985 = vld [vmem:[%s5 + $0x2c] sm:$0xf]
    %v3986 = vld [vmem:[%s5 + $0x30] sm:$0xf]
    %v3987 = vld [vmem:[%s5 + $0x34] sm:$0xf]
    %v3988 = vld [vmem:[%s5 + $0x38] sm:$0xf]
    %v3989 = vld [vmem:[%s5 + $0x3c] sm:$0xf]
    %v3990 = vld [vmem:[%s5 + $0x40] sm:$0xf]
    %v3991 = vld [vmem:[%s5 + $0x44] sm:$0xf]
    %v3992 = vld [vmem:[%s5 + $0x48] sm:$0xf]
    %v3993 = vld [vmem:[%s5 + $0x4c] sm:$0xf]
    %v3994 = vld [vmem:[%s5 + $0x50] sm:$0xf]
    %v3995 = vld [vmem:[%s5 + $0x54] sm:$0xf]
    %v3996 = vld [vmem:[%s5 + $0x58] sm:$0xf]
    %v3997 = vld [vmem:[%s5 + $0x5c] sm:$0xf]
    %v3998 = vld [vmem:[%s5 + $0x60] sm:$0xf]
    %v3999 = vld [vmem:[%s5 + $0x64] sm:$0xf]
    %v4000 = vld [vmem:[%s5 + $0x68] sm:$0xf]
    %v4001 = vld [vmem:[%s5 + $0x6c] sm:$0xf]
    %v4002 = vld [vmem:[%s5 + $0x70] sm:$0xf]
    %v4003 = vld [vmem:[%s5 + $0x74] sm:$0xf]
    %v4004 = vld [vmem:[%s5 + $0x78] sm:$0xf]
    %v4005 = vld [vmem:[%s5 + $0x7c] sm:$0xf]
    %v4006 = vld [vmem:[%s3201] sm:$0xff]
    %s4007 = scalar_lea.vmem %s5, 128
    %v4008 = vld [vmem:[%s4007] sm:$0xf]
    %v4009 = vld [vmem:[%s4007 + $0x4] sm:$0xf]
    %v4010 = vld [vmem:[%s4007 + $0x8] sm:$0xf]
    %v4011 = vld [vmem:[%s4007 + $0xc] sm:$0xf]
    %v4012 = vld [vmem:[%s4007 + $0x10] sm:$0xf]
    %v4013 = vld [vmem:[%s4007 + $0x14] sm:$0xf]
    %v4014 = vld [vmem:[%s4007 + $0x18] sm:$0xf]
    %v4015 = vld [vmem:[%s4007 + $0x1c] sm:$0xf]
    %v4016 = vld [vmem:[%s4007 + $0x20] sm:$0xf]
    %v4017 = vld [vmem:[%s4007 + $0x24] sm:$0xf]
    %v4018 = vld [vmem:[%s4007 + $0x28] sm:$0xf]
    %v4019 = vld [vmem:[%s4007 + $0x2c] sm:$0xf]
    %v4020 = vld [vmem:[%s4007 + $0x30] sm:$0xf]
    %v4021 = vld [vmem:[%s4007 + $0x34] sm:$0xf]
    %v4022 = vld [vmem:[%s4007 + $0x38] sm:$0xf]
    %v4023 = vld [vmem:[%s4007 + $0x3c] sm:$0xf]
    %v4024 = vld [vmem:[%s4007 + $0x40] sm:$0xf]
    %v4025 = vld [vmem:[%s4007 + $0x44] sm:$0xf]
    %v4026 = vld [vmem:[%s4007 + $0x48] sm:$0xf]
    %v4027 = vld [vmem:[%s4007 + $0x4c] sm:$0xf]
    %v4028 = vld [vmem:[%s4007 + $0x50] sm:$0xf]
    %v4029 = vld [vmem:[%s4007 + $0x54] sm:$0xf]
    %v4030 = vld [vmem:[%s4007 + $0x58] sm:$0xf]
    %v4031 = vld [vmem:[%s4007 + $0x5c] sm:$0xf]
    %v4032 = vld [vmem:[%s4007 + $0x60] sm:$0xf]
    %v4033 = vld [vmem:[%s4007 + $0x64] sm:$0xf]
    %v4034 = vld [vmem:[%s4007 + $0x68] sm:$0xf]
    %v4035 = vld [vmem:[%s4007 + $0x6c] sm:$0xf]
    %v4036 = vld [vmem:[%s4007 + $0x70] sm:$0xf]
    %v4037 = vld [vmem:[%s4007 + $0x74] sm:$0xf]
    %v4038 = vld [vmem:[%s4007 + $0x78] sm:$0xf]
    %v4039 = vld [vmem:[%s4007 + $0x7c] sm:$0xf]
    %v4041 = vunpack.c.l.b16 %v4006
    %v4042 = vunpack.c.h.b16 %v4006
    %v4043 = vpack.c.b16 %v4041, %v4041
    %v4044 = vpack.c.b16 %v4042, %v4042
    %v4079 = vunpack.c.l.b16 %v4008
    %v4080 = vunpack.c.l.b16 %v4009
    %v4081 = vunpack.c.l.b16 %v4010
    %v4082 = vunpack.c.l.b16 %v4011
    %v4083 = vunpack.c.l.b16 %v4012
    %v4084 = vunpack.c.l.b16 %v4013
    %v4085 = vunpack.c.l.b16 %v4014
    %v4086 = vunpack.c.l.b16 %v4015
    %v4087 = vunpack.c.l.b16 %v4016
    %v4088 = vunpack.c.l.b16 %v4017
    %v4089 = vunpack.c.l.b16 %v4018
    %v4090 = vunpack.c.l.b16 %v4019
    %v4091 = vunpack.c.l.b16 %v4020
    %v4092 = vunpack.c.l.b16 %v4021
    %v4093 = vunpack.c.l.b16 %v4022
    %v4094 = vunpack.c.l.b16 %v4023
    %v4095 = vunpack.c.l.b16 %v4024
    %v4096 = vunpack.c.l.b16 %v4025
    %v4097 = vunpack.c.l.b16 %v4026
    %v4098 = vunpack.c.l.b16 %v4027
    %v4099 = vunpack.c.l.b16 %v4028
    %v4100 = vunpack.c.l.b16 %v4029
    %v4101 = vunpack.c.l.b16 %v4030
    %v4102 = vunpack.c.l.b16 %v4031
    %v4103 = vunpack.c.l.b16 %v4032
    %v4104 = vunpack.c.l.b16 %v4033
    %v4105 = vunpack.c.l.b16 %v4034
    %v4106 = vunpack.c.l.b16 %v4035
    %v4107 = vunpack.c.l.b16 %v4036
    %v4108 = vunpack.c.l.b16 %v4037
    %v4109 = vunpack.c.l.b16 %v4038
    %v4110 = vunpack.c.l.b16 %v4039
    %v4111 = vpack.c.b16 %v4080, %v4079
    %v4112 = vpack.c.b16 %v4082, %v4081
    %v4113 = vpack.c.b16 %v4084, %v4083
    %v4114 = vpack.c.b16 %v4086, %v4085
    %v4115 = vpack.c.b16 %v4088, %v4087
    %v4116 = vpack.c.b16 %v4090, %v4089
    %v4117 = vpack.c.b16 %v4092, %v4091
    %v4118 = vpack.c.b16 %v4094, %v4093
    %v4119 = vpack.c.b16 %v4096, %v4095
    %v4120 = vpack.c.b16 %v4098, %v4097
    %v4121 = vpack.c.b16 %v4100, %v4099
    %v4122 = vpack.c.b16 %v4102, %v4101
    %v4123 = vpack.c.b16 %v4104, %v4103
    %v4124 = vpack.c.b16 %v4106, %v4105
    %v4125 = vpack.c.b16 %v4108, %v4107
    %v4126 = vpack.c.b16 %v4110, %v4109
    %4143 = vmatprep.subr.bf16.mxu0 0
    %4144 = vmatpush1.bf16.msra.mxu0 %v4118
    %4145 = vmatprep.subr.bf16.mxu0 0
    %4146 = vmatpush1.bf16.msra.mxu0 %v4117
    %4147 = vmatprep.subr.bf16.mxu0 0
    %4148 = vmatpush1.bf16.msra.mxu0 %v4116
    %4149 = vmatprep.subr.bf16.mxu0 0
    %4150 = vmatpush1.bf16.msra.mxu0 %v4115
    %4151 = vmatprep.subr.bf16.mxu0 0
    %4152 = vmatpush1.bf16.msra.mxu0 %v4114
    %4153 = vmatprep.subr.bf16.mxu0 0
    %4154 = vmatpush1.bf16.msra.mxu0 %v4113
    %4155 = vmatprep.subr.bf16.mxu0 0
    %4156 = vmatpush1.bf16.msra.mxu0 %v4112
    %4157 = vmatprep.subr.bf16.mxu0 0
    %4158 = vmatpush1.bf16.msra.mxu0 %v4111
    %4159 = vmatprep.subr.bf16.mxu0 0
    %4160 = vmatpush2.bf16.msra.mxu0 %v4126
    %4161 = vmatprep.subr.bf16.mxu0 0
    %4162 = vmatpush2.bf16.msra.mxu0 %v4125
    %4163 = vmatprep.subr.bf16.mxu0 0
    %4164 = vmatpush2.bf16.msra.mxu0 %v4124
    %4165 = vmatprep.subr.bf16.mxu0 0
    %4166 = vmatpush2.bf16.msra.mxu0 %v4123
    %4167 = vmatprep.subr.bf16.mxu0 0
    %4168 = vmatpush2.bf16.msra.mxu0 %v4122
    %4169 = vmatprep.subr.bf16.mxu0 0
    %4170 = vmatpush2.bf16.msra.mxu0 %v4121
    %4171 = vmatprep.subr.bf16.mxu0 0
    %4172 = vmatpush2.bf16.msra.mxu0 %v4120
    %4173 = vmatprep.subr.bf16.mxu0 0
    %4174 = vmatpush2.bf16.msra.mxu0 %v4119
    %4175 = vmatprep.mubr.bf16.mxu0 %v4044
    %4176 = vmatmul.mubr.bf16.gmra.mxu0 %v4043
    %v4177 = vpop.f32.mrf.mxu0
    %v4178 = vadd.f32 0.0, %v4177
    %v4179 = vpop.f32.mrf.mxu0
    %v4180 = vpop.f32.mrf.mxu0
    %v4181 = vpop.f32.mrf.mxu0
    %4182 = vdwg.mxu0
    %v4184 = vunpack.c.l.b16 %v3973
    %v4185 = vunpack.c.h.b16 %v3973
    %v4186 = vpack.c.b16 %v4184, %v4184
    %v4187 = vpack.c.b16 %v4185, %v4185
    %v4222 = vunpack.c.l.b16 %v3974
    %v4223 = vunpack.c.l.b16 %v3975
    %v4224 = vunpack.c.l.b16 %v3976
    %v4225 = vunpack.c.l.b16 %v3977
    %v4226 = vunpack.c.l.b16 %v3978
    %v4227 = vunpack.c.l.b16 %v3979
    %v4228 = vunpack.c.l.b16 %v3980
    %v4229 = vunpack.c.l.b16 %v3981
    %v4230 = vunpack.c.l.b16 %v3982
    %v4231 = vunpack.c.l.b16 %v3983
    %v4232 = vunpack.c.l.b16 %v3984
    %v4233 = vunpack.c.l.b16 %v3985
    %v4234 = vunpack.c.l.b16 %v3986
    %v4235 = vunpack.c.l.b16 %v3987
    %v4236 = vunpack.c.l.b16 %v3988
    %v4237 = vunpack.c.l.b16 %v3989
    %v4238 = vunpack.c.l.b16 %v3990
    %v4239 = vunpack.c.l.b16 %v3991
    %v4240 = vunpack.c.l.b16 %v3992
    %v4241 = vunpack.c.l.b16 %v3993
    %v4242 = vunpack.c.l.b16 %v3994
    %v4243 = vunpack.c.l.b16 %v3995
    %v4244 = vunpack.c.l.b16 %v3996
    %v4245 = vunpack.c.l.b16 %v3997
    %v4246 = vunpack.c.l.b16 %v3998
    %v4247 = vunpack.c.l.b16 %v3999
    %v4248 = vunpack.c.l.b16 %v4000
    %v4249 = vunpack.c.l.b16 %v4001
    %v4250 = vunpack.c.l.b16 %v4002
    %v4251 = vunpack.c.l.b16 %v4003
    %v4252 = vunpack.c.l.b16 %v4004
    %v4253 = vunpack.c.l.b16 %v4005
    %v4254 = vpack.c.b16 %v4223, %v4222
    %v4255 = vpack.c.b16 %v4225, %v4224
    %v4256 = vpack.c.b16 %v4227, %v4226
    %v4257 = vpack.c.b16 %v4229, %v4228
    %v4258 = vpack.c.b16 %v4231, %v4230
    %v4259 = vpack.c.b16 %v4233, %v4232
    %v4260 = vpack.c.b16 %v4235, %v4234
    %v4261 = vpack.c.b16 %v4237, %v4236
    %v4262 = vpack.c.b16 %v4239, %v4238
    %v4263 = vpack.c.b16 %v4241, %v4240
    %v4264 = vpack.c.b16 %v4243, %v4242
    %v4265 = vpack.c.b16 %v4245, %v4244
    %v4266 = vpack.c.b16 %v4247, %v4246
    %v4267 = vpack.c.b16 %v4249, %v4248
    %v4268 = vpack.c.b16 %v4251, %v4250
    %v4269 = vpack.c.b16 %v4253, %v4252
    %4286 = vmatprep.subr.bf16.mxu0 0
    %4287 = vmatpush1.bf16.msra.mxu0 %v4261
    %4288 = vmatprep.subr.bf16.mxu0 0
    %4289 = vmatpush1.bf16.msra.mxu0 %v4260
    %4290 = vmatprep.subr.bf16.mxu0 0
    %4291 = vmatpush1.bf16.msra.mxu0 %v4259
    %4292 = vmatprep.subr.bf16.mxu0 0
    %4293 = vmatpush1.bf16.msra.mxu0 %v4258
    %4294 = vmatprep.subr.bf16.mxu0 0
    %4295 = vmatpush1.bf16.msra.mxu0 %v4257
    %4296 = vmatprep.subr.bf16.mxu0 0
    %4297 = vmatpush1.bf16.msra.mxu0 %v4256
    %4298 = vmatprep.subr.bf16.mxu0 0
    %4299 = vmatpush1.bf16.msra.mxu0 %v4255
    %4300 = vmatprep.subr.bf16.mxu0 0
    %4301 = vmatpush1.bf16.msra.mxu0 %v4254
    %4302 = vmatprep.subr.bf16.mxu0 0
    %4303 = vmatpush2.bf16.msra.mxu0 %v4269
    %4304 = vmatprep.subr.bf16.mxu0 0
    %4305 = vmatpush2.bf16.msra.mxu0 %v4268
    %4306 = vmatprep.subr.bf16.mxu0 0
    %4307 = vmatpush2.bf16.msra.mxu0 %v4267
    %4308 = vmatprep.subr.bf16.mxu0 0
    %4309 = vmatpush2.bf16.msra.mxu0 %v4266
    %4310 = vmatprep.subr.bf16.mxu0 0
    %4311 = vmatpush2.bf16.msra.mxu0 %v4265
    %4312 = vmatprep.subr.bf16.mxu0 0
    %4313 = vmatpush2.bf16.msra.mxu0 %v4264
    %4314 = vmatprep.subr.bf16.mxu0 0
    %4315 = vmatpush2.bf16.msra.mxu0 %v4263
    %4316 = vmatprep.subr.bf16.mxu0 0
    %4317 = vmatpush2.bf16.msra.mxu0 %v4262
    %4318 = vmatprep.mubr.bf16.mxu0 %v4187
    %4319 = vmatmul.mubr.bf16.gmra.mxu0 %v4186
    %v4320 = vpop.f32.mrf.mxu0
    %v4321 = vadd.f32 %v4178, %v4320
    %v4322 = vpop.f32.mrf.mxu0
    %v4323 = vpop.f32.mrf.mxu0
    %v4324 = vpop.f32.mrf.mxu0
    %4325 = vdwg.mxu0
    %v4326 = vld [vmem:[#allocation3] sm:$0xee]
    %v4327 = vld [vmem:[#allocation3 + $0x8] sm:$0x11]
    %s4328 = scalar_lea.vmem %s5, 256
    %v4329 = vld [vmem:[%s4328] sm:$0xf]
    %v4330 = vld [vmem:[%s4328 + $0x4] sm:$0xf]
    %v4331 = vld [vmem:[%s4328 + $0x8] sm:$0xf]
    %v4332 = vld [vmem:[%s4328 + $0xc] sm:$0xf]
    %v4333 = vld [vmem:[%s4328 + $0x10] sm:$0xf]
    %v4334 = vld [vmem:[%s4328 + $0x14] sm:$0xf]
    %v4335 = vld [vmem:[%s4328 + $0x18] sm:$0xf]
    %v4336 = vld [vmem:[%s4328 + $0x1c] sm:$0xf]
    %v4337 = vld [vmem:[%s4328 + $0x20] sm:$0xf]
    %v4338 = vld [vmem:[%s4328 + $0x24] sm:$0xf]
    %v4339 = vld [vmem:[%s4328 + $0x28] sm:$0xf]
    %v4340 = vld [vmem:[%s4328 + $0x2c] sm:$0xf]
    %v4341 = vld [vmem:[%s4328 + $0x30] sm:$0xf]
    %v4342 = vld [vmem:[%s4328 + $0x34] sm:$0xf]
    %v4343 = vld [vmem:[%s4328 + $0x38] sm:$0xf]
    %v4344 = vld [vmem:[%s4328 + $0x3c] sm:$0xf]
    %v4345 = vld [vmem:[%s4328 + $0x40] sm:$0xf]
    %v4346 = vld [vmem:[%s4328 + $0x44] sm:$0xf]
    %v4347 = vld [vmem:[%s4328 + $0x48] sm:$0xf]
    %v4348 = vld [vmem:[%s4328 + $0x4c] sm:$0xf]
    %v4349 = vld [vmem:[%s4328 + $0x50] sm:$0xf]
    %v4350 = vld [vmem:[%s4328 + $0x54] sm:$0xf]
    %v4351 = vld [vmem:[%s4328 + $0x58] sm:$0xf]
    %v4352 = vld [vmem:[%s4328 + $0x5c] sm:$0xf]
    %v4353 = vld [vmem:[%s4328 + $0x60] sm:$0xf]
    %v4354 = vld [vmem:[%s4328 + $0x64] sm:$0xf]
    %v4355 = vld [vmem:[%s4328 + $0x68] sm:$0xf]
    %v4356 = vld [vmem:[%s4328 + $0x6c] sm:$0xf]
    %v4357 = vld [vmem:[%s4328 + $0x70] sm:$0xf]
    %v4358 = vld [vmem:[%s4328 + $0x74] sm:$0xf]
    %v4359 = vld [vmem:[%s4328 + $0x78] sm:$0xf]
    %v4360 = vld [vmem:[%s4328 + $0x7c] sm:$0xf]
    %v4363 = vunpack.c.l.b16 %v4326
    %v4364 = vunpack.c.h.b16 %v4326
    %v4365 = vunpack.c.l.b16 %v4327
    %v4366 = vunpack.c.h.b16 %v4327
    %v4367 = vpack.c.b16 %v4365, %v4363
    %v4368 = vpack.c.b16 %v4366, %v4364
    %v4369 = vrot.slane %v4367, 1
    %v4370 = vrot.slane %v4368, 1
    %v4405 = vunpack.c.l.b16 %v4329
    %v4406 = vunpack.c.l.b16 %v4330
    %v4407 = vunpack.c.l.b16 %v4331
    %v4408 = vunpack.c.l.b16 %v4332
    %v4409 = vunpack.c.l.b16 %v4333
    %v4410 = vunpack.c.l.b16 %v4334
    %v4411 = vunpack.c.l.b16 %v4335
    %v4412 = vunpack.c.l.b16 %v4336
    %v4413 = vunpack.c.l.b16 %v4337
    %v4414 = vunpack.c.l.b16 %v4338
    %v4415 = vunpack.c.l.b16 %v4339
    %v4416 = vunpack.c.l.b16 %v4340
    %v4417 = vunpack.c.l.b16 %v4341
    %v4418 = vunpack.c.l.b16 %v4342
    %v4419 = vunpack.c.l.b16 %v4343
    %v4420 = vunpack.c.l.b16 %v4344
    %v4421 = vunpack.c.l.b16 %v4345
    %v4422 = vunpack.c.l.b16 %v4346
    %v4423 = vunpack.c.l.b16 %v4347
    %v4424 = vunpack.c.l.b16 %v4348
    %v4425 = vunpack.c.l.b16 %v4349
    %v4426 = vunpack.c.l.b16 %v4350
    %v4427 = vunpack.c.l.b16 %v4351
    %v4428 = vunpack.c.l.b16 %v4352
    %v4429 = vunpack.c.l.b16 %v4353
    %v4430 = vunpack.c.l.b16 %v4354
    %v4431 = vunpack.c.l.b16 %v4355
    %v4432 = vunpack.c.l.b16 %v4356
    %v4433 = vunpack.c.l.b16 %v4357
    %v4434 = vunpack.c.l.b16 %v4358
    %v4435 = vunpack.c.l.b16 %v4359
    %v4436 = vunpack.c.l.b16 %v4360
    %v4437 = vpack.c.b16 %v4406, %v4405
    %v4438 = vpack.c.b16 %v4408, %v4407
    %v4439 = vpack.c.b16 %v4410, %v4409
    %v4440 = vpack.c.b16 %v4412, %v4411
    %v4441 = vpack.c.b16 %v4414, %v4413
    %v4442 = vpack.c.b16 %v4416, %v4415
    %v4443 = vpack.c.b16 %v4418, %v4417
    %v4444 = vpack.c.b16 %v4420, %v4419
    %v4445 = vpack.c.b16 %v4422, %v4421
    %v4446 = vpack.c.b16 %v4424, %v4423
    %v4447 = vpack.c.b16 %v4426, %v4425
    %v4448 = vpack.c.b16 %v4428, %v4427
    %v4449 = vpack.c.b16 %v4430, %v4429
    %v4450 = vpack.c.b16 %v4432, %v4431
    %v4451 = vpack.c.b16 %v4434, %v4433
    %v4452 = vpack.c.b16 %v4436, %v4435
    %4469 = vmatprep.subr.bf16.mxu0 0
    %4470 = vmatpush1.bf16.msra.mxu0 %v4444
    %4471 = vmatprep.subr.bf16.mxu0 0
    %4472 = vmatpush1.bf16.msra.mxu0 %v4443
    %4473 = vmatprep.subr.bf16.mxu0 0
    %4474 = vmatpush1.bf16.msra.mxu0 %v4442
    %4475 = vmatprep.subr.bf16.mxu0 0
    %4476 = vmatpush1.bf16.msra.mxu0 %v4441
    %4477 = vmatprep.subr.bf16.mxu0 0
    %4478 = vmatpush1.bf16.msra.mxu0 %v4440
    %4479 = vmatprep.subr.bf16.mxu0 0
    %4480 = vmatpush1.bf16.msra.mxu0 %v4439
    %4481 = vmatprep.subr.bf16.mxu0 0
    %4482 = vmatpush1.bf16.msra.mxu0 %v4438
    %4483 = vmatprep.subr.bf16.mxu0 0
    %4484 = vmatpush1.bf16.msra.mxu0 %v4437
    %4485 = vmatprep.subr.bf16.mxu0 0
    %4486 = vmatpush2.bf16.msra.mxu0 %v4452
    %4487 = vmatprep.subr.bf16.mxu0 0
    %4488 = vmatpush2.bf16.msra.mxu0 %v4451
    %4489 = vmatprep.subr.bf16.mxu0 0
    %4490 = vmatpush2.bf16.msra.mxu0 %v4450
    %4491 = vmatprep.subr.bf16.mxu0 0
    %4492 = vmatpush2.bf16.msra.mxu0 %v4449
    %4493 = vmatprep.subr.bf16.mxu0 0
    %4494 = vmatpush2.bf16.msra.mxu0 %v4448
    %4495 = vmatprep.subr.bf16.mxu0 0
    %4496 = vmatpush2.bf16.msra.mxu0 %v4447
    %4497 = vmatprep.subr.bf16.mxu0 0
    %4498 = vmatpush2.bf16.msra.mxu0 %v4446
    %4499 = vmatprep.subr.bf16.mxu0 0
    %4500 = vmatpush2.bf16.msra.mxu0 %v4445
    %4501 = vmatprep.mubr.bf16.mxu0 %v4370
    %4502 = vmatmul.mubr.bf16.gmra.mxu0 %v4369
    %v4503 = vpop.f32.mrf.mxu0
    %v4504 = vadd.f32 0.0, %v4503
    %v4505 = vpop.f32.mrf.mxu0
    %v4506 = vpop.f32.mrf.mxu0
    %v4507 = vpop.f32.mrf.mxu0
    %4508 = vdwg.mxu0
    %v4509 = vadd.f32 %v4321, %v4504
    %v4510 = vld [vmem:[%s3201] sm:$0xee]
    %v4511 = vld [vmem:[%s3201 + $0x8] sm:$0x11]
    %s4512 = scalar_lea.vmem %s5, 384
    %v4513 = vld [vmem:[%s4512] sm:$0xf]
    %v4514 = vld [vmem:[%s4512 + $0x4] sm:$0xf]
    %v4515 = vld [vmem:[%s4512 + $0x8] sm:$0xf]
    %v4516 = vld [vmem:[%s4512 + $0xc] sm:$0xf]
    %v4517 = vld [vmem:[%s4512 + $0x10] sm:$0xf]
    %v4518 = vld [vmem:[%s4512 + $0x14] sm:$0xf]
    %v4519 = vld [vmem:[%s4512 + $0x18] sm:$0xf]
    %v4520 = vld [vmem:[%s4512 + $0x1c] sm:$0xf]
    %v4521 = vld [vmem:[%s4512 + $0x20] sm:$0xf]
    %v4522 = vld [vmem:[%s4512 + $0x24] sm:$0xf]
    %v4523 = vld [vmem:[%s4512 + $0x28] sm:$0xf]
    %v4524 = vld [vmem:[%s4512 + $0x2c] sm:$0xf]
    %v4525 = vld [vmem:[%s4512 + $0x30] sm:$0xf]
    %v4526 = vld [vmem:[%s4512 + $0x34] sm:$0xf]
    %v4527 = vld [vmem:[%s4512 + $0x38] sm:$0xf]
    %v4528 = vld [vmem:[%s4512 + $0x3c] sm:$0xf]
    %v4529 = vld [vmem:[%s4512 + $0x40] sm:$0xf]
    %v4530 = vld [vmem:[%s4512 + $0x44] sm:$0xf]
    %v4531 = vld [vmem:[%s4512 + $0x48] sm:$0xf]
    %v4532 = vld [vmem:[%s4512 + $0x4c] sm:$0xf]
    %v4533 = vld [vmem:[%s4512 + $0x50] sm:$0xf]
    %v4534 = vld [vmem:[%s4512 + $0x54] sm:$0xf]
    %v4535 = vld [vmem:[%s4512 + $0x58] sm:$0xf]
    %v4536 = vld [vmem:[%s4512 + $0x5c] sm:$0xf]
    %v4537 = vld [vmem:[%s4512 + $0x60] sm:$0xf]
    %v4538 = vld [vmem:[%s4512 + $0x64] sm:$0xf]
    %v4539 = vld [vmem:[%s4512 + $0x68] sm:$0xf]
    %v4540 = vld [vmem:[%s4512 + $0x6c] sm:$0xf]
    %v4541 = vld [vmem:[%s4512 + $0x70] sm:$0xf]
    %v4542 = vld [vmem:[%s4512 + $0x74] sm:$0xf]
    %v4543 = vld [vmem:[%s4512 + $0x78] sm:$0xf]
    %v4544 = vld [vmem:[%s4512 + $0x7c] sm:$0xf]
    %v4547 = vunpack.c.l.b16 %v4510
    %v4548 = vunpack.c.h.b16 %v4510
    %v4549 = vunpack.c.l.b16 %v4511
    %v4550 = vunpack.c.h.b16 %v4511
    %v4551 = vpack.c.b16 %v4549, %v4547
    %v4552 = vpack.c.b16 %v4550, %v4548
    %v4553 = vrot.slane %v4551, 1
    %v4554 = vrot.slane %v4552, 1
    %v4589 = vunpack.c.l.b16 %v4513
    %v4590 = vunpack.c.l.b16 %v4514
    %v4591 = vunpack.c.l.b16 %v4515
    %v4592 = vunpack.c.l.b16 %v4516
    %v4593 = vunpack.c.l.b16 %v4517
    %v4594 = vunpack.c.l.b16 %v4518
    %v4595 = vunpack.c.l.b16 %v4519
    %v4596 = vunpack.c.l.b16 %v4520
    %v4597 = vunpack.c.l.b16 %v4521
    %v4598 = vunpack.c.l.b16 %v4522
    %v4599 = vunpack.c.l.b16 %v4523
    %v4600 = vunpack.c.l.b16 %v4524
    %v4601 = vunpack.c.l.b16 %v4525
    %v4602 = vunpack.c.l.b16 %v4526
    %v4603 = vunpack.c.l.b16 %v4527
    %v4604 = vunpack.c.l.b16 %v4528
    %v4605 = vunpack.c.l.b16 %v4529
    %v4606 = vunpack.c.l.b16 %v4530
    %v4607 = vunpack.c.l.b16 %v4531
    %v4608 = vunpack.c.l.b16 %v4532
    %v4609 = vunpack.c.l.b16 %v4533
    %v4610 = vunpack.c.l.b16 %v4534
    %v4611 = vunpack.c.l.b16 %v4535
    %v4612 = vunpack.c.l.b16 %v4536
    %v4613 = vunpack.c.l.b16 %v4537
    %v4614 = vunpack.c.l.b16 %v4538
    %v4615 = vunpack.c.l.b16 %v4539
    %v4616 = vunpack.c.l.b16 %v4540
    %v4617 = vunpack.c.l.b16 %v4541
    %v4618 = vunpack.c.l.b16 %v4542
    %v4619 = vunpack.c.l.b16 %v4543
    %v4620 = vunpack.c.l.b16 %v4544
    %v4621 = vpack.c.b16 %v4590, %v4589
    %v4622 = vpack.c.b16 %v4592, %v4591
    %v4623 = vpack.c.b16 %v4594, %v4593
    %v4624 = vpack.c.b16 %v4596, %v4595
    %v4625 = vpack.c.b16 %v4598, %v4597
    %v4626 = vpack.c.b16 %v4600, %v4599
    %v4627 = vpack.c.b16 %v4602, %v4601
    %v4628 = vpack.c.b16 %v4604, %v4603
    %v4629 = vpack.c.b16 %v4606, %v4605
    %v4630 = vpack.c.b16 %v4608, %v4607
    %v4631 = vpack.c.b16 %v4610, %v4609
    %v4632 = vpack.c.b16 %v4612, %v4611
    %v4633 = vpack.c.b16 %v4614, %v4613
    %v4634 = vpack.c.b16 %v4616, %v4615
    %v4635 = vpack.c.b16 %v4618, %v4617
    %v4636 = vpack.c.b16 %v4620, %v4619
    %4653 = vmatprep.subr.bf16.mxu0 0
    %4654 = vmatpush1.bf16.msra.mxu0 %v4628
    %4655 = vmatprep.subr.bf16.mxu0 0
    %4656 = vmatpush1.bf16.msra.mxu0 %v4627
    %4657 = vmatprep.subr.bf16.mxu0 0
    %4658 = vmatpush1.bf16.msra.mxu0 %v4626
    %4659 = vmatprep.subr.bf16.mxu0 0
    %4660 = vmatpush1.bf16.msra.mxu0 %v4625
    %4661 = vmatprep.subr.bf16.mxu0 0
    %4662 = vmatpush1.bf16.msra.mxu0 %v4624
    %4663 = vmatprep.subr.bf16.mxu0 0
    %4664 = vmatpush1.bf16.msra.mxu0 %v4623
    %4665 = vmatprep.subr.bf16.mxu0 0
    %4666 = vmatpush1.bf16.msra.mxu0 %v4622
    %4667 = vmatprep.subr.bf16.mxu0 0
    %4668 = vmatpush1.bf16.msra.mxu0 %v4621
    %4669 = vmatprep.subr.bf16.mxu0 0
    %4670 = vmatpush2.bf16.msra.mxu0 %v4636
    %4671 = vmatprep.subr.bf16.mxu0 0
    %4672 = vmatpush2.bf16.msra.mxu0 %v4635
    %4673 = vmatprep.subr.bf16.mxu0 0
    %4674 = vmatpush2.bf16.msra.mxu0 %v4634
    %4675 = vmatprep.subr.bf16.mxu0 0
    %4676 = vmatpush2.bf16.msra.mxu0 %v4633
    %4677 = vmatprep.subr.bf16.mxu0 0
    %4678 = vmatpush2.bf16.msra.mxu0 %v4632
    %4679 = vmatprep.subr.bf16.mxu0 0
    %4680 = vmatpush2.bf16.msra.mxu0 %v4631
    %4681 = vmatprep.subr.bf16.mxu0 0
    %4682 = vmatpush2.bf16.msra.mxu0 %v4630
    %4683 = vmatprep.subr.bf16.mxu0 0
    %4684 = vmatpush2.bf16.msra.mxu0 %v4629
    %4685 = vmatprep.mubr.bf16.mxu0 %v4554
    %4686 = vmatmul.mubr.bf16.gmra.mxu0 %v4553
    %v4687 = vpop.f32.mrf.mxu0
    %v4688 = vadd.f32 0.0, %v4687
    %v4689 = vpop.f32.mrf.mxu0
    %v4690 = vpop.f32.mrf.mxu0
    %v4691 = vpop.f32.mrf.mxu0
    %4692 = vdwg.mxu0
    %v4693 = vadd.f32 %v4509, %v4688
    %v4694 = vld [vmem:[#allocation3] sm:$0xcc]
    %v4695 = vld [vmem:[#allocation3 + $0x8] sm:$0x33]
    %s4696 = scalar_lea.vmem %s5, 512
    %v4697 = vld [vmem:[%s4696] sm:$0xf]
    %v4698 = vld [vmem:[%s4696 + $0x4] sm:$0xf]
    %v4699 = vld [vmem:[%s4696 + $0x8] sm:$0xf]
    %v4700 = vld [vmem:[%s4696 + $0xc] sm:$0xf]
    %v4701 = vld [vmem:[%s4696 + $0x10] sm:$0xf]
    %v4702 = vld [vmem:[%s4696 + $0x14] sm:$0xf]
    %v4703 = vld [vmem:[%s4696 + $0x18] sm:$0xf]
    %v4704 = vld [vmem:[%s4696 + $0x1c] sm:$0xf]
    %v4705 = vld [vmem:[%s4696 + $0x20] sm:$0xf]
    %v4706 = vld [vmem:[%s4696 + $0x24] sm:$0xf]
    %v4707 = vld [vmem:[%s4696 + $0x28] sm:$0xf]
    %v4708 = vld [vmem:[%s4696 + $0x2c] sm:$0xf]
    %v4709 = vld [vmem:[%s4696 + $0x30] sm:$0xf]
    %v4710 = vld [vmem:[%s4696 + $0x34] sm:$0xf]
    %v4711 = vld [vmem:[%s4696 + $0x38] sm:$0xf]
    %v4712 = vld [vmem:[%s4696 + $0x3c] sm:$0xf]
    %v4713 = vld [vmem:[%s4696 + $0x40] sm:$0xf]
    %v4714 = vld [vmem:[%s4696 + $0x44] sm:$0xf]
    %v4715 = vld [vmem:[%s4696 + $0x48] sm:$0xf]
    %v4716 = vld [vmem:[%s4696 + $0x4c] sm:$0xf]
    %v4717 = vld [vmem:[%s4696 + $0x50] sm:$0xf]
    %v4718 = vld [vmem:[%s4696 + $0x54] sm:$0xf]
    %v4719 = vld [vmem:[%s4696 + $0x58] sm:$0xf]
    %v4720 = vld [vmem:[%s4696 + $0x5c] sm:$0xf]
    %v4721 = vld [vmem:[%s4696 + $0x60] sm:$0xf]
    %v4722 = vld [vmem:[%s4696 + $0x64] sm:$0xf]
    %v4723 = vld [vmem:[%s4696 + $0x68] sm:$0xf]
    %v4724 = vld [vmem:[%s4696 + $0x6c] sm:$0xf]
    %v4725 = vld [vmem:[%s4696 + $0x70] sm:$0xf]
    %v4726 = vld [vmem:[%s4696 + $0x74] sm:$0xf]
    %v4727 = vld [vmem:[%s4696 + $0x78] sm:$0xf]
    %v4728 = vld [vmem:[%s4696 + $0x7c] sm:$0xf]
    %v4731 = vunpack.c.l.b16 %v4694
    %v4732 = vunpack.c.h.b16 %v4694
    %v4733 = vunpack.c.l.b16 %v4695
    %v4734 = vunpack.c.h.b16 %v4695
    %v4735 = vpack.c.b16 %v4733, %v4731
    %v4736 = vpack.c.b16 %v4734, %v4732
    %v4737 = vrot.slane %v4735, 2
    %v4738 = vrot.slane %v4736, 2
    %v4773 = vunpack.c.l.b16 %v4697
    %v4774 = vunpack.c.l.b16 %v4698
    %v4775 = vunpack.c.l.b16 %v4699
    %v4776 = vunpack.c.l.b16 %v4700
    %v4777 = vunpack.c.l.b16 %v4701
    %v4778 = vunpack.c.l.b16 %v4702
    %v4779 = vunpack.c.l.b16 %v4703
    %v4780 = vunpack.c.l.b16 %v4704
    %v4781 = vunpack.c.l.b16 %v4705
    %v4782 = vunpack.c.l.b16 %v4706
    %v4783 = vunpack.c.l.b16 %v4707
    %v4784 = vunpack.c.l.b16 %v4708
    %v4785 = vunpack.c.l.b16 %v4709
    %v4786 = vunpack.c.l.b16 %v4710
    %v4787 = vunpack.c.l.b16 %v4711
    %v4788 = vunpack.c.l.b16 %v4712
    %v4789 = vunpack.c.l.b16 %v4713
    %v4790 = vunpack.c.l.b16 %v4714
    %v4791 = vunpack.c.l.b16 %v4715
    %v4792 = vunpack.c.l.b16 %v4716
    %v4793 = vunpack.c.l.b16 %v4717
    %v4794 = vunpack.c.l.b16 %v4718
    %v4795 = vunpack.c.l.b16 %v4719
    %v4796 = vunpack.c.l.b16 %v4720
    %v4797 = vunpack.c.l.b16 %v4721
    %v4798 = vunpack.c.l.b16 %v4722
    %v4799 = vunpack.c.l.b16 %v4723
    %v4800 = vunpack.c.l.b16 %v4724
    %v4801 = vunpack.c.l.b16 %v4725
    %v4802 = vunpack.c.l.b16 %v4726
    %v4803 = vunpack.c.l.b16 %v4727
    %v4804 = vunpack.c.l.b16 %v4728
    %v4805 = vpack.c.b16 %v4774, %v4773
    %v4806 = vpack.c.b16 %v4776, %v4775
    %v4807 = vpack.c.b16 %v4778, %v4777
    %v4808 = vpack.c.b16 %v4780, %v4779
    %v4809 = vpack.c.b16 %v4782, %v4781
    %v4810 = vpack.c.b16 %v4784, %v4783
    %v4811 = vpack.c.b16 %v4786, %v4785
    %v4812 = vpack.c.b16 %v4788, %v4787
    %v4813 = vpack.c.b16 %v4790, %v4789
    %v4814 = vpack.c.b16 %v4792, %v4791
    %v4815 = vpack.c.b16 %v4794, %v4793
    %v4816 = vpack.c.b16 %v4796, %v4795
    %v4817 = vpack.c.b16 %v4798, %v4797
    %v4818 = vpack.c.b16 %v4800, %v4799
    %v4819 = vpack.c.b16 %v4802, %v4801
    %v4820 = vpack.c.b16 %v4804, %v4803
    %4837 = vmatprep.subr.bf16.mxu0 0
    %4838 = vmatpush1.bf16.msra.mxu0 %v4812
    %4839 = vmatprep.subr.bf16.mxu0 0
    %4840 = vmatpush1.bf16.msra.mxu0 %v4811
    %4841 = vmatprep.subr.bf16.mxu0 0
    %4842 = vmatpush1.bf16.msra.mxu0 %v4810
    %4843 = vmatprep.subr.bf16.mxu0 0
    %4844 = vmatpush1.bf16.msra.mxu0 %v4809
    %4845 = vmatprep.subr.bf16.mxu0 0
    %4846 = vmatpush1.bf16.msra.mxu0 %v4808
    %4847 = vmatprep.subr.bf16.mxu0 0
    %4848 = vmatpush1.bf16.msra.mxu0 %v4807
    %4849 = vmatprep.subr.bf16.mxu0 0
    %4850 = vmatpush1.bf16.msra.mxu0 %v4806
    %4851 = vmatprep.subr.bf16.mxu0 0
    %4852 = vmatpush1.bf16.msra.mxu0 %v4805
    %4853 = vmatprep.subr.bf16.mxu0 0
    %4854 = vmatpush2.bf16.msra.mxu0 %v4820
    %4855 = vmatprep.subr.bf16.mxu0 0
    %4856 = vmatpush2.bf16.msra.mxu0 %v4819
    %4857 = vmatprep.subr.bf16.mxu0 0
    %4858 = vmatpush2.bf16.msra.mxu0 %v4818
    %4859 = vmatprep.subr.bf16.mxu0 0
    %4860 = vmatpush2.bf16.msra.mxu0 %v4817
    %4861 = vmatprep.subr.bf16.mxu0 0
    %4862 = vmatpush2.bf16.msra.mxu0 %v4816
    %4863 = vmatprep.subr.bf16.mxu0 0
    %4864 = vmatpush2.bf16.msra.mxu0 %v4815
    %4865 = vmatprep.subr.bf16.mxu0 0
    %4866 = vmatpush2.bf16.msra.mxu0 %v4814
    %4867 = vmatprep.subr.bf16.mxu0 0
    %4868 = vmatpush2.bf16.msra.mxu0 %v4813
    %4869 = vmatprep.mubr.bf16.mxu0 %v4738
    %4870 = vmatmul.mubr.bf16.gmra.mxu0 %v4737
    %v4871 = vpop.f32.mrf.mxu0
    %v4872 = vadd.f32 0.0, %v4871
    %v4873 = vpop.f32.mrf.mxu0
    %v4874 = vpop.f32.mrf.mxu0
    %v4875 = vpop.f32.mrf.mxu0
    %4876 = vdwg.mxu0
    %v4877 = vadd.f32 %v4693, %v4872
    %v4878 = vld [vmem:[%s2808] sm:$0xff]
    %v4879 = vld [vmem:[%s3594] sm:$0xff]
    %v4881 = vunpack.c.l.b16 %v4879
    %v4882 = vunpack.c.h.b16 %v4879
    %v4883 = vpack.c.b16 %v4881, %v4881
    %v4884 = vpack.c.b16 %v4882, %v4882
    %4887 = vmatprep.subr.bf16.mxu0 0
    %4888 = vmatpush1.bf16.msra.mxu0 %v4118
    %4889 = vmatprep.subr.bf16.mxu0 0
    %4890 = vmatpush1.bf16.msra.mxu0 %v4117
    %4891 = vmatprep.subr.bf16.mxu0 0
    %4892 = vmatpush1.bf16.msra.mxu0 %v4116
    %4893 = vmatprep.subr.bf16.mxu0 0
    %4894 = vmatpush1.bf16.msra.mxu0 %v4115
    %4895 = vmatprep.subr.bf16.mxu0 0
    %4896 = vmatpush1.bf16.msra.mxu0 %v4114
    %4897 = vmatprep.subr.bf16.mxu0 0
    %4898 = vmatpush1.bf16.msra.mxu0 %v4113
    %4899 = vmatprep.subr.bf16.mxu0 0
    %4900 = vmatpush1.bf16.msra.mxu0 %v4112
    %4901 = vmatprep.subr.bf16.mxu0 0
    %4902 = vmatpush1.bf16.msra.mxu0 %v4111
    %4903 = vmatprep.subr.bf16.mxu0 0
    %4904 = vmatpush2.bf16.msra.mxu0 %v4126
    %4905 = vmatprep.subr.bf16.mxu0 0
    %4906 = vmatpush2.bf16.msra.mxu0 %v4125
    %4907 = vmatprep.subr.bf16.mxu0 0
    %4908 = vmatpush2.bf16.msra.mxu0 %v4124
    %4909 = vmatprep.subr.bf16.mxu0 0
    %4910 = vmatpush2.bf16.msra.mxu0 %v4123
    %4911 = vmatprep.subr.bf16.mxu0 0
    %4912 = vmatpush2.bf16.msra.mxu0 %v4122
    %4913 = vmatprep.subr.bf16.mxu0 0
    %4914 = vmatpush2.bf16.msra.mxu0 %v4121
    %4915 = vmatprep.subr.bf16.mxu0 0
    %4916 = vmatpush2.bf16.msra.mxu0 %v4120
    %4917 = vmatprep.subr.bf16.mxu0 0
    %4918 = vmatpush2.bf16.msra.mxu0 %v4119
    %4919 = vmatprep.mubr.bf16.mxu0 %v4884
    %4920 = vmatmul.mubr.bf16.gmra.mxu0 %v4883
    %v4921 = vpop.f32.mrf.mxu0
    %v4922 = vadd.f32 0.0, %v4921
    %v4923 = vpop.f32.mrf.mxu0
    %v4924 = vpop.f32.mrf.mxu0
    %v4925 = vpop.f32.mrf.mxu0
    %4926 = vdwg.mxu0
    %v4928 = vunpack.c.l.b16 %v4878
    %v4929 = vunpack.c.h.b16 %v4878
    %v4930 = vpack.c.b16 %v4928, %v4928
    %v4931 = vpack.c.b16 %v4929, %v4929
    %4934 = vmatprep.subr.bf16.mxu0 0
    %4935 = vmatpush1.bf16.msra.mxu0 %v4261
    %4936 = vmatprep.subr.bf16.mxu0 0
    %4937 = vmatpush1.bf16.msra.mxu0 %v4260
    %4938 = vmatprep.subr.bf16.mxu0 0
    %4939 = vmatpush1.bf16.msra.mxu0 %v4259
    %4940 = vmatprep.subr.bf16.mxu0 0
    %4941 = vmatpush1.bf16.msra.mxu0 %v4258
    %4942 = vmatprep.subr.bf16.mxu0 0
    %4943 = vmatpush1.bf16.msra.mxu0 %v4257
    %4944 = vmatprep.subr.bf16.mxu0 0
    %4945 = vmatpush1.bf16.msra.mxu0 %v4256
    %4946 = vmatprep.subr.bf16.mxu0 0
    %4947 = vmatpush1.bf16.msra.mxu0 %v4255
    %4948 = vmatprep.subr.bf16.mxu0 0
    %4949 = vmatpush1.bf16.msra.mxu0 %v4254
    %4950 = vmatprep.subr.bf16.mxu0 0
    %4951 = vmatpush2.bf16.msra.mxu0 %v4269
    %4952 = vmatprep.subr.bf16.mxu0 0
    %4953 = vmatpush2.bf16.msra.mxu0 %v4268
    %4954 = vmatprep.subr.bf16.mxu0 0
    %4955 = vmatpush2.bf16.msra.mxu0 %v4267
    %4956 = vmatprep.subr.bf16.mxu0 0
    %4957 = vmatpush2.bf16.msra.mxu0 %v4266
    %4958 = vmatprep.subr.bf16.mxu0 0
    %4959 = vmatpush2.bf16.msra.mxu0 %v4265
    %4960 = vmatprep.subr.bf16.mxu0 0
    %4961 = vmatpush2.bf16.msra.mxu0 %v4264
    %4962 = vmatprep.subr.bf16.mxu0 0
    %4963 = vmatpush2.bf16.msra.mxu0 %v4263
    %4964 = vmatprep.subr.bf16.mxu0 0
    %4965 = vmatpush2.bf16.msra.mxu0 %v4262
    %4966 = vmatprep.mubr.bf16.mxu0 %v4931
    %4967 = vmatmul.mubr.bf16.gmra.mxu0 %v4930
    %v4968 = vpop.f32.mrf.mxu0
    %v4969 = vadd.f32 %v4922, %v4968
    %v4970 = vpop.f32.mrf.mxu0
    %v4971 = vpop.f32.mrf.mxu0
    %v4972 = vpop.f32.mrf.mxu0
    %4973 = vdwg.mxu0
    %v4974 = vld [vmem:[%s2808] sm:$0xee]
    %v4975 = vld [vmem:[%s2808 + $0x8] sm:$0x11]
    %v4978 = vunpack.c.l.b16 %v4974
    %v4979 = vunpack.c.h.b16 %v4974
    %v4980 = vunpack.c.l.b16 %v4975
    %v4981 = vunpack.c.h.b16 %v4975
    %v4982 = vpack.c.b16 %v4980, %v4978
    %v4983 = vpack.c.b16 %v4981, %v4979
    %v4984 = vrot.slane %v4982, 1
    %v4985 = vrot.slane %v4983, 1
    %4988 = vmatprep.subr.bf16.mxu0 0
    %4989 = vmatpush1.bf16.msra.mxu0 %v4444
    %4990 = vmatprep.subr.bf16.mxu0 0
    %4991 = vmatpush1.bf16.msra.mxu0 %v4443
    %4992 = vmatprep.subr.bf16.mxu0 0
    %4993 = vmatpush1.bf16.msra.mxu0 %v4442
    %4994 = vmatprep.subr.bf16.mxu0 0
    %4995 = vmatpush1.bf16.msra.mxu0 %v4441
    %4996 = vmatprep.subr.bf16.mxu0 0
    %4997 = vmatpush1.bf16.msra.mxu0 %v4440
    %4998 = vmatprep.subr.bf16.mxu0 0
    %4999 = vmatpush1.bf16.msra.mxu0 %v4439
    %5000 = vmatprep.subr.bf16.mxu0 0
    %5001 = vmatpush1.bf16.msra.mxu0 %v4438
    %5002 = vmatprep.subr.bf16.mxu0 0
    %5003 = vmatpush1.bf16.msra.mxu0 %v4437
    %5004 = vmatprep.subr.bf16.mxu0 0
    %5005 = vmatpush2.bf16.msra.mxu0 %v4452
    %5006 = vmatprep.subr.bf16.mxu0 0
    %5007 = vmatpush2.bf16.msra.mxu0 %v4451
    %5008 = vmatprep.subr.bf16.mxu0 0
    %5009 = vmatpush2.bf16.msra.mxu0 %v4450
    %5010 = vmatprep.subr.bf16.mxu0 0
    %5011 = vmatpush2.bf16.msra.mxu0 %v4449
    %5012 = vmatprep.subr.bf16.mxu0 0
    %5013 = vmatpush2.bf16.msra.mxu0 %v4448
    %5014 = vmatprep.subr.bf16.mxu0 0
    %5015 = vmatpush2.bf16.msra.mxu0 %v4447
    %5016 = vmatprep.subr.bf16.mxu0 0
    %5017 = vmatpush2.bf16.msra.mxu0 %v4446
    %5018 = vmatprep.subr.bf16.mxu0 0
    %5019 = vmatpush2.bf16.msra.mxu0 %v4445
    %5020 = vmatprep.mubr.bf16.mxu0 %v4985
    %5021 = vmatmul.mubr.bf16.gmra.mxu0 %v4984
    %v5022 = vpop.f32.mrf.mxu0
    %v5023 = vadd.f32 0.0, %v5022
    %v5024 = vpop.f32.mrf.mxu0
    %v5025 = vpop.f32.mrf.mxu0
    %v5026 = vpop.f32.mrf.mxu0
    %5027 = vdwg.mxu0
    %v5028 = vadd.f32 %v4969, %v5023
    %v5029 = vld [vmem:[%s3594] sm:$0xee]
    %v5030 = vld [vmem:[%s3594 + $0x8] sm:$0x11]
    %v5033 = vunpack.c.l.b16 %v5029
    %v5034 = vunpack.c.h.b16 %v5029
    %v5035 = vunpack.c.l.b16 %v5030
    %v5036 = vunpack.c.h.b16 %v5030
    %v5037 = vpack.c.b16 %v5035, %v5033
    %v5038 = vpack.c.b16 %v5036, %v5034
    %v5039 = vrot.slane %v5037, 1
    %v5040 = vrot.slane %v5038, 1
    %5043 = vmatprep.subr.bf16.mxu0 0
    %5044 = vmatpush1.bf16.msra.mxu0 %v4628
    %5045 = vmatprep.subr.bf16.mxu0 0
    %5046 = vmatpush1.bf16.msra.mxu0 %v4627
    %5047 = vmatprep.subr.bf16.mxu0 0
    %5048 = vmatpush1.bf16.msra.mxu0 %v4626
    %5049 = vmatprep.subr.bf16.mxu0 0
    %5050 = vmatpush1.bf16.msra.mxu0 %v4625
    %5051 = vmatprep.subr.bf16.mxu0 0
    %5052 = vmatpush1.bf16.msra.mxu0 %v4624
    %5053 = vmatprep.subr.bf16.mxu0 0
    %5054 = vmatpush1.bf16.msra.mxu0 %v4623
    %5055 = vmatprep.subr.bf16.mxu0 0
    %5056 = vmatpush1.bf16.msra.mxu0 %v4622
    %5057 = vmatprep.subr.bf16.mxu0 0
    %5058 = vmatpush1.bf16.msra.mxu0 %v4621
    %5059 = vmatprep.subr.bf16.mxu0 0
    %5060 = vmatpush2.bf16.msra.mxu0 %v4636
    %5061 = vmatprep.subr.bf16.mxu0 0
    %5062 = vmatpush2.bf16.msra.mxu0 %v4635
    %5063 = vmatprep.subr.bf16.mxu0 0
    %5064 = vmatpush2.bf16.msra.mxu0 %v4634
    %5065 = vmatprep.subr.bf16.mxu0 0
    %5066 = vmatpush2.bf16.msra.mxu0 %v4633
    %5067 = vmatprep.subr.bf16.mxu0 0
    %5068 = vmatpush2.bf16.msra.mxu0 %v4632
    %5069 = vmatprep.subr.bf16.mxu0 0
    %5070 = vmatpush2.bf16.msra.mxu0 %v4631
    %5071 = vmatprep.subr.bf16.mxu0 0
    %5072 = vmatpush2.bf16.msra.mxu0 %v4630
    %5073 = vmatprep.subr.bf16.mxu0 0
    %5074 = vmatpush2.bf16.msra.mxu0 %v4629
    %5075 = vmatprep.mubr.bf16.mxu0 %v5040
    %5076 = vmatmul.mubr.bf16.gmra.mxu0 %v5039
    %v5077 = vpop.f32.mrf.mxu0
    %v5078 = vadd.f32 0.0, %v5077
    %v5079 = vpop.f32.mrf.mxu0
    %v5080 = vpop.f32.mrf.mxu0
    %v5081 = vpop.f32.mrf.mxu0
    %5082 = vdwg.mxu0
    %v5083 = vadd.f32 %v5028, %v5078
    %v5084 = vld [vmem:[%s2808] sm:$0xcc]
    %v5085 = vld [vmem:[%s2808 + $0x8] sm:$0x33]
    %v5088 = vunpack.c.l.b16 %v5084
    %v5089 = vunpack.c.h.b16 %v5084
    %v5090 = vunpack.c.l.b16 %v5085
    %v5091 = vunpack.c.h.b16 %v5085
    %v5092 = vpack.c.b16 %v5090, %v5088
    %v5093 = vpack.c.b16 %v5091, %v5089
    %v5094 = vrot.slane %v5092, 2
    %v5095 = vrot.slane %v5093, 2
    %5098 = vmatprep.subr.bf16.mxu0 0
    %5099 = vmatpush1.bf16.msra.mxu0 %v4812
    %5100 = vmatprep.subr.bf16.mxu0 0
    %5101 = vmatpush1.bf16.msra.mxu0 %v4811
    %5102 = vmatprep.subr.bf16.mxu0 0
    %5103 = vmatpush1.bf16.msra.mxu0 %v4810
    %5104 = vmatprep.subr.bf16.mxu0 0
    %5105 = vmatpush1.bf16.msra.mxu0 %v4809
    %5106 = vmatprep.subr.bf16.mxu0 0
    %5107 = vmatpush1.bf16.msra.mxu0 %v4808
    %5108 = vmatprep.subr.bf16.mxu0 0
    %5109 = vmatpush1.bf16.msra.mxu0 %v4807
    %5110 = vmatprep.subr.bf16.mxu0 0
    %5111 = vmatpush1.bf16.msra.mxu0 %v4806
    %5112 = vmatprep.subr.bf16.mxu0 0
    %5113 = vmatpush1.bf16.msra.mxu0 %v4805
    %5114 = vmatprep.subr.bf16.mxu0 0
    %5115 = vmatpush2.bf16.msra.mxu0 %v4820
    %5116 = vmatprep.subr.bf16.mxu0 0
    %5117 = vmatpush2.bf16.msra.mxu0 %v4819
    %5118 = vmatprep.subr.bf16.mxu0 0
    %5119 = vmatpush2.bf16.msra.mxu0 %v4818
    %5120 = vmatprep.subr.bf16.mxu0 0
    %5121 = vmatpush2.bf16.msra.mxu0 %v4817
    %5122 = vmatprep.subr.bf16.mxu0 0
    %5123 = vmatpush2.bf16.msra.mxu0 %v4816
    %5124 = vmatprep.subr.bf16.mxu0 0
    %5125 = vmatpush2.bf16.msra.mxu0 %v4815
    %5126 = vmatprep.subr.bf16.mxu0 0
    %5127 = vmatpush2.bf16.msra.mxu0 %v4814
    %5128 = vmatprep.subr.bf16.mxu0 0
    %5129 = vmatpush2.bf16.msra.mxu0 %v4813
    %5130 = vmatprep.mubr.bf16.mxu0 %v5095
    %5131 = vmatmul.mubr.bf16.gmra.mxu0 %v5094
    %v5132 = vpop.f32.mrf.mxu0
    %v5133 = vadd.f32 0.0, %v5132
    %v5134 = vpop.f32.mrf.mxu0
    %v5135 = vpop.f32.mrf.mxu0
    %v5136 = vpop.f32.mrf.mxu0
    %5137 = vdwg.mxu0
    %v5138 = vadd.f32 %v5083, %v5133
    %v5139 = vmax.f32 %v4877, %v5138
    %5140 = vmatprep.subr.bf16.mxu0 0
    %5141 = vmatpush1.bf16.msra.mxu0 %v4118
    %5142 = vmatprep.subr.bf16.mxu0 0
    %5143 = vmatpush1.bf16.msra.mxu0 %v4117
    %5144 = vmatprep.subr.bf16.mxu0 0
    %5145 = vmatpush1.bf16.msra.mxu0 %v4116
    %5146 = vmatprep.subr.bf16.mxu0 0
    %5147 = vmatpush1.bf16.msra.mxu0 %v4115
    %5148 = vmatprep.subr.bf16.mxu0 0
    %5149 = vmatpush1.bf16.msra.mxu0 %v4114
    %5150 = vmatprep.subr.bf16.mxu0 0
    %5151 = vmatpush1.bf16.msra.mxu0 %v4113
    %5152 = vmatprep.subr.bf16.mxu0 0
    %5153 = vmatpush1.bf16.msra.mxu0 %v4112
    %5154 = vmatprep.subr.bf16.mxu0 0
    %5155 = vmatpush1.bf16.msra.mxu0 %v4111
    %5156 = vmatprep.subr.bf16.mxu0 0
    %5157 = vmatpush2.bf16.msra.mxu0 %v4126
    %5158 = vmatprep.subr.bf16.mxu0 0
    %5159 = vmatpush2.bf16.msra.mxu0 %v4125
    %5160 = vmatprep.subr.bf16.mxu0 0
    %5161 = vmatpush2.bf16.msra.mxu0 %v4124
    %5162 = vmatprep.subr.bf16.mxu0 0
    %5163 = vmatpush2.bf16.msra.mxu0 %v4123
    %5164 = vmatprep.subr.bf16.mxu0 0
    %5165 = vmatpush2.bf16.msra.mxu0 %v4122
    %5166 = vmatprep.subr.bf16.mxu0 0
    %5167 = vmatpush2.bf16.msra.mxu0 %v4121
    %5168 = vmatprep.subr.bf16.mxu0 0
    %5169 = vmatpush2.bf16.msra.mxu0 %v4120
    %5170 = vmatprep.subr.bf16.mxu0 0
    %5171 = vmatpush2.bf16.msra.mxu0 %v4119
    %5172 = vmatprep.mubr.bf16.mxu0 %v4370
    %5173 = vmatmul.mubr.bf16.gmra.mxu0 %v4369
    %v5174 = vpop.f32.mrf.mxu0
    %v5175 = vadd.f32 0.0, %v5174
    %v5176 = vpop.f32.mrf.mxu0
    %v5177 = vpop.f32.mrf.mxu0
    %v5178 = vpop.f32.mrf.mxu0
    %5179 = vdwg.mxu0
    %5180 = vmatprep.subr.bf16.mxu0 0
    %5181 = vmatpush1.bf16.msra.mxu0 %v4261
    %5182 = vmatprep.subr.bf16.mxu0 0
    %5183 = vmatpush1.bf16.msra.mxu0 %v4260
    %5184 = vmatprep.subr.bf16.mxu0 0
    %5185 = vmatpush1.bf16.msra.mxu0 %v4259
    %5186 = vmatprep.subr.bf16.mxu0 0
    %5187 = vmatpush1.bf16.msra.mxu0 %v4258
    %5188 = vmatprep.subr.bf16.mxu0 0
    %5189 = vmatpush1.bf16.msra.mxu0 %v4257
    %5190 = vmatprep.subr.bf16.mxu0 0
    %5191 = vmatpush1.bf16.msra.mxu0 %v4256
    %5192 = vmatprep.subr.bf16.mxu0 0
    %5193 = vmatpush1.bf16.msra.mxu0 %v4255
    %5194 = vmatprep.subr.bf16.mxu0 0
    %5195 = vmatpush1.bf16.msra.mxu0 %v4254
    %5196 = vmatprep.subr.bf16.mxu0 0
    %5197 = vmatpush2.bf16.msra.mxu0 %v4269
    %5198 = vmatprep.subr.bf16.mxu0 0
    %5199 = vmatpush2.bf16.msra.mxu0 %v4268
    %5200 = vmatprep.subr.bf16.mxu0 0
    %5201 = vmatpush2.bf16.msra.mxu0 %v4267
    %5202 = vmatprep.subr.bf16.mxu0 0
    %5203 = vmatpush2.bf16.msra.mxu0 %v4266
    %5204 = vmatprep.subr.bf16.mxu0 0
    %5205 = vmatpush2.bf16.msra.mxu0 %v4265
    %5206 = vmatprep.subr.bf16.mxu0 0
    %5207 = vmatpush2.bf16.msra.mxu0 %v4264
    %5208 = vmatprep.subr.bf16.mxu0 0
    %5209 = vmatpush2.bf16.msra.mxu0 %v4263
    %5210 = vmatprep.subr.bf16.mxu0 0
    %5211 = vmatpush2.bf16.msra.mxu0 %v4262
    %5212 = vmatprep.mubr.bf16.mxu0 %v4044
    %5213 = vmatmul.mubr.bf16.gmra.mxu0 %v4043
    %v5214 = vpop.f32.mrf.mxu0
    %v5215 = vadd.f32 %v5175, %v5214
    %v5216 = vpop.f32.mrf.mxu0
    %v5217 = vpop.f32.mrf.mxu0
    %v5218 = vpop.f32.mrf.mxu0
    %5219 = vdwg.mxu0
    %5220 = vmatprep.subr.bf16.mxu0 0
    %5221 = vmatpush1.bf16.msra.mxu0 %v4444
    %5222 = vmatprep.subr.bf16.mxu0 0
    %5223 = vmatpush1.bf16.msra.mxu0 %v4443
    %5224 = vmatprep.subr.bf16.mxu0 0
    %5225 = vmatpush1.bf16.msra.mxu0 %v4442
    %5226 = vmatprep.subr.bf16.mxu0 0
    %5227 = vmatpush1.bf16.msra.mxu0 %v4441
    %5228 = vmatprep.subr.bf16.mxu0 0
    %5229 = vmatpush1.bf16.msra.mxu0 %v4440
    %5230 = vmatprep.subr.bf16.mxu0 0
    %5231 = vmatpush1.bf16.msra.mxu0 %v4439
    %5232 = vmatprep.subr.bf16.mxu0 0
    %5233 = vmatpush1.bf16.msra.mxu0 %v4438
    %5234 = vmatprep.subr.bf16.mxu0 0
    %5235 = vmatpush1.bf16.msra.mxu0 %v4437
    %5236 = vmatprep.subr.bf16.mxu0 0
    %5237 = vmatpush2.bf16.msra.mxu0 %v4452
    %5238 = vmatprep.subr.bf16.mxu0 0
    %5239 = vmatpush2.bf16.msra.mxu0 %v4451
    %5240 = vmatprep.subr.bf16.mxu0 0
    %5241 = vmatpush2.bf16.msra.mxu0 %v4450
    %5242 = vmatprep.subr.bf16.mxu0 0
    %5243 = vmatpush2.bf16.msra.mxu0 %v4449
    %5244 = vmatprep.subr.bf16.mxu0 0
    %5245 = vmatpush2.bf16.msra.mxu0 %v4448
    %5246 = vmatprep.subr.bf16.mxu0 0
    %5247 = vmatpush2.bf16.msra.mxu0 %v4447
    %5248 = vmatprep.subr.bf16.mxu0 0
    %5249 = vmatpush2.bf16.msra.mxu0 %v4446
    %5250 = vmatprep.subr.bf16.mxu0 0
    %5251 = vmatpush2.bf16.msra.mxu0 %v4445
    %5252 = vmatprep.mubr.bf16.mxu0 %v4554
    %5253 = vmatmul.mubr.bf16.gmra.mxu0 %v4553
    %v5254 = vpop.f32.mrf.mxu0
    %v5255 = vadd.f32 0.0, %v5254
    %v5256 = vpop.f32.mrf.mxu0
    %v5257 = vpop.f32.mrf.mxu0
    %v5258 = vpop.f32.mrf.mxu0
    %5259 = vdwg.mxu0
    %v5260 = vadd.f32 %v5215, %v5255
    %5261 = vmatprep.subr.bf16.mxu0 0
    %5262 = vmatpush1.bf16.msra.mxu0 %v4628
    %5263 = vmatprep.subr.bf16.mxu0 0
    %5264 = vmatpush1.bf16.msra.mxu0 %v4627
    %5265 = vmatprep.subr.bf16.mxu0 0
    %5266 = vmatpush1.bf16.msra.mxu0 %v4626
    %5267 = vmatprep.subr.bf16.mxu0 0
    %5268 = vmatpush1.bf16.msra.mxu0 %v4625
    %5269 = vmatprep.subr.bf16.mxu0 0
    %5270 = vmatpush1.bf16.msra.mxu0 %v4624
    %5271 = vmatprep.subr.bf16.mxu0 0
    %5272 = vmatpush1.bf16.msra.mxu0 %v4623
    %5273 = vmatprep.subr.bf16.mxu0 0
    %5274 = vmatpush1.bf16.msra.mxu0 %v4622
    %5275 = vmatprep.subr.bf16.mxu0 0
    %5276 = vmatpush1.bf16.msra.mxu0 %v4621
    %5277 = vmatprep.subr.bf16.mxu0 0
    %5278 = vmatpush2.bf16.msra.mxu0 %v4636
    %5279 = vmatprep.subr.bf16.mxu0 0
    %5280 = vmatpush2.bf16.msra.mxu0 %v4635
    %5281 = vmatprep.subr.bf16.mxu0 0
    %5282 = vmatpush2.bf16.msra.mxu0 %v4634
    %5283 = vmatprep.subr.bf16.mxu0 0
    %5284 = vmatpush2.bf16.msra.mxu0 %v4633
    %5285 = vmatprep.subr.bf16.mxu0 0
    %5286 = vmatpush2.bf16.msra.mxu0 %v4632
    %5287 = vmatprep.subr.bf16.mxu0 0
    %5288 = vmatpush2.bf16.msra.mxu0 %v4631
    %5289 = vmatprep.subr.bf16.mxu0 0
    %5290 = vmatpush2.bf16.msra.mxu0 %v4630
    %5291 = vmatprep.subr.bf16.mxu0 0
    %5292 = vmatpush2.bf16.msra.mxu0 %v4629
    %5293 = vmatprep.mubr.bf16.mxu0 %v4738
    %5294 = vmatmul.mubr.bf16.gmra.mxu0 %v4737
    %v5295 = vpop.f32.mrf.mxu0
    %v5296 = vadd.f32 0.0, %v5295
    %v5297 = vpop.f32.mrf.mxu0
    %v5298 = vpop.f32.mrf.mxu0
    %v5299 = vpop.f32.mrf.mxu0
    %5300 = vdwg.mxu0
    %v5301 = vadd.f32 %v5260, %v5296
    %v5302 = vld [vmem:[%s3201] sm:$0xcc]
    %v5303 = vld [vmem:[%s3201 + $0x8] sm:$0x33]
    %v5306 = vunpack.c.l.b16 %v5302
    %v5307 = vunpack.c.h.b16 %v5302
    %v5308 = vunpack.c.l.b16 %v5303
    %v5309 = vunpack.c.h.b16 %v5303
    %v5310 = vpack.c.b16 %v5308, %v5306
    %v5311 = vpack.c.b16 %v5309, %v5307
    %v5312 = vrot.slane %v5310, 2
    %v5313 = vrot.slane %v5311, 2
    %5316 = vmatprep.subr.bf16.mxu0 0
    %5317 = vmatpush1.bf16.msra.mxu0 %v4812
    %5318 = vmatprep.subr.bf16.mxu0 0
    %5319 = vmatpush1.bf16.msra.mxu0 %v4811
    %5320 = vmatprep.subr.bf16.mxu0 0
    %5321 = vmatpush1.bf16.msra.mxu0 %v4810
    %5322 = vmatprep.subr.bf16.mxu0 0
    %5323 = vmatpush1.bf16.msra.mxu0 %v4809
    %5324 = vmatprep.subr.bf16.mxu0 0
    %5325 = vmatpush1.bf16.msra.mxu0 %v4808
    %5326 = vmatprep.subr.bf16.mxu0 0
    %5327 = vmatpush1.bf16.msra.mxu0 %v4807
    %5328 = vmatprep.subr.bf16.mxu0 0
    %5329 = vmatpush1.bf16.msra.mxu0 %v4806
    %5330 = vmatprep.subr.bf16.mxu0 0
    %5331 = vmatpush1.bf16.msra.mxu0 %v4805
    %5332 = vmatprep.subr.bf16.mxu0 0
    %5333 = vmatpush2.bf16.msra.mxu0 %v4820
    %5334 = vmatprep.subr.bf16.mxu0 0
    %5335 = vmatpush2.bf16.msra.mxu0 %v4819
    %5336 = vmatprep.subr.bf16.mxu0 0
    %5337 = vmatpush2.bf16.msra.mxu0 %v4818
    %5338 = vmatprep.subr.bf16.mxu0 0
    %5339 = vmatpush2.bf16.msra.mxu0 %v4817
    %5340 = vmatprep.subr.bf16.mxu0 0
    %5341 = vmatpush2.bf16.msra.mxu0 %v4816
    %5342 = vmatprep.subr.bf16.mxu0 0
    %5343 = vmatpush2.bf16.msra.mxu0 %v4815
    %5344 = vmatprep.subr.bf16.mxu0 0
    %5345 = vmatpush2.bf16.msra.mxu0 %v4814
    %5346 = vmatprep.subr.bf16.mxu0 0
    %5347 = vmatpush2.bf16.msra.mxu0 %v4813
    %5348 = vmatprep.mubr.bf16.mxu0 %v5313
    %5349 = vmatmul.mubr.bf16.gmra.mxu0 %v5312
    %v5350 = vpop.f32.mrf.mxu0
    %v5351 = vadd.f32 0.0, %v5350
    %v5352 = vpop.f32.mrf.mxu0
    %v5353 = vpop.f32.mrf.mxu0
    %v5354 = vpop.f32.mrf.mxu0
    %5355 = vdwg.mxu0
    %v5356 = vadd.f32 %v5301, %v5351
    %v5357 = vmax.f32 %v5139, %v5356
    %5358 = vmatprep.subr.bf16.mxu0 0
    %5359 = vmatpush1.bf16.msra.mxu0 %v4118
    %5360 = vmatprep.subr.bf16.mxu0 0
    %5361 = vmatpush1.bf16.msra.mxu0 %v4117
    %5362 = vmatprep.subr.bf16.mxu0 0
    %5363 = vmatpush1.bf16.msra.mxu0 %v4116
    %5364 = vmatprep.subr.bf16.mxu0 0
    %5365 = vmatpush1.bf16.msra.mxu0 %v4115
    %5366 = vmatprep.subr.bf16.mxu0 0
    %5367 = vmatpush1.bf16.msra.mxu0 %v4114
    %5368 = vmatprep.subr.bf16.mxu0 0
    %5369 = vmatpush1.bf16.msra.mxu0 %v4113
    %5370 = vmatprep.subr.bf16.mxu0 0
    %5371 = vmatpush1.bf16.msra.mxu0 %v4112
    %5372 = vmatprep.subr.bf16.mxu0 0
    %5373 = vmatpush1.bf16.msra.mxu0 %v4111
    %5374 = vmatprep.subr.bf16.mxu0 0
    %5375 = vmatpush2.bf16.msra.mxu0 %v4126
    %5376 = vmatprep.subr.bf16.mxu0 0
    %5377 = vmatpush2.bf16.msra.mxu0 %v4125
    %5378 = vmatprep.subr.bf16.mxu0 0
    %5379 = vmatpush2.bf16.msra.mxu0 %v4124
    %5380 = vmatprep.subr.bf16.mxu0 0
    %5381 = vmatpush2.bf16.msra.mxu0 %v4123
    %5382 = vmatprep.subr.bf16.mxu0 0
    %5383 = vmatpush2.bf16.msra.mxu0 %v4122
    %5384 = vmatprep.subr.bf16.mxu0 0
    %5385 = vmatpush2.bf16.msra.mxu0 %v4121
    %5386 = vmatprep.subr.bf16.mxu0 0
    %5387 = vmatpush2.bf16.msra.mxu0 %v4120
    %5388 = vmatprep.subr.bf16.mxu0 0
    %5389 = vmatpush2.bf16.msra.mxu0 %v4119
    %5390 = vmatprep.mubr.bf16.mxu0 %v4985
    %5391 = vmatmul.mubr.bf16.gmra.mxu0 %v4984
    %v5392 = vpop.f32.mrf.mxu0
    %v5393 = vadd.f32 0.0, %v5392
    %v5394 = vpop.f32.mrf.mxu0
    %v5395 = vpop.f32.mrf.mxu0
    %v5396 = vpop.f32.mrf.mxu0
    %5397 = vdwg.mxu0
    %5398 = vmatprep.subr.bf16.mxu0 0
    %5399 = vmatpush1.bf16.msra.mxu0 %v4261
    %5400 = vmatprep.subr.bf16.mxu0 0
    %5401 = vmatpush1.bf16.msra.mxu0 %v4260
    %5402 = vmatprep.subr.bf16.mxu0 0
    %5403 = vmatpush1.bf16.msra.mxu0 %v4259
    %5404 = vmatprep.subr.bf16.mxu0 0
    %5405 = vmatpush1.bf16.msra.mxu0 %v4258
    %5406 = vmatprep.subr.bf16.mxu0 0
    %5407 = vmatpush1.bf16.msra.mxu0 %v4257
    %5408 = vmatprep.subr.bf16.mxu0 0
    %5409 = vmatpush1.bf16.msra.mxu0 %v4256
    %5410 = vmatprep.subr.bf16.mxu0 0
    %5411 = vmatpush1.bf16.msra.mxu0 %v4255
    %5412 = vmatprep.subr.bf16.mxu0 0
    %5413 = vmatpush1.bf16.msra.mxu0 %v4254
    %5414 = vmatprep.subr.bf16.mxu0 0
    %5415 = vmatpush2.bf16.msra.mxu0 %v4269
    %5416 = vmatprep.subr.bf16.mxu0 0
    %5417 = vmatpush2.bf16.msra.mxu0 %v4268
    %5418 = vmatprep.subr.bf16.mxu0 0
    %5419 = vmatpush2.bf16.msra.mxu0 %v4267
    %5420 = vmatprep.subr.bf16.mxu0 0
    %5421 = vmatpush2.bf16.msra.mxu0 %v4266
    %5422 = vmatprep.subr.bf16.mxu0 0
    %5423 = vmatpush2.bf16.msra.mxu0 %v4265
    %5424 = vmatprep.subr.bf16.mxu0 0
    %5425 = vmatpush2.bf16.msra.mxu0 %v4264
    %5426 = vmatprep.subr.bf16.mxu0 0
    %5427 = vmatpush2.bf16.msra.mxu0 %v4263
    %5428 = vmatprep.subr.bf16.mxu0 0
    %5429 = vmatpush2.bf16.msra.mxu0 %v4262
    %5430 = vmatprep.mubr.bf16.mxu0 %v4884
    %5431 = vmatmul.mubr.bf16.gmra.mxu0 %v4883
    %v5432 = vpop.f32.mrf.mxu0
    %v5433 = vadd.f32 %v5393, %v5432
    %v5434 = vpop.f32.mrf.mxu0
    %v5435 = vpop.f32.mrf.mxu0
    %v5436 = vpop.f32.mrf.mxu0
    %5437 = vdwg.mxu0
    %5438 = vmatprep.subr.bf16.mxu0 0
    %5439 = vmatpush1.bf16.msra.mxu0 %v4444
    %5440 = vmatprep.subr.bf16.mxu0 0
    %5441 = vmatpush1.bf16.msra.mxu0 %v4443
    %5442 = vmatprep.subr.bf16.mxu0 0
    %5443 = vmatpush1.bf16.msra.mxu0 %v4442
    %5444 = vmatprep.subr.bf16.mxu0 0
    %5445 = vmatpush1.bf16.msra.mxu0 %v4441
    %5446 = vmatprep.subr.bf16.mxu0 0
    %5447 = vmatpush1.bf16.msra.mxu0 %v4440
    %5448 = vmatprep.subr.bf16.mxu0 0
    %5449 = vmatpush1.bf16.msra.mxu0 %v4439
    %5450 = vmatprep.subr.bf16.mxu0 0
    %5451 = vmatpush1.bf16.msra.mxu0 %v4438
    %5452 = vmatprep.subr.bf16.mxu0 0
    %5453 = vmatpush1.bf16.msra.mxu0 %v4437
    %5454 = vmatprep.subr.bf16.mxu0 0
    %5455 = vmatpush2.bf16.msra.mxu0 %v4452
    %5456 = vmatprep.subr.bf16.mxu0 0
    %5457 = vmatpush2.bf16.msra.mxu0 %v4451
    %5458 = vmatprep.subr.bf16.mxu0 0
    %5459 = vmatpush2.bf16.msra.mxu0 %v4450
    %5460 = vmatprep.subr.bf16.mxu0 0
    %5461 = vmatpush2.bf16.msra.mxu0 %v4449
    %5462 = vmatprep.subr.bf16.mxu0 0
    %5463 = vmatpush2.bf16.msra.mxu0 %v4448
    %5464 = vmatprep.subr.bf16.mxu0 0
    %5465 = vmatpush2.bf16.msra.mxu0 %v4447
    %5466 = vmatprep.subr.bf16.mxu0 0
    %5467 = vmatpush2.bf16.msra.mxu0 %v4446
    %5468 = vmatprep.subr.bf16.mxu0 0
    %5469 = vmatpush2.bf16.msra.mxu0 %v4445
    %5470 = vmatprep.mubr.bf16.mxu0 %v5040
    %5471 = vmatmul.mubr.bf16.gmra.mxu0 %v5039
    %v5472 = vpop.f32.mrf.mxu0
    %v5473 = vadd.f32 0.0, %v5472
    %v5474 = vpop.f32.mrf.mxu0
    %v5475 = vpop.f32.mrf.mxu0
    %v5476 = vpop.f32.mrf.mxu0
    %5477 = vdwg.mxu0
    %v5478 = vadd.f32 %v5433, %v5473
    %5479 = vmatprep.subr.bf16.mxu0 0
    %5480 = vmatpush1.bf16.msra.mxu0 %v4628
    %5481 = vmatprep.subr.bf16.mxu0 0
    %5482 = vmatpush1.bf16.msra.mxu0 %v4627
    %5483 = vmatprep.subr.bf16.mxu0 0
    %5484 = vmatpush1.bf16.msra.mxu0 %v4626
    %5485 = vmatprep.subr.bf16.mxu0 0
    %5486 = vmatpush1.bf16.msra.mxu0 %v4625
    %5487 = vmatprep.subr.bf16.mxu0 0
    %5488 = vmatpush1.bf16.msra.mxu0 %v4624
    %5489 = vmatprep.subr.bf16.mxu0 0
    %5490 = vmatpush1.bf16.msra.mxu0 %v4623
    %5491 = vmatprep.subr.bf16.mxu0 0
    %5492 = vmatpush1.bf16.msra.mxu0 %v4622
    %5493 = vmatprep.subr.bf16.mxu0 0
    %5494 = vmatpush1.bf16.msra.mxu0 %v4621
    %5495 = vmatprep.subr.bf16.mxu0 0
    %5496 = vmatpush2.bf16.msra.mxu0 %v4636
    %5497 = vmatprep.subr.bf16.mxu0 0
    %5498 = vmatpush2.bf16.msra.mxu0 %v4635
    %5499 = vmatprep.subr.bf16.mxu0 0
    %5500 = vmatpush2.bf16.msra.mxu0 %v4634
    %5501 = vmatprep.subr.bf16.mxu0 0
    %5502 = vmatpush2.bf16.msra.mxu0 %v4633
    %5503 = vmatprep.subr.bf16.mxu0 0
    %5504 = vmatpush2.bf16.msra.mxu0 %v4632
    %5505 = vmatprep.subr.bf16.mxu0 0
    %5506 = vmatpush2.bf16.msra.mxu0 %v4631
    %5507 = vmatprep.subr.bf16.mxu0 0
    %5508 = vmatpush2.bf16.msra.mxu0 %v4630
    %5509 = vmatprep.subr.bf16.mxu0 0
    %5510 = vmatpush2.bf16.msra.mxu0 %v4629
    %5511 = vmatprep.mubr.bf16.mxu0 %v5095
    %5512 = vmatmul.mubr.bf16.gmra.mxu0 %v5094
    %v5513 = vpop.f32.mrf.mxu0
    %v5514 = vadd.f32 0.0, %v5513
    %v5515 = vpop.f32.mrf.mxu0
    %v5516 = vpop.f32.mrf.mxu0
    %v5517 = vpop.f32.mrf.mxu0
    %5518 = vdwg.mxu0
    %v5519 = vadd.f32 %v5478, %v5514
    %v5520 = vld [vmem:[%s3594] sm:$0xcc]
    %v5521 = vld [vmem:[%s3594 + $0x8] sm:$0x33]
    %v5524 = vunpack.c.l.b16 %v5520
    %v5525 = vunpack.c.h.b16 %v5520
    %v5526 = vunpack.c.l.b16 %v5521
    %v5527 = vunpack.c.h.b16 %v5521
    %v5528 = vpack.c.b16 %v5526, %v5524
    %v5529 = vpack.c.b16 %v5527, %v5525
    %v5530 = vrot.slane %v5528, 2
    %v5531 = vrot.slane %v5529, 2
    %5534 = vmatprep.subr.bf16.mxu0 0
    %5535 = vmatpush1.bf16.msra.mxu0 %v4812
    %5536 = vmatprep.subr.bf16.mxu0 0
    %5537 = vmatpush1.bf16.msra.mxu0 %v4811
    %5538 = vmatprep.subr.bf16.mxu0 0
    %5539 = vmatpush1.bf16.msra.mxu0 %v4810
    %5540 = vmatprep.subr.bf16.mxu0 0
    %5541 = vmatpush1.bf16.msra.mxu0 %v4809
    %5542 = vmatprep.subr.bf16.mxu0 0
    %5543 = vmatpush1.bf16.msra.mxu0 %v4808
    %5544 = vmatprep.subr.bf16.mxu0 0
    %5545 = vmatpush1.bf16.msra.mxu0 %v4807
    %5546 = vmatprep.subr.bf16.mxu0 0
    %5547 = vmatpush1.bf16.msra.mxu0 %v4806
    %5548 = vmatprep.subr.bf16.mxu0 0
    %5549 = vmatpush1.bf16.msra.mxu0 %v4805
    %5550 = vmatprep.subr.bf16.mxu0 0
    %5551 = vmatpush2.bf16.msra.mxu0 %v4820
    %5552 = vmatprep.subr.bf16.mxu0 0
    %5553 = vmatpush2.bf16.msra.mxu0 %v4819
    %5554 = vmatprep.subr.bf16.mxu0 0
    %5555 = vmatpush2.bf16.msra.mxu0 %v4818
    %5556 = vmatprep.subr.bf16.mxu0 0
    %5557 = vmatpush2.bf16.msra.mxu0 %v4817
    %5558 = vmatprep.subr.bf16.mxu0 0
    %5559 = vmatpush2.bf16.msra.mxu0 %v4816
    %5560 = vmatprep.subr.bf16.mxu0 0
    %5561 = vmatpush2.bf16.msra.mxu0 %v4815
    %5562 = vmatprep.subr.bf16.mxu0 0
    %5563 = vmatpush2.bf16.msra.mxu0 %v4814
    %5564 = vmatprep.subr.bf16.mxu0 0
    %5565 = vmatpush2.bf16.msra.mxu0 %v4813
    %5566 = vmatprep.mubr.bf16.mxu0 %v5531
    %5567 = vmatmul.mubr.bf16.gmra.mxu0 %v5530
    %v5568 = vpop.f32.mrf.mxu0
    %v5569 = vadd.f32 0.0, %v5568
    %v5570 = vpop.f32.mrf.mxu0
    %v5571 = vpop.f32.mrf.mxu0
    %v5572 = vpop.f32.mrf.mxu0
    %5573 = vdwg.mxu0
    %v5574 = vadd.f32 %v5519, %v5569
    %v5575 = vmax.f32 %v5357, %v5574
    %v5576 = vld [vmem:[%s6] sm:$0x1]
    %v5578 = vlaneseq
    %v5579 = vshrl.u32 %v5578, 7
    %v5580 = vsub.s32 0, %v5579
    %v5581 = vrot.slane %v5576, %v5580
    %v5583 = vadd.f32 %v5575, %v5581
    %v5584 = vmax.f32 %v5583, 0.0
    %v5585 = vrot.slane %v5584, 4
    %v5586 = vadd.f32 %v5584, %v5585
    %v5587 = vrot.slane %v5586, 2
    %v5588 = vadd.f32 %v5586, %v5587
    %v5589 = vrot.slane %v5588, 1
    %v5590 = vadd.f32 %v5588, %v5589
    %v5591 = vmul.f32 %v5584, %v5584
    %v5592 = vrot.slane %v5591, 4
    %v5593 = vadd.f32 %v5591, %v5592
    %v5594 = vrot.slane %v5593, 2
    %v5595 = vadd.f32 %v5593, %v5594
    %v5596 = vrot.slane %v5595, 1
    %v5597 = vadd.f32 %v5595, %v5596
    %5599 = vrot.lane.b32.xlu0 %v5590, 96
    %v5600 = vpop.permute.xlu0 %5599
    %v5602 = vadd.f32 %v5590, %v5600
    %5603 = vrot.lane.b32.xlu0 %v5590, 64
    %v5604 = vpop.permute.xlu0 %5603
    %v5606 = vadd.f32 %v5602, %v5604
    %5607 = vrot.lane.b32.xlu0 %v5590, 32
    %v5608 = vpop.permute.xlu0 %5607
    %v5610 = vadd.f32 %v5606, %v5608
    %v5611 = vrcp.pop 32.0
    %v5612 = vmul.f32 %v5610, %v5611
    %5614 = vrot.lane.b32.xlu0 %v5597, 96
    %v5615 = vpop.permute.xlu0 %5614
    %v5617 = vadd.f32 %v5597, %v5615
    %5618 = vrot.lane.b32.xlu0 %v5597, 64
    %v5619 = vpop.permute.xlu0 %5618
    %v5621 = vadd.f32 %v5617, %v5619
    %5622 = vrot.lane.b32.xlu0 %v5597, 32
    %v5623 = vpop.permute.xlu0 %5622
    %v5625 = vadd.f32 %v5621, %v5623
    %v5626 = vmul.f32 %v5625, %v5611
    %v5627 = vmul.f32 %v5612, %v5612
    %v5628 = vsub.f32 %v5626, %v5627
    %v5629 = vmax.f32 %v5628, 0.0
    %v5630 = vld [vmem:[%s7] sm:$0x1]
    %v5631 = vadd.f32 %v5629, 1e-05
    %v5632 = vrsqrt.pop %v5631
    %v5633 = vmul.f32 %v5630, %v5632
    %v5634 = vld [vmem:[%s8] sm:$0x1]
    %v5635 = vmul.f32 %v5612, %v5633
    %v5636 = vsub.f32 %v5634, %v5635
    %v5638 = vlaneseq
    %v5639 = vshrl.u32 %v5638, 7
    %v5640 = vsub.s32 0, %v5639
    %v5641 = vrot.slane %v5633, %v5640
    %v5643 = vmul.f32 %v5584, %v5641
    %v5645 = vlaneseq
    %v5646 = vshrl.u32 %v5645, 7
    %v5647 = vsub.s32 0, %v5646
    %v5648 = vrot.slane %v5636, %v5647
    %v5650 = vadd.f32 %v5643, %v5648
    %5651 = vst.msk [vmem:[#allocation4] sm:$0xff] %vm95, %v5650
    %5652 = vrot.lane.b32.xlu0 %v5641, 32
    %v5653 = vpop.permute.xlu0 %5652
    %v5655 = vmul.f32 %v5584, %v5653
    %5656 = vrot.lane.b32.xlu0 %v5648, 32
    %v5657 = vpop.permute.xlu0 %5656
    %v5659 = vadd.f32 %v5655, %v5657
    %vm5660 = vcmask 523520
    %5661 = vst.msk [vmem:[#allocation4] sm:$0xff] %vm5660, %v5659
    %5662 = vrot.lane.b32.xlu0 %v5641, 64
    %v5663 = vpop.permute.xlu0 %5662
    %v5665 = vmul.f32 %v5584, %v5663
    %5666 = vrot.lane.b32.xlu0 %v5648, 64
    %v5667 = vpop.permute.xlu0 %5666
    %v5669 = vadd.f32 %v5665, %v5667
    %vm5670 = vcmask 785920
    %5671 = vst.msk [vmem:[#allocation4] sm:$0xff] %vm5670, %v5669
    %5672 = vrot.lane.b32.xlu0 %v5641, 96
    %v5673 = vpop.permute.xlu0 %5672
    %v5675 = vmul.f32 %v5584, %v5673
    %5676 = vrot.lane.b32.xlu0 %v5648, 96
    %v5677 = vpop.permute.xlu0 %5676
    %v5679 = vadd.f32 %v5675, %v5677
    %vm5680 = vcmask 1048320
    %5681 = vst.msk [vmem:[#allocation4] sm:$0xff] %vm5680, %v5679
    %v5682 = vld [vmem:[#allocation4] sm:$0x3]
    %v5683 = vpack.c.bf16 %v5682, %v5682
    %v5684 = vld [vmem:[%s9] sm:$0xf]
    %v5685 = vld [vmem:[%s9 + $0x4] sm:$0xf]
    %v5686 = vld [vmem:[%s9 + $0x8] sm:$0xf]
    %v5687 = vld [vmem:[%s9 + $0xc] sm:$0xf]
    %v5688 = vld [vmem:[%s9 + $0x10] sm:$0xf]
    %v5689 = vld [vmem:[%s9 + $0x14] sm:$0xf]
    %v5690 = vld [vmem:[%s9 + $0x18] sm:$0xf]
    %v5691 = vld [vmem:[%s9 + $0x1c] sm:$0xf]
    %v5692 = vld [vmem:[%s9 + $0x20] sm:$0xf]
    %v5693 = vld [vmem:[%s9 + $0x24] sm:$0xf]
    %v5694 = vld [vmem:[%s9 + $0x28] sm:$0xf]
    %v5695 = vld [vmem:[%s9 + $0x2c] sm:$0xf]
    %v5696 = vld [vmem:[%s9 + $0x30] sm:$0xf]
    %v5697 = vld [vmem:[%s9 + $0x34] sm:$0xf]
    %v5698 = vld [vmem:[%s9 + $0x38] sm:$0xf]
    %v5699 = vld [vmem:[%s9 + $0x3c] sm:$0xf]
    %v5700 = vld [vmem:[#allocation4 + $0x2] sm:$0x3]
    %v5701 = vpack.c.bf16 %v5700, %v5700
    %s5702 = scalar_lea.vmem %s9, 64
    %v5703 = vld [vmem:[%s5702] sm:$0xf]
    %v5704 = vld [vmem:[%s5702 + $0x4] sm:$0xf]
    %v5705 = vld [vmem:[%s5702 + $0x8] sm:$0xf]
    %v5706 = vld [vmem:[%s5702 + $0xc] sm:$0xf]
    %v5707 = vld [vmem:[%s5702 + $0x10] sm:$0xf]
    %v5708 = vld [vmem:[%s5702 + $0x14] sm:$0xf]
    %v5709 = vld [vmem:[%s5702 + $0x18] sm:$0xf]
    %v5710 = vld [vmem:[%s5702 + $0x1c] sm:$0xf]
    %v5711 = vld [vmem:[%s5702 + $0x20] sm:$0xf]
    %v5712 = vld [vmem:[%s5702 + $0x24] sm:$0xf]
    %v5713 = vld [vmem:[%s5702 + $0x28] sm:$0xf]
    %v5714 = vld [vmem:[%s5702 + $0x2c] sm:$0xf]
    %v5715 = vld [vmem:[%s5702 + $0x30] sm:$0xf]
    %v5716 = vld [vmem:[%s5702 + $0x34] sm:$0xf]
    %v5717 = vld [vmem:[%s5702 + $0x38] sm:$0xf]
    %v5718 = vld [vmem:[%s5702 + $0x3c] sm:$0xf]
    %v5735 = vunpack.c.l.b16 %v5703
    %v5736 = vunpack.c.l.b16 %v5704
    %v5737 = vunpack.c.l.b16 %v5705
    %v5738 = vunpack.c.l.b16 %v5706
    %v5739 = vunpack.c.l.b16 %v5707
    %v5740 = vunpack.c.l.b16 %v5708
    %v5741 = vunpack.c.l.b16 %v5709
    %v5742 = vunpack.c.l.b16 %v5710
    %v5743 = vunpack.c.l.b16 %v5711
    %v5744 = vunpack.c.l.b16 %v5712
    %v5745 = vunpack.c.l.b16 %v5713
    %v5746 = vunpack.c.l.b16 %v5714
    %v5747 = vunpack.c.l.b16 %v5715
    %v5748 = vunpack.c.l.b16 %v5716
    %v5749 = vunpack.c.l.b16 %v5717
    %v5750 = vunpack.c.l.b16 %v5718
    %v5751 = vpack.c.b16 %v5736, %v5735
    %v5752 = vpack.c.b16 %v5738, %v5737
    %v5753 = vpack.c.b16 %v5740, %v5739
    %v5754 = vpack.c.b16 %v5742, %v5741
    %v5755 = vpack.c.b16 %v5744, %v5743
    %v5756 = vpack.c.b16 %v5746, %v5745
    %v5757 = vpack.c.b16 %v5748, %v5747
    %v5758 = vpack.c.b16 %v5750, %v5749
    %5767 = vmatprep.subr.bf16.mxu0 0
    %5768 = vmatpush1.bf16.msra.mxu0 %v5758
    %5769 = vmatprep.subr.bf16.mxu0 0
    %5770 = vmatpush1.bf16.msra.mxu0 %v5757
    %5771 = vmatprep.subr.bf16.mxu0 0
    %5772 = vmatpush1.bf16.msra.mxu0 %v5756
    %5773 = vmatprep.subr.bf16.mxu0 0
    %5774 = vmatpush1.bf16.msra.mxu0 %v5755
    %5775 = vmatprep.subr.bf16.mxu0 0
    %5776 = vmatpush1.bf16.msra.mxu0 %v5754
    %5777 = vmatprep.subr.bf16.mxu0 0
    %5778 = vmatpush1.bf16.msra.mxu0 %v5753
    %5779 = vmatprep.subr.bf16.mxu0 0
    %5780 = vmatpush1.bf16.msra.mxu0 %v5752
    %5781 = vmatprep.subr.bf16.mxu0 0
    %5782 = vmatpush1.bf16.msra.mxu0 %v5751
    %5783 = vmatprep.subr.bf16.mxu0 0
    %5784 = vmatpush2.bf16.msra.mxu0 0
    %5785 = vmatprep.subr.bf16.mxu0 0
    %5786 = vmatpush2.bf16.msra.mxu0 0
    %5787 = vmatprep.subr.bf16.mxu0 0
    %5788 = vmatpush2.bf16.msra.mxu0 0
    %5789 = vmatprep.subr.bf16.mxu0 0
    %5790 = vmatpush2.bf16.msra.mxu0 0
    %5791 = vmatprep.subr.bf16.mxu0 0
    %5792 = vmatpush2.bf16.msra.mxu0 0
    %5793 = vmatprep.subr.bf16.mxu0 0
    %5794 = vmatpush2.bf16.msra.mxu0 0
    %5795 = vmatprep.subr.bf16.mxu0 0
    %5796 = vmatpush2.bf16.msra.mxu0 0
    %5797 = vmatprep.subr.bf16.mxu0 0
    %5798 = vmatpush2.bf16.msra.mxu0 0
    %5799 = vmatprep.mubr.bf16.mxu0 0
    %5800 = vmatmul.mubr.bf16.gmra.mxu0 %v5701
    %v5801 = vpop.f32.mrf.mxu0
    %v5802 = vadd.f32 0.0, %v5801
    %v5803 = vpop.f32.mrf.mxu0
    %v5804 = vpop.f32.mrf.mxu0
    %v5805 = vpop.f32.mrf.mxu0
    %5806 = vdwg.mxu0
    %v5823 = vunpack.c.l.b16 %v5684
    %v5824 = vunpack.c.l.b16 %v5685
    %v5825 = vunpack.c.l.b16 %v5686
    %v5826 = vunpack.c.l.b16 %v5687
    %v5827 = vunpack.c.l.b16 %v5688
    %v5828 = vunpack.c.l.b16 %v5689
    %v5829 = vunpack.c.l.b16 %v5690
    %v5830 = vunpack.c.l.b16 %v5691
    %v5831 = vunpack.c.l.b16 %v5692
    %v5832 = vunpack.c.l.b16 %v5693
    %v5833 = vunpack.c.l.b16 %v5694
    %v5834 = vunpack.c.l.b16 %v5695
    %v5835 = vunpack.c.l.b16 %v5696
    %v5836 = vunpack.c.l.b16 %v5697
    %v5837 = vunpack.c.l.b16 %v5698
    %v5838 = vunpack.c.l.b16 %v5699
    %v5839 = vpack.c.b16 %v5824, %v5823
    %v5840 = vpack.c.b16 %v5826, %v5825
    %v5841 = vpack.c.b16 %v5828, %v5827
    %v5842 = vpack.c.b16 %v5830, %v5829
    %v5843 = vpack.c.b16 %v5832, %v5831
    %v5844 = vpack.c.b16 %v5834, %v5833
    %v5845 = vpack.c.b16 %v5836, %v5835
    %v5846 = vpack.c.b16 %v5838, %v5837
    %5855 = vmatprep.subr.bf16.mxu0 0
    %5856 = vmatpush1.bf16.msra.mxu0 %v5846
    %5857 = vmatprep.subr.bf16.mxu0 0
    %5858 = vmatpush1.bf16.msra.mxu0 %v5845
    %5859 = vmatprep.subr.bf16.mxu0 0
    %5860 = vmatpush1.bf16.msra.mxu0 %v5844
    %5861 = vmatprep.subr.bf16.mxu0 0
    %5862 = vmatpush1.bf16.msra.mxu0 %v5843
    %5863 = vmatprep.subr.bf16.mxu0 0
    %5864 = vmatpush1.bf16.msra.mxu0 %v5842
    %5865 = vmatprep.subr.bf16.mxu0 0
    %5866 = vmatpush1.bf16.msra.mxu0 %v5841
    %5867 = vmatprep.subr.bf16.mxu0 0
    %5868 = vmatpush1.bf16.msra.mxu0 %v5840
    %5869 = vmatprep.subr.bf16.mxu0 0
    %5870 = vmatpush1.bf16.msra.mxu0 %v5839
    %5871 = vmatprep.subr.bf16.mxu0 0
    %5872 = vmatpush2.bf16.msra.mxu0 0
    %5873 = vmatprep.subr.bf16.mxu0 0
    %5874 = vmatpush2.bf16.msra.mxu0 0
    %5875 = vmatprep.subr.bf16.mxu0 0
    %5876 = vmatpush2.bf16.msra.mxu0 0
    %5877 = vmatprep.subr.bf16.mxu0 0
    %5878 = vmatpush2.bf16.msra.mxu0 0
    %5879 = vmatprep.subr.bf16.mxu0 0
    %5880 = vmatpush2.bf16.msra.mxu0 0
    %5881 = vmatprep.subr.bf16.mxu0 0
    %5882 = vmatpush2.bf16.msra.mxu0 0
    %5883 = vmatprep.subr.bf16.mxu0 0
    %5884 = vmatpush2.bf16.msra.mxu0 0
    %5885 = vmatprep.subr.bf16.mxu0 0
    %5886 = vmatpush2.bf16.msra.mxu0 0
    %5887 = vmatprep.mubr.bf16.mxu0 0
    %5888 = vmatmul.mubr.bf16.gmra.mxu0 %v5683
    %v5889 = vpop.f32.mrf.mxu0
    %v5890 = vadd.f32 %v5802, %v5889
    %v5891 = vpop.f32.mrf.mxu0
    %v5892 = vpop.f32.mrf.mxu0
    %v5893 = vpop.f32.mrf.mxu0
    %5894 = vdwg.mxu0
    %v5895 = vld [vmem:[#allocation4 + $0x4] sm:$0x3]
    %v5896 = vpack.c.bf16 %v5895, %v5895
    %s5897 = scalar_lea.vmem %s9, 128
    %v5898 = vld [vmem:[%s5897] sm:$0xf]
    %v5899 = vld [vmem:[%s5897 + $0x4] sm:$0xf]
    %v5900 = vld [vmem:[%s5897 + $0x8] sm:$0xf]
    %v5901 = vld [vmem:[%s5897 + $0xc] sm:$0xf]
    %v5902 = vld [vmem:[%s5897 + $0x10] sm:$0xf]
    %v5903 = vld [vmem:[%s5897 + $0x14] sm:$0xf]
    %v5904 = vld [vmem:[%s5897 + $0x18] sm:$0xf]
    %v5905 = vld [vmem:[%s5897 + $0x1c] sm:$0xf]
    %v5906 = vld [vmem:[%s5897 + $0x20] sm:$0xf]
    %v5907 = vld [vmem:[%s5897 + $0x24] sm:$0xf]
    %v5908 = vld [vmem:[%s5897 + $0x28] sm:$0xf]
    %v5909 = vld [vmem:[%s5897 + $0x2c] sm:$0xf]
    %v5910 = vld [vmem:[%s5897 + $0x30] sm:$0xf]
    %v5911 = vld [vmem:[%s5897 + $0x34] sm:$0xf]
    %v5912 = vld [vmem:[%s5897 + $0x38] sm:$0xf]
    %v5913 = vld [vmem:[%s5897 + $0x3c] sm:$0xf]
    %v5930 = vunpack.c.l.b16 %v5898
    %v5931 = vunpack.c.l.b16 %v5899
    %v5932 = vunpack.c.l.b16 %v5900
    %v5933 = vunpack.c.l.b16 %v5901
    %v5934 = vunpack.c.l.b16 %v5902
    %v5935 = vunpack.c.l.b16 %v5903
    %v5936 = vunpack.c.l.b16 %v5904
    %v5937 = vunpack.c.l.b16 %v5905
    %v5938 = vunpack.c.l.b16 %v5906
    %v5939 = vunpack.c.l.b16 %v5907
    %v5940 = vunpack.c.l.b16 %v5908
    %v5941 = vunpack.c.l.b16 %v5909
    %v5942 = vunpack.c.l.b16 %v5910
    %v5943 = vunpack.c.l.b16 %v5911
    %v5944 = vunpack.c.l.b16 %v5912
    %v5945 = vunpack.c.l.b16 %v5913
    %v5946 = vpack.c.b16 %v5931, %v5930
    %v5947 = vpack.c.b16 %v5933, %v5932
    %v5948 = vpack.c.b16 %v5935, %v5934
    %v5949 = vpack.c.b16 %v5937, %v5936
    %v5950 = vpack.c.b16 %v5939, %v5938
    %v5951 = vpack.c.b16 %v5941, %v5940
    %v5952 = vpack.c.b16 %v5943, %v5942
    %v5953 = vpack.c.b16 %v5945, %v5944
    %5962 = vmatprep.subr.bf16.mxu0 0
    %5963 = vmatpush1.bf16.msra.mxu0 %v5953
    %5964 = vmatprep.subr.bf16.mxu0 0
    %5965 = vmatpush1.bf16.msra.mxu0 %v5952
    %5966 = vmatprep.subr.bf16.mxu0 0
    %5967 = vmatpush1.bf16.msra.mxu0 %v5951
    %5968 = vmatprep.subr.bf16.mxu0 0
    %5969 = vmatpush1.bf16.msra.mxu0 %v5950
    %5970 = vmatprep.subr.bf16.mxu0 0
    %5971 = vmatpush1.bf16.msra.mxu0 %v5949
    %5972 = vmatprep.subr.bf16.mxu0 0
    %5973 = vmatpush1.bf16.msra.mxu0 %v5948
    %5974 = vmatprep.subr.bf16.mxu0 0
    %5975 = vmatpush1.bf16.msra.mxu0 %v5947
    %5976 = vmatprep.subr.bf16.mxu0 0
    %5977 = vmatpush1.bf16.msra.mxu0 %v5946
    %5978 = vmatprep.subr.bf16.mxu0 0
    %5979 = vmatpush2.bf16.msra.mxu0 0
    %5980 = vmatprep.subr.bf16.mxu0 0
    %5981 = vmatpush2.bf16.msra.mxu0 0
    %5982 = vmatprep.subr.bf16.mxu0 0
    %5983 = vmatpush2.bf16.msra.mxu0 0
    %5984 = vmatprep.subr.bf16.mxu0 0
    %5985 = vmatpush2.bf16.msra.mxu0 0
    %5986 = vmatprep.subr.bf16.mxu0 0
    %5987 = vmatpush2.bf16.msra.mxu0 0
    %5988 = vmatprep.subr.bf16.mxu0 0
    %5989 = vmatpush2.bf16.msra.mxu0 0
    %5990 = vmatprep.subr.bf16.mxu0 0
    %5991 = vmatpush2.bf16.msra.mxu0 0
    %5992 = vmatprep.subr.bf16.mxu0 0
    %5993 = vmatpush2.bf16.msra.mxu0 0
    %5994 = vmatprep.mubr.bf16.mxu0 0
    %5995 = vmatmul.mubr.bf16.gmra.mxu0 %v5896
    %v5996 = vpop.f32.mrf.mxu0
    %v5997 = vadd.f32 0.0, %v5996
    %v5998 = vpop.f32.mrf.mxu0
    %v5999 = vpop.f32.mrf.mxu0
    %v6000 = vpop.f32.mrf.mxu0
    %6001 = vdwg.mxu0
    %v6002 = vadd.f32 %v5890, %v5997
    %v6003 = vld [vmem:[#allocation4 + $0x6] sm:$0x3]
    %v6004 = vpack.c.bf16 %v6003, %v6003
    %s6005 = scalar_lea.vmem %s9, 192
    %v6006 = vld [vmem:[%s6005] sm:$0xf]
    %v6007 = vld [vmem:[%s6005 + $0x4] sm:$0xf]
    %v6008 = vld [vmem:[%s6005 + $0x8] sm:$0xf]
    %v6009 = vld [vmem:[%s6005 + $0xc] sm:$0xf]
    %v6010 = vld [vmem:[%s6005 + $0x10] sm:$0xf]
    %v6011 = vld [vmem:[%s6005 + $0x14] sm:$0xf]
    %v6012 = vld [vmem:[%s6005 + $0x18] sm:$0xf]
    %v6013 = vld [vmem:[%s6005 + $0x1c] sm:$0xf]
    %v6014 = vld [vmem:[%s6005 + $0x20] sm:$0xf]
    %v6015 = vld [vmem:[%s6005 + $0x24] sm:$0xf]
    %v6016 = vld [vmem:[%s6005 + $0x28] sm:$0xf]
    %v6017 = vld [vmem:[%s6005 + $0x2c] sm:$0xf]
    %v6018 = vld [vmem:[%s6005 + $0x30] sm:$0xf]
    %v6019 = vld [vmem:[%s6005 + $0x34] sm:$0xf]
    %v6020 = vld [vmem:[%s6005 + $0x38] sm:$0xf]
    %v6021 = vld [vmem:[%s6005 + $0x3c] sm:$0xf]
    %v6038 = vunpack.c.l.b16 %v6006
    %v6039 = vunpack.c.l.b16 %v6007
    %v6040 = vunpack.c.l.b16 %v6008
    %v6041 = vunpack.c.l.b16 %v6009
    %v6042 = vunpack.c.l.b16 %v6010
    %v6043 = vunpack.c.l.b16 %v6011
    %v6044 = vunpack.c.l.b16 %v6012
    %v6045 = vunpack.c.l.b16 %v6013
    %v6046 = vunpack.c.l.b16 %v6014
    %v6047 = vunpack.c.l.b16 %v6015
    %v6048 = vunpack.c.l.b16 %v6016
    %v6049 = vunpack.c.l.b16 %v6017
    %v6050 = vunpack.c.l.b16 %v6018
    %v6051 = vunpack.c.l.b16 %v6019
    %v6052 = vunpack.c.l.b16 %v6020
    %v6053 = vunpack.c.l.b16 %v6021
    %v6054 = vpack.c.b16 %v6039, %v6038
    %v6055 = vpack.c.b16 %v6041, %v6040
    %v6056 = vpack.c.b16 %v6043, %v6042
    %v6057 = vpack.c.b16 %v6045, %v6044
    %v6058 = vpack.c.b16 %v6047, %v6046
    %v6059 = vpack.c.b16 %v6049, %v6048
    %v6060 = vpack.c.b16 %v6051, %v6050
    %v6061 = vpack.c.b16 %v6053, %v6052
    %6070 = vmatprep.subr.bf16.mxu0 0
    %6071 = vmatpush1.bf16.msra.mxu0 %v6061
    %6072 = vmatprep.subr.bf16.mxu0 0
    %6073 = vmatpush1.bf16.msra.mxu0 %v6060
    %6074 = vmatprep.subr.bf16.mxu0 0
    %6075 = vmatpush1.bf16.msra.mxu0 %v6059
    %6076 = vmatprep.subr.bf16.mxu0 0
    %6077 = vmatpush1.bf16.msra.mxu0 %v6058
    %6078 = vmatprep.subr.bf16.mxu0 0
    %6079 = vmatpush1.bf16.msra.mxu0 %v6057
    %6080 = vmatprep.subr.bf16.mxu0 0
    %6081 = vmatpush1.bf16.msra.mxu0 %v6056
    %6082 = vmatprep.subr.bf16.mxu0 0
    %6083 = vmatpush1.bf16.msra.mxu0 %v6055
    %6084 = vmatprep.subr.bf16.mxu0 0
    %6085 = vmatpush1.bf16.msra.mxu0 %v6054
    %6086 = vmatprep.subr.bf16.mxu0 0
    %6087 = vmatpush2.bf16.msra.mxu0 0
    %6088 = vmatprep.subr.bf16.mxu0 0
    %6089 = vmatpush2.bf16.msra.mxu0 0
    %6090 = vmatprep.subr.bf16.mxu0 0
    %6091 = vmatpush2.bf16.msra.mxu0 0
    %6092 = vmatprep.subr.bf16.mxu0 0
    %6093 = vmatpush2.bf16.msra.mxu0 0
    %6094 = vmatprep.subr.bf16.mxu0 0
    %6095 = vmatpush2.bf16.msra.mxu0 0
    %6096 = vmatprep.subr.bf16.mxu0 0
    %6097 = vmatpush2.bf16.msra.mxu0 0
    %6098 = vmatprep.subr.bf16.mxu0 0
    %6099 = vmatpush2.bf16.msra.mxu0 0
    %6100 = vmatprep.subr.bf16.mxu0 0
    %6101 = vmatpush2.bf16.msra.mxu0 0
    %6102 = vmatprep.mubr.bf16.mxu0 0
    %6103 = vmatmul.mubr.bf16.gmra.mxu0 %v6004
    %v6104 = vpop.f32.mrf.mxu0
    %v6105 = vadd.f32 0.0, %v6104
    %v6106 = vpop.f32.mrf.mxu0
    %v6107 = vpop.f32.mrf.mxu0
    %v6108 = vpop.f32.mrf.mxu0
    %6109 = vdwg.mxu0
    %v6110 = vadd.f32 %v6002, %v6105
    %v6111 = vld [vmem:[%s10] sm:$0x1]
    %v6113 = vlaneseq
    %v6114 = vshrl.u32 %v6113, 7
    %v6115 = vsub.s32 0, %v6114
    %v6116 = vrot.slane %v6111, %v6115
    %v6118 = vadd.f32 %v6110, %v6116
    %v6119 = vmax.f32 %v6118, 0.0
    %v6120 = vpack.c.bf16 %v6119, %v6119
    %v6121 = vld [vmem:[%s11] sm:$0xf]
    %v6122 = vld [vmem:[%s11 + $0x4] sm:$0xf]
    %v6123 = vld [vmem:[%s11 + $0x8] sm:$0xf]
    %v6124 = vld [vmem:[%s11 + $0xc] sm:$0xf]
    %v6125 = vld [vmem:[%s11 + $0x10] sm:$0xf]
    %v6126 = vld [vmem:[%s11 + $0x14] sm:$0xf]
    %v6127 = vld [vmem:[%s11 + $0x18] sm:$0xf]
    %v6128 = vld [vmem:[%s11 + $0x1c] sm:$0xf]
    %v6129 = vld [vmem:[%s11 + $0x20] sm:$0xf]
    %v6130 = vld [vmem:[%s11 + $0x24] sm:$0xf]
    %v6131 = vld [vmem:[%s11 + $0x28] sm:$0xf]
    %v6132 = vld [vmem:[%s11 + $0x2c] sm:$0xf]
    %v6133 = vld [vmem:[%s11 + $0x30] sm:$0xf]
    %v6134 = vld [vmem:[%s11 + $0x34] sm:$0xf]
    %v6135 = vld [vmem:[%s11 + $0x38] sm:$0xf]
    %v6136 = vld [vmem:[%s11 + $0x3c] sm:$0xf]
    %v6137 = vld [vmem:[%s12] sm:$0x1]
    %v6139 = vlaneseq
    %v6140 = vshrl.u32 %v6139, 7
    %v6141 = vsub.s32 0, %v6140
    %v6142 = vrot.slane %v6137, %v6141
    %v6160 = vunpack.c.l.b16 %v6121
    %v6161 = vunpack.c.l.b16 %v6122
    %v6162 = vunpack.c.l.b16 %v6123
    %v6163 = vunpack.c.l.b16 %v6124
    %v6164 = vunpack.c.l.b16 %v6125
    %v6165 = vunpack.c.l.b16 %v6126
    %v6166 = vunpack.c.l.b16 %v6127
    %v6167 = vunpack.c.l.b16 %v6128
    %v6168 = vunpack.c.l.b16 %v6129
    %v6169 = vunpack.c.l.b16 %v6130
    %v6170 = vunpack.c.l.b16 %v6131
    %v6171 = vunpack.c.l.b16 %v6132
    %v6172 = vunpack.c.l.b16 %v6133
    %v6173 = vunpack.c.l.b16 %v6134
    %v6174 = vunpack.c.l.b16 %v6135
    %v6175 = vunpack.c.l.b16 %v6136
    %v6176 = vpack.c.b16 %v6161, %v6160
    %v6177 = vpack.c.b16 %v6163, %v6162
    %v6178 = vpack.c.b16 %v6165, %v6164
    %v6179 = vpack.c.b16 %v6167, %v6166
    %v6180 = vpack.c.b16 %v6169, %v6168
    %v6181 = vpack.c.b16 %v6171, %v6170
    %v6182 = vpack.c.b16 %v6173, %v6172
    %v6183 = vpack.c.b16 %v6175, %v6174
    %6192 = vmatprep.subr.bf16.mxu0 0
    %6193 = vmatpush1.bf16.msra.mxu0 %v6183
    %6194 = vmatprep.subr.bf16.mxu0 0
    %6195 = vmatpush1.bf16.msra.mxu0 %v6182
    %6196 = vmatprep.subr.bf16.mxu0 0
    %6197 = vmatpush1.bf16.msra.mxu0 %v6181
    %6198 = vmatprep.subr.bf16.mxu0 0
    %6199 = vmatpush1.bf16.msra.mxu0 %v6180
    %6200 = vmatprep.subr.bf16.mxu0 0
    %6201 = vmatpush1.bf16.msra.mxu0 %v6179
    %6202 = vmatprep.subr.bf16.mxu0 0
    %6203 = vmatpush1.bf16.msra.mxu0 %v6178
    %6204 = vmatprep.subr.bf16.mxu0 0
    %6205 = vmatpush1.bf16.msra.mxu0 %v6177
    %6206 = vmatprep.subr.bf16.mxu0 0
    %6207 = vmatpush1.bf16.msra.mxu0 %v6176
    %6208 = vmatprep.subr.bf16.mxu0 0
    %6209 = vmatpush2.bf16.msra.mxu0 0
    %6210 = vmatprep.subr.bf16.mxu0 0
    %6211 = vmatpush2.bf16.msra.mxu0 0
    %6212 = vmatprep.subr.bf16.mxu0 0
    %6213 = vmatpush2.bf16.msra.mxu0 0
    %6214 = vmatprep.subr.bf16.mxu0 0
    %6215 = vmatpush2.bf16.msra.mxu0 0
    %6216 = vmatprep.subr.bf16.mxu0 0
    %6217 = vmatpush2.bf16.msra.mxu0 0
    %6218 = vmatprep.subr.bf16.mxu0 0
    %6219 = vmatpush2.bf16.msra.mxu0 0
    %6220 = vmatprep.subr.bf16.mxu0 0
    %6221 = vmatpush2.bf16.msra.mxu0 0
    %6222 = vmatprep.subr.bf16.mxu0 0
    %6223 = vmatpush2.bf16.msra.mxu0 0
    %6224 = vmatprep.mubr.bf16.mxu0 0
    %6225 = vmatmul.mubr.bf16.gmra.mxu0 %v6120
    %v6226 = vpop.f32.mrf.mxu0
    %v6227 = vadd.f32 %v6142, %v6226
    %v6228 = vpop.f32.mrf.mxu0
    %v6229 = vpop.f32.mrf.mxu0
    %v6230 = vpop.f32.mrf.mxu0
    %6231 = vdwg.mxu0
    %v6232 = vlaneseq
    %v6233 = vand.u32 %v6232, 127
    %vm6234 = vcmp.lt.s32.totalorder %v6233, 10
    %v6235 = vsel %vm6234, %v6227, -1e+30
    %vm6236 = vcmask 1041408
    %v6237 = vsel %vm6236, %v6235, -inf
    %6238 = vmax.xlane.f32.xlu0 %v6237
    %v6239 = vpop.xlane.xlu0 %6238
    %v6240 = vsub.f32 %v6235, %v6239
    %v6241 = vmul.f32 %v6240, 1.442695
    %v6242 = vpow.pop %v6241
    %v6243 = vsel %vm6236, %v6242, 0.0
    %6244 = vadd.xlane.f32.xlu0 %v6243
    %v6245 = vpop.xlane.xlu0 %6244
    %v6246 = vlog2.pop %v6245
    %v6247 = vmul.f32 %v6246, 0.6931472
    %v6248 = vsub.f32 %v6240, %v6247
    %v6249 = vsel %vm6234, %v6248, 0.0
    %6250 = vst [vmem:[#allocation5] sm:$0x3] %v6249
    // Predicated region
    $region54: #{mnist_forward.1} parent=1 // pred_check
      _
    $region55: #{mnist_forward.1} parent=1 // pred_check_branch
      %6252 = sbr.rel (0) target = $region57
    $region56: #{mnist_forward.1} parent=1 // pred_region
      %s6254 = ssub.s32 32, 32
      %6255 = vsyncadd [#allocation6], %s6254
      %s6257 = sshll.u32 [#allocation5], 4
      %s6258 = int_to_ptr.vmem [resolvable:$true] %s6257
      %6260 = dma.vmem_to_hbm [thread:$0]  %s6258, 32, %s13, [#allocation6]
    $region57: #{mnist_forward.1} parent=1 // pred_fallthru
      _
    // Predicated region
    $region58: #{mnist_forward.1} parent=1 // pred_check
      _
    $region59: #{mnist_forward.1} parent=1 // pred_check_branch
      %6262 = sbr.rel (0) target = $region61
    $region60: #{mnist_forward.1} parent=1 // pred_region
      %6263 = dma.done [#allocation6], 32
    $region61: #{mnist_forward.1} parent=1 // pred_fallthru
      _
    %6264 = vsyncpa [#allocation6], 1

</llo_original>
